<compile_context>
chip_gen: v7x
topology: tpu7x:2x2x1
jax: 0.10.0
libtpu: 0.0.40
codegen_flags: <defaults>
</compile_context>

<pallas_src>
import math

import jax
import jax.numpy as jnp
from jax.experimental import pallas as pl
from jax.experimental.pallas import tpu as pltpu

BN_EPS = 1e-5
C_PAD = 128    # lane width; every channel dim lives in 128 lanes
GUARD = 8      # zero guard rows above/below each pooled activation

# (c_in, c_out, kernel, stride, pad) — exactly the torch QCNN config.
LAYER_CFG = [
    (1, 16, 64, 8, 28),
    (16, 32, 3, 1, 1),
    (32, 64, 3, 1, 1),
    (64, 64, 3, 1, 1),
    (64, 64, 3, 1, 1),
    (64, 64, 3, 1, 0),
]

_VMEM = pl.BlockSpec(memory_space=pltpu.MemorySpace.VMEM)


# ------------------------------ Pallas kernel ------------------------------ #
def _qcnn_kernel(*refs):
    (p1_ref,
     wrg1, wb1, brg1, bb1,
     wrg2, wb2, brg2, bb2,
     wrg3, wb3, brg3, bb3,
     wrg4, wb4, brg4, bb4,
     wrg5, wb5, brg5, bb5,
     wrg6, wb6, brg6, bb6,
     w1_ref, b1_ref, w2_ref, b2_ref,
     out_ref,
     tmp, a1, a2, a3, a4, a5, a6) = refs

    bsz = out_ref.shape[0]
    lane = jax.lax.broadcasted_iota(jnp.int32, (1, C_PAD), 1)
    lane_lo = lane < 64                      # hoisted once, reused everywhere

    def bn_stats(y, count, vmask=None):
        # One-pass train-mode BatchNorm1d stats (biased var, gamma=1, beta=0).
        # TODO(synk): add gamma/beta inputs + two-pass variance for trained BN.
        ym = y if vmask is None else y * vmask
        s1 = jnp.sum(ym, axis=0, keepdims=True)
        s2 = jnp.sum(ym * y, axis=0, keepdims=True)
        mean = s1 / count
        var = jnp.maximum(s2 / count - mean * mean, 0.0)
        return mean, jax.lax.rsqrt(var + BN_EPS)

    def pack256(a, b, c):
        # [a_ch | b_ch | c_ch | junk] in 256 lanes; a/b/c carry their (<=64)
        # real channels in lanes 0..63.  Junk lanes are killed by zero weight
        # rows, so no masking of the upper halves is needed.
        half1 = jnp.where(lane_lo, a, pltpu.roll(b, 64, axis=1))
        return jnp.concatenate([half1, c], axis=1)

    def quad3(a, b, c, wrg_ref, wbq_ref, brg_ref, bbq_ref):
        # conv_r(x)*conv_g(x) + conv_b(x^2) for a K=3 tap-packed layer:
        # one (h,256)x(256,128) matmul for [r|g] and one for the squared slab.
        slab = pack256(a, b, c)
        rg = jnp.dot(slab.astype(jnp.bfloat16), wrg_ref[...],
                     preferred_element_type=jnp.float32) + brg_ref[...]
        qq = jnp.dot((slab * slab).astype(jnp.bfloat16), wbq_ref[...],
                     preferred_element_type=jnp.float32) + bbq_ref[...]
        # r in lanes 0..63, g in lanes 64..127 -> one XLU roll gives r*g.
        return rg * pltpu.roll(rg, 64, axis=1) + qq

    def pool_store(y, dst_ref):
        # BN stats on the pre-pool conv output, MaxPool1d(2,2) on the raw
        # output (one staging round-trip + 2 strided reads), then
        # normalize+ReLU on the pooled half (BN/ReLU/max commute).  Stored with
        # zero guard rows so consumers read unit-stride shifted windows.
        # TODO(synk): pool fully in-register (even/odd sublane shuffle) to drop
        # the staging buffer; kept as ref reads for guaranteed lowering.
        h = y.shape[0]
        mean, inv = bn_stats(y, float(h))
        tmp[0:h, :] = y
        pooled = jnp.maximum(tmp[pl.ds(0, h // 2, stride=2), :],
                             tmp[pl.ds(1, h // 2, stride=2), :])
        pn = jnp.maximum((pooled - mean) * inv, 0.0)
        zeros = jnp.zeros((GUARD, C_PAD), jnp.float32)
        dst_ref[0:GUARD, :] = zeros
        dst_ref[GUARD:GUARD + h // 2, :] = pn
        dst_ref[GUARD + h // 2:2 * GUARD + h // 2, :] = zeros

    # ---------------- layer 1: im2col patches -> quad conv ------------------
    p = p1_ref[...]                                            # (B*256, 64) bf16
    rg = jnp.dot(p, wrg1[...], preferred_element_type=jnp.float32) + brg1[...]
    qq = jnp.dot(p * p, wb1[...], preferred_element_type=jnp.float32) + bb1[...]
    pool_store(rg * pltpu.roll(rg, 64, axis=1) + qq, a1)       # (B*256,128) -> a1

    # ---------------- layers 2..5: K=3, stride 1, pad 1 ---------------------
    for prev, dst, l_in, wrg, wbq, brg, bbq in (
            (a1, a2, 128, wrg2, wb2, brg2, bb2),
            (a2, a3, 64, wrg3, wb3, brg3, bb3),
            (a3, a4, 32, wrg4, wb4, brg4, bb4),
            (a4, a5, 16, wrg5, wb5, brg5, bb5)):
        h = bsz * l_in
        win_m = prev[GUARD - 1:GUARD - 1 + h, :]               # unit-stride reads
        win_0 = prev[GUARD:GUARD + h, :]
        win_p = prev[GUARD + 1:GUARD + 1 + h, :]
        # zero the conv's pad taps at per-sample boundaries (cross-batch rows)
        q = jnp.bitwise_and(
            jax.lax.broadcasted_iota(jnp.int32, (h, 1), 0), l_in - 1)
        win_m = win_m * jnp.where(q != 0, 1.0, 0.0)
        win_p = win_p * jnp.where(q != l_in - 1, 1.0, 0.0)
        pool_store(quad3(win_m, win_0, win_p, wrg, wbq, brg, bbq), dst)

    # ---------------- layer 6: K=3, stride 1, pad 0 --------------------------
    h6 = bsz * 8
    y6 = quad3(a5[GUARD:GUARD + h6, :],
               a5[GUARD + 1:GUARD + 1 + h6, :],
               a5[GUARD + 2:GUARD + 2 + h6, :],
               wrg6, wb6, brg6, bb6)
    jq = jnp.bitwise_and(jax.lax.broadcasted_iota(jnp.int32, (h6, 1), 0), 7)
    vmask = jnp.where(jq < 6, 1.0, 0.0)        # only 6 of 8 rows/sample valid
    mean, inv = bn_stats(y6, float(6 * bsz), vmask=vmask)
    a6[...] = jnp.maximum((y6 - mean) * inv, 0.0)

    # ------------- MLP head: pool -> fc1 -> ReLU -> (dropout) -> fc2 --------
    # TODO(synk): nn.Dropout(0.5) is stochastic in torch train mode; applied
    # here as identity (inference semantics).
    p0 = jnp.maximum(a6[pl.ds(0, bsz, stride=8), :], a6[pl.ds(1, bsz, stride=8), :])
    p1h = jnp.maximum(a6[pl.ds(2, bsz, stride=8), :], a6[pl.ds(3, bsz, stride=8), :])
    p2 = jnp.maximum(a6[pl.ds(4, bsz, stride=8), :], a6[pl.ds(5, bsz, stride=8), :])
    feat = pack256(p0, p1h, p2)                                # (B, 256)
    h1 = jnp.dot(feat.astype(jnp.bfloat16), w1_ref[...],
                 preferred_element_type=jnp.float32) + b1_ref[...]
    h1 = jnp.maximum(h1, 0.0)
    out_ref[...] = (jnp.dot(h1, w2_ref[...], preferred_element_type=jnp.float32)
                    + b2_ref[...])


def _qcnn_pallas(p1, params, b):
    scratch = [
        pltpu.VMEM((b * 256, C_PAD), jnp.float32),             # shared pre-pool stage
        pltpu.VMEM((b * 128 + 2 * GUARD, C_PAD), jnp.float32),  # pooled layer-1
        pltpu.VMEM((b * 64 + 2 * GUARD, C_PAD), jnp.float32),
        pltpu.VMEM((b * 32 + 2 * GUARD, C_PAD), jnp.float32),
        pltpu.VMEM((b * 16 + 2 * GUARD, C_PAD), jnp.float32),
        pltpu.VMEM((b * 8 + 2 * GUARD, C_PAD), jnp.float32),
        pltpu.VMEM((b * 8, C_PAD), jnp.float32),               # layer-6 pre-pool
    ]
    scratch_rows = b * (256 + 128 + 64 + 32 + 16 + 8 + 8) + 5 * 2 * GUARD
    scratch_bytes = scratch_rows * C_PAD * 4
    param_bytes = sum(int(a.size) * a.dtype.itemsize for a in params)
    io_bytes = int(p1.size) * p1.dtype.itemsize + b * 10 * 4
    # v7x budget: 64 MiB VMEM per core; generous headroom for compiler temps.
    vmem_limit = int(min(64 * 2 ** 20,
                         max(32 * 2 ** 20,
                             2 * (scratch_bytes + param_bytes + io_bytes)
                             + 8 * 2 ** 20)))
    # TODO(synk): batch-tiled grid + 2-way core split (v7x) for large batch.
    return pl.pallas_call(
        _qcnn_kernel,
        out_shape=jax.ShapeDtypeStruct((b, 10), jnp.float32),
        in_specs=[_VMEM] * (1 + len(params)),
        out_specs=_VMEM,
        scratch_shapes=scratch,
        compiler_params=pltpu.CompilerParams(vmem_limit_bytes=vmem_limit),
    )(p1, *params)


# ------------------------- weight lowering (host) --------------------------- #
def _pad2(a, rows, cols):
    return jnp.pad(a, ((0, rows - a.shape[0]), (0, cols - a.shape[1])))


def _bias_pack(lo, hi=None):
    v = jnp.zeros((1, C_PAD), jnp.float32)
    v = v.at[0, :lo.shape[0]].set(lo)
    if hi is not None:
        v = v.at[0, 64:64 + hi.shape[0]].set(hi)
    return v


def _lower_layer1(wr, wg, wb, br, bg, bb):
    # (16,1,64) -> patch-matmul layout (64 taps, 128 lanes): W_r in lanes 0..15,
    # W_g in lanes 64..79 (r*g recovered with a 64-lane roll in-kernel).
    def tomat(w):
        return w.reshape(w.shape[0], -1).T                     # (64, c_out)
    wrg = jnp.zeros((64, C_PAD), jnp.float32)
    wrg = wrg.at[:, :wr.shape[0]].set(tomat(wr))
    wrg = wrg.at[:, 64:64 + wg.shape[0]].set(tomat(wg))
    wbm = _pad2(tomat(wb), 64, C_PAD)
    return [wrg.astype(jnp.bfloat16), wbm.astype(jnp.bfloat16),
            _bias_pack(br, bg), _bias_pack(bb)]


def _lower_layer_k3(wr, wg, wb, br, bg, bb):
    # (c_out, c_in, 3) -> tap-packed (256, 128): rows t*64..t*64+63 hold tap t
    # (c_in real rows), columns [W_r (0..63) | W_g (64..127)]; rows 192..255
    # stay zero so the slab's 4th (junk) chunk never contributes.
    def tap(w, t):
        return _pad2(w[:, :, t].T, 64, 64)
    wrg = jnp.zeros((256, C_PAD), jnp.float32)
    wbm = jnp.zeros((256, C_PAD), jnp.float32)
    for t in range(3):
        wrg = wrg.at[t * 64:t * 64 + 64, 0:64].set(tap(wr, t))
        wrg = wrg.at[t * 64:t * 64 + 64, 64:128].set(tap(wg, t))
        wbm = wbm.at[t * 64:t * 64 + 64, 0:64].set(tap(wb, t))
    return [wrg.astype(jnp.bfloat16), wbm.astype(jnp.bfloat16),
            _bias_pack(br, bg), _bias_pack(bb)]


def _lower_fc(w1, b1, w2, b2):
    # torch fc1: (100, 192) with input index c*3 + pos; regroup so the kernel's
    # [pos0 | pos1 | pos2 | junk] 256-lane feature slab multiplies it directly.
    w1t = w1.T                                                  # (192, 100)
    w1m = jnp.zeros((256, C_PAD), jnp.float32)
    for j in range(3):
        w1m = w1m.at[j * 64:j * 64 + 64, :w1.shape[0]].set(w1t[j::3, :])
    w2m = jnp.pad(w2.T, ((0, C_PAD - w2.shape[1]), (0, 0)))     # (128, 10) f32
    return [w1m.astype(jnp.bfloat16), _bias_pack(b1), w2m, b2[None, :]]


def init_params(key):
    """Mirrors torch init: kaiming_uniform(a=sqrt(5)) w_r, w_g=0, b_g=1, w_b=0,
    b_b=0, torch-default Linear init; lowered to the packed bf16 kernel layout."""
    keys = jax.random.split(key, len(LAYER_CFG) + 2)
    params = []
    for i, (c_in, c_out, k, _, _) in enumerate(LAYER_CFG):
        bound = 1.0 / math.sqrt(c_in * k)
        kw, kb = jax.random.split(keys[i])
        wr = jax.random.uniform(kw, (c_out, c_in, k), jnp.float32, -bound, bound)
        br = jax.random.uniform(kb, (c_out,), jnp.float32, -bound, bound)
        wg = jnp.zeros((c_out, c_in, k), jnp.float32)
        bg = jnp.ones((c_out,), jnp.float32)
        wbq = jnp.zeros((c_out, c_in, k), jnp.float32)
        bbq = jnp.zeros((c_out,), jnp.float32)
        lower = _lower_layer1 if i == 0 else _lower_layer_k3
        params.extend(lower(wr, wg, wbq, br, bg, bbq))
    k1w, k1b = jax.random.split(keys[-2])
    k2w, k2b = jax.random.split(keys[-1])
    b1_bound = 1.0 / math.sqrt(192)
    w1 = jax.random.uniform(k1w, (100, 192), jnp.float32, -b1_bound, b1_bound)
    b1 = jax.random.uniform(k1b, (100,), jnp.float32, -b1_bound, b1_bound)
    b2_bound = 1.0 / math.sqrt(100)
    w2 = jax.random.uniform(k2w, (10, 100), jnp.float32, -b2_bound, b2_bound)
    b2 = jax.random.uniform(k2b, (10,), jnp.float32, -b2_bound, b2_bound)
    params.extend(_lower_fc(w1, b1, w2, b2))
    return params


# --------------------------------- forward ---------------------------------- #
@jax.jit
def qcnn_forward(x, params):
    """x: (B, 1, 2048) float32, torch NCW layout. Returns (B, 10) float32."""
    b = x.shape[0]
    assert x.shape[1] == 1 and x.shape[2] == 2048
    # Layer-1 im2col (K=64, stride=8, pad=28) on the raw input via a
    # reshape/slice trick (no gather); shipped to the kernel in bf16.
    xp = jnp.pad(x[:, 0, :], ((0, 0), (28, 28)))                # (B, 2104)
    xr = xp.reshape(b, 263, 8)
    p1 = jnp.concatenate([xr[:, j:j + 256, :] for j in range(8)], axis=2)
    p1 = p1.reshape(b * 256, 64).astype(jnp.bfloat16)           # (B*256, 64)
    return _qcnn_pallas(p1, params, b)


if __name__ == "__main__":
    key = jax.random.PRNGKey(0)
    kx, kp = jax.random.split(key)
    # Input length 2048 is implied by the module (final feature map 64*3=192).
    x = jax.random.normal(kx, (2, 1, 2048), dtype=jnp.float32)
    params = init_params(kp)
    out = qcnn_forward(x, params)
    out = jax.block_until_ready(out)
    assert out.shape == (2, 10) and out.dtype == jnp.float32
    assert bool(jnp.all(jnp.isfinite(out)))
    print("KERNEL_OK")
</pallas_src>

<mosaic_0001>
module attributes {stable_mosaic.version = 11 : i64} {
  func.func @_qcnn_kernel(%arg0: memref<512x64xbf16, #tpu.memory_space<vmem>>, %arg1: memref<64x128xbf16, #tpu.memory_space<vmem>>, %arg2: memref<64x128xbf16, #tpu.memory_space<vmem>>, %arg3: memref<1x128xf32, #tpu.memory_space<vmem>>, %arg4: memref<1x128xf32, #tpu.memory_space<vmem>>, %arg5: memref<256x128xbf16, #tpu.memory_space<vmem>>, %arg6: memref<256x128xbf16, #tpu.memory_space<vmem>>, %arg7: memref<1x128xf32, #tpu.memory_space<vmem>>, %arg8: memref<1x128xf32, #tpu.memory_space<vmem>>, %arg9: memref<256x128xbf16, #tpu.memory_space<vmem>>, %arg10: memref<256x128xbf16, #tpu.memory_space<vmem>>, %arg11: memref<1x128xf32, #tpu.memory_space<vmem>>, %arg12: memref<1x128xf32, #tpu.memory_space<vmem>>, %arg13: memref<256x128xbf16, #tpu.memory_space<vmem>>, %arg14: memref<256x128xbf16, #tpu.memory_space<vmem>>, %arg15: memref<1x128xf32, #tpu.memory_space<vmem>>, %arg16: memref<1x128xf32, #tpu.memory_space<vmem>>, %arg17: memref<256x128xbf16, #tpu.memory_space<vmem>>, %arg18: memref<256x128xbf16, #tpu.memory_space<vmem>>, %arg19: memref<1x128xf32, #tpu.memory_space<vmem>>, %arg20: memref<1x128xf32, #tpu.memory_space<vmem>>, %arg21: memref<256x128xbf16, #tpu.memory_space<vmem>>, %arg22: memref<256x128xbf16, #tpu.memory_space<vmem>>, %arg23: memref<1x128xf32, #tpu.memory_space<vmem>>, %arg24: memref<1x128xf32, #tpu.memory_space<vmem>>, %arg25: memref<256x128xbf16, #tpu.memory_space<vmem>>, %arg26: memref<1x128xf32, #tpu.memory_space<vmem>>, %arg27: memref<128x10xf32, #tpu.memory_space<vmem>>, %arg28: memref<1x10xf32, #tpu.memory_space<vmem>>, %arg29: memref<2x10xf32, #tpu.memory_space<vmem>>, %arg30: memref<512x128xf32, #tpu.memory_space<vmem>>, %arg31: memref<272x128xf32, #tpu.memory_space<vmem>>, %arg32: memref<144x128xf32, #tpu.memory_space<vmem>>, %arg33: memref<80x128xf32, #tpu.memory_space<vmem>>, %arg34: memref<48x128xf32, #tpu.memory_space<vmem>>, %arg35: memref<32x128xf32, #tpu.memory_space<vmem>>, %arg36: memref<16x128xf32, #tpu.memory_space<vmem>>) attributes {dimension_semantics = [], scalar_prefetch = 0 : i64, scratch_operands = 7 : i64, tpu.core_type = #tpu.core_type<tc>} {
    %0 = tpu.iota {dimensions = array<i32: 1>} : vector<1x128xi32>
    %c64_i32 = arith.constant 64 : i32
    %1 = vector.broadcast %c64_i32 : i32 to vector<1x128xi32>
    %2 = arith.cmpi slt, %0, %1 : vector<1x128xi32>
    %c0 = arith.constant 0 : index
    %c0_0 = arith.constant 0 : index
    %3 = vector.load %arg0[%c0, %c0_0] : memref<512x64xbf16, #tpu.memory_space<vmem>>, vector<512x64xbf16>
    %c0_1 = arith.constant 0 : index
    %c0_2 = arith.constant 0 : index
    %4 = vector.load %arg1[%c0_1, %c0_2] : memref<64x128xbf16, #tpu.memory_space<vmem>>, vector<64x128xbf16>
    %cst = arith.constant dense<0.000000e+00> : vector<512x128xf32>
    %5 = tpu.matmul %3, %4, %cst {dimension_numbers = #tpu.dot_dimension_numbers<[1], [0], [0], [1], [0, 0, 1, 1], [], []>} : vector<512x64xbf16>, vector<64x128xbf16>, vector<512x128xf32> -> vector<512x128xf32>
    %c0_3 = arith.constant 0 : index
    %c0_4 = arith.constant 0 : index
    %6 = vector.load %arg3[%c0_3, %c0_4] : memref<1x128xf32, #tpu.memory_space<vmem>>, vector<1x128xf32>
    %7 = vector.broadcast %6 : vector<1x128xf32> to vector<512x128xf32>
    %8 = arith.addf %5, %7 : vector<512x128xf32>
    %9 = arith.mulf %3, %3 : vector<512x64xbf16>
    %c0_5 = arith.constant 0 : index
    %c0_6 = arith.constant 0 : index
    %10 = vector.load %arg2[%c0_5, %c0_6] : memref<64x128xbf16, #tpu.memory_space<vmem>>, vector<64x128xbf16>
    %cst_7 = arith.constant dense<0.000000e+00> : vector<512x128xf32>
    %11 = tpu.matmul %9, %10, %cst_7 {dimension_numbers = #tpu.dot_dimension_numbers<[1], [0], [0], [1], [0, 0, 1, 1], [], []>} : vector<512x64xbf16>, vector<64x128xbf16>, vector<512x128xf32> -> vector<512x128xf32>
    %c0_8 = arith.constant 0 : index
    %c0_9 = arith.constant 0 : index
    %12 = vector.load %arg4[%c0_8, %c0_9] : memref<1x128xf32, #tpu.memory_space<vmem>>, vector<1x128xf32>
    %13 = vector.broadcast %12 : vector<1x128xf32> to vector<512x128xf32>
    %14 = arith.addf %11, %13 : vector<512x128xf32>
    %c64_i32_10 = arith.constant 64 : i32
    %15 = tpu.dynamic_rotate %8 by %c64_i32_10 dim 1 : vector<512x128xf32>, i32 -> vector<512x128xf32>
    %16 = arith.mulf %8, %15 : vector<512x128xf32>
    %17 = arith.addf %16, %14 : vector<512x128xf32>
    %cst_11 = arith.constant dense<0.000000e+00> : vector<128xf32>
    %18 = vector.multi_reduction <add>, %17, %cst_11 [0] : vector<512x128xf32> to vector<128xf32>
    %19 = vector.shape_cast %18 : vector<128xf32> to vector<1x128xf32>
    %20 = arith.mulf %17, %17 : vector<512x128xf32>
    %cst_12 = arith.constant dense<0.000000e+00> : vector<128xf32>
    %21 = vector.multi_reduction <add>, %20, %cst_12 [0] : vector<512x128xf32> to vector<128xf32>
    %22 = vector.shape_cast %21 : vector<128xf32> to vector<1x128xf32>
    %cst_13 = arith.constant 5.120000e+02 : f32
    %23 = vector.broadcast %cst_13 : f32 to vector<1x128xf32>
    %24 = arith.divf %19, %23 : vector<1x128xf32>
    %cst_14 = arith.constant 5.120000e+02 : f32
    %25 = vector.broadcast %cst_14 : f32 to vector<1x128xf32>
    %26 = arith.divf %22, %25 : vector<1x128xf32>
    %27 = arith.mulf %24, %24 : vector<1x128xf32>
    %28 = arith.subf %26, %27 : vector<1x128xf32>
    %cst_15 = arith.constant 0.000000e+00 : f32
    %29 = vector.broadcast %cst_15 : f32 to vector<1x128xf32>
    %30 = arith.maximumf %28, %29 : vector<1x128xf32>
    %cst_16 = arith.constant 9.99999974E-6 : f32
    %31 = vector.broadcast %cst_16 : f32 to vector<1x128xf32>
    %32 = arith.addf %30, %31 : vector<1x128xf32>
    %33 = math.rsqrt %32 : vector<1x128xf32>
    %c0_17 = arith.constant 0 : index
    %c0_18 = arith.constant 0 : index
    %34 = vector.load %arg30[%c0_17, %c0_18] : memref<512x128xf32, #tpu.memory_space<vmem>>, vector<512x128xf32>
    tpu.vector_store %arg30[%c0_17, %c0_18], %17 {strides = array<i32>} : memref<512x128xf32, #tpu.memory_space<vmem>>, vector<512x128xf32>,
    %c0_19 = arith.constant 0 : index
    %c0_20 = arith.constant 0 : index
    %35 = tpu.strided_load %arg30[%c0_19, %c0_20] {strides = array<i32: 2, 1>} : memref<512x128xf32, #tpu.memory_space<vmem>>, vector<256x128xf32>
    %c1 = arith.constant 1 : index
    %c0_21 = arith.constant 0 : index
    %36 = tpu.strided_load %arg30[%c1, %c0_21] {strides = array<i32: 2, 1>} : memref<512x128xf32, #tpu.memory_space<vmem>>, vector<256x128xf32>
    %37 = arith.maximumf %35, %36 : vector<256x128xf32>
    %38 = vector.broadcast %24 : vector<1x128xf32> to vector<256x128xf32>
    %39 = arith.subf %37, %38 : vector<256x128xf32>
    %40 = vector.broadcast %33 : vector<1x128xf32> to vector<256x128xf32>
    %41 = arith.mulf %39, %40 : vector<256x128xf32>
    %cst_22 = arith.constant 0.000000e+00 : f32
    %42 = vector.broadcast %cst_22 : f32 to vector<256x128xf32>
    %43 = arith.maximumf %41, %42 : vector<256x128xf32>
    %cst_23 = arith.constant 0.000000e+00 : f32
    %44 = vector.broadcast %cst_23 : f32 to vector<8x128xf32>
    %c0_24 = arith.constant 0 : index
    %c0_25 = arith.constant 0 : index
    %45 = vector.load %arg31[%c0_24, %c0_25] : memref<272x128xf32, #tpu.memory_space<vmem>>, vector<8x128xf32>
    tpu.vector_store %arg31[%c0_24, %c0_25], %44 {strides = array<i32>} : memref<272x128xf32, #tpu.memory_space<vmem>>, vector<8x128xf32>,
    %c8 = arith.constant 8 : index
    %c0_26 = arith.constant 0 : index
    %46 = vector.load %arg31[%c8, %c0_26] : memref<272x128xf32, #tpu.memory_space<vmem>>, vector<256x128xf32>
    tpu.vector_store %arg31[%c8, %c0_26], %43 {strides = array<i32>} : memref<272x128xf32, #tpu.memory_space<vmem>>, vector<256x128xf32>,
    %c264 = arith.constant 264 : index
    %c0_27 = arith.constant 0 : index
    %47 = vector.load %arg31[%c264, %c0_27] : memref<272x128xf32, #tpu.memory_space<vmem>>, vector<8x128xf32>
    tpu.vector_store %arg31[%c264, %c0_27], %44 {strides = array<i32>} : memref<272x128xf32, #tpu.memory_space<vmem>>, vector<8x128xf32>,
    %c7 = arith.constant 7 : index
    %c0_28 = arith.constant 0 : index
    %48 = vector.load %arg31[%c7, %c0_28] : memref<272x128xf32, #tpu.memory_space<vmem>>, vector<256x128xf32>
    %c8_29 = arith.constant 8 : index
    %c0_30 = arith.constant 0 : index
    %49 = vector.load %arg31[%c8_29, %c0_30] : memref<272x128xf32, #tpu.memory_space<vmem>>, vector<256x128xf32>
    %c9 = arith.constant 9 : index
    %c0_31 = arith.constant 0 : index
    %50 = vector.load %arg31[%c9, %c0_31] : memref<272x128xf32, #tpu.memory_space<vmem>>, vector<256x128xf32>
    %51 = tpu.iota {dimensions = array<i32: 0>} : vector<256x1xi32>
    %c127_i32 = arith.constant 127 : i32
    %52 = vector.broadcast %c127_i32 : i32 to vector<256x1xi32>
    %53 = arith.andi %51, %52 : vector<256x1xi32>
    %c0_i32 = arith.constant 0 : i32
    %54 = vector.broadcast %c0_i32 : i32 to vector<256x1xi32>
    %55 = arith.cmpi ne, %53, %54 : vector<256x1xi32>
    %cst_32 = arith.constant 1.000000e+00 : f32
    %cst_33 = arith.constant 0.000000e+00 : f32
    %56 = vector.broadcast %cst_32 : f32 to vector<256x1xf32>
    %57 = vector.broadcast %cst_33 : f32 to vector<256x1xf32>
    %58 = arith.select %55, %56, %57 : vector<256x1xi1>, vector<256x1xf32>
    %59 = vector.broadcast %58 : vector<256x1xf32> to vector<256x128xf32>
    %60 = arith.mulf %48, %59 : vector<256x128xf32>
    %c127_i32_34 = arith.constant 127 : i32
    %61 = vector.broadcast %c127_i32_34 : i32 to vector<256x1xi32>
    %62 = arith.cmpi ne, %53, %61 : vector<256x1xi32>
    %cst_35 = arith.constant 1.000000e+00 : f32
    %cst_36 = arith.constant 0.000000e+00 : f32
    %63 = vector.broadcast %cst_35 : f32 to vector<256x1xf32>
    %64 = vector.broadcast %cst_36 : f32 to vector<256x1xf32>
    %65 = arith.select %62, %63, %64 : vector<256x1xi1>, vector<256x1xf32>
    %66 = vector.broadcast %65 : vector<256x1xf32> to vector<256x128xf32>
    %67 = arith.mulf %50, %66 : vector<256x128xf32>
    %c64_i32_37 = arith.constant 64 : i32
    %68 = tpu.dynamic_rotate %49 by %c64_i32_37 dim 1 : vector<256x128xf32>, i32 -> vector<256x128xf32>
    %69 = vector.shape_cast %2 : vector<1x128xi1> to vector<1x128xi1>
    %70 = vector.broadcast %69 : vector<1x128xi1> to vector<256x128xi1>
    %71 = arith.select %70, %60, %68 : vector<256x128xi1>, vector<256x128xf32>
    %72 = tpu.concatenate %71, %67 in 1 : vector<256x128xf32>, vector<256x128xf32> -> vector<256x256xf32>
    %73 = arith.truncf %72 : vector<256x256xf32> to vector<256x256xbf16>
    %c0_38 = arith.constant 0 : index
    %c0_39 = arith.constant 0 : index
    %74 = vector.load %arg5[%c0_38, %c0_39] : memref<256x128xbf16, #tpu.memory_space<vmem>>, vector<256x128xbf16>
    %cst_40 = arith.constant dense<0.000000e+00> : vector<256x128xf32>
    %75 = tpu.matmul %73, %74, %cst_40 {dimension_numbers = #tpu.dot_dimension_numbers<[1], [0], [0], [1], [0, 0, 1, 1], [], []>} : vector<256x256xbf16>, vector<256x128xbf16>, vector<256x128xf32> -> vector<256x128xf32>
    %c0_41 = arith.constant 0 : index
    %c0_42 = arith.constant 0 : index
    %76 = vector.load %arg7[%c0_41, %c0_42] : memref<1x128xf32, #tpu.memory_space<vmem>>, vector<1x128xf32>
    %77 = vector.broadcast %76 : vector<1x128xf32> to vector<256x128xf32>
    %78 = arith.addf %75, %77 : vector<256x128xf32>
    %79 = arith.mulf %72, %72 : vector<256x256xf32>
    %80 = arith.truncf %79 : vector<256x256xf32> to vector<256x256xbf16>
    %c0_43 = arith.constant 0 : index
    %c0_44 = arith.constant 0 : index
    %81 = vector.load %arg6[%c0_43, %c0_44] : memref<256x128xbf16, #tpu.memory_space<vmem>>, vector<256x128xbf16>
    %cst_45 = arith.constant dense<0.000000e+00> : vector<256x128xf32>
    %82 = tpu.matmul %80, %81, %cst_45 {dimension_numbers = #tpu.dot_dimension_numbers<[1], [0], [0], [1], [0, 0, 1, 1], [], []>} : vector<256x256xbf16>, vector<256x128xbf16>, vector<256x128xf32> -> vector<256x128xf32>
    %c0_46 = arith.constant 0 : index
    %c0_47 = arith.constant 0 : index
    %83 = vector.load %arg8[%c0_46, %c0_47] : memref<1x128xf32, #tpu.memory_space<vmem>>, vector<1x128xf32>
    %84 = vector.broadcast %83 : vector<1x128xf32> to vector<256x128xf32>
    %85 = arith.addf %82, %84 : vector<256x128xf32>
    %c64_i32_48 = arith.constant 64 : i32
    %86 = tpu.dynamic_rotate %78 by %c64_i32_48 dim 1 : vector<256x128xf32>, i32 -> vector<256x128xf32>
    %87 = arith.mulf %78, %86 : vector<256x128xf32>
    %88 = arith.addf %87, %85 : vector<256x128xf32>
    %cst_49 = arith.constant dense<0.000000e+00> : vector<128xf32>
    %89 = vector.multi_reduction <add>, %88, %cst_49 [0] : vector<256x128xf32> to vector<128xf32>
    %90 = vector.shape_cast %89 : vector<128xf32> to vector<1x128xf32>
    %91 = arith.mulf %88, %88 : vector<256x128xf32>
    %cst_50 = arith.constant dense<0.000000e+00> : vector<128xf32>
    %92 = vector.multi_reduction <add>, %91, %cst_50 [0] : vector<256x128xf32> to vector<128xf32>
    %93 = vector.shape_cast %92 : vector<128xf32> to vector<1x128xf32>
    %cst_51 = arith.constant 2.560000e+02 : f32
    %94 = vector.broadcast %cst_51 : f32 to vector<1x128xf32>
    %95 = arith.divf %90, %94 : vector<1x128xf32>
    %cst_52 = arith.constant 2.560000e+02 : f32
    %96 = vector.broadcast %cst_52 : f32 to vector<1x128xf32>
    %97 = arith.divf %93, %96 : vector<1x128xf32>
    %98 = arith.mulf %95, %95 : vector<1x128xf32>
    %99 = arith.subf %97, %98 : vector<1x128xf32>
    %cst_53 = arith.constant 0.000000e+00 : f32
    %100 = vector.broadcast %cst_53 : f32 to vector<1x128xf32>
    %101 = arith.maximumf %99, %100 : vector<1x128xf32>
    %cst_54 = arith.constant 9.99999974E-6 : f32
    %102 = vector.broadcast %cst_54 : f32 to vector<1x128xf32>
    %103 = arith.addf %101, %102 : vector<1x128xf32>
    %104 = math.rsqrt %103 : vector<1x128xf32>
    %c0_55 = arith.constant 0 : index
    %c0_56 = arith.constant 0 : index
    %105 = vector.load %arg30[%c0_55, %c0_56] : memref<512x128xf32, #tpu.memory_space<vmem>>, vector<256x128xf32>
    tpu.vector_store %arg30[%c0_55, %c0_56], %88 {strides = array<i32>} : memref<512x128xf32, #tpu.memory_space<vmem>>, vector<256x128xf32>,
    %c0_57 = arith.constant 0 : index
    %c0_58 = arith.constant 0 : index
    %106 = tpu.strided_load %arg30[%c0_57, %c0_58] {strides = array<i32: 2, 1>} : memref<512x128xf32, #tpu.memory_space<vmem>>, vector<128x128xf32>
    %c1_59 = arith.constant 1 : index
    %c0_60 = arith.constant 0 : index
    %107 = tpu.strided_load %arg30[%c1_59, %c0_60] {strides = array<i32: 2, 1>} : memref<512x128xf32, #tpu.memory_space<vmem>>, vector<128x128xf32>
    %108 = arith.maximumf %106, %107 : vector<128x128xf32>
    %109 = vector.broadcast %95 : vector<1x128xf32> to vector<128x128xf32>
    %110 = arith.subf %108, %109 : vector<128x128xf32>
    %111 = vector.broadcast %104 : vector<1x128xf32> to vector<128x128xf32>
    %112 = arith.mulf %110, %111 : vector<128x128xf32>
    %cst_61 = arith.constant 0.000000e+00 : f32
    %113 = vector.broadcast %cst_61 : f32 to vector<128x128xf32>
    %114 = arith.maximumf %112, %113 : vector<128x128xf32>
    %cst_62 = arith.constant 0.000000e+00 : f32
    %115 = vector.broadcast %cst_62 : f32 to vector<8x128xf32>
    %c0_63 = arith.constant 0 : index
    %c0_64 = arith.constant 0 : index
    %116 = vector.load %arg32[%c0_63, %c0_64] : memref<144x128xf32, #tpu.memory_space<vmem>>, vector<8x128xf32>
    tpu.vector_store %arg32[%c0_63, %c0_64], %115 {strides = array<i32>} : memref<144x128xf32, #tpu.memory_space<vmem>>, vector<8x128xf32>,
    %c8_65 = arith.constant 8 : index
    %c0_66 = arith.constant 0 : index
    %117 = vector.load %arg32[%c8_65, %c0_66] : memref<144x128xf32, #tpu.memory_space<vmem>>, vector<128x128xf32>
    tpu.vector_store %arg32[%c8_65, %c0_66], %114 {strides = array<i32>} : memref<144x128xf32, #tpu.memory_space<vmem>>, vector<128x128xf32>,
    %c136 = arith.constant 136 : index
    %c0_67 = arith.constant 0 : index
    %118 = vector.load %arg32[%c136, %c0_67] : memref<144x128xf32, #tpu.memory_space<vmem>>, vector<8x128xf32>
    tpu.vector_store %arg32[%c136, %c0_67], %115 {strides = array<i32>} : memref<144x128xf32, #tpu.memory_space<vmem>>, vector<8x128xf32>,
    %c7_68 = arith.constant 7 : index
    %c0_69 = arith.constant 0 : index
    %119 = vector.load %arg32[%c7_68, %c0_69] : memref<144x128xf32, #tpu.memory_space<vmem>>, vector<128x128xf32>
    %c8_70 = arith.constant 8 : index
    %c0_71 = arith.constant 0 : index
    %120 = vector.load %arg32[%c8_70, %c0_71] : memref<144x128xf32, #tpu.memory_space<vmem>>, vector<128x128xf32>
    %c9_72 = arith.constant 9 : index
    %c0_73 = arith.constant 0 : index
    %121 = vector.load %arg32[%c9_72, %c0_73] : memref<144x128xf32, #tpu.memory_space<vmem>>, vector<128x128xf32>
    %122 = tpu.iota {dimensions = array<i32: 0>} : vector<128x1xi32>
    %c63_i32 = arith.constant 63 : i32
    %123 = vector.broadcast %c63_i32 : i32 to vector<128x1xi32>
    %124 = arith.andi %122, %123 : vector<128x1xi32>
    %c0_i32_74 = arith.constant 0 : i32
    %125 = vector.broadcast %c0_i32_74 : i32 to vector<128x1xi32>
    %126 = arith.cmpi ne, %124, %125 : vector<128x1xi32>
    %cst_75 = arith.constant 1.000000e+00 : f32
    %cst_76 = arith.constant 0.000000e+00 : f32
    %127 = vector.broadcast %cst_75 : f32 to vector<128x1xf32>
    %128 = vector.broadcast %cst_76 : f32 to vector<128x1xf32>
    %129 = arith.select %126, %127, %128 : vector<128x1xi1>, vector<128x1xf32>
    %130 = vector.broadcast %129 : vector<128x1xf32> to vector<128x128xf32>
    %131 = arith.mulf %119, %130 : vector<128x128xf32>
    %c63_i32_77 = arith.constant 63 : i32
    %132 = vector.broadcast %c63_i32_77 : i32 to vector<128x1xi32>
    %133 = arith.cmpi ne, %124, %132 : vector<128x1xi32>
    %cst_78 = arith.constant 1.000000e+00 : f32
    %cst_79 = arith.constant 0.000000e+00 : f32
    %134 = vector.broadcast %cst_78 : f32 to vector<128x1xf32>
    %135 = vector.broadcast %cst_79 : f32 to vector<128x1xf32>
    %136 = arith.select %133, %134, %135 : vector<128x1xi1>, vector<128x1xf32>
    %137 = vector.broadcast %136 : vector<128x1xf32> to vector<128x128xf32>
    %138 = arith.mulf %121, %137 : vector<128x128xf32>
    %c64_i32_80 = arith.constant 64 : i32
    %139 = tpu.dynamic_rotate %120 by %c64_i32_80 dim 1 : vector<128x128xf32>, i32 -> vector<128x128xf32>
    %140 = vector.shape_cast %2 : vector<1x128xi1> to vector<1x128xi1>
    %141 = vector.broadcast %140 : vector<1x128xi1> to vector<128x128xi1>
    %142 = arith.select %141, %131, %139 : vector<128x128xi1>, vector<128x128xf32>
    %143 = tpu.concatenate %142, %138 in 1 : vector<128x128xf32>, vector<128x128xf32> -> vector<128x256xf32>
    %144 = arith.truncf %143 : vector<128x256xf32> to vector<128x256xbf16>
    %c0_81 = arith.constant 0 : index
    %c0_82 = arith.constant 0 : index
    %145 = vector.load %arg9[%c0_81, %c0_82] : memref<256x128xbf16, #tpu.memory_space<vmem>>, vector<256x128xbf16>
    %cst_83 = arith.constant dense<0.000000e+00> : vector<128x128xf32>
    %146 = tpu.matmul %144, %145, %cst_83 {dimension_numbers = #tpu.dot_dimension_numbers<[1], [0], [0], [1], [0, 0, 1, 1], [], []>} : vector<128x256xbf16>, vector<256x128xbf16>, vector<128x128xf32> -> vector<128x128xf32>
    %c0_84 = arith.constant 0 : index
    %c0_85 = arith.constant 0 : index
    %147 = vector.load %arg11[%c0_84, %c0_85] : memref<1x128xf32, #tpu.memory_space<vmem>>, vector<1x128xf32>
    %148 = vector.broadcast %147 : vector<1x128xf32> to vector<128x128xf32>
    %149 = arith.addf %146, %148 : vector<128x128xf32>
    %150 = arith.mulf %143, %143 : vector<128x256xf32>
    %151 = arith.truncf %150 : vector<128x256xf32> to vector<128x256xbf16>
    %c0_86 = arith.constant 0 : index
    %c0_87 = arith.constant 0 : index
    %152 = vector.load %arg10[%c0_86, %c0_87] : memref<256x128xbf16, #tpu.memory_space<vmem>>, vector<256x128xbf16>
    %cst_88 = arith.constant dense<0.000000e+00> : vector<128x128xf32>
    %153 = tpu.matmul %151, %152, %cst_88 {dimension_numbers = #tpu.dot_dimension_numbers<[1], [0], [0], [1], [0, 0, 1, 1], [], []>} : vector<128x256xbf16>, vector<256x128xbf16>, vector<128x128xf32> -> vector<128x128xf32>
    %c0_89 = arith.constant 0 : index
    %c0_90 = arith.constant 0 : index
    %154 = vector.load %arg12[%c0_89, %c0_90] : memref<1x128xf32, #tpu.memory_space<vmem>>, vector<1x128xf32>
    %155 = vector.broadcast %154 : vector<1x128xf32> to vector<128x128xf32>
    %156 = arith.addf %153, %155 : vector<128x128xf32>
    %c64_i32_91 = arith.constant 64 : i32
    %157 = tpu.dynamic_rotate %149 by %c64_i32_91 dim 1 : vector<128x128xf32>, i32 -> vector<128x128xf32>
    %158 = arith.mulf %149, %157 : vector<128x128xf32>
    %159 = arith.addf %158, %156 : vector<128x128xf32>
    %cst_92 = arith.constant dense<0.000000e+00> : vector<128xf32>
    %160 = vector.multi_reduction <add>, %159, %cst_92 [0] : vector<128x128xf32> to vector<128xf32>
    %161 = vector.shape_cast %160 : vector<128xf32> to vector<1x128xf32>
    %162 = arith.mulf %159, %159 : vector<128x128xf32>
    %cst_93 = arith.constant dense<0.000000e+00> : vector<128xf32>
    %163 = vector.multi_reduction <add>, %162, %cst_93 [0] : vector<128x128xf32> to vector<128xf32>
    %164 = vector.shape_cast %163 : vector<128xf32> to vector<1x128xf32>
    %cst_94 = arith.constant 1.280000e+02 : f32
    %165 = vector.broadcast %cst_94 : f32 to vector<1x128xf32>
    %166 = arith.divf %161, %165 : vector<1x128xf32>
    %cst_95 = arith.constant 1.280000e+02 : f32
    %167 = vector.broadcast %cst_95 : f32 to vector<1x128xf32>
    %168 = arith.divf %164, %167 : vector<1x128xf32>
    %169 = arith.mulf %166, %166 : vector<1x128xf32>
    %170 = arith.subf %168, %169 : vector<1x128xf32>
    %cst_96 = arith.constant 0.000000e+00 : f32
    %171 = vector.broadcast %cst_96 : f32 to vector<1x128xf32>
    %172 = arith.maximumf %170, %171 : vector<1x128xf32>
    %cst_97 = arith.constant 9.99999974E-6 : f32
    %173 = vector.broadcast %cst_97 : f32 to vector<1x128xf32>
    %174 = arith.addf %172, %173 : vector<1x128xf32>
    %175 = math.rsqrt %174 : vector<1x128xf32>
    %c0_98 = arith.constant 0 : index
    %c0_99 = arith.constant 0 : index
    %176 = vector.load %arg30[%c0_98, %c0_99] : memref<512x128xf32, #tpu.memory_space<vmem>>, vector<128x128xf32>
    tpu.vector_store %arg30[%c0_98, %c0_99], %159 {strides = array<i32>} : memref<512x128xf32, #tpu.memory_space<vmem>>, vector<128x128xf32>,
    %c0_100 = arith.constant 0 : index
    %c0_101 = arith.constant 0 : index
    %177 = tpu.strided_load %arg30[%c0_100, %c0_101] {strides = array<i32: 2, 1>} : memref<512x128xf32, #tpu.memory_space<vmem>>, vector<64x128xf32>
    %c1_102 = arith.constant 1 : index
    %c0_103 = arith.constant 0 : index
    %178 = tpu.strided_load %arg30[%c1_102, %c0_103] {strides = array<i32: 2, 1>} : memref<512x128xf32, #tpu.memory_space<vmem>>, vector<64x128xf32>
    %179 = arith.maximumf %177, %178 : vector<64x128xf32>
    %180 = vector.broadcast %166 : vector<1x128xf32> to vector<64x128xf32>
    %181 = arith.subf %179, %180 : vector<64x128xf32>
    %182 = vector.broadcast %175 : vector<1x128xf32> to vector<64x128xf32>
    %183 = arith.mulf %181, %182 : vector<64x128xf32>
    %cst_104 = arith.constant 0.000000e+00 : f32
    %184 = vector.broadcast %cst_104 : f32 to vector<64x128xf32>
    %185 = arith.maximumf %183, %184 : vector<64x128xf32>
    %cst_105 = arith.constant 0.000000e+00 : f32
    %186 = vector.broadcast %cst_105 : f32 to vector<8x128xf32>
    %c0_106 = arith.constant 0 : index
    %c0_107 = arith.constant 0 : index
    %187 = vector.load %arg33[%c0_106, %c0_107] : memref<80x128xf32, #tpu.memory_space<vmem>>, vector<8x128xf32>
    tpu.vector_store %arg33[%c0_106, %c0_107], %186 {strides = array<i32>} : memref<80x128xf32, #tpu.memory_space<vmem>>, vector<8x128xf32>,
    %c8_108 = arith.constant 8 : index
    %c0_109 = arith.constant 0 : index
    %188 = vector.load %arg33[%c8_108, %c0_109] : memref<80x128xf32, #tpu.memory_space<vmem>>, vector<64x128xf32>
    tpu.vector_store %arg33[%c8_108, %c0_109], %185 {strides = array<i32>} : memref<80x128xf32, #tpu.memory_space<vmem>>, vector<64x128xf32>,
    %c72 = arith.constant 72 : index
    %c0_110 = arith.constant 0 : index
    %189 = vector.load %arg33[%c72, %c0_110] : memref<80x128xf32, #tpu.memory_space<vmem>>, vector<8x128xf32>
    tpu.vector_store %arg33[%c72, %c0_110], %186 {strides = array<i32>} : memref<80x128xf32, #tpu.memory_space<vmem>>, vector<8x128xf32>,
    %c7_111 = arith.constant 7 : index
    %c0_112 = arith.constant 0 : index
    %190 = vector.load %arg33[%c7_111, %c0_112] : memref<80x128xf32, #tpu.memory_space<vmem>>, vector<64x128xf32>
    %c8_113 = arith.constant 8 : index
    %c0_114 = arith.constant 0 : index
    %191 = vector.load %arg33[%c8_113, %c0_114] : memref<80x128xf32, #tpu.memory_space<vmem>>, vector<64x128xf32>
    %c9_115 = arith.constant 9 : index
    %c0_116 = arith.constant 0 : index
    %192 = vector.load %arg33[%c9_115, %c0_116] : memref<80x128xf32, #tpu.memory_space<vmem>>, vector<64x128xf32>
    %193 = tpu.iota {dimensions = array<i32: 0>} : vector<64x1xi32>
    %c31_i32 = arith.constant 31 : i32
    %194 = vector.broadcast %c31_i32 : i32 to vector<64x1xi32>
    %195 = arith.andi %193, %194 : vector<64x1xi32>
    %c0_i32_117 = arith.constant 0 : i32
    %196 = vector.broadcast %c0_i32_117 : i32 to vector<64x1xi32>
    %197 = arith.cmpi ne, %195, %196 : vector<64x1xi32>
    %cst_118 = arith.constant 1.000000e+00 : f32
    %cst_119 = arith.constant 0.000000e+00 : f32
    %198 = vector.broadcast %cst_118 : f32 to vector<64x1xf32>
    %199 = vector.broadcast %cst_119 : f32 to vector<64x1xf32>
    %200 = arith.select %197, %198, %199 : vector<64x1xi1>, vector<64x1xf32>
    %201 = vector.broadcast %200 : vector<64x1xf32> to vector<64x128xf32>
    %202 = arith.mulf %190, %201 : vector<64x128xf32>
    %c31_i32_120 = arith.constant 31 : i32
    %203 = vector.broadcast %c31_i32_120 : i32 to vector<64x1xi32>
    %204 = arith.cmpi ne, %195, %203 : vector<64x1xi32>
    %cst_121 = arith.constant 1.000000e+00 : f32
    %cst_122 = arith.constant 0.000000e+00 : f32
    %205 = vector.broadcast %cst_121 : f32 to vector<64x1xf32>
    %206 = vector.broadcast %cst_122 : f32 to vector<64x1xf32>
    %207 = arith.select %204, %205, %206 : vector<64x1xi1>, vector<64x1xf32>
    %208 = vector.broadcast %207 : vector<64x1xf32> to vector<64x128xf32>
    %209 = arith.mulf %192, %208 : vector<64x128xf32>
    %c64_i32_123 = arith.constant 64 : i32
    %210 = tpu.dynamic_rotate %191 by %c64_i32_123 dim 1 : vector<64x128xf32>, i32 -> vector<64x128xf32>
    %211 = vector.shape_cast %2 : vector<1x128xi1> to vector<1x128xi1>
    %212 = vector.broadcast %211 : vector<1x128xi1> to vector<64x128xi1>
    %213 = arith.select %212, %202, %210 : vector<64x128xi1>, vector<64x128xf32>
    %214 = tpu.concatenate %213, %209 in 1 : vector<64x128xf32>, vector<64x128xf32> -> vector<64x256xf32>
    %215 = arith.truncf %214 : vector<64x256xf32> to vector<64x256xbf16>
    %c0_124 = arith.constant 0 : index
    %c0_125 = arith.constant 0 : index
    %216 = vector.load %arg13[%c0_124, %c0_125] : memref<256x128xbf16, #tpu.memory_space<vmem>>, vector<256x128xbf16>
    %cst_126 = arith.constant dense<0.000000e+00> : vector<64x128xf32>
    %217 = tpu.matmul %215, %216, %cst_126 {dimension_numbers = #tpu.dot_dimension_numbers<[1], [0], [0], [1], [0, 0, 1, 1], [], []>} : vector<64x256xbf16>, vector<256x128xbf16>, vector<64x128xf32> -> vector<64x128xf32>
    %c0_127 = arith.constant 0 : index
    %c0_128 = arith.constant 0 : index
    %218 = vector.load %arg15[%c0_127, %c0_128] : memref<1x128xf32, #tpu.memory_space<vmem>>, vector<1x128xf32>
    %219 = vector.broadcast %218 : vector<1x128xf32> to vector<64x128xf32>
    %220 = arith.addf %217, %219 : vector<64x128xf32>
    %221 = arith.mulf %214, %214 : vector<64x256xf32>
    %222 = arith.truncf %221 : vector<64x256xf32> to vector<64x256xbf16>
    %c0_129 = arith.constant 0 : index
    %c0_130 = arith.constant 0 : index
    %223 = vector.load %arg14[%c0_129, %c0_130] : memref<256x128xbf16, #tpu.memory_space<vmem>>, vector<256x128xbf16>
    %cst_131 = arith.constant dense<0.000000e+00> : vector<64x128xf32>
    %224 = tpu.matmul %222, %223, %cst_131 {dimension_numbers = #tpu.dot_dimension_numbers<[1], [0], [0], [1], [0, 0, 1, 1], [], []>} : vector<64x256xbf16>, vector<256x128xbf16>, vector<64x128xf32> -> vector<64x128xf32>
    %c0_132 = arith.constant 0 : index
    %c0_133 = arith.constant 0 : index
    %225 = vector.load %arg16[%c0_132, %c0_133] : memref<1x128xf32, #tpu.memory_space<vmem>>, vector<1x128xf32>
    %226 = vector.broadcast %225 : vector<1x128xf32> to vector<64x128xf32>
    %227 = arith.addf %224, %226 : vector<64x128xf32>
    %c64_i32_134 = arith.constant 64 : i32
    %228 = tpu.dynamic_rotate %220 by %c64_i32_134 dim 1 : vector<64x128xf32>, i32 -> vector<64x128xf32>
    %229 = arith.mulf %220, %228 : vector<64x128xf32>
    %230 = arith.addf %229, %227 : vector<64x128xf32>
    %cst_135 = arith.constant dense<0.000000e+00> : vector<128xf32>
    %231 = vector.multi_reduction <add>, %230, %cst_135 [0] : vector<64x128xf32> to vector<128xf32>
    %232 = vector.shape_cast %231 : vector<128xf32> to vector<1x128xf32>
    %233 = arith.mulf %230, %230 : vector<64x128xf32>
    %cst_136 = arith.constant dense<0.000000e+00> : vector<128xf32>
    %234 = vector.multi_reduction <add>, %233, %cst_136 [0] : vector<64x128xf32> to vector<128xf32>
    %235 = vector.shape_cast %234 : vector<128xf32> to vector<1x128xf32>
    %cst_137 = arith.constant 6.400000e+01 : f32
    %236 = vector.broadcast %cst_137 : f32 to vector<1x128xf32>
    %237 = arith.divf %232, %236 : vector<1x128xf32>
    %cst_138 = arith.constant 6.400000e+01 : f32
    %238 = vector.broadcast %cst_138 : f32 to vector<1x128xf32>
    %239 = arith.divf %235, %238 : vector<1x128xf32>
    %240 = arith.mulf %237, %237 : vector<1x128xf32>
    %241 = arith.subf %239, %240 : vector<1x128xf32>
    %cst_139 = arith.constant 0.000000e+00 : f32
    %242 = vector.broadcast %cst_139 : f32 to vector<1x128xf32>
    %243 = arith.maximumf %241, %242 : vector<1x128xf32>
    %cst_140 = arith.constant 9.99999974E-6 : f32
    %244 = vector.broadcast %cst_140 : f32 to vector<1x128xf32>
    %245 = arith.addf %243, %244 : vector<1x128xf32>
    %246 = math.rsqrt %245 : vector<1x128xf32>
    %c0_141 = arith.constant 0 : index
    %c0_142 = arith.constant 0 : index
    %247 = vector.load %arg30[%c0_141, %c0_142] : memref<512x128xf32, #tpu.memory_space<vmem>>, vector<64x128xf32>
    tpu.vector_store %arg30[%c0_141, %c0_142], %230 {strides = array<i32>} : memref<512x128xf32, #tpu.memory_space<vmem>>, vector<64x128xf32>,
    %c0_143 = arith.constant 0 : index
    %c0_144 = arith.constant 0 : index
    %248 = tpu.strided_load %arg30[%c0_143, %c0_144] {strides = array<i32: 2, 1>} : memref<512x128xf32, #tpu.memory_space<vmem>>, vector<32x128xf32>
    %c1_145 = arith.constant 1 : index
    %c0_146 = arith.constant 0 : index
    %249 = tpu.strided_load %arg30[%c1_145, %c0_146] {strides = array<i32: 2, 1>} : memref<512x128xf32, #tpu.memory_space<vmem>>, vector<32x128xf32>
    %250 = arith.maximumf %248, %249 : vector<32x128xf32>
    %251 = vector.broadcast %237 : vector<1x128xf32> to vector<32x128xf32>
    %252 = arith.subf %250, %251 : vector<32x128xf32>
    %253 = vector.broadcast %246 : vector<1x128xf32> to vector<32x128xf32>
    %254 = arith.mulf %252, %253 : vector<32x128xf32>
    %cst_147 = arith.constant 0.000000e+00 : f32
    %255 = vector.broadcast %cst_147 : f32 to vector<32x128xf32>
    %256 = arith.maximumf %254, %255 : vector<32x128xf32>
    %cst_148 = arith.constant 0.000000e+00 : f32
    %257 = vector.broadcast %cst_148 : f32 to vector<8x128xf32>
    %c0_149 = arith.constant 0 : index
    %c0_150 = arith.constant 0 : index
    %258 = vector.load %arg34[%c0_149, %c0_150] : memref<48x128xf32, #tpu.memory_space<vmem>>, vector<8x128xf32>
    tpu.vector_store %arg34[%c0_149, %c0_150], %257 {strides = array<i32>} : memref<48x128xf32, #tpu.memory_space<vmem>>, vector<8x128xf32>,
    %c8_151 = arith.constant 8 : index
    %c0_152 = arith.constant 0 : index
    %259 = vector.load %arg34[%c8_151, %c0_152] : memref<48x128xf32, #tpu.memory_space<vmem>>, vector<32x128xf32>
    tpu.vector_store %arg34[%c8_151, %c0_152], %256 {strides = array<i32>} : memref<48x128xf32, #tpu.memory_space<vmem>>, vector<32x128xf32>,
    %c40 = arith.constant 40 : index
    %c0_153 = arith.constant 0 : index
    %260 = vector.load %arg34[%c40, %c0_153] : memref<48x128xf32, #tpu.memory_space<vmem>>, vector<8x128xf32>
    tpu.vector_store %arg34[%c40, %c0_153], %257 {strides = array<i32>} : memref<48x128xf32, #tpu.memory_space<vmem>>, vector<8x128xf32>,
    %c7_154 = arith.constant 7 : index
    %c0_155 = arith.constant 0 : index
    %261 = vector.load %arg34[%c7_154, %c0_155] : memref<48x128xf32, #tpu.memory_space<vmem>>, vector<32x128xf32>
    %c8_156 = arith.constant 8 : index
    %c0_157 = arith.constant 0 : index
    %262 = vector.load %arg34[%c8_156, %c0_157] : memref<48x128xf32, #tpu.memory_space<vmem>>, vector<32x128xf32>
    %c9_158 = arith.constant 9 : index
    %c0_159 = arith.constant 0 : index
    %263 = vector.load %arg34[%c9_158, %c0_159] : memref<48x128xf32, #tpu.memory_space<vmem>>, vector<32x128xf32>
    %264 = tpu.iota {dimensions = array<i32: 0>} : vector<32x1xi32>
    %c15_i32 = arith.constant 15 : i32
    %265 = vector.broadcast %c15_i32 : i32 to vector<32x1xi32>
    %266 = arith.andi %264, %265 : vector<32x1xi32>
    %c0_i32_160 = arith.constant 0 : i32
    %267 = vector.broadcast %c0_i32_160 : i32 to vector<32x1xi32>
    %268 = arith.cmpi ne, %266, %267 : vector<32x1xi32>
    %cst_161 = arith.constant 1.000000e+00 : f32
    %cst_162 = arith.constant 0.000000e+00 : f32
    %269 = vector.broadcast %cst_161 : f32 to vector<32x1xf32>
    %270 = vector.broadcast %cst_162 : f32 to vector<32x1xf32>
    %271 = arith.select %268, %269, %270 : vector<32x1xi1>, vector<32x1xf32>
    %272 = vector.broadcast %271 : vector<32x1xf32> to vector<32x128xf32>
    %273 = arith.mulf %261, %272 : vector<32x128xf32>
    %c15_i32_163 = arith.constant 15 : i32
    %274 = vector.broadcast %c15_i32_163 : i32 to vector<32x1xi32>
    %275 = arith.cmpi ne, %266, %274 : vector<32x1xi32>
    %cst_164 = arith.constant 1.000000e+00 : f32
    %cst_165 = arith.constant 0.000000e+00 : f32
    %276 = vector.broadcast %cst_164 : f32 to vector<32x1xf32>
    %277 = vector.broadcast %cst_165 : f32 to vector<32x1xf32>
    %278 = arith.select %275, %276, %277 : vector<32x1xi1>, vector<32x1xf32>
    %279 = vector.broadcast %278 : vector<32x1xf32> to vector<32x128xf32>
    %280 = arith.mulf %263, %279 : vector<32x128xf32>
    %c64_i32_166 = arith.constant 64 : i32
    %281 = tpu.dynamic_rotate %262 by %c64_i32_166 dim 1 : vector<32x128xf32>, i32 -> vector<32x128xf32>
    %282 = vector.shape_cast %2 : vector<1x128xi1> to vector<1x128xi1>
    %283 = vector.broadcast %282 : vector<1x128xi1> to vector<32x128xi1>
    %284 = arith.select %283, %273, %281 : vector<32x128xi1>, vector<32x128xf32>
    %285 = tpu.concatenate %284, %280 in 1 : vector<32x128xf32>, vector<32x128xf32> -> vector<32x256xf32>
    %286 = arith.truncf %285 : vector<32x256xf32> to vector<32x256xbf16>
    %c0_167 = arith.constant 0 : index
    %c0_168 = arith.constant 0 : index
    %287 = vector.load %arg17[%c0_167, %c0_168] : memref<256x128xbf16, #tpu.memory_space<vmem>>, vector<256x128xbf16>
    %cst_169 = arith.constant dense<0.000000e+00> : vector<32x128xf32>
    %288 = tpu.matmul %286, %287, %cst_169 {dimension_numbers = #tpu.dot_dimension_numbers<[1], [0], [0], [1], [0, 0, 1, 1], [], []>} : vector<32x256xbf16>, vector<256x128xbf16>, vector<32x128xf32> -> vector<32x128xf32>
    %c0_170 = arith.constant 0 : index
    %c0_171 = arith.constant 0 : index
    %289 = vector.load %arg19[%c0_170, %c0_171] : memref<1x128xf32, #tpu.memory_space<vmem>>, vector<1x128xf32>
    %290 = vector.broadcast %289 : vector<1x128xf32> to vector<32x128xf32>
    %291 = arith.addf %288, %290 : vector<32x128xf32>
    %292 = arith.mulf %285, %285 : vector<32x256xf32>
    %293 = arith.truncf %292 : vector<32x256xf32> to vector<32x256xbf16>
    %c0_172 = arith.constant 0 : index
    %c0_173 = arith.constant 0 : index
    %294 = vector.load %arg18[%c0_172, %c0_173] : memref<256x128xbf16, #tpu.memory_space<vmem>>, vector<256x128xbf16>
    %cst_174 = arith.constant dense<0.000000e+00> : vector<32x128xf32>
    %295 = tpu.matmul %293, %294, %cst_174 {dimension_numbers = #tpu.dot_dimension_numbers<[1], [0], [0], [1], [0, 0, 1, 1], [], []>} : vector<32x256xbf16>, vector<256x128xbf16>, vector<32x128xf32> -> vector<32x128xf32>
    %c0_175 = arith.constant 0 : index
    %c0_176 = arith.constant 0 : index
    %296 = vector.load %arg20[%c0_175, %c0_176] : memref<1x128xf32, #tpu.memory_space<vmem>>, vector<1x128xf32>
    %297 = vector.broadcast %296 : vector<1x128xf32> to vector<32x128xf32>
    %298 = arith.addf %295, %297 : vector<32x128xf32>
    %c64_i32_177 = arith.constant 64 : i32
    %299 = tpu.dynamic_rotate %291 by %c64_i32_177 dim 1 : vector<32x128xf32>, i32 -> vector<32x128xf32>
    %300 = arith.mulf %291, %299 : vector<32x128xf32>
    %301 = arith.addf %300, %298 : vector<32x128xf32>
    %cst_178 = arith.constant dense<0.000000e+00> : vector<128xf32>
    %302 = vector.multi_reduction <add>, %301, %cst_178 [0] : vector<32x128xf32> to vector<128xf32>
    %303 = vector.shape_cast %302 : vector<128xf32> to vector<1x128xf32>
    %304 = arith.mulf %301, %301 : vector<32x128xf32>
    %cst_179 = arith.constant dense<0.000000e+00> : vector<128xf32>
    %305 = vector.multi_reduction <add>, %304, %cst_179 [0] : vector<32x128xf32> to vector<128xf32>
    %306 = vector.shape_cast %305 : vector<128xf32> to vector<1x128xf32>
    %cst_180 = arith.constant 3.200000e+01 : f32
    %307 = vector.broadcast %cst_180 : f32 to vector<1x128xf32>
    %308 = arith.divf %303, %307 : vector<1x128xf32>
    %cst_181 = arith.constant 3.200000e+01 : f32
    %309 = vector.broadcast %cst_181 : f32 to vector<1x128xf32>
    %310 = arith.divf %306, %309 : vector<1x128xf32>
    %311 = arith.mulf %308, %308 : vector<1x128xf32>
    %312 = arith.subf %310, %311 : vector<1x128xf32>
    %cst_182 = arith.constant 0.000000e+00 : f32
    %313 = vector.broadcast %cst_182 : f32 to vector<1x128xf32>
    %314 = arith.maximumf %312, %313 : vector<1x128xf32>
    %cst_183 = arith.constant 9.99999974E-6 : f32
    %315 = vector.broadcast %cst_183 : f32 to vector<1x128xf32>
    %316 = arith.addf %314, %315 : vector<1x128xf32>
    %317 = math.rsqrt %316 : vector<1x128xf32>
    %c0_184 = arith.constant 0 : index
    %c0_185 = arith.constant 0 : index
    %318 = vector.load %arg30[%c0_184, %c0_185] : memref<512x128xf32, #tpu.memory_space<vmem>>, vector<32x128xf32>
    tpu.vector_store %arg30[%c0_184, %c0_185], %301 {strides = array<i32>} : memref<512x128xf32, #tpu.memory_space<vmem>>, vector<32x128xf32>,
    %c0_186 = arith.constant 0 : index
    %c0_187 = arith.constant 0 : index
    %319 = tpu.strided_load %arg30[%c0_186, %c0_187] {strides = array<i32: 2, 1>} : memref<512x128xf32, #tpu.memory_space<vmem>>, vector<16x128xf32>
    %c1_188 = arith.constant 1 : index
    %c0_189 = arith.constant 0 : index
    %320 = tpu.strided_load %arg30[%c1_188, %c0_189] {strides = array<i32: 2, 1>} : memref<512x128xf32, #tpu.memory_space<vmem>>, vector<16x128xf32>
    %321 = arith.maximumf %319, %320 : vector<16x128xf32>
    %322 = vector.broadcast %308 : vector<1x128xf32> to vector<16x128xf32>
    %323 = arith.subf %321, %322 : vector<16x128xf32>
    %324 = vector.broadcast %317 : vector<1x128xf32> to vector<16x128xf32>
    %325 = arith.mulf %323, %324 : vector<16x128xf32>
    %cst_190 = arith.constant 0.000000e+00 : f32
    %326 = vector.broadcast %cst_190 : f32 to vector<16x128xf32>
    %327 = arith.maximumf %325, %326 : vector<16x128xf32>
    %cst_191 = arith.constant 0.000000e+00 : f32
    %328 = vector.broadcast %cst_191 : f32 to vector<8x128xf32>
    %c0_192 = arith.constant 0 : index
    %c0_193 = arith.constant 0 : index
    %329 = vector.load %arg35[%c0_192, %c0_193] : memref<32x128xf32, #tpu.memory_space<vmem>>, vector<8x128xf32>
    tpu.vector_store %arg35[%c0_192, %c0_193], %328 {strides = array<i32>} : memref<32x128xf32, #tpu.memory_space<vmem>>, vector<8x128xf32>,
    %c8_194 = arith.constant 8 : index
    %c0_195 = arith.constant 0 : index
    %330 = vector.load %arg35[%c8_194, %c0_195] : memref<32x128xf32, #tpu.memory_space<vmem>>, vector<16x128xf32>
    tpu.vector_store %arg35[%c8_194, %c0_195], %327 {strides = array<i32>} : memref<32x128xf32, #tpu.memory_space<vmem>>, vector<16x128xf32>,
    %c24 = arith.constant 24 : index
    %c0_196 = arith.constant 0 : index
    %331 = vector.load %arg35[%c24, %c0_196] : memref<32x128xf32, #tpu.memory_space<vmem>>, vector<8x128xf32>
    tpu.vector_store %arg35[%c24, %c0_196], %328 {strides = array<i32>} : memref<32x128xf32, #tpu.memory_space<vmem>>, vector<8x128xf32>,
    %c8_197 = arith.constant 8 : index
    %c0_198 = arith.constant 0 : index
    %332 = vector.load %arg35[%c8_197, %c0_198] : memref<32x128xf32, #tpu.memory_space<vmem>>, vector<16x128xf32>
    %c9_199 = arith.constant 9 : index
    %c0_200 = arith.constant 0 : index
    %333 = vector.load %arg35[%c9_199, %c0_200] : memref<32x128xf32, #tpu.memory_space<vmem>>, vector<16x128xf32>
    %c10 = arith.constant 10 : index
    %c0_201 = arith.constant 0 : index
    %334 = vector.load %arg35[%c10, %c0_201] : memref<32x128xf32, #tpu.memory_space<vmem>>, vector<16x128xf32>
    %c64_i32_202 = arith.constant 64 : i32
    %335 = tpu.dynamic_rotate %333 by %c64_i32_202 dim 1 : vector<16x128xf32>, i32 -> vector<16x128xf32>
    %336 = vector.shape_cast %2 : vector<1x128xi1> to vector<1x128xi1>
    %337 = vector.broadcast %336 : vector<1x128xi1> to vector<16x128xi1>
    %338 = arith.select %337, %332, %335 : vector<16x128xi1>, vector<16x128xf32>
    %339 = tpu.concatenate %338, %334 in 1 : vector<16x128xf32>, vector<16x128xf32> -> vector<16x256xf32>
    %340 = arith.truncf %339 : vector<16x256xf32> to vector<16x256xbf16>
    %c0_203 = arith.constant 0 : index
    %c0_204 = arith.constant 0 : index
    %341 = vector.load %arg21[%c0_203, %c0_204] : memref<256x128xbf16, #tpu.memory_space<vmem>>, vector<256x128xbf16>
    %cst_205 = arith.constant dense<0.000000e+00> : vector<16x128xf32>
    %342 = tpu.matmul %340, %341, %cst_205 {dimension_numbers = #tpu.dot_dimension_numbers<[1], [0], [0], [1], [0, 0, 1, 1], [], []>} : vector<16x256xbf16>, vector<256x128xbf16>, vector<16x128xf32> -> vector<16x128xf32>
    %c0_206 = arith.constant 0 : index
    %c0_207 = arith.constant 0 : index
    %343 = vector.load %arg23[%c0_206, %c0_207] : memref<1x128xf32, #tpu.memory_space<vmem>>, vector<1x128xf32>
    %344 = vector.broadcast %343 : vector<1x128xf32> to vector<16x128xf32>
    %345 = arith.addf %342, %344 : vector<16x128xf32>
    %346 = arith.mulf %339, %339 : vector<16x256xf32>
    %347 = arith.truncf %346 : vector<16x256xf32> to vector<16x256xbf16>
    %c0_208 = arith.constant 0 : index
    %c0_209 = arith.constant 0 : index
    %348 = vector.load %arg22[%c0_208, %c0_209] : memref<256x128xbf16, #tpu.memory_space<vmem>>, vector<256x128xbf16>
    %cst_210 = arith.constant dense<0.000000e+00> : vector<16x128xf32>
    %349 = tpu.matmul %347, %348, %cst_210 {dimension_numbers = #tpu.dot_dimension_numbers<[1], [0], [0], [1], [0, 0, 1, 1], [], []>} : vector<16x256xbf16>, vector<256x128xbf16>, vector<16x128xf32> -> vector<16x128xf32>
    %c0_211 = arith.constant 0 : index
    %c0_212 = arith.constant 0 : index
    %350 = vector.load %arg24[%c0_211, %c0_212] : memref<1x128xf32, #tpu.memory_space<vmem>>, vector<1x128xf32>
    %351 = vector.broadcast %350 : vector<1x128xf32> to vector<16x128xf32>
    %352 = arith.addf %349, %351 : vector<16x128xf32>
    %c64_i32_213 = arith.constant 64 : i32
    %353 = tpu.dynamic_rotate %345 by %c64_i32_213 dim 1 : vector<16x128xf32>, i32 -> vector<16x128xf32>
    %354 = arith.mulf %345, %353 : vector<16x128xf32>
    %355 = arith.addf %354, %352 : vector<16x128xf32>
    %356 = tpu.iota {dimensions = array<i32: 0>} : vector<16x1xi32>
    %c7_i32 = arith.constant 7 : i32
    %357 = vector.broadcast %c7_i32 : i32 to vector<16x1xi32>
    %358 = arith.andi %356, %357 : vector<16x1xi32>
    %c6_i32 = arith.constant 6 : i32
    %359 = vector.broadcast %c6_i32 : i32 to vector<16x1xi32>
    %360 = arith.cmpi slt, %358, %359 : vector<16x1xi32>
    %cst_214 = arith.constant 1.000000e+00 : f32
    %cst_215 = arith.constant 0.000000e+00 : f32
    %361 = vector.broadcast %cst_214 : f32 to vector<16x1xf32>
    %362 = vector.broadcast %cst_215 : f32 to vector<16x1xf32>
    %363 = arith.select %360, %361, %362 : vector<16x1xi1>, vector<16x1xf32>
    %364 = vector.broadcast %363 : vector<16x1xf32> to vector<16x128xf32>
    %365 = arith.mulf %355, %364 : vector<16x128xf32>
    %cst_216 = arith.constant dense<0.000000e+00> : vector<128xf32>
    %366 = vector.multi_reduction <add>, %365, %cst_216 [0] : vector<16x128xf32> to vector<128xf32>
    %367 = vector.shape_cast %366 : vector<128xf32> to vector<1x128xf32>
    %368 = arith.mulf %365, %355 : vector<16x128xf32>
    %cst_217 = arith.constant dense<0.000000e+00> : vector<128xf32>
    %369 = vector.multi_reduction <add>, %368, %cst_217 [0] : vector<16x128xf32> to vector<128xf32>
    %370 = vector.shape_cast %369 : vector<128xf32> to vector<1x128xf32>
    %cst_218 = arith.constant 1.200000e+01 : f32
    %371 = vector.broadcast %cst_218 : f32 to vector<1x128xf32>
    %372 = arith.divf %367, %371 : vector<1x128xf32>
    %cst_219 = arith.constant 1.200000e+01 : f32
    %373 = vector.broadcast %cst_219 : f32 to vector<1x128xf32>
    %374 = arith.divf %370, %373 : vector<1x128xf32>
    %375 = arith.mulf %372, %372 : vector<1x128xf32>
    %376 = arith.subf %374, %375 : vector<1x128xf32>
    %cst_220 = arith.constant 0.000000e+00 : f32
    %377 = vector.broadcast %cst_220 : f32 to vector<1x128xf32>
    %378 = arith.maximumf %376, %377 : vector<1x128xf32>
    %cst_221 = arith.constant 9.99999974E-6 : f32
    %379 = vector.broadcast %cst_221 : f32 to vector<1x128xf32>
    %380 = arith.addf %378, %379 : vector<1x128xf32>
    %381 = math.rsqrt %380 : vector<1x128xf32>
    %382 = vector.broadcast %372 : vector<1x128xf32> to vector<16x128xf32>
    %383 = arith.subf %355, %382 : vector<16x128xf32>
    %384 = vector.broadcast %381 : vector<1x128xf32> to vector<16x128xf32>
    %385 = arith.mulf %383, %384 : vector<16x128xf32>
    %cst_222 = arith.constant 0.000000e+00 : f32
    %386 = vector.broadcast %cst_222 : f32 to vector<16x128xf32>
    %387 = arith.maximumf %385, %386 : vector<16x128xf32>
    %c0_223 = arith.constant 0 : index
    %c0_224 = arith.constant 0 : index
    %388 = vector.load %arg36[%c0_223, %c0_224] : memref<16x128xf32, #tpu.memory_space<vmem>>, vector<16x128xf32>
    tpu.vector_store %arg36[%c0_223, %c0_224], %387 {strides = array<i32>} : memref<16x128xf32, #tpu.memory_space<vmem>>, vector<16x128xf32>,
    %c0_225 = arith.constant 0 : index
    %c0_226 = arith.constant 0 : index
    %389 = tpu.strided_load %arg36[%c0_225, %c0_226] {strides = array<i32: 8, 1>} : memref<16x128xf32, #tpu.memory_space<vmem>>, vector<2x128xf32>
    %c1_227 = arith.constant 1 : index
    %c0_228 = arith.constant 0 : index
    %390 = tpu.strided_load %arg36[%c1_227, %c0_228] {strides = array<i32: 8, 1>} : memref<16x128xf32, #tpu.memory_space<vmem>>, vector<2x128xf32>
    %391 = arith.maximumf %389, %390 : vector<2x128xf32>
    %c2 = arith.constant 2 : index
    %c0_229 = arith.constant 0 : index
    %392 = tpu.strided_load %arg36[%c2, %c0_229] {strides = array<i32: 8, 1>} : memref<16x128xf32, #tpu.memory_space<vmem>>, vector<2x128xf32>
    %c3 = arith.constant 3 : index
    %c0_230 = arith.constant 0 : index
    %393 = tpu.strided_load %arg36[%c3, %c0_230] {strides = array<i32: 8, 1>} : memref<16x128xf32, #tpu.memory_space<vmem>>, vector<2x128xf32>
    %394 = arith.maximumf %392, %393 : vector<2x128xf32>
    %c4 = arith.constant 4 : index
    %c0_231 = arith.constant 0 : index
    %395 = tpu.strided_load %arg36[%c4, %c0_231] {strides = array<i32: 8, 1>} : memref<16x128xf32, #tpu.memory_space<vmem>>, vector<2x128xf32>
    %c5 = arith.constant 5 : index
    %c0_232 = arith.constant 0 : index
    %396 = tpu.strided_load %arg36[%c5, %c0_232] {strides = array<i32: 8, 1>} : memref<16x128xf32, #tpu.memory_space<vmem>>, vector<2x128xf32>
    %397 = arith.maximumf %395, %396 : vector<2x128xf32>
    %c64_i32_233 = arith.constant 64 : i32
    %398 = tpu.dynamic_rotate %394 by %c64_i32_233 dim 1 : vector<2x128xf32>, i32 -> vector<2x128xf32>
    %399 = vector.shape_cast %2 : vector<1x128xi1> to vector<1x128xi1>
    %400 = vector.broadcast %399 : vector<1x128xi1> to vector<2x128xi1>
    %401 = arith.select %400, %391, %398 : vector<2x128xi1>, vector<2x128xf32>
    %402 = tpu.concatenate %401, %397 in 1 : vector<2x128xf32>, vector<2x128xf32> -> vector<2x256xf32>
    %403 = arith.truncf %402 : vector<2x256xf32> to vector<2x256xbf16>
    %c0_234 = arith.constant 0 : index
    %c0_235 = arith.constant 0 : index
    %404 = vector.load %arg25[%c0_234, %c0_235] : memref<256x128xbf16, #tpu.memory_space<vmem>>, vector<256x128xbf16>
    %cst_236 = arith.constant dense<0.000000e+00> : vector<2x128xf32>
    %405 = tpu.matmul %403, %404, %cst_236 {dimension_numbers = #tpu.dot_dimension_numbers<[1], [0], [0], [1], [0, 0, 1, 1], [], []>} : vector<2x256xbf16>, vector<256x128xbf16>, vector<2x128xf32> -> vector<2x128xf32>
    %c0_237 = arith.constant 0 : index
    %c0_238 = arith.constant 0 : index
    %406 = vector.load %arg26[%c0_237, %c0_238] : memref<1x128xf32, #tpu.memory_space<vmem>>, vector<1x128xf32>
    %407 = vector.broadcast %406 : vector<1x128xf32> to vector<2x128xf32>
    %408 = arith.addf %405, %407 : vector<2x128xf32>
    %cst_239 = arith.constant 0.000000e+00 : f32
    %409 = vector.broadcast %cst_239 : f32 to vector<2x128xf32>
    %410 = arith.maximumf %408, %409 : vector<2x128xf32>
    %c0_240 = arith.constant 0 : index
    %c0_241 = arith.constant 0 : index
    %411 = vector.load %arg27[%c0_240, %c0_241] : memref<128x10xf32, #tpu.memory_space<vmem>>, vector<128x10xf32>
    %cst_242 = arith.constant dense<0.000000e+00> : vector<2x10xf32>
    %412 = tpu.matmul %410, %411, %cst_242 {dimension_numbers = #tpu.dot_dimension_numbers<[1], [0], [0], [1], [0, 0, 1, 1], [], []>} : vector<2x128xf32>, vector<128x10xf32>, vector<2x10xf32> -> vector<2x10xf32>
    %c0_243 = arith.constant 0 : index
    %c0_244 = arith.constant 0 : index
    %413 = vector.load %arg28[%c0_243, %c0_244] : memref<1x10xf32, #tpu.memory_space<vmem>>, vector<1x10xf32>
    %414 = vector.broadcast %413 : vector<1x10xf32> to vector<2x10xf32>
    %415 = arith.addf %412, %414 : vector<2x10xf32>
    %c0_245 = arith.constant 0 : index
    %c0_246 = arith.constant 0 : index
    %416 = vector.load %arg29[%c0_245, %c0_246] : memref<2x10xf32, #tpu.memory_space<vmem>>, vector<2x10xf32>
    tpu.vector_store %arg29[%c0_245, %c0_246], %415 {strides = array<i32>} : memref<2x10xf32, #tpu.memory_space<vmem>>, vector<2x10xf32>,
    return
  }
}

</mosaic_0001>

<llo_original>
// kernel: qcnn_forward.1
$region0: #{qcnn_forward.1}
  #allocation0 [shape = 'u32[]', space=smem, size = 0x4, offset = 0x4, fixed_abs, tag = 'smem constant byte address 0x4 - core index']
  #allocation1 [shape = 'u32[144,128]{1,0:T(1,128)}', space=vmem, size = 0x12000, scoped, tag = 'internal scratch']
  #allocation2 [shape = 'f32[512,128]{1,0:T(8,128)}', space=vmem, size = 0x40000, scoped, tag = 'scratch operand']
  #allocation3 [shape = 'f32[272,128]{1,0:T(8,128)}', space=vmem, size = 0x22000, scoped, tag = 'scratch operand']
  #allocation4 [shape = 'f32[144,128]{1,0:T(8,128)}', space=vmem, size = 0x12000, scoped, tag = 'scratch operand']
  #allocation5 [shape = 'f32[80,128]{1,0:T(8,128)}', space=vmem, size = 0xa000, scoped, tag = 'scratch operand']
  #allocation6 [shape = 'f32[48,128]{1,0:T(8,128)}', space=vmem, size = 0x6000, scoped, tag = 'scratch operand']
  #allocation7 [shape = 'f32[32,128]{1,0:T(8,128)}', space=vmem, size = 0x4000, scoped, tag = 'scratch operand']
  #allocation8 [shape = 'f32[16,128]{1,0:T(8,128)}', space=vmem, size = 0x2000, scoped, tag = 'scratch operand']
  %s0 = inlined_call_operand.smem [shape: u32[30], index: -1, kind: input, shape index: {}]
  %s1 = sld [smem:[%s0]]
  %s2 = scalar_lea.smem %s0, 1
  %s3 = sld [smem:[%s2]]
  %s4 = scalar_lea.smem %s0, 2
  %s5 = sld [smem:[%s4]]
  %s6 = scalar_lea.smem %s0, 3
  %s7 = sld [smem:[%s6]]
  %s8 = scalar_lea.smem %s0, 4
  %s9 = sld [smem:[%s8]]
  %s10 = scalar_lea.smem %s0, 5
  %s11 = sld [smem:[%s10]]
  %s12 = scalar_lea.smem %s0, 6
  %s13 = sld [smem:[%s12]]
  %s14 = scalar_lea.smem %s0, 7
  %s15 = sld [smem:[%s14]]
  %s16 = scalar_lea.smem %s0, 8
  %s17 = sld [smem:[%s16]]
  %s18 = scalar_lea.smem %s0, 9
  %s19 = sld [smem:[%s18]]
  %s20 = scalar_lea.smem %s0, 10
  %s21 = sld [smem:[%s20]]
  %s22 = scalar_lea.smem %s0, 11
  %s23 = sld [smem:[%s22]]
  %s24 = scalar_lea.smem %s0, 12
  %s25 = sld [smem:[%s24]]
  %s26 = scalar_lea.smem %s0, 13
  %s27 = sld [smem:[%s26]]
  %s28 = scalar_lea.smem %s0, 14
  %s29 = sld [smem:[%s28]]
  %s30 = scalar_lea.smem %s0, 15
  %s31 = sld [smem:[%s30]]
  %s32 = scalar_lea.smem %s0, 16
  %s33 = sld [smem:[%s32]]
  %s34 = scalar_lea.smem %s0, 17
  %s35 = sld [smem:[%s34]]
  %s36 = scalar_lea.smem %s0, 18
  %s37 = sld [smem:[%s36]]
  %s38 = scalar_lea.smem %s0, 19
  %s39 = sld [smem:[%s38]]
  %s40 = scalar_lea.smem %s0, 20
  %s41 = sld [smem:[%s40]]
  %s42 = scalar_lea.smem %s0, 21
  %s43 = sld [smem:[%s42]]
  %s44 = scalar_lea.smem %s0, 22
  %s45 = sld [smem:[%s44]]
  %s46 = scalar_lea.smem %s0, 23
  %s47 = sld [smem:[%s46]]
  %s48 = scalar_lea.smem %s0, 24
  %s49 = sld [smem:[%s48]]
  %s50 = scalar_lea.smem %s0, 25
  %s51 = sld [smem:[%s50]]
  %s52 = scalar_lea.smem %s0, 26
  %s53 = sld [smem:[%s52]]
  %s54 = scalar_lea.smem %s0, 27
  %s55 = sld [smem:[%s54]]
  %s56 = scalar_lea.smem %s0, 28
  %s57 = sld [smem:[%s56]]
  %s58 = scalar_lea.smem %s0, 29
  %s59 = sld [smem:[%s58]]
  %s60 = sld [smem:[#allocation0]]
  $region126: #{qcnn_forward.1} parent=0
    _
  %s62 = ssub.s32 1, %s60
  %s63 = scalar_select 0, %s62, %s60
  $region1: #{qcnn_forward.1} parent=0
    #allocation9 [shape = 'u8[1024]{0}', space=vmem, size = 0x400, scoped, tag = 'output window, operand 0, single buffered']
    #allocation10 [shape = 's32[1]{0}', space=sflag, size = 0x4, scoped, tag = 'scoped memory for qcnn_forward.1']
    %64 = vsyncpa [#allocation10], 0
    // Predicated region
    $region2: #{qcnn_forward.1} parent=1 // pred_check
      _
    $region3: #{qcnn_forward.1} parent=1 // pred_check_branch
      %66 = sbr.rel (0) target = $region5
    $region4: #{qcnn_forward.1} parent=1 // pred_region
      _
    $region5: #{qcnn_forward.1} parent=1 // pred_fallthru
      _
    // Predicated region
    $region6: #{qcnn_forward.1} parent=1 // pred_check
      _
    $region7: #{qcnn_forward.1} parent=1 // pred_check_branch
      %68 = sbr.rel (0) target = $region9
    $region8: #{qcnn_forward.1} parent=1 // pred_region
      _
    $region9: #{qcnn_forward.1} parent=1 // pred_fallthru
      _
    // Predicated region
    $region10: #{qcnn_forward.1} parent=1 // pred_check
      _
    $region11: #{qcnn_forward.1} parent=1 // pred_check_branch
      %70 = sbr.rel (0) target = $region13
    $region12: #{qcnn_forward.1} parent=1 // pred_region
      _
    $region13: #{qcnn_forward.1} parent=1 // pred_fallthru
      _
    // Predicated region
    $region14: #{qcnn_forward.1} parent=1 // pred_check
      _
    $region15: #{qcnn_forward.1} parent=1 // pred_check_branch
      %72 = sbr.rel (0) target = $region17
    $region16: #{qcnn_forward.1} parent=1 // pred_region
      _
    $region17: #{qcnn_forward.1} parent=1 // pred_fallthru
      _
    // Predicated region
    $region18: #{qcnn_forward.1} parent=1 // pred_check
      _
    $region19: #{qcnn_forward.1} parent=1 // pred_check_branch
      %74 = sbr.rel (0) target = $region21
    $region20: #{qcnn_forward.1} parent=1 // pred_region
      _
    $region21: #{qcnn_forward.1} parent=1 // pred_fallthru
      _
    // Predicated region
    $region22: #{qcnn_forward.1} parent=1 // pred_check
      _
    $region23: #{qcnn_forward.1} parent=1 // pred_check_branch
      %76 = sbr.rel (0) target = $region25
    $region24: #{qcnn_forward.1} parent=1 // pred_region
      _
    $region25: #{qcnn_forward.1} parent=1 // pred_fallthru
      _
    // Predicated region
    $region26: #{qcnn_forward.1} parent=1 // pred_check
      _
    $region27: #{qcnn_forward.1} parent=1 // pred_check_branch
      %78 = sbr.rel (0) target = $region29
    $region28: #{qcnn_forward.1} parent=1 // pred_region
      _
    $region29: #{qcnn_forward.1} parent=1 // pred_fallthru
      _
    // Predicated region
    $region30: #{qcnn_forward.1} parent=1 // pred_check
      _
    $region31: #{qcnn_forward.1} parent=1 // pred_check_branch
      %80 = sbr.rel (0) target = $region33
    $region32: #{qcnn_forward.1} parent=1 // pred_region
      _
    $region33: #{qcnn_forward.1} parent=1 // pred_fallthru
      _
    // Predicated region
    $region34: #{qcnn_forward.1} parent=1 // pred_check
      _
    $region35: #{qcnn_forward.1} parent=1 // pred_check_branch
      %82 = sbr.rel (0) target = $region37
    $region36: #{qcnn_forward.1} parent=1 // pred_region
      _
    $region37: #{qcnn_forward.1} parent=1 // pred_fallthru
      _
    // Predicated region
    $region38: #{qcnn_forward.1} parent=1 // pred_check
      _
    $region39: #{qcnn_forward.1} parent=1 // pred_check_branch
      %84 = sbr.rel (0) target = $region41
    $region40: #{qcnn_forward.1} parent=1 // pred_region
      _
    $region41: #{qcnn_forward.1} parent=1 // pred_fallthru
      _
    // Predicated region
    $region42: #{qcnn_forward.1} parent=1 // pred_check
      _
    $region43: #{qcnn_forward.1} parent=1 // pred_check_branch
      %86 = sbr.rel (0) target = $region45
    $region44: #{qcnn_forward.1} parent=1 // pred_region
      _
    $region45: #{qcnn_forward.1} parent=1 // pred_fallthru
      _
    // Predicated region
    $region46: #{qcnn_forward.1} parent=1 // pred_check
      _
    $region47: #{qcnn_forward.1} parent=1 // pred_check_branch
      %88 = sbr.rel (0) target = $region49
    $region48: #{qcnn_forward.1} parent=1 // pred_region
      _
    $region49: #{qcnn_forward.1} parent=1 // pred_fallthru
      _
    // Predicated region
    $region50: #{qcnn_forward.1} parent=1 // pred_check
      _
    $region51: #{qcnn_forward.1} parent=1 // pred_check_branch
      %90 = sbr.rel (0) target = $region53
    $region52: #{qcnn_forward.1} parent=1 // pred_region
      _
    $region53: #{qcnn_forward.1} parent=1 // pred_fallthru
      _
    // Predicated region
    $region54: #{qcnn_forward.1} parent=1 // pred_check
      _
    $region55: #{qcnn_forward.1} parent=1 // pred_check_branch
      %92 = sbr.rel (0) target = $region57
    $region56: #{qcnn_forward.1} parent=1 // pred_region
      _
    $region57: #{qcnn_forward.1} parent=1 // pred_fallthru
      _
    // Predicated region
    $region58: #{qcnn_forward.1} parent=1 // pred_check
      _
    $region59: #{qcnn_forward.1} parent=1 // pred_check_branch
      %94 = sbr.rel (0) target = $region61
    $region60: #{qcnn_forward.1} parent=1 // pred_region
      _
    $region61: #{qcnn_forward.1} parent=1 // pred_fallthru
      _
    // Predicated region
    $region62: #{qcnn_forward.1} parent=1 // pred_check
      _
    $region63: #{qcnn_forward.1} parent=1 // pred_check_branch
      %96 = sbr.rel (0) target = $region65
    $region64: #{qcnn_forward.1} parent=1 // pred_region
      _
    $region65: #{qcnn_forward.1} parent=1 // pred_fallthru
      _
    // Predicated region
    $region66: #{qcnn_forward.1} parent=1 // pred_check
      _
    $region67: #{qcnn_forward.1} parent=1 // pred_check_branch
      %98 = sbr.rel (0) target = $region69
    $region68: #{qcnn_forward.1} parent=1 // pred_region
      _
    $region69: #{qcnn_forward.1} parent=1 // pred_fallthru
      _
    // Predicated region
    $region70: #{qcnn_forward.1} parent=1 // pred_check
      _
    $region71: #{qcnn_forward.1} parent=1 // pred_check_branch
      %100 = sbr.rel (0) target = $region73
    $region72: #{qcnn_forward.1} parent=1 // pred_region
      _
    $region73: #{qcnn_forward.1} parent=1 // pred_fallthru
      _
    // Predicated region
    $region74: #{qcnn_forward.1} parent=1 // pred_check
      _
    $region75: #{qcnn_forward.1} parent=1 // pred_check_branch
      %102 = sbr.rel (0) target = $region77
    $region76: #{qcnn_forward.1} parent=1 // pred_region
      _
    $region77: #{qcnn_forward.1} parent=1 // pred_fallthru
      _
    // Predicated region
    $region78: #{qcnn_forward.1} parent=1 // pred_check
      _
    $region79: #{qcnn_forward.1} parent=1 // pred_check_branch
      %104 = sbr.rel (0) target = $region81
    $region80: #{qcnn_forward.1} parent=1 // pred_region
      _
    $region81: #{qcnn_forward.1} parent=1 // pred_fallthru
      _
    // Predicated region
    $region82: #{qcnn_forward.1} parent=1 // pred_check
      _
    $region83: #{qcnn_forward.1} parent=1 // pred_check_branch
      %106 = sbr.rel (0) target = $region85
    $region84: #{qcnn_forward.1} parent=1 // pred_region
      _
    $region85: #{qcnn_forward.1} parent=1 // pred_fallthru
      _
    // Predicated region
    $region86: #{qcnn_forward.1} parent=1 // pred_check
      _
    $region87: #{qcnn_forward.1} parent=1 // pred_check_branch
      %108 = sbr.rel (0) target = $region89
    $region88: #{qcnn_forward.1} parent=1 // pred_region
      _
    $region89: #{qcnn_forward.1} parent=1 // pred_fallthru
      _
    // Predicated region
    $region90: #{qcnn_forward.1} parent=1 // pred_check
      _
    $region91: #{qcnn_forward.1} parent=1 // pred_check_branch
      %110 = sbr.rel (0) target = $region93
    $region92: #{qcnn_forward.1} parent=1 // pred_region
      _
    $region93: #{qcnn_forward.1} parent=1 // pred_fallthru
      _
    // Predicated region
    $region94: #{qcnn_forward.1} parent=1 // pred_check
      _
    $region95: #{qcnn_forward.1} parent=1 // pred_check_branch
      %112 = sbr.rel (0) target = $region97
    $region96: #{qcnn_forward.1} parent=1 // pred_region
      _
    $region97: #{qcnn_forward.1} parent=1 // pred_fallthru
      _
    // Predicated region
    $region98: #{qcnn_forward.1} parent=1 // pred_check
      _
    $region99: #{qcnn_forward.1} parent=1 // pred_check_branch
      %114 = sbr.rel (0) target = $region101
    $region100: #{qcnn_forward.1} parent=1 // pred_region
      _
    $region101: #{qcnn_forward.1} parent=1 // pred_fallthru
      _
    // Predicated region
    $region102: #{qcnn_forward.1} parent=1 // pred_check
      _
    $region103: #{qcnn_forward.1} parent=1 // pred_check_branch
      %116 = sbr.rel (0) target = $region105
    $region104: #{qcnn_forward.1} parent=1 // pred_region
      _
    $region105: #{qcnn_forward.1} parent=1 // pred_fallthru
      _
    // Predicated region
    $region106: #{qcnn_forward.1} parent=1 // pred_check
      _
    $region107: #{qcnn_forward.1} parent=1 // pred_check_branch
      %118 = sbr.rel (0) target = $region109
    $region108: #{qcnn_forward.1} parent=1 // pred_region
      _
    $region109: #{qcnn_forward.1} parent=1 // pred_fallthru
      _
    // Predicated region
    $region110: #{qcnn_forward.1} parent=1 // pred_check
      _
    $region111: #{qcnn_forward.1} parent=1 // pred_check_branch
      %120 = sbr.rel (0) target = $region113
    $region112: #{qcnn_forward.1} parent=1 // pred_region
      _
    $region113: #{qcnn_forward.1} parent=1 // pred_fallthru
      _
    // Predicated region
    $region114: #{qcnn_forward.1} parent=1 // pred_check
      _
    $region115: #{qcnn_forward.1} parent=1 // pred_check_branch
      %122 = sbr.rel (0) target = $region117
    $region116: #{qcnn_forward.1} parent=1 // pred_region
      _
    $region117: #{qcnn_forward.1} parent=1 // pred_fallthru
      _
    %v124 = vlaneseq
    %v125 = vand.u32 %v124, 127
    %vm126 = vcmp.lt.s32.totalorder %v125, 64
    %v127 = vld [vmem:[%s1] sm:$0xf]
    %v128 = vld [vmem:[%s1 + $0x4] sm:$0xf]
    %v129 = vld [vmem:[%s1 + $0x8] sm:$0xf]
    %v130 = vld [vmem:[%s1 + $0xc] sm:$0xf]
    %v131 = vld [vmem:[%s1 + $0x10] sm:$0xf]
    %v132 = vld [vmem:[%s1 + $0x14] sm:$0xf]
    %v133 = vld [vmem:[%s1 + $0x18] sm:$0xf]
    %v134 = vld [vmem:[%s1 + $0x1c] sm:$0xf]
    %v135 = vld [vmem:[%s1 + $0x20] sm:$0xf]
    %v136 = vld [vmem:[%s1 + $0x24] sm:$0xf]
    %v137 = vld [vmem:[%s1 + $0x28] sm:$0xf]
    %v138 = vld [vmem:[%s1 + $0x2c] sm:$0xf]
    %v139 = vld [vmem:[%s1 + $0x30] sm:$0xf]
    %v140 = vld [vmem:[%s1 + $0x34] sm:$0xf]
    %v141 = vld [vmem:[%s1 + $0x38] sm:$0xf]
    %v142 = vld [vmem:[%s1 + $0x3c] sm:$0xf]
    %v143 = vld [vmem:[%s1 + $0x40] sm:$0xf]
    %v144 = vld [vmem:[%s1 + $0x44] sm:$0xf]
    %v145 = vld [vmem:[%s1 + $0x48] sm:$0xf]
    %v146 = vld [vmem:[%s1 + $0x4c] sm:$0xf]
    %v147 = vld [vmem:[%s1 + $0x50] sm:$0xf]
    %v148 = vld [vmem:[%s1 + $0x54] sm:$0xf]
    %v149 = vld [vmem:[%s1 + $0x58] sm:$0xf]
    %v150 = vld [vmem:[%s1 + $0x5c] sm:$0xf]
    %v151 = vld [vmem:[%s1 + $0x60] sm:$0xf]
    %v152 = vld [vmem:[%s1 + $0x64] sm:$0xf]
    %v153 = vld [vmem:[%s1 + $0x68] sm:$0xf]
    %v154 = vld [vmem:[%s1 + $0x6c] sm:$0xf]
    %v155 = vld [vmem:[%s1 + $0x70] sm:$0xf]
    %v156 = vld [vmem:[%s1 + $0x74] sm:$0xf]
    %v157 = vld [vmem:[%s1 + $0x78] sm:$0xf]
    %v158 = vld [vmem:[%s1 + $0x7c] sm:$0xf]
    %v159 = vld [vmem:[%s1 + $0x80] sm:$0xf]
    %v160 = vld [vmem:[%s1 + $0x84] sm:$0xf]
    %v161 = vld [vmem:[%s1 + $0x88] sm:$0xf]
    %v162 = vld [vmem:[%s1 + $0x8c] sm:$0xf]
    %v163 = vld [vmem:[%s1 + $0x90] sm:$0xf]
    %v164 = vld [vmem:[%s1 + $0x94] sm:$0xf]
    %v165 = vld [vmem:[%s1 + $0x98] sm:$0xf]
    %v166 = vld [vmem:[%s1 + $0x9c] sm:$0xf]
    %v167 = vld [vmem:[%s1 + $0xa0] sm:$0xf]
    %v168 = vld [vmem:[%s1 + $0xa4] sm:$0xf]
    %v169 = vld [vmem:[%s1 + $0xa8] sm:$0xf]
    %v170 = vld [vmem:[%s1 + $0xac] sm:$0xf]
    %v171 = vld [vmem:[%s1 + $0xb0] sm:$0xf]
    %v172 = vld [vmem:[%s1 + $0xb4] sm:$0xf]
    %v173 = vld [vmem:[%s1 + $0xb8] sm:$0xf]
    %v174 = vld [vmem:[%s1 + $0xbc] sm:$0xf]
    %v175 = vld [vmem:[%s1 + $0xc0] sm:$0xf]
    %v176 = vld [vmem:[%s1 + $0xc4] sm:$0xf]
    %v177 = vld [vmem:[%s1 + $0xc8] sm:$0xf]
    %v178 = vld [vmem:[%s1 + $0xcc] sm:$0xf]
    %v179 = vld [vmem:[%s1 + $0xd0] sm:$0xf]
    %v180 = vld [vmem:[%s1 + $0xd4] sm:$0xf]
    %v181 = vld [vmem:[%s1 + $0xd8] sm:$0xf]
    %v182 = vld [vmem:[%s1 + $0xdc] sm:$0xf]
    %v183 = vld [vmem:[%s1 + $0xe0] sm:$0xf]
    %v184 = vld [vmem:[%s1 + $0xe4] sm:$0xf]
    %v185 = vld [vmem:[%s1 + $0xe8] sm:$0xf]
    %v186 = vld [vmem:[%s1 + $0xec] sm:$0xf]
    %v187 = vld [vmem:[%s1 + $0xf0] sm:$0xf]
    %v188 = vld [vmem:[%s1 + $0xf4] sm:$0xf]
    %v189 = vld [vmem:[%s1 + $0xf8] sm:$0xf]
    %v190 = vld [vmem:[%s1 + $0xfc] sm:$0xf]
    %v191 = vld [vmem:[%s3] sm:$0xf]
    %v192 = vld [vmem:[%s3 + $0x4] sm:$0xf]
    %v193 = vld [vmem:[%s3 + $0x8] sm:$0xf]
    %v194 = vld [vmem:[%s3 + $0xc] sm:$0xf]
    %v195 = vld [vmem:[%s3 + $0x10] sm:$0xf]
    %v196 = vld [vmem:[%s3 + $0x14] sm:$0xf]
    %v197 = vld [vmem:[%s3 + $0x18] sm:$0xf]
    %v198 = vld [vmem:[%s3 + $0x1c] sm:$0xf]
    %v199 = vld [vmem:[%s7] sm:$0x1]
    %v201 = vlaneseq
    %v202 = vshrl.u32 %v201, 7
    %v203 = vsub.s32 0, %v202
    %v204 = vrot.slane %v199, %v203
    %v270 = vunpack.c.l.b16 %v127
    %v271 = vunpack.c.l.b16 %v128
    %v272 = vunpack.c.l.b16 %v129
    %v273 = vunpack.c.l.b16 %v130
    %v274 = vunpack.c.l.b16 %v131
    %v275 = vunpack.c.l.b16 %v132
    %v276 = vunpack.c.l.b16 %v133
    %v277 = vunpack.c.l.b16 %v134
    %v278 = vunpack.c.l.b16 %v135
    %v279 = vunpack.c.l.b16 %v136
    %v280 = vunpack.c.l.b16 %v137
    %v281 = vunpack.c.l.b16 %v138
    %v282 = vunpack.c.l.b16 %v139
    %v283 = vunpack.c.l.b16 %v140
    %v284 = vunpack.c.l.b16 %v141
    %v285 = vunpack.c.l.b16 %v142
    %v286 = vunpack.c.l.b16 %v143
    %v287 = vunpack.c.l.b16 %v144
    %v288 = vunpack.c.l.b16 %v145
    %v289 = vunpack.c.l.b16 %v146
    %v290 = vunpack.c.l.b16 %v147
    %v291 = vunpack.c.l.b16 %v148
    %v292 = vunpack.c.l.b16 %v149
    %v293 = vunpack.c.l.b16 %v150
    %v294 = vunpack.c.l.b16 %v151
    %v295 = vunpack.c.l.b16 %v152
    %v296 = vunpack.c.l.b16 %v153
    %v297 = vunpack.c.l.b16 %v154
    %v298 = vunpack.c.l.b16 %v155
    %v299 = vunpack.c.l.b16 %v156
    %v300 = vunpack.c.l.b16 %v157
    %v301 = vunpack.c.l.b16 %v158
    %v302 = vunpack.c.l.b16 %v159
    %v303 = vunpack.c.l.b16 %v160
    %v304 = vunpack.c.l.b16 %v161
    %v305 = vunpack.c.l.b16 %v162
    %v306 = vunpack.c.l.b16 %v163
    %v307 = vunpack.c.l.b16 %v164
    %v308 = vunpack.c.l.b16 %v165
    %v309 = vunpack.c.l.b16 %v166
    %v310 = vunpack.c.l.b16 %v167
    %v311 = vunpack.c.l.b16 %v168
    %v312 = vunpack.c.l.b16 %v169
    %v313 = vunpack.c.l.b16 %v170
    %v314 = vunpack.c.l.b16 %v171
    %v315 = vunpack.c.l.b16 %v172
    %v316 = vunpack.c.l.b16 %v173
    %v317 = vunpack.c.l.b16 %v174
    %v318 = vunpack.c.l.b16 %v175
    %v319 = vunpack.c.l.b16 %v176
    %v320 = vunpack.c.l.b16 %v177
    %v321 = vunpack.c.l.b16 %v178
    %v322 = vunpack.c.l.b16 %v179
    %v323 = vunpack.c.l.b16 %v180
    %v324 = vunpack.c.l.b16 %v181
    %v325 = vunpack.c.l.b16 %v182
    %v326 = vunpack.c.l.b16 %v183
    %v327 = vunpack.c.l.b16 %v184
    %v328 = vunpack.c.l.b16 %v185
    %v329 = vunpack.c.l.b16 %v186
    %v330 = vunpack.c.l.b16 %v187
    %v331 = vunpack.c.l.b16 %v188
    %v332 = vunpack.c.l.b16 %v189
    %v333 = vunpack.c.l.b16 %v190
    %v334 = vpack.c.b16 %v271, %v270
    %v335 = vpack.c.b16 %v273, %v272
    %v336 = vpack.c.b16 %v275, %v274
    %v337 = vpack.c.b16 %v277, %v276
    %v338 = vpack.c.b16 %v279, %v278
    %v339 = vpack.c.b16 %v281, %v280
    %v340 = vpack.c.b16 %v283, %v282
    %v341 = vpack.c.b16 %v285, %v284
    %v342 = vpack.c.b16 %v287, %v286
    %v343 = vpack.c.b16 %v289, %v288
    %v344 = vpack.c.b16 %v291, %v290
    %v345 = vpack.c.b16 %v293, %v292
    %v346 = vpack.c.b16 %v295, %v294
    %v347 = vpack.c.b16 %v297, %v296
    %v348 = vpack.c.b16 %v299, %v298
    %v349 = vpack.c.b16 %v301, %v300
    %v350 = vpack.c.b16 %v303, %v302
    %v351 = vpack.c.b16 %v305, %v304
    %v352 = vpack.c.b16 %v307, %v306
    %v353 = vpack.c.b16 %v309, %v308
    %v354 = vpack.c.b16 %v311, %v310
    %v355 = vpack.c.b16 %v313, %v312
    %v356 = vpack.c.b16 %v315, %v314
    %v357 = vpack.c.b16 %v317, %v316
    %v358 = vpack.c.b16 %v319, %v318
    %v359 = vpack.c.b16 %v321, %v320
    %v360 = vpack.c.b16 %v323, %v322
    %v361 = vpack.c.b16 %v325, %v324
    %v362 = vpack.c.b16 %v327, %v326
    %v363 = vpack.c.b16 %v329, %v328
    %v364 = vpack.c.b16 %v331, %v330
    %v365 = vpack.c.b16 %v333, %v332
    %v374 = vunpack.c.l.b16 %v191
    %v375 = vunpack.c.l.b16 %v192
    %v376 = vunpack.c.l.b16 %v193
    %v377 = vunpack.c.l.b16 %v194
    %v378 = vunpack.c.l.b16 %v195
    %v379 = vunpack.c.l.b16 %v196
    %v380 = vunpack.c.l.b16 %v197
    %v381 = vunpack.c.l.b16 %v198
    %v382 = vpack.c.b16 %v375, %v374
    %v383 = vpack.c.b16 %v377, %v376
    %v384 = vpack.c.b16 %v379, %v378
    %v385 = vpack.c.b16 %v381, %v380
    %vm390 = vcmask 523264
    %v392 = vsel %vm390, %v334, 0
    %v395 = vsel %vm390, %v335, 0
    %v398 = vsel %vm390, %v336, 0
    %v401 = vsel %vm390, %v337, 0
    %v404 = vsel %vm390, %v338, 0
    %v407 = vsel %vm390, %v339, 0
    %v410 = vsel %vm390, %v340, 0
    %v413 = vsel %vm390, %v341, 0
    %v416 = vsel %vm390, %v342, 0
    %v419 = vsel %vm390, %v343, 0
    %v422 = vsel %vm390, %v344, 0
    %v425 = vsel %vm390, %v345, 0
    %v428 = vsel %vm390, %v346, 0
    %v431 = vsel %vm390, %v347, 0
    %v434 = vsel %vm390, %v348, 0
    %v437 = vsel %vm390, %v349, 0
    %v440 = vsel %vm390, %v350, 0
    %v443 = vsel %vm390, %v351, 0
    %v446 = vsel %vm390, %v352, 0
    %v449 = vsel %vm390, %v353, 0
    %v452 = vsel %vm390, %v354, 0
    %v455 = vsel %vm390, %v355, 0
    %v458 = vsel %vm390, %v356, 0
    %v461 = vsel %vm390, %v357, 0
    %v464 = vsel %vm390, %v358, 0
    %v467 = vsel %vm390, %v359, 0
    %v470 = vsel %vm390, %v360, 0
    %v473 = vsel %vm390, %v361, 0
    %v476 = vsel %vm390, %v362, 0
    %v479 = vsel %vm390, %v363, 0
    %v482 = vsel %vm390, %v364, 0
    %v485 = vsel %vm390, %v365, 0
    %487 = vmatprep.subr.bf16.mxu0 0
    %488 = vmatpush1.bf16.msra.mxu0 %v382
    %489 = vmatprep.subr.bf16.mxu0 0
    %490 = vmatpush1.bf16.msra.mxu0 %v383
    %491 = vmatprep.subr.bf16.mxu0 0
    %492 = vmatpush1.bf16.msra.mxu0 %v384
    %493 = vmatprep.subr.bf16.mxu0 0
    %494 = vmatpush1.bf16.msra.mxu0 %v385
    %495 = vmatprep.subr.bf16.mxu0 0
    %496 = vmatpush1.bf16.msra.mxu0 0
    %497 = vmatprep.subr.bf16.mxu0 0
    %498 = vmatpush1.bf16.msra.mxu0 0
    %499 = vmatprep.subr.bf16.mxu0 0
    %500 = vmatpush1.bf16.msra.mxu0 0
    %501 = vmatprep.subr.bf16.mxu0 0
    %502 = vmatpush1.bf16.msra.mxu0 0
    %503 = vmatprep.subr.bf16.mxu0 0
    %504 = vmatpush1.bf16.msra.mxu0 0
    %505 = vmatprep.subr.bf16.mxu0 0
    %506 = vmatpush1.bf16.msra.mxu0 0
    %507 = vmatprep.subr.bf16.mxu0 0
    %508 = vmatpush1.bf16.msra.mxu0 0
    %509 = vmatprep.subr.bf16.mxu0 0
    %510 = vmatpush1.bf16.msra.mxu0 0
    %511 = vmatprep.subr.bf16.mxu0 0
    %512 = vmatpush1.bf16.msra.mxu0 0
    %513 = vmatprep.subr.bf16.mxu0 0
    %514 = vmatpush1.bf16.msra.mxu0 0
    %515 = vmatprep.subr.bf16.mxu0 0
    %516 = vmatpush1.bf16.msra.mxu0 0
    %517 = vmatprep.subr.bf16.mxu0 0
    %518 = vmatpush1.bf16.msra.mxu0 0
    %519 = vmatprep.mubr.bf16.mxu0 0
    %520 = vmatmul.mubr.bf16.gmra.mrb[0].mxu0 %v392
    %v521 = vpop.f32.mrb[0].mxu0
    %v522 = vadd.f32 %v204, %v521
    %v523 = vpop.f32.mrb[0].mxu0
    %v524 = vpop.f32.mrb[0].mxu0
    %v525 = vadd.f32 %v204, %v524
    %v526 = vpop.f32.mrb[0].mxu0
    %527 = vmatprep.mubr.bf16.mxu0 0
    %528 = vmatmul.mubr.bf16.gmra.mrb[0].mxu0 %v395
    %v529 = vpop.f32.mrb[0].mxu0
    %v530 = vadd.f32 %v204, %v529
    %v531 = vpop.f32.mrb[0].mxu0
    %v532 = vpop.f32.mrb[0].mxu0
    %v533 = vadd.f32 %v204, %v532
    %v534 = vpop.f32.mrb[0].mxu0
    %535 = vmatprep.mubr.bf16.mxu0 0
    %536 = vmatmul.mubr.bf16.gmra.mrb[0].mxu0 %v398
    %v537 = vpop.f32.mrb[0].mxu0
    %v538 = vadd.f32 %v204, %v537
    %v539 = vpop.f32.mrb[0].mxu0
    %v540 = vpop.f32.mrb[0].mxu0
    %v541 = vadd.f32 %v204, %v540
    %v542 = vpop.f32.mrb[0].mxu0
    %543 = vmatprep.mubr.bf16.mxu0 0
    %544 = vmatmul.mubr.bf16.gmra.mrb[0].mxu0 %v401
    %v545 = vpop.f32.mrb[0].mxu0
    %v546 = vadd.f32 %v204, %v545
    %v547 = vpop.f32.mrb[0].mxu0
    %v548 = vpop.f32.mrb[0].mxu0
    %v549 = vadd.f32 %v204, %v548
    %v550 = vpop.f32.mrb[0].mxu0
    %551 = vmatprep.mubr.bf16.mxu0 0
    %552 = vmatmul.mubr.bf16.gmra.mrb[0].mxu0 %v404
    %v553 = vpop.f32.mrb[0].mxu0
    %v554 = vadd.f32 %v204, %v553
    %v555 = vpop.f32.mrb[0].mxu0
    %v556 = vpop.f32.mrb[0].mxu0
    %v557 = vadd.f32 %v204, %v556
    %v558 = vpop.f32.mrb[0].mxu0
    %559 = vmatprep.mubr.bf16.mxu0 0
    %560 = vmatmul.mubr.bf16.gmra.mrb[0].mxu0 %v407
    %v561 = vpop.f32.mrb[0].mxu0
    %v562 = vadd.f32 %v204, %v561
    %v563 = vpop.f32.mrb[0].mxu0
    %v564 = vpop.f32.mrb[0].mxu0
    %v565 = vadd.f32 %v204, %v564
    %v566 = vpop.f32.mrb[0].mxu0
    %567 = vmatprep.mubr.bf16.mxu0 0
    %568 = vmatmul.mubr.bf16.gmra.mrb[0].mxu0 %v410
    %v569 = vpop.f32.mrb[0].mxu0
    %v570 = vadd.f32 %v204, %v569
    %v571 = vpop.f32.mrb[0].mxu0
    %v572 = vpop.f32.mrb[0].mxu0
    %v573 = vadd.f32 %v204, %v572
    %v574 = vpop.f32.mrb[0].mxu0
    %575 = vmatprep.mubr.bf16.mxu0 0
    %576 = vmatmul.mubr.bf16.gmra.mrb[0].mxu0 %v413
    %v577 = vpop.f32.mrb[0].mxu0
    %v578 = vadd.f32 %v204, %v577
    %v579 = vpop.f32.mrb[0].mxu0
    %v580 = vpop.f32.mrb[0].mxu0
    %v581 = vadd.f32 %v204, %v580
    %v582 = vpop.f32.mrb[0].mxu0
    %583 = vmatprep.mubr.bf16.mxu0 0
    %584 = vmatmul.mubr.bf16.gmra.mrb[0].mxu0 %v416
    %v585 = vpop.f32.mrb[0].mxu0
    %v586 = vadd.f32 %v204, %v585
    %v587 = vpop.f32.mrb[0].mxu0
    %v588 = vpop.f32.mrb[0].mxu0
    %v589 = vadd.f32 %v204, %v588
    %v590 = vpop.f32.mrb[0].mxu0
    %591 = vmatprep.mubr.bf16.mxu0 0
    %592 = vmatmul.mubr.bf16.gmra.mrb[0].mxu0 %v419
    %v593 = vpop.f32.mrb[0].mxu0
    %v594 = vadd.f32 %v204, %v593
    %v595 = vpop.f32.mrb[0].mxu0
    %v596 = vpop.f32.mrb[0].mxu0
    %v597 = vadd.f32 %v204, %v596
    %v598 = vpop.f32.mrb[0].mxu0
    %599 = vmatprep.mubr.bf16.mxu0 0
    %600 = vmatmul.mubr.bf16.gmra.mrb[0].mxu0 %v422
    %v601 = vpop.f32.mrb[0].mxu0
    %v602 = vadd.f32 %v204, %v601
    %v603 = vpop.f32.mrb[0].mxu0
    %v604 = vpop.f32.mrb[0].mxu0
    %v605 = vadd.f32 %v204, %v604
    %v606 = vpop.f32.mrb[0].mxu0
    %607 = vmatprep.mubr.bf16.mxu0 0
    %608 = vmatmul.mubr.bf16.gmra.mrb[0].mxu0 %v425
    %v609 = vpop.f32.mrb[0].mxu0
    %v610 = vadd.f32 %v204, %v609
    %v611 = vpop.f32.mrb[0].mxu0
    %v612 = vpop.f32.mrb[0].mxu0
    %v613 = vadd.f32 %v204, %v612
    %v614 = vpop.f32.mrb[0].mxu0
    %615 = vmatprep.mubr.bf16.mxu0 0
    %616 = vmatmul.mubr.bf16.gmra.mrb[0].mxu0 %v428
    %v617 = vpop.f32.mrb[0].mxu0
    %v618 = vadd.f32 %v204, %v617
    %v619 = vpop.f32.mrb[0].mxu0
    %v620 = vpop.f32.mrb[0].mxu0
    %v621 = vadd.f32 %v204, %v620
    %v622 = vpop.f32.mrb[0].mxu0
    %623 = vmatprep.mubr.bf16.mxu0 0
    %624 = vmatmul.mubr.bf16.gmra.mrb[0].mxu0 %v431
    %v625 = vpop.f32.mrb[0].mxu0
    %v626 = vadd.f32 %v204, %v625
    %v627 = vpop.f32.mrb[0].mxu0
    %v628 = vpop.f32.mrb[0].mxu0
    %v629 = vadd.f32 %v204, %v628
    %v630 = vpop.f32.mrb[0].mxu0
    %631 = vmatprep.mubr.bf16.mxu0 0
    %632 = vmatmul.mubr.bf16.gmra.mrb[0].mxu0 %v434
    %v633 = vpop.f32.mrb[0].mxu0
    %v634 = vadd.f32 %v204, %v633
    %v635 = vpop.f32.mrb[0].mxu0
    %v636 = vpop.f32.mrb[0].mxu0
    %v637 = vadd.f32 %v204, %v636
    %v638 = vpop.f32.mrb[0].mxu0
    %639 = vmatprep.mubr.bf16.mxu0 0
    %640 = vmatmul.mubr.bf16.gmra.mrb[0].mxu0 %v437
    %v641 = vpop.f32.mrb[0].mxu0
    %v642 = vadd.f32 %v204, %v641
    %v643 = vpop.f32.mrb[0].mxu0
    %v644 = vpop.f32.mrb[0].mxu0
    %v645 = vadd.f32 %v204, %v644
    %v646 = vpop.f32.mrb[0].mxu0
    %647 = vmatprep.mubr.bf16.mxu0 0
    %648 = vmatmul.mubr.bf16.gmra.mrb[0].mxu0 %v440
    %v649 = vpop.f32.mrb[0].mxu0
    %v650 = vadd.f32 %v204, %v649
    %v651 = vpop.f32.mrb[0].mxu0
    %v652 = vpop.f32.mrb[0].mxu0
    %v653 = vadd.f32 %v204, %v652
    %v654 = vpop.f32.mrb[0].mxu0
    %655 = vmatprep.mubr.bf16.mxu0 0
    %656 = vmatmul.mubr.bf16.gmra.mrb[0].mxu0 %v443
    %v657 = vpop.f32.mrb[0].mxu0
    %v658 = vadd.f32 %v204, %v657
    %v659 = vpop.f32.mrb[0].mxu0
    %v660 = vpop.f32.mrb[0].mxu0
    %v661 = vadd.f32 %v204, %v660
    %v662 = vpop.f32.mrb[0].mxu0
    %663 = vmatprep.mubr.bf16.mxu0 0
    %664 = vmatmul.mubr.bf16.gmra.mrb[0].mxu0 %v446
    %v665 = vpop.f32.mrb[0].mxu0
    %v666 = vadd.f32 %v204, %v665
    %v667 = vpop.f32.mrb[0].mxu0
    %v668 = vpop.f32.mrb[0].mxu0
    %v669 = vadd.f32 %v204, %v668
    %v670 = vpop.f32.mrb[0].mxu0
    %671 = vmatprep.mubr.bf16.mxu0 0
    %672 = vmatmul.mubr.bf16.gmra.mrb[0].mxu0 %v449
    %v673 = vpop.f32.mrb[0].mxu0
    %v674 = vadd.f32 %v204, %v673
    %v675 = vpop.f32.mrb[0].mxu0
    %v676 = vpop.f32.mrb[0].mxu0
    %v677 = vadd.f32 %v204, %v676
    %v678 = vpop.f32.mrb[0].mxu0
    %679 = vmatprep.mubr.bf16.mxu0 0
    %680 = vmatmul.mubr.bf16.gmra.mrb[0].mxu0 %v452
    %v681 = vpop.f32.mrb[0].mxu0
    %v682 = vadd.f32 %v204, %v681
    %v683 = vpop.f32.mrb[0].mxu0
    %v684 = vpop.f32.mrb[0].mxu0
    %v685 = vadd.f32 %v204, %v684
    %v686 = vpop.f32.mrb[0].mxu0
    %687 = vmatprep.mubr.bf16.mxu0 0
    %688 = vmatmul.mubr.bf16.gmra.mrb[0].mxu0 %v455
    %v689 = vpop.f32.mrb[0].mxu0
    %v690 = vadd.f32 %v204, %v689
    %v691 = vpop.f32.mrb[0].mxu0
    %v692 = vpop.f32.mrb[0].mxu0
    %v693 = vadd.f32 %v204, %v692
    %v694 = vpop.f32.mrb[0].mxu0
    %695 = vmatprep.mubr.bf16.mxu0 0
    %696 = vmatmul.mubr.bf16.gmra.mrb[0].mxu0 %v458
    %v697 = vpop.f32.mrb[0].mxu0
    %v698 = vadd.f32 %v204, %v697
    %v699 = vpop.f32.mrb[0].mxu0
    %v700 = vpop.f32.mrb[0].mxu0
    %v701 = vadd.f32 %v204, %v700
    %v702 = vpop.f32.mrb[0].mxu0
    %703 = vmatprep.mubr.bf16.mxu0 0
    %704 = vmatmul.mubr.bf16.gmra.mrb[0].mxu0 %v461
    %v705 = vpop.f32.mrb[0].mxu0
    %v706 = vadd.f32 %v204, %v705
    %v707 = vpop.f32.mrb[0].mxu0
    %v708 = vpop.f32.mrb[0].mxu0
    %v709 = vadd.f32 %v204, %v708
    %v710 = vpop.f32.mrb[0].mxu0
    %711 = vmatprep.mubr.bf16.mxu0 0
    %712 = vmatmul.mubr.bf16.gmra.mrb[0].mxu0 %v464
    %v713 = vpop.f32.mrb[0].mxu0
    %v714 = vadd.f32 %v204, %v713
    %v715 = vpop.f32.mrb[0].mxu0
    %v716 = vpop.f32.mrb[0].mxu0
    %v717 = vadd.f32 %v204, %v716
    %v718 = vpop.f32.mrb[0].mxu0
    %719 = vmatprep.mubr.bf16.mxu0 0
    %720 = vmatmul.mubr.bf16.gmra.mrb[0].mxu0 %v467
    %v721 = vpop.f32.mrb[0].mxu0
    %v722 = vadd.f32 %v204, %v721
    %v723 = vpop.f32.mrb[0].mxu0
    %v724 = vpop.f32.mrb[0].mxu0
    %v725 = vadd.f32 %v204, %v724
    %v726 = vpop.f32.mrb[0].mxu0
    %727 = vmatprep.mubr.bf16.mxu0 0
    %728 = vmatmul.mubr.bf16.gmra.mrb[0].mxu0 %v470
    %v729 = vpop.f32.mrb[0].mxu0
    %v730 = vadd.f32 %v204, %v729
    %v731 = vpop.f32.mrb[0].mxu0
    %v732 = vpop.f32.mrb[0].mxu0
    %v733 = vadd.f32 %v204, %v732
    %v734 = vpop.f32.mrb[0].mxu0
    %735 = vmatprep.mubr.bf16.mxu0 0
    %736 = vmatmul.mubr.bf16.gmra.mrb[0].mxu0 %v473
    %v737 = vpop.f32.mrb[0].mxu0
    %v738 = vadd.f32 %v204, %v737
    %v739 = vpop.f32.mrb[0].mxu0
    %v740 = vpop.f32.mrb[0].mxu0
    %v741 = vadd.f32 %v204, %v740
    %v742 = vpop.f32.mrb[0].mxu0
    %743 = vmatprep.mubr.bf16.mxu0 0
    %744 = vmatmul.mubr.bf16.gmra.mrb[0].mxu0 %v476
    %v745 = vpop.f32.mrb[0].mxu0
    %v746 = vadd.f32 %v204, %v745
    %v747 = vpop.f32.mrb[0].mxu0
    %v748 = vpop.f32.mrb[0].mxu0
    %v749 = vadd.f32 %v204, %v748
    %v750 = vpop.f32.mrb[0].mxu0
    %751 = vmatprep.mubr.bf16.mxu0 0
    %752 = vmatmul.mubr.bf16.gmra.mrb[0].mxu0 %v479
    %v753 = vpop.f32.mrb[0].mxu0
    %v754 = vadd.f32 %v204, %v753
    %v755 = vpop.f32.mrb[0].mxu0
    %v756 = vpop.f32.mrb[0].mxu0
    %v757 = vadd.f32 %v204, %v756
    %v758 = vpop.f32.mrb[0].mxu0
    %759 = vmatprep.mubr.bf16.mxu0 0
    %760 = vmatmul.mubr.bf16.gmra.mrb[0].mxu0 %v482
    %v761 = vpop.f32.mrb[0].mxu0
    %v762 = vadd.f32 %v204, %v761
    %v763 = vpop.f32.mrb[0].mxu0
    %v764 = vpop.f32.mrb[0].mxu0
    %v765 = vadd.f32 %v204, %v764
    %v766 = vpop.f32.mrb[0].mxu0
    %767 = vmatprep.mubr.bf16.mxu0 0
    %768 = vmatmul.mubr.bf16.gmra.mrb[0].mxu0 %v485
    %v769 = vpop.f32.mrb[0].mxu0
    %v770 = vadd.f32 %v204, %v769
    %v771 = vpop.f32.mrb[0].mxu0
    %v772 = vpop.f32.mrb[0].mxu0
    %v773 = vadd.f32 %v204, %v772
    %v774 = vpop.f32.mrb[0].mxu0
    %775 = vdwg.mxu0
    %v776 = vmul.bf16 %v127, %v127
    %v777 = vmul.bf16 %v128, %v128
    %v778 = vmul.bf16 %v129, %v129
    %v779 = vmul.bf16 %v130, %v130
    %v780 = vmul.bf16 %v131, %v131
    %v781 = vmul.bf16 %v132, %v132
    %v782 = vmul.bf16 %v133, %v133
    %v783 = vmul.bf16 %v134, %v134
    %v784 = vmul.bf16 %v135, %v135
    %v785 = vmul.bf16 %v136, %v136
    %v786 = vmul.bf16 %v137, %v137
    %v787 = vmul.bf16 %v138, %v138
    %v788 = vmul.bf16 %v139, %v139
    %v789 = vmul.bf16 %v140, %v140
    %v790 = vmul.bf16 %v141, %v141
    %v791 = vmul.bf16 %v142, %v142
    %v792 = vmul.bf16 %v143, %v143
    %v793 = vmul.bf16 %v144, %v144
    %v794 = vmul.bf16 %v145, %v145
    %v795 = vmul.bf16 %v146, %v146
    %v796 = vmul.bf16 %v147, %v147
    %v797 = vmul.bf16 %v148, %v148
    %v798 = vmul.bf16 %v149, %v149
    %v799 = vmul.bf16 %v150, %v150
    %v800 = vmul.bf16 %v151, %v151
    %v801 = vmul.bf16 %v152, %v152
    %v802 = vmul.bf16 %v153, %v153
    %v803 = vmul.bf16 %v154, %v154
    %v804 = vmul.bf16 %v155, %v155
    %v805 = vmul.bf16 %v156, %v156
    %v806 = vmul.bf16 %v157, %v157
    %v807 = vmul.bf16 %v158, %v158
    %v808 = vmul.bf16 %v159, %v159
    %v809 = vmul.bf16 %v160, %v160
    %v810 = vmul.bf16 %v161, %v161
    %v811 = vmul.bf16 %v162, %v162
    %v812 = vmul.bf16 %v163, %v163
    %v813 = vmul.bf16 %v164, %v164
    %v814 = vmul.bf16 %v165, %v165
    %v815 = vmul.bf16 %v166, %v166
    %v816 = vmul.bf16 %v167, %v167
    %v817 = vmul.bf16 %v168, %v168
    %v818 = vmul.bf16 %v169, %v169
    %v819 = vmul.bf16 %v170, %v170
    %v820 = vmul.bf16 %v171, %v171
    %v821 = vmul.bf16 %v172, %v172
    %v822 = vmul.bf16 %v173, %v173
    %v823 = vmul.bf16 %v174, %v174
    %v824 = vmul.bf16 %v175, %v175
    %v825 = vmul.bf16 %v176, %v176
    %v826 = vmul.bf16 %v177, %v177
    %v827 = vmul.bf16 %v178, %v178
    %v828 = vmul.bf16 %v179, %v179
    %v829 = vmul.bf16 %v180, %v180
    %v830 = vmul.bf16 %v181, %v181
    %v831 = vmul.bf16 %v182, %v182
    %v832 = vmul.bf16 %v183, %v183
    %v833 = vmul.bf16 %v184, %v184
    %v834 = vmul.bf16 %v185, %v185
    %v835 = vmul.bf16 %v186, %v186
    %v836 = vmul.bf16 %v187, %v187
    %v837 = vmul.bf16 %v188, %v188
    %v838 = vmul.bf16 %v189, %v189
    %v839 = vmul.bf16 %v190, %v190
    %v840 = vld [vmem:[%s5] sm:$0xf]
    %v841 = vld [vmem:[%s5 + $0x4] sm:$0xf]
    %v842 = vld [vmem:[%s5 + $0x8] sm:$0xf]
    %v843 = vld [vmem:[%s5 + $0xc] sm:$0xf]
    %v844 = vld [vmem:[%s5 + $0x10] sm:$0xf]
    %v845 = vld [vmem:[%s5 + $0x14] sm:$0xf]
    %v846 = vld [vmem:[%s5 + $0x18] sm:$0xf]
    %v847 = vld [vmem:[%s5 + $0x1c] sm:$0xf]
    %v848 = vld [vmem:[%s9] sm:$0x1]
    %v850 = vlaneseq
    %v851 = vshrl.u32 %v850, 7
    %v852 = vsub.s32 0, %v851
    %v853 = vrot.slane %v848, %v852
    %v919 = vunpack.c.l.b16 %v776
    %v920 = vunpack.c.l.b16 %v777
    %v921 = vunpack.c.l.b16 %v778
    %v922 = vunpack.c.l.b16 %v779
    %v923 = vunpack.c.l.b16 %v780
    %v924 = vunpack.c.l.b16 %v781
    %v925 = vunpack.c.l.b16 %v782
    %v926 = vunpack.c.l.b16 %v783
    %v927 = vunpack.c.l.b16 %v784
    %v928 = vunpack.c.l.b16 %v785
    %v929 = vunpack.c.l.b16 %v786
    %v930 = vunpack.c.l.b16 %v787
    %v931 = vunpack.c.l.b16 %v788
    %v932 = vunpack.c.l.b16 %v789
    %v933 = vunpack.c.l.b16 %v790
    %v934 = vunpack.c.l.b16 %v791
    %v935 = vunpack.c.l.b16 %v792
    %v936 = vunpack.c.l.b16 %v793
    %v937 = vunpack.c.l.b16 %v794
    %v938 = vunpack.c.l.b16 %v795
    %v939 = vunpack.c.l.b16 %v796
    %v940 = vunpack.c.l.b16 %v797
    %v941 = vunpack.c.l.b16 %v798
    %v942 = vunpack.c.l.b16 %v799
    %v943 = vunpack.c.l.b16 %v800
    %v944 = vunpack.c.l.b16 %v801
    %v945 = vunpack.c.l.b16 %v802
    %v946 = vunpack.c.l.b16 %v803
    %v947 = vunpack.c.l.b16 %v804
    %v948 = vunpack.c.l.b16 %v805
    %v949 = vunpack.c.l.b16 %v806
    %v950 = vunpack.c.l.b16 %v807
    %v951 = vunpack.c.l.b16 %v808
    %v952 = vunpack.c.l.b16 %v809
    %v953 = vunpack.c.l.b16 %v810
    %v954 = vunpack.c.l.b16 %v811
    %v955 = vunpack.c.l.b16 %v812
    %v956 = vunpack.c.l.b16 %v813
    %v957 = vunpack.c.l.b16 %v814
    %v958 = vunpack.c.l.b16 %v815
    %v959 = vunpack.c.l.b16 %v816
    %v960 = vunpack.c.l.b16 %v817
    %v961 = vunpack.c.l.b16 %v818
    %v962 = vunpack.c.l.b16 %v819
    %v963 = vunpack.c.l.b16 %v820
    %v964 = vunpack.c.l.b16 %v821
    %v965 = vunpack.c.l.b16 %v822
    %v966 = vunpack.c.l.b16 %v823
    %v967 = vunpack.c.l.b16 %v824
    %v968 = vunpack.c.l.b16 %v825
    %v969 = vunpack.c.l.b16 %v826
    %v970 = vunpack.c.l.b16 %v827
    %v971 = vunpack.c.l.b16 %v828
    %v972 = vunpack.c.l.b16 %v829
    %v973 = vunpack.c.l.b16 %v830
    %v974 = vunpack.c.l.b16 %v831
    %v975 = vunpack.c.l.b16 %v832
    %v976 = vunpack.c.l.b16 %v833
    %v977 = vunpack.c.l.b16 %v834
    %v978 = vunpack.c.l.b16 %v835
    %v979 = vunpack.c.l.b16 %v836
    %v980 = vunpack.c.l.b16 %v837
    %v981 = vunpack.c.l.b16 %v838
    %v982 = vunpack.c.l.b16 %v839
    %v983 = vpack.c.b16 %v920, %v919
    %v984 = vpack.c.b16 %v922, %v921
    %v985 = vpack.c.b16 %v924, %v923
    %v986 = vpack.c.b16 %v926, %v925
    %v987 = vpack.c.b16 %v928, %v927
    %v988 = vpack.c.b16 %v930, %v929
    %v989 = vpack.c.b16 %v932, %v931
    %v990 = vpack.c.b16 %v934, %v933
    %v991 = vpack.c.b16 %v936, %v935
    %v992 = vpack.c.b16 %v938, %v937
    %v993 = vpack.c.b16 %v940, %v939
    %v994 = vpack.c.b16 %v942, %v941
    %v995 = vpack.c.b16 %v944, %v943
    %v996 = vpack.c.b16 %v946, %v945
    %v997 = vpack.c.b16 %v948, %v947
    %v998 = vpack.c.b16 %v950, %v949
    %v999 = vpack.c.b16 %v952, %v951
    %v1000 = vpack.c.b16 %v954, %v953
    %v1001 = vpack.c.b16 %v956, %v955
    %v1002 = vpack.c.b16 %v958, %v957
    %v1003 = vpack.c.b16 %v960, %v959
    %v1004 = vpack.c.b16 %v962, %v961
    %v1005 = vpack.c.b16 %v964, %v963
    %v1006 = vpack.c.b16 %v966, %v965
    %v1007 = vpack.c.b16 %v968, %v967
    %v1008 = vpack.c.b16 %v970, %v969
    %v1009 = vpack.c.b16 %v972, %v971
    %v1010 = vpack.c.b16 %v974, %v973
    %v1011 = vpack.c.b16 %v976, %v975
    %v1012 = vpack.c.b16 %v978, %v977
    %v1013 = vpack.c.b16 %v980, %v979
    %v1014 = vpack.c.b16 %v982, %v981
    %v1023 = vunpack.c.l.b16 %v840
    %v1024 = vunpack.c.l.b16 %v841
    %v1025 = vunpack.c.l.b16 %v842
    %v1026 = vunpack.c.l.b16 %v843
    %v1027 = vunpack.c.l.b16 %v844
    %v1028 = vunpack.c.l.b16 %v845
    %v1029 = vunpack.c.l.b16 %v846
    %v1030 = vunpack.c.l.b16 %v847
    %v1031 = vpack.c.b16 %v1024, %v1023
    %v1032 = vpack.c.b16 %v1026, %v1025
    %v1033 = vpack.c.b16 %v1028, %v1027
    %v1034 = vpack.c.b16 %v1030, %v1029
    %v1040 = vsel %vm390, %v983, 0
    %v1043 = vsel %vm390, %v984, 0
    %v1046 = vsel %vm390, %v985, 0
    %v1049 = vsel %vm390, %v986, 0
    %v1052 = vsel %vm390, %v987, 0
    %v1055 = vsel %vm390, %v988, 0
    %v1058 = vsel %vm390, %v989, 0
    %v1061 = vsel %vm390, %v990, 0
    %v1064 = vsel %vm390, %v991, 0
    %v1067 = vsel %vm390, %v992, 0
    %v1070 = vsel %vm390, %v993, 0
    %v1073 = vsel %vm390, %v994, 0
    %v1076 = vsel %vm390, %v995, 0
    %v1079 = vsel %vm390, %v996, 0
    %v1082 = vsel %vm390, %v997, 0
    %v1085 = vsel %vm390, %v998, 0
    %v1088 = vsel %vm390, %v999, 0
    %v1091 = vsel %vm390, %v1000, 0
    %v1094 = vsel %vm390, %v1001, 0
    %v1097 = vsel %vm390, %v1002, 0
    %v1100 = vsel %vm390, %v1003, 0
    %v1103 = vsel %vm390, %v1004, 0
    %v1106 = vsel %vm390, %v1005, 0
    %v1109 = vsel %vm390, %v1006, 0
    %v1112 = vsel %vm390, %v1007, 0
    %v1115 = vsel %vm390, %v1008, 0
    %v1118 = vsel %vm390, %v1009, 0
    %v1121 = vsel %vm390, %v1010, 0
    %v1124 = vsel %vm390, %v1011, 0
    %v1127 = vsel %vm390, %v1012, 0
    %v1130 = vsel %vm390, %v1013, 0
    %v1133 = vsel %vm390, %v1014, 0
    %1135 = vmatprep.subr.bf16.mxu0 0
    %1136 = vmatpush1.bf16.msra.mxu0 %v1031
    %1137 = vmatprep.subr.bf16.mxu0 0
    %1138 = vmatpush1.bf16.msra.mxu0 %v1032
    %1139 = vmatprep.subr.bf16.mxu0 0
    %1140 = vmatpush1.bf16.msra.mxu0 %v1033
    %1141 = vmatprep.subr.bf16.mxu0 0
    %1142 = vmatpush1.bf16.msra.mxu0 %v1034
    %1143 = vmatprep.subr.bf16.mxu0 0
    %1144 = vmatpush1.bf16.msra.mxu0 0
    %1145 = vmatprep.subr.bf16.mxu0 0
    %1146 = vmatpush1.bf16.msra.mxu0 0
    %1147 = vmatprep.subr.bf16.mxu0 0
    %1148 = vmatpush1.bf16.msra.mxu0 0
    %1149 = vmatprep.subr.bf16.mxu0 0
    %1150 = vmatpush1.bf16.msra.mxu0 0
    %1151 = vmatprep.subr.bf16.mxu0 0
    %1152 = vmatpush1.bf16.msra.mxu0 0
    %1153 = vmatprep.subr.bf16.mxu0 0
    %1154 = vmatpush1.bf16.msra.mxu0 0
    %1155 = vmatprep.subr.bf16.mxu0 0
    %1156 = vmatpush1.bf16.msra.mxu0 0
    %1157 = vmatprep.subr.bf16.mxu0 0
    %1158 = vmatpush1.bf16.msra.mxu0 0
    %1159 = vmatprep.subr.bf16.mxu0 0
    %1160 = vmatpush1.bf16.msra.mxu0 0
    %1161 = vmatprep.subr.bf16.mxu0 0
    %1162 = vmatpush1.bf16.msra.mxu0 0
    %1163 = vmatprep.subr.bf16.mxu0 0
    %1164 = vmatpush1.bf16.msra.mxu0 0
    %1165 = vmatprep.subr.bf16.mxu0 0
    %1166 = vmatpush1.bf16.msra.mxu0 0
    %1167 = vmatprep.mubr.bf16.mxu0 0
    %1168 = vmatmul.mubr.bf16.gmra.mrb[0].mxu0 %v1040
    %v1169 = vpop.f32.mrb[0].mxu0
    %v1170 = vadd.f32 %v853, %v1169
    %v1171 = vpop.f32.mrb[0].mxu0
    %v1172 = vpop.f32.mrb[0].mxu0
    %v1173 = vadd.f32 %v853, %v1172
    %v1174 = vpop.f32.mrb[0].mxu0
    %1175 = vmatprep.mubr.bf16.mxu0 0
    %1176 = vmatmul.mubr.bf16.gmra.mrb[0].mxu0 %v1043
    %v1177 = vpop.f32.mrb[0].mxu0
    %v1178 = vadd.f32 %v853, %v1177
    %v1179 = vpop.f32.mrb[0].mxu0
    %v1180 = vpop.f32.mrb[0].mxu0
    %v1181 = vadd.f32 %v853, %v1180
    %v1182 = vpop.f32.mrb[0].mxu0
    %1183 = vmatprep.mubr.bf16.mxu0 0
    %1184 = vmatmul.mubr.bf16.gmra.mrb[0].mxu0 %v1046
    %v1185 = vpop.f32.mrb[0].mxu0
    %v1186 = vadd.f32 %v853, %v1185
    %v1187 = vpop.f32.mrb[0].mxu0
    %v1188 = vpop.f32.mrb[0].mxu0
    %v1189 = vadd.f32 %v853, %v1188
    %v1190 = vpop.f32.mrb[0].mxu0
    %1191 = vmatprep.mubr.bf16.mxu0 0
    %1192 = vmatmul.mubr.bf16.gmra.mrb[0].mxu0 %v1049
    %v1193 = vpop.f32.mrb[0].mxu0
    %v1194 = vadd.f32 %v853, %v1193
    %v1195 = vpop.f32.mrb[0].mxu0
    %v1196 = vpop.f32.mrb[0].mxu0
    %v1197 = vadd.f32 %v853, %v1196
    %v1198 = vpop.f32.mrb[0].mxu0
    %1199 = vmatprep.mubr.bf16.mxu0 0
    %1200 = vmatmul.mubr.bf16.gmra.mrb[0].mxu0 %v1052
    %v1201 = vpop.f32.mrb[0].mxu0
    %v1202 = vadd.f32 %v853, %v1201
    %v1203 = vpop.f32.mrb[0].mxu0
    %v1204 = vpop.f32.mrb[0].mxu0
    %v1205 = vadd.f32 %v853, %v1204
    %v1206 = vpop.f32.mrb[0].mxu0
    %1207 = vmatprep.mubr.bf16.mxu0 0
    %1208 = vmatmul.mubr.bf16.gmra.mrb[0].mxu0 %v1055
    %v1209 = vpop.f32.mrb[0].mxu0
    %v1210 = vadd.f32 %v853, %v1209
    %v1211 = vpop.f32.mrb[0].mxu0
    %v1212 = vpop.f32.mrb[0].mxu0
    %v1213 = vadd.f32 %v853, %v1212
    %v1214 = vpop.f32.mrb[0].mxu0
    %1215 = vmatprep.mubr.bf16.mxu0 0
    %1216 = vmatmul.mubr.bf16.gmra.mrb[0].mxu0 %v1058
    %v1217 = vpop.f32.mrb[0].mxu0
    %v1218 = vadd.f32 %v853, %v1217
    %v1219 = vpop.f32.mrb[0].mxu0
    %v1220 = vpop.f32.mrb[0].mxu0
    %v1221 = vadd.f32 %v853, %v1220
    %v1222 = vpop.f32.mrb[0].mxu0
    %1223 = vmatprep.mubr.bf16.mxu0 0
    %1224 = vmatmul.mubr.bf16.gmra.mrb[0].mxu0 %v1061
    %v1225 = vpop.f32.mrb[0].mxu0
    %v1226 = vadd.f32 %v853, %v1225
    %v1227 = vpop.f32.mrb[0].mxu0
    %v1228 = vpop.f32.mrb[0].mxu0
    %v1229 = vadd.f32 %v853, %v1228
    %v1230 = vpop.f32.mrb[0].mxu0
    %1231 = vmatprep.mubr.bf16.mxu0 0
    %1232 = vmatmul.mubr.bf16.gmra.mrb[0].mxu0 %v1064
    %v1233 = vpop.f32.mrb[0].mxu0
    %v1234 = vadd.f32 %v853, %v1233
    %v1235 = vpop.f32.mrb[0].mxu0
    %v1236 = vpop.f32.mrb[0].mxu0
    %v1237 = vadd.f32 %v853, %v1236
    %v1238 = vpop.f32.mrb[0].mxu0
    %1239 = vmatprep.mubr.bf16.mxu0 0
    %1240 = vmatmul.mubr.bf16.gmra.mrb[0].mxu0 %v1067
    %v1241 = vpop.f32.mrb[0].mxu0
    %v1242 = vadd.f32 %v853, %v1241
    %v1243 = vpop.f32.mrb[0].mxu0
    %v1244 = vpop.f32.mrb[0].mxu0
    %v1245 = vadd.f32 %v853, %v1244
    %v1246 = vpop.f32.mrb[0].mxu0
    %1247 = vmatprep.mubr.bf16.mxu0 0
    %1248 = vmatmul.mubr.bf16.gmra.mrb[0].mxu0 %v1070
    %v1249 = vpop.f32.mrb[0].mxu0
    %v1250 = vadd.f32 %v853, %v1249
    %v1251 = vpop.f32.mrb[0].mxu0
    %v1252 = vpop.f32.mrb[0].mxu0
    %v1253 = vadd.f32 %v853, %v1252
    %v1254 = vpop.f32.mrb[0].mxu0
    %1255 = vmatprep.mubr.bf16.mxu0 0
    %1256 = vmatmul.mubr.bf16.gmra.mrb[0].mxu0 %v1073
    %v1257 = vpop.f32.mrb[0].mxu0
    %v1258 = vadd.f32 %v853, %v1257
    %v1259 = vpop.f32.mrb[0].mxu0
    %v1260 = vpop.f32.mrb[0].mxu0
    %v1261 = vadd.f32 %v853, %v1260
    %v1262 = vpop.f32.mrb[0].mxu0
    %1263 = vmatprep.mubr.bf16.mxu0 0
    %1264 = vmatmul.mubr.bf16.gmra.mrb[0].mxu0 %v1076
    %v1265 = vpop.f32.mrb[0].mxu0
    %v1266 = vadd.f32 %v853, %v1265
    %v1267 = vpop.f32.mrb[0].mxu0
    %v1268 = vpop.f32.mrb[0].mxu0
    %v1269 = vadd.f32 %v853, %v1268
    %v1270 = vpop.f32.mrb[0].mxu0
    %1271 = vmatprep.mubr.bf16.mxu0 0
    %1272 = vmatmul.mubr.bf16.gmra.mrb[0].mxu0 %v1079
    %v1273 = vpop.f32.mrb[0].mxu0
    %v1274 = vadd.f32 %v853, %v1273
    %v1275 = vpop.f32.mrb[0].mxu0
    %v1276 = vpop.f32.mrb[0].mxu0
    %v1277 = vadd.f32 %v853, %v1276
    %v1278 = vpop.f32.mrb[0].mxu0
    %1279 = vmatprep.mubr.bf16.mxu0 0
    %1280 = vmatmul.mubr.bf16.gmra.mrb[0].mxu0 %v1082
    %v1281 = vpop.f32.mrb[0].mxu0
    %v1282 = vadd.f32 %v853, %v1281
    %v1283 = vpop.f32.mrb[0].mxu0
    %v1284 = vpop.f32.mrb[0].mxu0
    %v1285 = vadd.f32 %v853, %v1284
    %v1286 = vpop.f32.mrb[0].mxu0
    %1287 = vmatprep.mubr.bf16.mxu0 0
    %1288 = vmatmul.mubr.bf16.gmra.mrb[0].mxu0 %v1085
    %v1289 = vpop.f32.mrb[0].mxu0
    %v1290 = vadd.f32 %v853, %v1289
    %v1291 = vpop.f32.mrb[0].mxu0
    %v1292 = vpop.f32.mrb[0].mxu0
    %v1293 = vadd.f32 %v853, %v1292
    %v1294 = vpop.f32.mrb[0].mxu0
    %1295 = vmatprep.mubr.bf16.mxu0 0
    %1296 = vmatmul.mubr.bf16.gmra.mrb[0].mxu0 %v1088
    %v1297 = vpop.f32.mrb[0].mxu0
    %v1298 = vadd.f32 %v853, %v1297
    %v1299 = vpop.f32.mrb[0].mxu0
    %v1300 = vpop.f32.mrb[0].mxu0
    %v1301 = vadd.f32 %v853, %v1300
    %v1302 = vpop.f32.mrb[0].mxu0
    %1303 = vmatprep.mubr.bf16.mxu0 0
    %1304 = vmatmul.mubr.bf16.gmra.mrb[0].mxu0 %v1091
    %v1305 = vpop.f32.mrb[0].mxu0
    %v1306 = vadd.f32 %v853, %v1305
    %v1307 = vpop.f32.mrb[0].mxu0
    %v1308 = vpop.f32.mrb[0].mxu0
    %v1309 = vadd.f32 %v853, %v1308
    %v1310 = vpop.f32.mrb[0].mxu0
    %1311 = vmatprep.mubr.bf16.mxu0 0
    %1312 = vmatmul.mubr.bf16.gmra.mrb[0].mxu0 %v1094
    %v1313 = vpop.f32.mrb[0].mxu0
    %v1314 = vadd.f32 %v853, %v1313
    %v1315 = vpop.f32.mrb[0].mxu0
    %v1316 = vpop.f32.mrb[0].mxu0
    %v1317 = vadd.f32 %v853, %v1316
    %v1318 = vpop.f32.mrb[0].mxu0
    %1319 = vmatprep.mubr.bf16.mxu0 0
    %1320 = vmatmul.mubr.bf16.gmra.mrb[0].mxu0 %v1097
    %v1321 = vpop.f32.mrb[0].mxu0
    %v1322 = vadd.f32 %v853, %v1321
    %v1323 = vpop.f32.mrb[0].mxu0
    %v1324 = vpop.f32.mrb[0].mxu0
    %v1325 = vadd.f32 %v853, %v1324
    %v1326 = vpop.f32.mrb[0].mxu0
    %1327 = vmatprep.mubr.bf16.mxu0 0
    %1328 = vmatmul.mubr.bf16.gmra.mrb[0].mxu0 %v1100
    %v1329 = vpop.f32.mrb[0].mxu0
    %v1330 = vadd.f32 %v853, %v1329
    %v1331 = vpop.f32.mrb[0].mxu0
    %v1332 = vpop.f32.mrb[0].mxu0
    %v1333 = vadd.f32 %v853, %v1332
    %v1334 = vpop.f32.mrb[0].mxu0
    %1335 = vmatprep.mubr.bf16.mxu0 0
    %1336 = vmatmul.mubr.bf16.gmra.mrb[0].mxu0 %v1103
    %v1337 = vpop.f32.mrb[0].mxu0
    %v1338 = vadd.f32 %v853, %v1337
    %v1339 = vpop.f32.mrb[0].mxu0
    %v1340 = vpop.f32.mrb[0].mxu0
    %v1341 = vadd.f32 %v853, %v1340
    %v1342 = vpop.f32.mrb[0].mxu0
    %1343 = vmatprep.mubr.bf16.mxu0 0
    %1344 = vmatmul.mubr.bf16.gmra.mrb[0].mxu0 %v1106
    %v1345 = vpop.f32.mrb[0].mxu0
    %v1346 = vadd.f32 %v853, %v1345
    %v1347 = vpop.f32.mrb[0].mxu0
    %v1348 = vpop.f32.mrb[0].mxu0
    %v1349 = vadd.f32 %v853, %v1348
    %v1350 = vpop.f32.mrb[0].mxu0
    %1351 = vmatprep.mubr.bf16.mxu0 0
    %1352 = vmatmul.mubr.bf16.gmra.mrb[0].mxu0 %v1109
    %v1353 = vpop.f32.mrb[0].mxu0
    %v1354 = vadd.f32 %v853, %v1353
    %v1355 = vpop.f32.mrb[0].mxu0
    %v1356 = vpop.f32.mrb[0].mxu0
    %v1357 = vadd.f32 %v853, %v1356
    %v1358 = vpop.f32.mrb[0].mxu0
    %1359 = vmatprep.mubr.bf16.mxu0 0
    %1360 = vmatmul.mubr.bf16.gmra.mrb[0].mxu0 %v1112
    %v1361 = vpop.f32.mrb[0].mxu0
    %v1362 = vadd.f32 %v853, %v1361
    %v1363 = vpop.f32.mrb[0].mxu0
    %v1364 = vpop.f32.mrb[0].mxu0
    %v1365 = vadd.f32 %v853, %v1364
    %v1366 = vpop.f32.mrb[0].mxu0
    %1367 = vmatprep.mubr.bf16.mxu0 0
    %1368 = vmatmul.mubr.bf16.gmra.mrb[0].mxu0 %v1115
    %v1369 = vpop.f32.mrb[0].mxu0
    %v1370 = vadd.f32 %v853, %v1369
    %v1371 = vpop.f32.mrb[0].mxu0
    %v1372 = vpop.f32.mrb[0].mxu0
    %v1373 = vadd.f32 %v853, %v1372
    %v1374 = vpop.f32.mrb[0].mxu0
    %1375 = vmatprep.mubr.bf16.mxu0 0
    %1376 = vmatmul.mubr.bf16.gmra.mrb[0].mxu0 %v1118
    %v1377 = vpop.f32.mrb[0].mxu0
    %v1378 = vadd.f32 %v853, %v1377
    %v1379 = vpop.f32.mrb[0].mxu0
    %v1380 = vpop.f32.mrb[0].mxu0
    %v1381 = vadd.f32 %v853, %v1380
    %v1382 = vpop.f32.mrb[0].mxu0
    %1383 = vmatprep.mubr.bf16.mxu0 0
    %1384 = vmatmul.mubr.bf16.gmra.mrb[0].mxu0 %v1121
    %v1385 = vpop.f32.mrb[0].mxu0
    %v1386 = vadd.f32 %v853, %v1385
    %v1387 = vpop.f32.mrb[0].mxu0
    %v1388 = vpop.f32.mrb[0].mxu0
    %v1389 = vadd.f32 %v853, %v1388
    %v1390 = vpop.f32.mrb[0].mxu0
    %1391 = vmatprep.mubr.bf16.mxu0 0
    %1392 = vmatmul.mubr.bf16.gmra.mrb[0].mxu0 %v1124
    %v1393 = vpop.f32.mrb[0].mxu0
    %v1394 = vadd.f32 %v853, %v1393
    %v1395 = vpop.f32.mrb[0].mxu0
    %v1396 = vpop.f32.mrb[0].mxu0
    %v1397 = vadd.f32 %v853, %v1396
    %v1398 = vpop.f32.mrb[0].mxu0
    %1399 = vmatprep.mubr.bf16.mxu0 0
    %1400 = vmatmul.mubr.bf16.gmra.mrb[0].mxu0 %v1127
    %v1401 = vpop.f32.mrb[0].mxu0
    %v1402 = vadd.f32 %v853, %v1401
    %v1403 = vpop.f32.mrb[0].mxu0
    %v1404 = vpop.f32.mrb[0].mxu0
    %v1405 = vadd.f32 %v853, %v1404
    %v1406 = vpop.f32.mrb[0].mxu0
    %1407 = vmatprep.mubr.bf16.mxu0 0
    %1408 = vmatmul.mubr.bf16.gmra.mrb[0].mxu0 %v1130
    %v1409 = vpop.f32.mrb[0].mxu0
    %v1410 = vadd.f32 %v853, %v1409
    %v1411 = vpop.f32.mrb[0].mxu0
    %v1412 = vpop.f32.mrb[0].mxu0
    %v1413 = vadd.f32 %v853, %v1412
    %v1414 = vpop.f32.mrb[0].mxu0
    %1415 = vmatprep.mubr.bf16.mxu0 0
    %1416 = vmatmul.mubr.bf16.gmra.mrb[0].mxu0 %v1133
    %v1417 = vpop.f32.mrb[0].mxu0
    %v1418 = vadd.f32 %v853, %v1417
    %v1419 = vpop.f32.mrb[0].mxu0
    %v1420 = vpop.f32.mrb[0].mxu0
    %v1421 = vadd.f32 %v853, %v1420
    %v1422 = vpop.f32.mrb[0].mxu0
    %1423 = vdwg.mxu0
    %1424 = vrot.lane.b32.xlu0 %v522, 64
    %v1425 = vpop.permute.xlu0 %1424
    %1426 = vrot.lane.b32.xlu0 %v525, 64
    %v1427 = vpop.permute.xlu0 %1426
    %1428 = vrot.lane.b32.xlu0 %v530, 64
    %v1429 = vpop.permute.xlu0 %1428
    %1430 = vrot.lane.b32.xlu0 %v533, 64
    %v1431 = vpop.permute.xlu0 %1430
    %1432 = vrot.lane.b32.xlu0 %v538, 64
    %v1433 = vpop.permute.xlu0 %1432
    %1434 = vrot.lane.b32.xlu0 %v541, 64
    %v1435 = vpop.permute.xlu0 %1434
    %1436 = vrot.lane.b32.xlu0 %v546, 64
    %v1437 = vpop.permute.xlu0 %1436
    %1438 = vrot.lane.b32.xlu0 %v549, 64
    %v1439 = vpop.permute.xlu0 %1438
    %1440 = vrot.lane.b32.xlu0 %v554, 64
    %v1441 = vpop.permute.xlu0 %1440
    %1442 = vrot.lane.b32.xlu0 %v557, 64
    %v1443 = vpop.permute.xlu0 %1442
    %1444 = vrot.lane.b32.xlu0 %v562, 64
    %v1445 = vpop.permute.xlu0 %1444
    %1446 = vrot.lane.b32.xlu0 %v565, 64
    %v1447 = vpop.permute.xlu0 %1446
    %1448 = vrot.lane.b32.xlu0 %v570, 64
    %v1449 = vpop.permute.xlu0 %1448
    %1450 = vrot.lane.b32.xlu0 %v573, 64
    %v1451 = vpop.permute.xlu0 %1450
    %1452 = vrot.lane.b32.xlu0 %v578, 64
    %v1453 = vpop.permute.xlu0 %1452
    %1454 = vrot.lane.b32.xlu0 %v581, 64
    %v1455 = vpop.permute.xlu0 %1454
    %1456 = vrot.lane.b32.xlu0 %v586, 64
    %v1457 = vpop.permute.xlu0 %1456
    %1458 = vrot.lane.b32.xlu0 %v589, 64
    %v1459 = vpop.permute.xlu0 %1458
    %1460 = vrot.lane.b32.xlu0 %v594, 64
    %v1461 = vpop.permute.xlu0 %1460
    %1462 = vrot.lane.b32.xlu0 %v597, 64
    %v1463 = vpop.permute.xlu0 %1462
    %1464 = vrot.lane.b32.xlu0 %v602, 64
    %v1465 = vpop.permute.xlu0 %1464
    %1466 = vrot.lane.b32.xlu0 %v605, 64
    %v1467 = vpop.permute.xlu0 %1466
    %1468 = vrot.lane.b32.xlu0 %v610, 64
    %v1469 = vpop.permute.xlu0 %1468
    %1470 = vrot.lane.b32.xlu0 %v613, 64
    %v1471 = vpop.permute.xlu0 %1470
    %1472 = vrot.lane.b32.xlu0 %v618, 64
    %v1473 = vpop.permute.xlu0 %1472
    %1474 = vrot.lane.b32.xlu0 %v621, 64
    %v1475 = vpop.permute.xlu0 %1474
    %1476 = vrot.lane.b32.xlu0 %v626, 64
    %v1477 = vpop.permute.xlu0 %1476
    %1478 = vrot.lane.b32.xlu0 %v629, 64
    %v1479 = vpop.permute.xlu0 %1478
    %1480 = vrot.lane.b32.xlu0 %v634, 64
    %v1481 = vpop.permute.xlu0 %1480
    %1482 = vrot.lane.b32.xlu0 %v637, 64
    %v1483 = vpop.permute.xlu0 %1482
    %1484 = vrot.lane.b32.xlu0 %v642, 64
    %v1485 = vpop.permute.xlu0 %1484
    %1486 = vrot.lane.b32.xlu0 %v645, 64
    %v1487 = vpop.permute.xlu0 %1486
    %1488 = vrot.lane.b32.xlu0 %v650, 64
    %v1489 = vpop.permute.xlu0 %1488
    %1490 = vrot.lane.b32.xlu0 %v653, 64
    %v1491 = vpop.permute.xlu0 %1490
    %1492 = vrot.lane.b32.xlu0 %v658, 64
    %v1493 = vpop.permute.xlu0 %1492
    %1494 = vrot.lane.b32.xlu0 %v661, 64
    %v1495 = vpop.permute.xlu0 %1494
    %1496 = vrot.lane.b32.xlu0 %v666, 64
    %v1497 = vpop.permute.xlu0 %1496
    %1498 = vrot.lane.b32.xlu0 %v669, 64
    %v1499 = vpop.permute.xlu0 %1498
    %1500 = vrot.lane.b32.xlu0 %v674, 64
    %v1501 = vpop.permute.xlu0 %1500
    %1502 = vrot.lane.b32.xlu0 %v677, 64
    %v1503 = vpop.permute.xlu0 %1502
    %1504 = vrot.lane.b32.xlu0 %v682, 64
    %v1505 = vpop.permute.xlu0 %1504
    %1506 = vrot.lane.b32.xlu0 %v685, 64
    %v1507 = vpop.permute.xlu0 %1506
    %1508 = vrot.lane.b32.xlu0 %v690, 64
    %v1509 = vpop.permute.xlu0 %1508
    %1510 = vrot.lane.b32.xlu0 %v693, 64
    %v1511 = vpop.permute.xlu0 %1510
    %1512 = vrot.lane.b32.xlu0 %v698, 64
    %v1513 = vpop.permute.xlu0 %1512
    %1514 = vrot.lane.b32.xlu0 %v701, 64
    %v1515 = vpop.permute.xlu0 %1514
    %1516 = vrot.lane.b32.xlu0 %v706, 64
    %v1517 = vpop.permute.xlu0 %1516
    %1518 = vrot.lane.b32.xlu0 %v709, 64
    %v1519 = vpop.permute.xlu0 %1518
    %1520 = vrot.lane.b32.xlu0 %v714, 64
    %v1521 = vpop.permute.xlu0 %1520
    %1522 = vrot.lane.b32.xlu0 %v717, 64
    %v1523 = vpop.permute.xlu0 %1522
    %1524 = vrot.lane.b32.xlu0 %v722, 64
    %v1525 = vpop.permute.xlu0 %1524
    %1526 = vrot.lane.b32.xlu0 %v725, 64
    %v1527 = vpop.permute.xlu0 %1526
    %1528 = vrot.lane.b32.xlu0 %v730, 64
    %v1529 = vpop.permute.xlu0 %1528
    %1530 = vrot.lane.b32.xlu0 %v733, 64
    %v1531 = vpop.permute.xlu0 %1530
    %1532 = vrot.lane.b32.xlu0 %v738, 64
    %v1533 = vpop.permute.xlu0 %1532
    %1534 = vrot.lane.b32.xlu0 %v741, 64
    %v1535 = vpop.permute.xlu0 %1534
    %1536 = vrot.lane.b32.xlu0 %v746, 64
    %v1537 = vpop.permute.xlu0 %1536
    %1538 = vrot.lane.b32.xlu0 %v749, 64
    %v1539 = vpop.permute.xlu0 %1538
    %1540 = vrot.lane.b32.xlu0 %v754, 64
    %v1541 = vpop.permute.xlu0 %1540
    %1542 = vrot.lane.b32.xlu0 %v757, 64
    %v1543 = vpop.permute.xlu0 %1542
    %1544 = vrot.lane.b32.xlu0 %v762, 64
    %v1545 = vpop.permute.xlu0 %1544
    %1546 = vrot.lane.b32.xlu0 %v765, 64
    %v1547 = vpop.permute.xlu0 %1546
    %1548 = vrot.lane.b32.xlu0 %v770, 64
    %v1549 = vpop.permute.xlu0 %1548
    %1550 = vrot.lane.b32.xlu0 %v773, 64
    %v1551 = vpop.permute.xlu0 %1550
    %v1552 = vmul.f32 %v522, %v1425
    %v1553 = vmul.f32 %v525, %v1427
    %v1554 = vmul.f32 %v530, %v1429
    %v1555 = vmul.f32 %v533, %v1431
    %v1556 = vmul.f32 %v538, %v1433
    %v1557 = vmul.f32 %v541, %v1435
    %v1558 = vmul.f32 %v546, %v1437
    %v1559 = vmul.f32 %v549, %v1439
    %v1560 = vmul.f32 %v554, %v1441
    %v1561 = vmul.f32 %v557, %v1443
    %v1562 = vmul.f32 %v562, %v1445
    %v1563 = vmul.f32 %v565, %v1447
    %v1564 = vmul.f32 %v570, %v1449
    %v1565 = vmul.f32 %v573, %v1451
    %v1566 = vmul.f32 %v578, %v1453
    %v1567 = vmul.f32 %v581, %v1455
    %v1568 = vmul.f32 %v586, %v1457
    %v1569 = vmul.f32 %v589, %v1459
    %v1570 = vmul.f32 %v594, %v1461
    %v1571 = vmul.f32 %v597, %v1463
    %v1572 = vmul.f32 %v602, %v1465
    %v1573 = vmul.f32 %v605, %v1467
    %v1574 = vmul.f32 %v610, %v1469
    %v1575 = vmul.f32 %v613, %v1471
    %v1576 = vmul.f32 %v618, %v1473
    %v1577 = vmul.f32 %v621, %v1475
    %v1578 = vmul.f32 %v626, %v1477
    %v1579 = vmul.f32 %v629, %v1479
    %v1580 = vmul.f32 %v634, %v1481
    %v1581 = vmul.f32 %v637, %v1483
    %v1582 = vmul.f32 %v642, %v1485
    %v1583 = vmul.f32 %v645, %v1487
    %v1584 = vmul.f32 %v650, %v1489
    %v1585 = vmul.f32 %v653, %v1491
    %v1586 = vmul.f32 %v658, %v1493
    %v1587 = vmul.f32 %v661, %v1495
    %v1588 = vmul.f32 %v666, %v1497
    %v1589 = vmul.f32 %v669, %v1499
    %v1590 = vmul.f32 %v674, %v1501
    %v1591 = vmul.f32 %v677, %v1503
    %v1592 = vmul.f32 %v682, %v1505
    %v1593 = vmul.f32 %v685, %v1507
    %v1594 = vmul.f32 %v690, %v1509
    %v1595 = vmul.f32 %v693, %v1511
    %v1596 = vmul.f32 %v698, %v1513
    %v1597 = vmul.f32 %v701, %v1515
    %v1598 = vmul.f32 %v706, %v1517
    %v1599 = vmul.f32 %v709, %v1519
    %v1600 = vmul.f32 %v714, %v1521
    %v1601 = vmul.f32 %v717, %v1523
    %v1602 = vmul.f32 %v722, %v1525
    %v1603 = vmul.f32 %v725, %v1527
    %v1604 = vmul.f32 %v730, %v1529
    %v1605 = vmul.f32 %v733, %v1531
    %v1606 = vmul.f32 %v738, %v1533
    %v1607 = vmul.f32 %v741, %v1535
    %v1608 = vmul.f32 %v746, %v1537
    %v1609 = vmul.f32 %v749, %v1539
    %v1610 = vmul.f32 %v754, %v1541
    %v1611 = vmul.f32 %v757, %v1543
    %v1612 = vmul.f32 %v762, %v1545
    %v1613 = vmul.f32 %v765, %v1547
    %v1614 = vmul.f32 %v770, %v1549
    %v1615 = vmul.f32 %v773, %v1551
    %v1616 = vadd.f32 %v1552, %v1170
    %v1617 = vadd.f32 %v1553, %v1173
    %v1618 = vadd.f32 %v1554, %v1178
    %v1619 = vadd.f32 %v1555, %v1181
    %v1620 = vadd.f32 %v1556, %v1186
    %v1621 = vadd.f32 %v1557, %v1189
    %v1622 = vadd.f32 %v1558, %v1194
    %v1623 = vadd.f32 %v1559, %v1197
    %v1624 = vadd.f32 %v1560, %v1202
    %v1625 = vadd.f32 %v1561, %v1205
    %v1626 = vadd.f32 %v1562, %v1210
    %v1627 = vadd.f32 %v1563, %v1213
    %v1628 = vadd.f32 %v1564, %v1218
    %v1629 = vadd.f32 %v1565, %v1221
    %v1630 = vadd.f32 %v1566, %v1226
    %v1631 = vadd.f32 %v1567, %v1229
    %v1632 = vadd.f32 %v1568, %v1234
    %v1633 = vadd.f32 %v1569, %v1237
    %v1634 = vadd.f32 %v1570, %v1242
    %v1635 = vadd.f32 %v1571, %v1245
    %v1636 = vadd.f32 %v1572, %v1250
    %v1637 = vadd.f32 %v1573, %v1253
    %v1638 = vadd.f32 %v1574, %v1258
    %v1639 = vadd.f32 %v1575, %v1261
    %v1640 = vadd.f32 %v1576, %v1266
    %v1641 = vadd.f32 %v1577, %v1269
    %v1642 = vadd.f32 %v1578, %v1274
    %v1643 = vadd.f32 %v1579, %v1277
    %v1644 = vadd.f32 %v1580, %v1282
    %v1645 = vadd.f32 %v1581, %v1285
    %v1646 = vadd.f32 %v1582, %v1290
    %v1647 = vadd.f32 %v1583, %v1293
    %v1648 = vadd.f32 %v1584, %v1298
    %v1649 = vadd.f32 %v1585, %v1301
    %v1650 = vadd.f32 %v1586, %v1306
    %v1651 = vadd.f32 %v1587, %v1309
    %v1652 = vadd.f32 %v1588, %v1314
    %v1653 = vadd.f32 %v1589, %v1317
    %v1654 = vadd.f32 %v1590, %v1322
    %v1655 = vadd.f32 %v1591, %v1325
    %v1656 = vadd.f32 %v1592, %v1330
    %v1657 = vadd.f32 %v1593, %v1333
    %v1658 = vadd.f32 %v1594, %v1338
    %v1659 = vadd.f32 %v1595, %v1341
    %v1660 = vadd.f32 %v1596, %v1346
    %v1661 = vadd.f32 %v1597, %v1349
    %v1662 = vadd.f32 %v1598, %v1354
    %v1663 = vadd.f32 %v1599, %v1357
    %v1664 = vadd.f32 %v1600, %v1362
    %v1665 = vadd.f32 %v1601, %v1365
    %v1666 = vadd.f32 %v1602, %v1370
    %v1667 = vadd.f32 %v1603, %v1373
    %v1668 = vadd.f32 %v1604, %v1378
    %v1669 = vadd.f32 %v1605, %v1381
    %v1670 = vadd.f32 %v1606, %v1386
    %v1671 = vadd.f32 %v1607, %v1389
    %v1672 = vadd.f32 %v1608, %v1394
    %v1673 = vadd.f32 %v1609, %v1397
    %v1674 = vadd.f32 %v1610, %v1402
    %v1675 = vadd.f32 %v1611, %v1405
    %v1676 = vadd.f32 %v1612, %v1410
    %v1677 = vadd.f32 %v1613, %v1413
    %v1678 = vadd.f32 %v1614, %v1418
    %v1679 = vadd.f32 %v1615, %v1421
    %v1680 = vadd.f32 %v1616, %v1617
    %v1681 = vadd.f32 %v1680, %v1618
    %v1682 = vadd.f32 %v1681, %v1619
    %v1683 = vadd.f32 %v1682, %v1620
    %v1684 = vadd.f32 %v1683, %v1621
    %v1685 = vadd.f32 %v1684, %v1622
    %v1686 = vadd.f32 %v1685, %v1623
    %v1687 = vadd.f32 %v1686, %v1624
    %v1688 = vadd.f32 %v1687, %v1625
    %v1689 = vadd.f32 %v1688, %v1626
    %v1690 = vadd.f32 %v1689, %v1627
    %v1691 = vadd.f32 %v1690, %v1628
    %v1692 = vadd.f32 %v1691, %v1629
    %v1693 = vadd.f32 %v1692, %v1630
    %v1694 = vadd.f32 %v1693, %v1631
    %v1695 = vadd.f32 %v1694, %v1632
    %v1696 = vadd.f32 %v1695, %v1633
    %v1697 = vadd.f32 %v1696, %v1634
    %v1698 = vadd.f32 %v1697, %v1635
    %v1699 = vadd.f32 %v1698, %v1636
    %v1700 = vadd.f32 %v1699, %v1637
    %v1701 = vadd.f32 %v1700, %v1638
    %v1702 = vadd.f32 %v1701, %v1639
    %v1703 = vadd.f32 %v1702, %v1640
    %v1704 = vadd.f32 %v1703, %v1641
    %v1705 = vadd.f32 %v1704, %v1642
    %v1706 = vadd.f32 %v1705, %v1643
    %v1707 = vadd.f32 %v1706, %v1644
    %v1708 = vadd.f32 %v1707, %v1645
    %v1709 = vadd.f32 %v1708, %v1646
    %v1710 = vadd.f32 %v1709, %v1647
    %v1711 = vadd.f32 %v1710, %v1648
    %v1712 = vadd.f32 %v1711, %v1649
    %v1713 = vadd.f32 %v1712, %v1650
    %v1714 = vadd.f32 %v1713, %v1651
    %v1715 = vadd.f32 %v1714, %v1652
    %v1716 = vadd.f32 %v1715, %v1653
    %v1717 = vadd.f32 %v1716, %v1654
    %v1718 = vadd.f32 %v1717, %v1655
    %v1719 = vadd.f32 %v1718, %v1656
    %v1720 = vadd.f32 %v1719, %v1657
    %v1721 = vadd.f32 %v1720, %v1658
    %v1722 = vadd.f32 %v1721, %v1659
    %v1723 = vadd.f32 %v1722, %v1660
    %v1724 = vadd.f32 %v1723, %v1661
    %v1725 = vadd.f32 %v1724, %v1662
    %v1726 = vadd.f32 %v1725, %v1663
    %v1727 = vadd.f32 %v1726, %v1664
    %v1728 = vadd.f32 %v1727, %v1665
    %v1729 = vadd.f32 %v1728, %v1666
    %v1730 = vadd.f32 %v1729, %v1667
    %v1731 = vadd.f32 %v1730, %v1668
    %v1732 = vadd.f32 %v1731, %v1669
    %v1733 = vadd.f32 %v1732, %v1670
    %v1734 = vadd.f32 %v1733, %v1671
    %v1735 = vadd.f32 %v1734, %v1672
    %v1736 = vadd.f32 %v1735, %v1673
    %v1737 = vadd.f32 %v1736, %v1674
    %v1738 = vadd.f32 %v1737, %v1675
    %v1739 = vadd.f32 %v1738, %v1676
    %v1740 = vadd.f32 %v1739, %v1677
    %v1741 = vadd.f32 %v1740, %v1678
    %v1742 = vadd.f32 %v1741, %v1679
    %v1743 = vrot.slane %v1742, 4
    %v1744 = vadd.f32 %v1742, %v1743
    %v1745 = vrot.slane %v1744, 2
    %v1746 = vadd.f32 %v1744, %v1745
    %v1747 = vrot.slane %v1746, 1
    %v1748 = vadd.f32 %v1746, %v1747
    %v1749 = vmul.f32 %v1616, %v1616
    %v1750 = vmul.f32 %v1617, %v1617
    %v1751 = vmul.f32 %v1618, %v1618
    %v1752 = vmul.f32 %v1619, %v1619
    %v1753 = vmul.f32 %v1620, %v1620
    %v1754 = vmul.f32 %v1621, %v1621
    %v1755 = vmul.f32 %v1622, %v1622
    %v1756 = vmul.f32 %v1623, %v1623
    %v1757 = vmul.f32 %v1624, %v1624
    %v1758 = vmul.f32 %v1625, %v1625
    %v1759 = vmul.f32 %v1626, %v1626
    %v1760 = vmul.f32 %v1627, %v1627
    %v1761 = vmul.f32 %v1628, %v1628
    %v1762 = vmul.f32 %v1629, %v1629
    %v1763 = vmul.f32 %v1630, %v1630
    %v1764 = vmul.f32 %v1631, %v1631
    %v1765 = vmul.f32 %v1632, %v1632
    %v1766 = vmul.f32 %v1633, %v1633
    %v1767 = vmul.f32 %v1634, %v1634
    %v1768 = vmul.f32 %v1635, %v1635
    %v1769 = vmul.f32 %v1636, %v1636
    %v1770 = vmul.f32 %v1637, %v1637
    %v1771 = vmul.f32 %v1638, %v1638
    %v1772 = vmul.f32 %v1639, %v1639
    %v1773 = vmul.f32 %v1640, %v1640
    %v1774 = vmul.f32 %v1641, %v1641
    %v1775 = vmul.f32 %v1642, %v1642
    %v1776 = vmul.f32 %v1643, %v1643
    %v1777 = vmul.f32 %v1644, %v1644
    %v1778 = vmul.f32 %v1645, %v1645
    %v1779 = vmul.f32 %v1646, %v1646
    %v1780 = vmul.f32 %v1647, %v1647
    %v1781 = vmul.f32 %v1648, %v1648
    %v1782 = vmul.f32 %v1649, %v1649
    %v1783 = vmul.f32 %v1650, %v1650
    %v1784 = vmul.f32 %v1651, %v1651
    %v1785 = vmul.f32 %v1652, %v1652
    %v1786 = vmul.f32 %v1653, %v1653
    %v1787 = vmul.f32 %v1654, %v1654
    %v1788 = vmul.f32 %v1655, %v1655
    %v1789 = vmul.f32 %v1656, %v1656
    %v1790 = vmul.f32 %v1657, %v1657
    %v1791 = vmul.f32 %v1658, %v1658
    %v1792 = vmul.f32 %v1659, %v1659
    %v1793 = vmul.f32 %v1660, %v1660
    %v1794 = vmul.f32 %v1661, %v1661
    %v1795 = vmul.f32 %v1662, %v1662
    %v1796 = vmul.f32 %v1663, %v1663
    %v1797 = vmul.f32 %v1664, %v1664
    %v1798 = vmul.f32 %v1665, %v1665
    %v1799 = vmul.f32 %v1666, %v1666
    %v1800 = vmul.f32 %v1667, %v1667
    %v1801 = vmul.f32 %v1668, %v1668
    %v1802 = vmul.f32 %v1669, %v1669
    %v1803 = vmul.f32 %v1670, %v1670
    %v1804 = vmul.f32 %v1671, %v1671
    %v1805 = vmul.f32 %v1672, %v1672
    %v1806 = vmul.f32 %v1673, %v1673
    %v1807 = vmul.f32 %v1674, %v1674
    %v1808 = vmul.f32 %v1675, %v1675
    %v1809 = vmul.f32 %v1676, %v1676
    %v1810 = vmul.f32 %v1677, %v1677
    %v1811 = vmul.f32 %v1678, %v1678
    %v1812 = vmul.f32 %v1679, %v1679
    %v1813 = vadd.f32 %v1749, %v1750
    %v1814 = vadd.f32 %v1813, %v1751
    %v1815 = vadd.f32 %v1814, %v1752
    %v1816 = vadd.f32 %v1815, %v1753
    %v1817 = vadd.f32 %v1816, %v1754
    %v1818 = vadd.f32 %v1817, %v1755
    %v1819 = vadd.f32 %v1818, %v1756
    %v1820 = vadd.f32 %v1819, %v1757
    %v1821 = vadd.f32 %v1820, %v1758
    %v1822 = vadd.f32 %v1821, %v1759
    %v1823 = vadd.f32 %v1822, %v1760
    %v1824 = vadd.f32 %v1823, %v1761
    %v1825 = vadd.f32 %v1824, %v1762
    %v1826 = vadd.f32 %v1825, %v1763
    %v1827 = vadd.f32 %v1826, %v1764
    %v1828 = vadd.f32 %v1827, %v1765
    %v1829 = vadd.f32 %v1828, %v1766
    %v1830 = vadd.f32 %v1829, %v1767
    %v1831 = vadd.f32 %v1830, %v1768
    %v1832 = vadd.f32 %v1831, %v1769
    %v1833 = vadd.f32 %v1832, %v1770
    %v1834 = vadd.f32 %v1833, %v1771
    %v1835 = vadd.f32 %v1834, %v1772
    %v1836 = vadd.f32 %v1835, %v1773
    %v1837 = vadd.f32 %v1836, %v1774
    %v1838 = vadd.f32 %v1837, %v1775
    %v1839 = vadd.f32 %v1838, %v1776
    %v1840 = vadd.f32 %v1839, %v1777
    %v1841 = vadd.f32 %v1840, %v1778
    %v1842 = vadd.f32 %v1841, %v1779
    %v1843 = vadd.f32 %v1842, %v1780
    %v1844 = vadd.f32 %v1843, %v1781
    %v1845 = vadd.f32 %v1844, %v1782
    %v1846 = vadd.f32 %v1845, %v1783
    %v1847 = vadd.f32 %v1846, %v1784
    %v1848 = vadd.f32 %v1847, %v1785
    %v1849 = vadd.f32 %v1848, %v1786
    %v1850 = vadd.f32 %v1849, %v1787
    %v1851 = vadd.f32 %v1850, %v1788
    %v1852 = vadd.f32 %v1851, %v1789
    %v1853 = vadd.f32 %v1852, %v1790
    %v1854 = vadd.f32 %v1853, %v1791
    %v1855 = vadd.f32 %v1854, %v1792
    %v1856 = vadd.f32 %v1855, %v1793
    %v1857 = vadd.f32 %v1856, %v1794
    %v1858 = vadd.f32 %v1857, %v1795
    %v1859 = vadd.f32 %v1858, %v1796
    %v1860 = vadd.f32 %v1859, %v1797
    %v1861 = vadd.f32 %v1860, %v1798
    %v1862 = vadd.f32 %v1861, %v1799
    %v1863 = vadd.f32 %v1862, %v1800
    %v1864 = vadd.f32 %v1863, %v1801
    %v1865 = vadd.f32 %v1864, %v1802
    %v1866 = vadd.f32 %v1865, %v1803
    %v1867 = vadd.f32 %v1866, %v1804
    %v1868 = vadd.f32 %v1867, %v1805
    %v1869 = vadd.f32 %v1868, %v1806
    %v1870 = vadd.f32 %v1869, %v1807
    %v1871 = vadd.f32 %v1870, %v1808
    %v1872 = vadd.f32 %v1871, %v1809
    %v1873 = vadd.f32 %v1872, %v1810
    %v1874 = vadd.f32 %v1873, %v1811
    %v1875 = vadd.f32 %v1874, %v1812
    %v1876 = vrot.slane %v1875, 4
    %v1877 = vadd.f32 %v1875, %v1876
    %v1878 = vrot.slane %v1877, 2
    %v1879 = vadd.f32 %v1877, %v1878
    %v1880 = vrot.slane %v1879, 1
    %v1881 = vadd.f32 %v1879, %v1880
    %v1882 = vrcp.pop 512.0
    %v1883 = vmul.f32 %v1748, %v1882
    %v1884 = vmul.f32 %v1881, %v1882
    %v1885 = vmul.f32 %v1883, %v1883
    %v1886 = vsub.f32 %v1884, %v1885
    %v1887 = vmax.f32 %v1886, 0.0
    %v1888 = vadd.f32 %v1887, 1e-05
    %v1889 = vrsqrt.pop %v1888
    %1890 = vst [vmem:[#allocation2] sm:$0xff] %v1616
    %1891 = vst [vmem:[#allocation2 + $0x8] sm:$0xff] %v1617
    %1892 = vst [vmem:[#allocation2 + $0x10] sm:$0xff] %v1618
    %1893 = vst [vmem:[#allocation2 + $0x18] sm:$0xff] %v1619
    %1894 = vst [vmem:[#allocation2 + $0x20] sm:$0xff] %v1620
    %1895 = vst [vmem:[#allocation2 + $0x28] sm:$0xff] %v1621
    %1896 = vst [vmem:[#allocation2 + $0x30] sm:$0xff] %v1622
    %1897 = vst [vmem:[#allocation2 + $0x38] sm:$0xff] %v1623
    %1898 = vst [vmem:[#allocation2 + $0x40] sm:$0xff] %v1624
    %1899 = vst [vmem:[#allocation2 + $0x48] sm:$0xff] %v1625
    %1900 = vst [vmem:[#allocation2 + $0x50] sm:$0xff] %v1626
    %1901 = vst [vmem:[#allocation2 + $0x58] sm:$0xff] %v1627
    %1902 = vst [vmem:[#allocation2 + $0x60] sm:$0xff] %v1628
    %1903 = vst [vmem:[#allocation2 + $0x68] sm:$0xff] %v1629
    %1904 = vst [vmem:[#allocation2 + $0x70] sm:$0xff] %v1630
    %1905 = vst [vmem:[#allocation2 + $0x78] sm:$0xff] %v1631
    %1906 = vst [vmem:[#allocation2 + $0x80] sm:$0xff] %v1632
    %1907 = vst [vmem:[#allocation2 + $0x88] sm:$0xff] %v1633
    %1908 = vst [vmem:[#allocation2 + $0x90] sm:$0xff] %v1634
    %1909 = vst [vmem:[#allocation2 + $0x98] sm:$0xff] %v1635
    %1910 = vst [vmem:[#allocation2 + $0xa0] sm:$0xff] %v1636
    %1911 = vst [vmem:[#allocation2 + $0xa8] sm:$0xff] %v1637
    %1912 = vst [vmem:[#allocation2 + $0xb0] sm:$0xff] %v1638
    %1913 = vst [vmem:[#allocation2 + $0xb8] sm:$0xff] %v1639
    %1914 = vst [vmem:[#allocation2 + $0xc0] sm:$0xff] %v1640
    %1915 = vst [vmem:[#allocation2 + $0xc8] sm:$0xff] %v1641
    %1916 = vst [vmem:[#allocation2 + $0xd0] sm:$0xff] %v1642
    %1917 = vst [vmem:[#allocation2 + $0xd8] sm:$0xff] %v1643
    %1918 = vst [vmem:[#allocation2 + $0xe0] sm:$0xff] %v1644
    %1919 = vst [vmem:[#allocation2 + $0xe8] sm:$0xff] %v1645
    %1920 = vst [vmem:[#allocation2 + $0xf0] sm:$0xff] %v1646
    %1921 = vst [vmem:[#allocation2 + $0xf8] sm:$0xff] %v1647
    %1922 = vst [vmem:[#allocation2 + $0x100] sm:$0xff] %v1648
    %1923 = vst [vmem:[#allocation2 + $0x108] sm:$0xff] %v1649
    %1924 = vst [vmem:[#allocation2 + $0x110] sm:$0xff] %v1650
    %1925 = vst [vmem:[#allocation2 + $0x118] sm:$0xff] %v1651
    %1926 = vst [vmem:[#allocation2 + $0x120] sm:$0xff] %v1652
    %1927 = vst [vmem:[#allocation2 + $0x128] sm:$0xff] %v1653
    %1928 = vst [vmem:[#allocation2 + $0x130] sm:$0xff] %v1654
    %1929 = vst [vmem:[#allocation2 + $0x138] sm:$0xff] %v1655
    %1930 = vst [vmem:[#allocation2 + $0x140] sm:$0xff] %v1656
    %1931 = vst [vmem:[#allocation2 + $0x148] sm:$0xff] %v1657
    %1932 = vst [vmem:[#allocation2 + $0x150] sm:$0xff] %v1658
    %1933 = vst [vmem:[#allocation2 + $0x158] sm:$0xff] %v1659
    %1934 = vst [vmem:[#allocation2 + $0x160] sm:$0xff] %v1660
    %1935 = vst [vmem:[#allocation2 + $0x168] sm:$0xff] %v1661
    %1936 = vst [vmem:[#allocation2 + $0x170] sm:$0xff] %v1662
    %1937 = vst [vmem:[#allocation2 + $0x178] sm:$0xff] %v1663
    %1938 = vst [vmem:[#allocation2 + $0x180] sm:$0xff] %v1664
    %1939 = vst [vmem:[#allocation2 + $0x188] sm:$0xff] %v1665
    %1940 = vst [vmem:[#allocation2 + $0x190] sm:$0xff] %v1666
    %1941 = vst [vmem:[#allocation2 + $0x198] sm:$0xff] %v1667
    %1942 = vst [vmem:[#allocation2 + $0x1a0] sm:$0xff] %v1668
    %1943 = vst [vmem:[#allocation2 + $0x1a8] sm:$0xff] %v1669
    %1944 = vst [vmem:[#allocation2 + $0x1b0] sm:$0xff] %v1670
    %1945 = vst [vmem:[#allocation2 + $0x1b8] sm:$0xff] %v1671
    %1946 = vst [vmem:[#allocation2 + $0x1c0] sm:$0xff] %v1672
    %1947 = vst [vmem:[#allocation2 + $0x1c8] sm:$0xff] %v1673
    %1948 = vst [vmem:[#allocation2 + $0x1d0] sm:$0xff] %v1674
    %1949 = vst [vmem:[#allocation2 + $0x1d8] sm:$0xff] %v1675
    %1950 = vst [vmem:[#allocation2 + $0x1e0] sm:$0xff] %v1676
    %1951 = vst [vmem:[#allocation2 + $0x1e8] sm:$0xff] %v1677
    %1952 = vst [vmem:[#allocation2 + $0x1f0] sm:$0xff] %v1678
    %1953 = vst [vmem:[#allocation2 + $0x1f8] sm:$0xff] %v1679
    %v1954 = vld [vmem:[#allocation2] ss:$2 sm:$0xff]
    %s1955 = scalar_lea.vmem [#allocation2], 16
    %v1956 = vld [vmem:[%s1955] ss:$2 sm:$0xff]
    %s1957 = scalar_lea.vmem [#allocation2], 32
    %v1958 = vld [vmem:[%s1957] ss:$2 sm:$0xff]
    %s1959 = scalar_lea.vmem [#allocation2], 48
    %v1960 = vld [vmem:[%s1959] ss:$2 sm:$0xff]
    %s1961 = scalar_lea.vmem [#allocation2], 64
    %v1962 = vld [vmem:[%s1961] ss:$2 sm:$0xff]
    %s1963 = scalar_lea.vmem [#allocation2], 80
    %v1964 = vld [vmem:[%s1963] ss:$2 sm:$0xff]
    %s1965 = scalar_lea.vmem [#allocation2], 96
    %v1966 = vld [vmem:[%s1965] ss:$2 sm:$0xff]
    %s1967 = scalar_lea.vmem [#allocation2], 112
    %v1968 = vld [vmem:[%s1967] ss:$2 sm:$0xff]
    %s1969 = scalar_lea.vmem [#allocation2], 128
    %v1970 = vld [vmem:[%s1969] ss:$2 sm:$0xff]
    %s1971 = scalar_lea.vmem [#allocation2], 144
    %v1972 = vld [vmem:[%s1971] ss:$2 sm:$0xff]
    %s1973 = scalar_lea.vmem [#allocation2], 160
    %v1974 = vld [vmem:[%s1973] ss:$2 sm:$0xff]
    %s1975 = scalar_lea.vmem [#allocation2], 176
    %v1976 = vld [vmem:[%s1975] ss:$2 sm:$0xff]
    %s1977 = scalar_lea.vmem [#allocation2], 192
    %v1978 = vld [vmem:[%s1977] ss:$2 sm:$0xff]
    %s1979 = scalar_lea.vmem [#allocation2], 208
    %v1980 = vld [vmem:[%s1979] ss:$2 sm:$0xff]
    %s1981 = scalar_lea.vmem [#allocation2], 224
    %v1982 = vld [vmem:[%s1981] ss:$2 sm:$0xff]
    %s1983 = scalar_lea.vmem [#allocation2], 240
    %v1984 = vld [vmem:[%s1983] ss:$2 sm:$0xff]
    %s1985 = scalar_lea.vmem [#allocation2], 256
    %v1986 = vld [vmem:[%s1985] ss:$2 sm:$0xff]
    %s1987 = scalar_lea.vmem [#allocation2], 272
    %v1988 = vld [vmem:[%s1987] ss:$2 sm:$0xff]
    %s1989 = scalar_lea.vmem [#allocation2], 288
    %v1990 = vld [vmem:[%s1989] ss:$2 sm:$0xff]
    %s1991 = scalar_lea.vmem [#allocation2], 304
    %v1992 = vld [vmem:[%s1991] ss:$2 sm:$0xff]
    %s1993 = scalar_lea.vmem [#allocation2], 320
    %v1994 = vld [vmem:[%s1993] ss:$2 sm:$0xff]
    %s1995 = scalar_lea.vmem [#allocation2], 336
    %v1996 = vld [vmem:[%s1995] ss:$2 sm:$0xff]
    %s1997 = scalar_lea.vmem [#allocation2], 352
    %v1998 = vld [vmem:[%s1997] ss:$2 sm:$0xff]
    %s1999 = scalar_lea.vmem [#allocation2], 368
    %v2000 = vld [vmem:[%s1999] ss:$2 sm:$0xff]
    %s2001 = scalar_lea.vmem [#allocation2], 384
    %v2002 = vld [vmem:[%s2001] ss:$2 sm:$0xff]
    %s2003 = scalar_lea.vmem [#allocation2], 400
    %v2004 = vld [vmem:[%s2003] ss:$2 sm:$0xff]
    %s2005 = scalar_lea.vmem [#allocation2], 416
    %v2006 = vld [vmem:[%s2005] ss:$2 sm:$0xff]
    %s2007 = scalar_lea.vmem [#allocation2], 432
    %v2008 = vld [vmem:[%s2007] ss:$2 sm:$0xff]
    %s2009 = scalar_lea.vmem [#allocation2], 448
    %v2010 = vld [vmem:[%s2009] ss:$2 sm:$0xff]
    %s2011 = scalar_lea.vmem [#allocation2], 464
    %v2012 = vld [vmem:[%s2011] ss:$2 sm:$0xff]
    %s2013 = scalar_lea.vmem [#allocation2], 480
    %v2014 = vld [vmem:[%s2013] ss:$2 sm:$0xff]
    %s2015 = scalar_lea.vmem [#allocation2], 496
    %v2016 = vld [vmem:[%s2015] ss:$2 sm:$0xff]
    %s2017 = scalar_lea.vmem [#allocation2], 1
    %v2018 = vld [vmem:[%s2017] ss:$2 sm:$0xff]
    %s2019 = scalar_lea.vmem [#allocation2], 17
    %v2020 = vld [vmem:[%s2019] ss:$2 sm:$0xff]
    %s2021 = scalar_lea.vmem [#allocation2], 33
    %v2022 = vld [vmem:[%s2021] ss:$2 sm:$0xff]
    %s2023 = scalar_lea.vmem [#allocation2], 49
    %v2024 = vld [vmem:[%s2023] ss:$2 sm:$0xff]
    %s2025 = scalar_lea.vmem [#allocation2], 65
    %v2026 = vld [vmem:[%s2025] ss:$2 sm:$0xff]
    %s2027 = scalar_lea.vmem [#allocation2], 81
    %v2028 = vld [vmem:[%s2027] ss:$2 sm:$0xff]
    %s2029 = scalar_lea.vmem [#allocation2], 97
    %v2030 = vld [vmem:[%s2029] ss:$2 sm:$0xff]
    %s2031 = scalar_lea.vmem [#allocation2], 113
    %v2032 = vld [vmem:[%s2031] ss:$2 sm:$0xff]
    %s2033 = scalar_lea.vmem [#allocation2], 129
    %v2034 = vld [vmem:[%s2033] ss:$2 sm:$0xff]
    %s2035 = scalar_lea.vmem [#allocation2], 145
    %v2036 = vld [vmem:[%s2035] ss:$2 sm:$0xff]
    %s2037 = scalar_lea.vmem [#allocation2], 161
    %v2038 = vld [vmem:[%s2037] ss:$2 sm:$0xff]
    %s2039 = scalar_lea.vmem [#allocation2], 177
    %v2040 = vld [vmem:[%s2039] ss:$2 sm:$0xff]
    %s2041 = scalar_lea.vmem [#allocation2], 193
    %v2042 = vld [vmem:[%s2041] ss:$2 sm:$0xff]
    %s2043 = scalar_lea.vmem [#allocation2], 209
    %v2044 = vld [vmem:[%s2043] ss:$2 sm:$0xff]
    %s2045 = scalar_lea.vmem [#allocation2], 225
    %v2046 = vld [vmem:[%s2045] ss:$2 sm:$0xff]
    %s2047 = scalar_lea.vmem [#allocation2], 241
    %v2048 = vld [vmem:[%s2047] ss:$2 sm:$0xff]
    %s2049 = scalar_lea.vmem [#allocation2], 257
    %v2050 = vld [vmem:[%s2049] ss:$2 sm:$0xff]
    %s2051 = scalar_lea.vmem [#allocation2], 273
    %v2052 = vld [vmem:[%s2051] ss:$2 sm:$0xff]
    %s2053 = scalar_lea.vmem [#allocation2], 289
    %v2054 = vld [vmem:[%s2053] ss:$2 sm:$0xff]
    %s2055 = scalar_lea.vmem [#allocation2], 305
    %v2056 = vld [vmem:[%s2055] ss:$2 sm:$0xff]
    %s2057 = scalar_lea.vmem [#allocation2], 321
    %v2058 = vld [vmem:[%s2057] ss:$2 sm:$0xff]
    %s2059 = scalar_lea.vmem [#allocation2], 337
    %v2060 = vld [vmem:[%s2059] ss:$2 sm:$0xff]
    %s2061 = scalar_lea.vmem [#allocation2], 353
    %v2062 = vld [vmem:[%s2061] ss:$2 sm:$0xff]
    %s2063 = scalar_lea.vmem [#allocation2], 369
    %v2064 = vld [vmem:[%s2063] ss:$2 sm:$0xff]
    %s2065 = scalar_lea.vmem [#allocation2], 385
    %v2066 = vld [vmem:[%s2065] ss:$2 sm:$0xff]
    %s2067 = scalar_lea.vmem [#allocation2], 401
    %v2068 = vld [vmem:[%s2067] ss:$2 sm:$0xff]
    %s2069 = scalar_lea.vmem [#allocation2], 417
    %v2070 = vld [vmem:[%s2069] ss:$2 sm:$0xff]
    %s2071 = scalar_lea.vmem [#allocation2], 433
    %v2072 = vld [vmem:[%s2071] ss:$2 sm:$0xff]
    %s2073 = scalar_lea.vmem [#allocation2], 449
    %v2074 = vld [vmem:[%s2073] ss:$2 sm:$0xff]
    %s2075 = scalar_lea.vmem [#allocation2], 465
    %v2076 = vld [vmem:[%s2075] ss:$2 sm:$0xff]
    %s2077 = scalar_lea.vmem [#allocation2], 481
    %v2078 = vld [vmem:[%s2077] ss:$2 sm:$0xff]
    %s2079 = scalar_lea.vmem [#allocation2], 497
    %v2080 = vld [vmem:[%s2079] ss:$2 sm:$0xff]
    %v2081 = vmax.f32 %v1954, %v2018
    %v2082 = vmax.f32 %v1956, %v2020
    %v2083 = vmax.f32 %v1958, %v2022
    %v2084 = vmax.f32 %v1960, %v2024
    %v2085 = vmax.f32 %v1962, %v2026
    %v2086 = vmax.f32 %v1964, %v2028
    %v2087 = vmax.f32 %v1966, %v2030
    %v2088 = vmax.f32 %v1968, %v2032
    %v2089 = vmax.f32 %v1970, %v2034
    %v2090 = vmax.f32 %v1972, %v2036
    %v2091 = vmax.f32 %v1974, %v2038
    %v2092 = vmax.f32 %v1976, %v2040
    %v2093 = vmax.f32 %v1978, %v2042
    %v2094 = vmax.f32 %v1980, %v2044
    %v2095 = vmax.f32 %v1982, %v2046
    %v2096 = vmax.f32 %v1984, %v2048
    %v2097 = vmax.f32 %v1986, %v2050
    %v2098 = vmax.f32 %v1988, %v2052
    %v2099 = vmax.f32 %v1990, %v2054
    %v2100 = vmax.f32 %v1992, %v2056
    %v2101 = vmax.f32 %v1994, %v2058
    %v2102 = vmax.f32 %v1996, %v2060
    %v2103 = vmax.f32 %v1998, %v2062
    %v2104 = vmax.f32 %v2000, %v2064
    %v2105 = vmax.f32 %v2002, %v2066
    %v2106 = vmax.f32 %v2004, %v2068
    %v2107 = vmax.f32 %v2006, %v2070
    %v2108 = vmax.f32 %v2008, %v2072
    %v2109 = vmax.f32 %v2010, %v2074
    %v2110 = vmax.f32 %v2012, %v2076
    %v2111 = vmax.f32 %v2014, %v2078
    %v2112 = vmax.f32 %v2016, %v2080
    %v2113 = vsub.f32 %v2081, %v1883
    %v2114 = vsub.f32 %v2082, %v1883
    %v2115 = vsub.f32 %v2083, %v1883
    %v2116 = vsub.f32 %v2084, %v1883
    %v2117 = vsub.f32 %v2085, %v1883
    %v2118 = vsub.f32 %v2086, %v1883
    %v2119 = vsub.f32 %v2087, %v1883
    %v2120 = vsub.f32 %v2088, %v1883
    %v2121 = vsub.f32 %v2089, %v1883
    %v2122 = vsub.f32 %v2090, %v1883
    %v2123 = vsub.f32 %v2091, %v1883
    %v2124 = vsub.f32 %v2092, %v1883
    %v2125 = vsub.f32 %v2093, %v1883
    %v2126 = vsub.f32 %v2094, %v1883
    %v2127 = vsub.f32 %v2095, %v1883
    %v2128 = vsub.f32 %v2096, %v1883
    %v2129 = vsub.f32 %v2097, %v1883
    %v2130 = vsub.f32 %v2098, %v1883
    %v2131 = vsub.f32 %v2099, %v1883
    %v2132 = vsub.f32 %v2100, %v1883
    %v2133 = vsub.f32 %v2101, %v1883
    %v2134 = vsub.f32 %v2102, %v1883
    %v2135 = vsub.f32 %v2103, %v1883
    %v2136 = vsub.f32 %v2104, %v1883
    %v2137 = vsub.f32 %v2105, %v1883
    %v2138 = vsub.f32 %v2106, %v1883
    %v2139 = vsub.f32 %v2107, %v1883
    %v2140 = vsub.f32 %v2108, %v1883
    %v2141 = vsub.f32 %v2109, %v1883
    %v2142 = vsub.f32 %v2110, %v1883
    %v2143 = vsub.f32 %v2111, %v1883
    %v2144 = vsub.f32 %v2112, %v1883
    %v2145 = vmul.f32 %v2113, %v1889
    %v2146 = vmul.f32 %v2114, %v1889
    %v2147 = vmul.f32 %v2115, %v1889
    %v2148 = vmul.f32 %v2116, %v1889
    %v2149 = vmul.f32 %v2117, %v1889
    %v2150 = vmul.f32 %v2118, %v1889
    %v2151 = vmul.f32 %v2119, %v1889
    %v2152 = vmul.f32 %v2120, %v1889
    %v2153 = vmul.f32 %v2121, %v1889
    %v2154 = vmul.f32 %v2122, %v1889
    %v2155 = vmul.f32 %v2123, %v1889
    %v2156 = vmul.f32 %v2124, %v1889
    %v2157 = vmul.f32 %v2125, %v1889
    %v2158 = vmul.f32 %v2126, %v1889
    %v2159 = vmul.f32 %v2127, %v1889
    %v2160 = vmul.f32 %v2128, %v1889
    %v2161 = vmul.f32 %v2129, %v1889
    %v2162 = vmul.f32 %v2130, %v1889
    %v2163 = vmul.f32 %v2131, %v1889
    %v2164 = vmul.f32 %v2132, %v1889
    %v2165 = vmul.f32 %v2133, %v1889
    %v2166 = vmul.f32 %v2134, %v1889
    %v2167 = vmul.f32 %v2135, %v1889
    %v2168 = vmul.f32 %v2136, %v1889
    %v2169 = vmul.f32 %v2137, %v1889
    %v2170 = vmul.f32 %v2138, %v1889
    %v2171 = vmul.f32 %v2139, %v1889
    %v2172 = vmul.f32 %v2140, %v1889
    %v2173 = vmul.f32 %v2141, %v1889
    %v2174 = vmul.f32 %v2142, %v1889
    %v2175 = vmul.f32 %v2143, %v1889
    %v2176 = vmul.f32 %v2144, %v1889
    %v2177 = vmax.f32 %v2145, 0.0
    %v2178 = vmax.f32 %v2146, 0.0
    %v2179 = vmax.f32 %v2147, 0.0
    %v2180 = vmax.f32 %v2148, 0.0
    %v2181 = vmax.f32 %v2149, 0.0
    %v2182 = vmax.f32 %v2150, 0.0
    %v2183 = vmax.f32 %v2151, 0.0
    %v2184 = vmax.f32 %v2152, 0.0
    %v2185 = vmax.f32 %v2153, 0.0
    %v2186 = vmax.f32 %v2154, 0.0
    %v2187 = vmax.f32 %v2155, 0.0
    %v2188 = vmax.f32 %v2156, 0.0
    %v2189 = vmax.f32 %v2157, 0.0
    %v2190 = vmax.f32 %v2158, 0.0
    %v2191 = vmax.f32 %v2159, 0.0
    %v2192 = vmax.f32 %v2160, 0.0
    %v2193 = vmax.f32 %v2161, 0.0
    %v2194 = vmax.f32 %v2162, 0.0
    %v2195 = vmax.f32 %v2163, 0.0
    %v2196 = vmax.f32 %v2164, 0.0
    %v2197 = vmax.f32 %v2165, 0.0
    %v2198 = vmax.f32 %v2166, 0.0
    %v2199 = vmax.f32 %v2167, 0.0
    %v2200 = vmax.f32 %v2168, 0.0
    %v2201 = vmax.f32 %v2169, 0.0
    %v2202 = vmax.f32 %v2170, 0.0
    %v2203 = vmax.f32 %v2171, 0.0
    %v2204 = vmax.f32 %v2172, 0.0
    %v2205 = vmax.f32 %v2173, 0.0
    %v2206 = vmax.f32 %v2174, 0.0
    %v2207 = vmax.f32 %v2175, 0.0
    %v2208 = vmax.f32 %v2176, 0.0
    %2209 = vst [vmem:[#allocation3] sm:$0xff] 0.0
    %2210 = vst [vmem:[#allocation3 + $0x8] sm:$0xff] %v2177
    %2211 = vst [vmem:[#allocation3 + $0x10] sm:$0xff] %v2178
    %2212 = vst [vmem:[#allocation3 + $0x18] sm:$0xff] %v2179
    %2213 = vst [vmem:[#allocation3 + $0x20] sm:$0xff] %v2180
    %2214 = vst [vmem:[#allocation3 + $0x28] sm:$0xff] %v2181
    %2215 = vst [vmem:[#allocation3 + $0x30] sm:$0xff] %v2182
    %2216 = vst [vmem:[#allocation3 + $0x38] sm:$0xff] %v2183
    %2217 = vst [vmem:[#allocation3 + $0x40] sm:$0xff] %v2184
    %2218 = vst [vmem:[#allocation3 + $0x48] sm:$0xff] %v2185
    %2219 = vst [vmem:[#allocation3 + $0x50] sm:$0xff] %v2186
    %2220 = vst [vmem:[#allocation3 + $0x58] sm:$0xff] %v2187
    %2221 = vst [vmem:[#allocation3 + $0x60] sm:$0xff] %v2188
    %2222 = vst [vmem:[#allocation3 + $0x68] sm:$0xff] %v2189
    %2223 = vst [vmem:[#allocation3 + $0x70] sm:$0xff] %v2190
    %2224 = vst [vmem:[#allocation3 + $0x78] sm:$0xff] %v2191
    %2225 = vst [vmem:[#allocation3 + $0x80] sm:$0xff] %v2192
    %2226 = vst [vmem:[#allocation3 + $0x88] sm:$0xff] %v2193
    %2227 = vst [vmem:[#allocation3 + $0x90] sm:$0xff] %v2194
    %2228 = vst [vmem:[#allocation3 + $0x98] sm:$0xff] %v2195
    %2229 = vst [vmem:[#allocation3 + $0xa0] sm:$0xff] %v2196
    %2230 = vst [vmem:[#allocation3 + $0xa8] sm:$0xff] %v2197
    %2231 = vst [vmem:[#allocation3 + $0xb0] sm:$0xff] %v2198
    %2232 = vst [vmem:[#allocation3 + $0xb8] sm:$0xff] %v2199
    %2233 = vst [vmem:[#allocation3 + $0xc0] sm:$0xff] %v2200
    %2234 = vst [vmem:[#allocation3 + $0xc8] sm:$0xff] %v2201
    %2235 = vst [vmem:[#allocation3 + $0xd0] sm:$0xff] %v2202
    %2236 = vst [vmem:[#allocation3 + $0xd8] sm:$0xff] %v2203
    %2237 = vst [vmem:[#allocation3 + $0xe0] sm:$0xff] %v2204
    %2238 = vst [vmem:[#allocation3 + $0xe8] sm:$0xff] %v2205
    %2239 = vst [vmem:[#allocation3 + $0xf0] sm:$0xff] %v2206
    %2240 = vst [vmem:[#allocation3 + $0xf8] sm:$0xff] %v2207
    %2241 = vst [vmem:[#allocation3 + $0x100] sm:$0xff] %v2208
    %2242 = vst [vmem:[#allocation3 + $0x108] sm:$0xff] 0.0
    %v2243 = vld [vmem:[#allocation3 + $0x7] sm:$0xff]
    %v2244 = vld [vmem:[#allocation3 + $0xf] sm:$0xff]
    %v2245 = vld [vmem:[#allocation3 + $0x17] sm:$0xff]
    %v2246 = vld [vmem:[#allocation3 + $0x1f] sm:$0xff]
    %v2247 = vld [vmem:[#allocation3 + $0x27] sm:$0xff]
    %v2248 = vld [vmem:[#allocation3 + $0x2f] sm:$0xff]
    %v2249 = vld [vmem:[#allocation3 + $0x37] sm:$0xff]
    %v2250 = vld [vmem:[#allocation3 + $0x3f] sm:$0xff]
    %v2251 = vld [vmem:[#allocation3 + $0x47] sm:$0xff]
    %v2252 = vld [vmem:[#allocation3 + $0x4f] sm:$0xff]
    %v2253 = vld [vmem:[#allocation3 + $0x57] sm:$0xff]
    %v2254 = vld [vmem:[#allocation3 + $0x5f] sm:$0xff]
    %v2255 = vld [vmem:[#allocation3 + $0x67] sm:$0xff]
    %v2256 = vld [vmem:[#allocation3 + $0x6f] sm:$0xff]
    %v2257 = vld [vmem:[#allocation3 + $0x77] sm:$0xff]
    %v2258 = vld [vmem:[#allocation3 + $0x7f] sm:$0xff]
    %v2259 = vld [vmem:[#allocation3 + $0x87] sm:$0xff]
    %v2260 = vld [vmem:[#allocation3 + $0x8f] sm:$0xff]
    %v2261 = vld [vmem:[#allocation3 + $0x97] sm:$0xff]
    %v2262 = vld [vmem:[#allocation3 + $0x9f] sm:$0xff]
    %v2263 = vld [vmem:[#allocation3 + $0xa7] sm:$0xff]
    %v2264 = vld [vmem:[#allocation3 + $0xaf] sm:$0xff]
    %v2265 = vld [vmem:[#allocation3 + $0xb7] sm:$0xff]
    %v2266 = vld [vmem:[#allocation3 + $0xbf] sm:$0xff]
    %v2267 = vld [vmem:[#allocation3 + $0xc7] sm:$0xff]
    %v2268 = vld [vmem:[#allocation3 + $0xcf] sm:$0xff]
    %v2269 = vld [vmem:[#allocation3 + $0xd7] sm:$0xff]
    %v2270 = vld [vmem:[#allocation3 + $0xdf] sm:$0xff]
    %v2271 = vld [vmem:[#allocation3 + $0xe7] sm:$0xff]
    %v2272 = vld [vmem:[#allocation3 + $0xef] sm:$0xff]
    %v2273 = vld [vmem:[#allocation3 + $0xf7] sm:$0xff]
    %v2274 = vld [vmem:[#allocation3 + $0xff] sm:$0xff]
    %v2275 = vld [vmem:[#allocation3 + $0x8] sm:$0xff]
    %v2276 = vld [vmem:[#allocation3 + $0x10] sm:$0xff]
    %v2277 = vld [vmem:[#allocation3 + $0x18] sm:$0xff]
    %v2278 = vld [vmem:[#allocation3 + $0x20] sm:$0xff]
    %v2279 = vld [vmem:[#allocation3 + $0x28] sm:$0xff]
    %v2280 = vld [vmem:[#allocation3 + $0x30] sm:$0xff]
    %v2281 = vld [vmem:[#allocation3 + $0x38] sm:$0xff]
    %v2282 = vld [vmem:[#allocation3 + $0x40] sm:$0xff]
    %v2283 = vld [vmem:[#allocation3 + $0x48] sm:$0xff]
    %v2284 = vld [vmem:[#allocation3 + $0x50] sm:$0xff]
    %v2285 = vld [vmem:[#allocation3 + $0x58] sm:$0xff]
    %v2286 = vld [vmem:[#allocation3 + $0x60] sm:$0xff]
    %v2287 = vld [vmem:[#allocation3 + $0x68] sm:$0xff]
    %v2288 = vld [vmem:[#allocation3 + $0x70] sm:$0xff]
    %v2289 = vld [vmem:[#allocation3 + $0x78] sm:$0xff]
    %v2290 = vld [vmem:[#allocation3 + $0x80] sm:$0xff]
    %v2291 = vld [vmem:[#allocation3 + $0x88] sm:$0xff]
    %v2292 = vld [vmem:[#allocation3 + $0x90] sm:$0xff]
    %v2293 = vld [vmem:[#allocation3 + $0x98] sm:$0xff]
    %v2294 = vld [vmem:[#allocation3 + $0xa0] sm:$0xff]
    %v2295 = vld [vmem:[#allocation3 + $0xa8] sm:$0xff]
    %v2296 = vld [vmem:[#allocation3 + $0xb0] sm:$0xff]
    %v2297 = vld [vmem:[#allocation3 + $0xb8] sm:$0xff]
    %v2298 = vld [vmem:[#allocation3 + $0xc0] sm:$0xff]
    %v2299 = vld [vmem:[#allocation3 + $0xc8] sm:$0xff]
    %v2300 = vld [vmem:[#allocation3 + $0xd0] sm:$0xff]
    %v2301 = vld [vmem:[#allocation3 + $0xd8] sm:$0xff]
    %v2302 = vld [vmem:[#allocation3 + $0xe0] sm:$0xff]
    %v2303 = vld [vmem:[#allocation3 + $0xe8] sm:$0xff]
    %v2304 = vld [vmem:[#allocation3 + $0xf0] sm:$0xff]
    %v2305 = vld [vmem:[#allocation3 + $0xf8] sm:$0xff]
    %v2306 = vld [vmem:[#allocation3 + $0x100] sm:$0xff]
    %v2307 = vld [vmem:[#allocation3 + $0x9] sm:$0xff]
    %v2308 = vld [vmem:[#allocation3 + $0x11] sm:$0xff]
    %v2309 = vld [vmem:[#allocation3 + $0x19] sm:$0xff]
    %v2310 = vld [vmem:[#allocation3 + $0x21] sm:$0xff]
    %v2311 = vld [vmem:[#allocation3 + $0x29] sm:$0xff]
    %v2312 = vld [vmem:[#allocation3 + $0x31] sm:$0xff]
    %v2313 = vld [vmem:[#allocation3 + $0x39] sm:$0xff]
    %v2314 = vld [vmem:[#allocation3 + $0x41] sm:$0xff]
    %v2315 = vld [vmem:[#allocation3 + $0x49] sm:$0xff]
    %v2316 = vld [vmem:[#allocation3 + $0x51] sm:$0xff]
    %v2317 = vld [vmem:[#allocation3 + $0x59] sm:$0xff]
    %v2318 = vld [vmem:[#allocation3 + $0x61] sm:$0xff]
    %v2319 = vld [vmem:[#allocation3 + $0x69] sm:$0xff]
    %v2320 = vld [vmem:[#allocation3 + $0x71] sm:$0xff]
    %v2321 = vld [vmem:[#allocation3 + $0x79] sm:$0xff]
    %v2322 = vld [vmem:[#allocation3 + $0x81] sm:$0xff]
    %v2323 = vld [vmem:[#allocation3 + $0x89] sm:$0xff]
    %v2324 = vld [vmem:[#allocation3 + $0x91] sm:$0xff]
    %v2325 = vld [vmem:[#allocation3 + $0x99] sm:$0xff]
    %v2326 = vld [vmem:[#allocation3 + $0xa1] sm:$0xff]
    %v2327 = vld [vmem:[#allocation3 + $0xa9] sm:$0xff]
    %v2328 = vld [vmem:[#allocation3 + $0xb1] sm:$0xff]
    %v2329 = vld [vmem:[#allocation3 + $0xb9] sm:$0xff]
    %v2330 = vld [vmem:[#allocation3 + $0xc1] sm:$0xff]
    %v2331 = vld [vmem:[#allocation3 + $0xc9] sm:$0xff]
    %v2332 = vld [vmem:[#allocation3 + $0xd1] sm:$0xff]
    %v2333 = vld [vmem:[#allocation3 + $0xd9] sm:$0xff]
    %v2334 = vld [vmem:[#allocation3 + $0xe1] sm:$0xff]
    %v2335 = vld [vmem:[#allocation3 + $0xe9] sm:$0xff]
    %v2336 = vld [vmem:[#allocation3 + $0xf1] sm:$0xff]
    %v2337 = vld [vmem:[#allocation3 + $0xf9] sm:$0xff]
    %v2338 = vld [vmem:[#allocation3 + $0x101] sm:$0xff]
    %v2339 = vlaneseq
    %v2340 = vshrl.u32 %v2339, 7
    %v2341 = vadd.s32 %v2340, 8
    %v2342 = vadd.s32 %v2340, 16
    %v2343 = vadd.s32 %v2340, 24
    %v2344 = vadd.s32 %v2340, 32
    %v2345 = vadd.s32 %v2340, 40
    %v2346 = vadd.s32 %v2340, 48
    %v2347 = vadd.s32 %v2340, 56
    %v2348 = vadd.s32 %v2340, 64
    %v2349 = vadd.s32 %v2340, 72
    %v2350 = vadd.s32 %v2340, 80
    %v2351 = vadd.s32 %v2340, 88
    %v2352 = vadd.s32 %v2340, 96
    %v2353 = vadd.s32 %v2340, 104
    %v2354 = vadd.s32 %v2340, 112
    %v2355 = vadd.s32 %v2340, 120
    %v2356 = vadd.s32 %v2340, 128
    %v2357 = vadd.s32 %v2340, 136
    %v2358 = vadd.s32 %v2340, 144
    %v2359 = vadd.s32 %v2340, 152
    %v2360 = vadd.s32 %v2340, 160
    %v2361 = vadd.s32 %v2340, 168
    %v2362 = vadd.s32 %v2340, 176
    %v2363 = vadd.s32 %v2340, 184
    %v2364 = vadd.s32 %v2340, 192
    %v2365 = vadd.s32 %v2340, 200
    %v2366 = vadd.s32 %v2340, 208
    %v2367 = vadd.s32 %v2340, 216
    %v2368 = vadd.s32 %v2340, 224
    %v2369 = vadd.s32 %v2340, 232
    %v2370 = vadd.s32 %v2340, 240
    %v2371 = vadd.s32 %v2340, 248
    %v2372 = vand.u32 %v2340, 127
    %v2373 = vand.u32 %v2341, 127
    %v2374 = vand.u32 %v2342, 127
    %v2375 = vand.u32 %v2343, 127
    %v2376 = vand.u32 %v2344, 127
    %v2377 = vand.u32 %v2345, 127
    %v2378 = vand.u32 %v2346, 127
    %v2379 = vand.u32 %v2347, 127
    %v2380 = vand.u32 %v2348, 127
    %v2381 = vand.u32 %v2349, 127
    %v2382 = vand.u32 %v2350, 127
    %v2383 = vand.u32 %v2351, 127
    %v2384 = vand.u32 %v2352, 127
    %v2385 = vand.u32 %v2353, 127
    %v2386 = vand.u32 %v2354, 127
    %v2387 = vand.u32 %v2355, 127
    %v2388 = vand.u32 %v2356, 127
    %v2389 = vand.u32 %v2357, 127
    %v2390 = vand.u32 %v2358, 127
    %v2391 = vand.u32 %v2359, 127
    %v2392 = vand.u32 %v2360, 127
    %v2393 = vand.u32 %v2361, 127
    %v2394 = vand.u32 %v2362, 127
    %v2395 = vand.u32 %v2363, 127
    %v2396 = vand.u32 %v2364, 127
    %v2397 = vand.u32 %v2365, 127
    %v2398 = vand.u32 %v2366, 127
    %v2399 = vand.u32 %v2367, 127
    %v2400 = vand.u32 %v2368, 127
    %v2401 = vand.u32 %v2369, 127
    %v2402 = vand.u32 %v2370, 127
    %v2403 = vand.u32 %v2371, 127
    %vm2404 = vcmp.ne.s32.totalorder %v2372, 0
    %vm2405 = vcmp.ne.s32.totalorder %v2373, 0
    %vm2406 = vcmp.ne.s32.totalorder %v2374, 0
    %vm2407 = vcmp.ne.s32.totalorder %v2375, 0
    %vm2408 = vcmp.ne.s32.totalorder %v2376, 0
    %vm2409 = vcmp.ne.s32.totalorder %v2377, 0
    %vm2410 = vcmp.ne.s32.totalorder %v2378, 0
    %vm2411 = vcmp.ne.s32.totalorder %v2379, 0
    %vm2412 = vcmp.ne.s32.totalorder %v2380, 0
    %vm2413 = vcmp.ne.s32.totalorder %v2381, 0
    %vm2414 = vcmp.ne.s32.totalorder %v2382, 0
    %vm2415 = vcmp.ne.s32.totalorder %v2383, 0
    %vm2416 = vcmp.ne.s32.totalorder %v2384, 0
    %vm2417 = vcmp.ne.s32.totalorder %v2385, 0
    %vm2418 = vcmp.ne.s32.totalorder %v2386, 0
    %vm2419 = vcmp.ne.s32.totalorder %v2387, 0
    %vm2420 = vcmp.ne.s32.totalorder %v2388, 0
    %vm2421 = vcmp.ne.s32.totalorder %v2389, 0
    %vm2422 = vcmp.ne.s32.totalorder %v2390, 0
    %vm2423 = vcmp.ne.s32.totalorder %v2391, 0
    %vm2424 = vcmp.ne.s32.totalorder %v2392, 0
    %vm2425 = vcmp.ne.s32.totalorder %v2393, 0
    %vm2426 = vcmp.ne.s32.totalorder %v2394, 0
    %vm2427 = vcmp.ne.s32.totalorder %v2395, 0
    %vm2428 = vcmp.ne.s32.totalorder %v2396, 0
    %vm2429 = vcmp.ne.s32.totalorder %v2397, 0
    %vm2430 = vcmp.ne.s32.totalorder %v2398, 0
    %vm2431 = vcmp.ne.s32.totalorder %v2399, 0
    %vm2432 = vcmp.ne.s32.totalorder %v2400, 0
    %vm2433 = vcmp.ne.s32.totalorder %v2401, 0
    %vm2434 = vcmp.ne.s32.totalorder %v2402, 0
    %vm2435 = vcmp.ne.s32.totalorder %v2403, 0
    %v2436 = vsel %vm2404, 1.0, 0.0
    %v2437 = vsel %vm2405, 1.0, 0.0
    %v2438 = vsel %vm2406, 1.0, 0.0
    %v2439 = vsel %vm2407, 1.0, 0.0
    %v2440 = vsel %vm2408, 1.0, 0.0
    %v2441 = vsel %vm2409, 1.0, 0.0
    %v2442 = vsel %vm2410, 1.0, 0.0
    %v2443 = vsel %vm2411, 1.0, 0.0
    %v2444 = vsel %vm2412, 1.0, 0.0
    %v2445 = vsel %vm2413, 1.0, 0.0
    %v2446 = vsel %vm2414, 1.0, 0.0
    %v2447 = vsel %vm2415, 1.0, 0.0
    %v2448 = vsel %vm2416, 1.0, 0.0
    %v2449 = vsel %vm2417, 1.0, 0.0
    %v2450 = vsel %vm2418, 1.0, 0.0
    %v2451 = vsel %vm2419, 1.0, 0.0
    %v2452 = vsel %vm2420, 1.0, 0.0
    %v2453 = vsel %vm2421, 1.0, 0.0
    %v2454 = vsel %vm2422, 1.0, 0.0
    %v2455 = vsel %vm2423, 1.0, 0.0
    %v2456 = vsel %vm2424, 1.0, 0.0
    %v2457 = vsel %vm2425, 1.0, 0.0
    %v2458 = vsel %vm2426, 1.0, 0.0
    %v2459 = vsel %vm2427, 1.0, 0.0
    %v2460 = vsel %vm2428, 1.0, 0.0
    %v2461 = vsel %vm2429, 1.0, 0.0
    %v2462 = vsel %vm2430, 1.0, 0.0
    %v2463 = vsel %vm2431, 1.0, 0.0
    %v2464 = vsel %vm2432, 1.0, 0.0
    %v2465 = vsel %vm2433, 1.0, 0.0
    %v2466 = vsel %vm2434, 1.0, 0.0
    %v2467 = vsel %vm2435, 1.0, 0.0
    %v2468 = vmul.f32 %v2243, %v2436
    %v2469 = vmul.f32 %v2244, %v2437
    %v2470 = vmul.f32 %v2245, %v2438
    %v2471 = vmul.f32 %v2246, %v2439
    %v2472 = vmul.f32 %v2247, %v2440
    %v2473 = vmul.f32 %v2248, %v2441
    %v2474 = vmul.f32 %v2249, %v2442
    %v2475 = vmul.f32 %v2250, %v2443
    %v2476 = vmul.f32 %v2251, %v2444
    %v2477 = vmul.f32 %v2252, %v2445
    %v2478 = vmul.f32 %v2253, %v2446
    %v2479 = vmul.f32 %v2254, %v2447
    %v2480 = vmul.f32 %v2255, %v2448
    %v2481 = vmul.f32 %v2256, %v2449
    %v2482 = vmul.f32 %v2257, %v2450
    %v2483 = vmul.f32 %v2258, %v2451
    %v2484 = vmul.f32 %v2259, %v2452
    %v2485 = vmul.f32 %v2260, %v2453
    %v2486 = vmul.f32 %v2261, %v2454
    %v2487 = vmul.f32 %v2262, %v2455
    %v2488 = vmul.f32 %v2263, %v2456
    %v2489 = vmul.f32 %v2264, %v2457
    %v2490 = vmul.f32 %v2265, %v2458
    %v2491 = vmul.f32 %v2266, %v2459
    %v2492 = vmul.f32 %v2267, %v2460
    %v2493 = vmul.f32 %v2268, %v2461
    %v2494 = vmul.f32 %v2269, %v2462
    %v2495 = vmul.f32 %v2270, %v2463
    %v2496 = vmul.f32 %v2271, %v2464
    %v2497 = vmul.f32 %v2272, %v2465
    %v2498 = vmul.f32 %v2273, %v2466
    %v2499 = vmul.f32 %v2274, %v2467
    %vm2500 = vcmp.ne.s32.totalorder %v2372, 127
    %vm2501 = vcmp.ne.s32.totalorder %v2373, 127
    %vm2502 = vcmp.ne.s32.totalorder %v2374, 127
    %vm2503 = vcmp.ne.s32.totalorder %v2375, 127
    %vm2504 = vcmp.ne.s32.totalorder %v2376, 127
    %vm2505 = vcmp.ne.s32.totalorder %v2377, 127
    %vm2506 = vcmp.ne.s32.totalorder %v2378, 127
    %vm2507 = vcmp.ne.s32.totalorder %v2379, 127
    %vm2508 = vcmp.ne.s32.totalorder %v2380, 127
    %vm2509 = vcmp.ne.s32.totalorder %v2381, 127
    %vm2510 = vcmp.ne.s32.totalorder %v2382, 127
    %vm2511 = vcmp.ne.s32.totalorder %v2383, 127
    %vm2512 = vcmp.ne.s32.totalorder %v2384, 127
    %vm2513 = vcmp.ne.s32.totalorder %v2385, 127
    %vm2514 = vcmp.ne.s32.totalorder %v2386, 127
    %vm2515 = vcmp.ne.s32.totalorder %v2387, 127
    %vm2516 = vcmp.ne.s32.totalorder %v2388, 127
    %vm2517 = vcmp.ne.s32.totalorder %v2389, 127
    %vm2518 = vcmp.ne.s32.totalorder %v2390, 127
    %vm2519 = vcmp.ne.s32.totalorder %v2391, 127
    %vm2520 = vcmp.ne.s32.totalorder %v2392, 127
    %vm2521 = vcmp.ne.s32.totalorder %v2393, 127
    %vm2522 = vcmp.ne.s32.totalorder %v2394, 127
    %vm2523 = vcmp.ne.s32.totalorder %v2395, 127
    %vm2524 = vcmp.ne.s32.totalorder %v2396, 127
    %vm2525 = vcmp.ne.s32.totalorder %v2397, 127
    %vm2526 = vcmp.ne.s32.totalorder %v2398, 127
    %vm2527 = vcmp.ne.s32.totalorder %v2399, 127
    %vm2528 = vcmp.ne.s32.totalorder %v2400, 127
    %vm2529 = vcmp.ne.s32.totalorder %v2401, 127
    %vm2530 = vcmp.ne.s32.totalorder %v2402, 127
    %vm2531 = vcmp.ne.s32.totalorder %v2403, 127
    %v2532 = vsel %vm2500, 1.0, 0.0
    %v2533 = vsel %vm2501, 1.0, 0.0
    %v2534 = vsel %vm2502, 1.0, 0.0
    %v2535 = vsel %vm2503, 1.0, 0.0
    %v2536 = vsel %vm2504, 1.0, 0.0
    %v2537 = vsel %vm2505, 1.0, 0.0
    %v2538 = vsel %vm2506, 1.0, 0.0
    %v2539 = vsel %vm2507, 1.0, 0.0
    %v2540 = vsel %vm2508, 1.0, 0.0
    %v2541 = vsel %vm2509, 1.0, 0.0
    %v2542 = vsel %vm2510, 1.0, 0.0
    %v2543 = vsel %vm2511, 1.0, 0.0
    %v2544 = vsel %vm2512, 1.0, 0.0
    %v2545 = vsel %vm2513, 1.0, 0.0
    %v2546 = vsel %vm2514, 1.0, 0.0
    %v2547 = vsel %vm2515, 1.0, 0.0
    %v2548 = vsel %vm2516, 1.0, 0.0
    %v2549 = vsel %vm2517, 1.0, 0.0
    %v2550 = vsel %vm2518, 1.0, 0.0
    %v2551 = vsel %vm2519, 1.0, 0.0
    %v2552 = vsel %vm2520, 1.0, 0.0
    %v2553 = vsel %vm2521, 1.0, 0.0
    %v2554 = vsel %vm2522, 1.0, 0.0
    %v2555 = vsel %vm2523, 1.0, 0.0
    %v2556 = vsel %vm2524, 1.0, 0.0
    %v2557 = vsel %vm2525, 1.0, 0.0
    %v2558 = vsel %vm2526, 1.0, 0.0
    %v2559 = vsel %vm2527, 1.0, 0.0
    %v2560 = vsel %vm2528, 1.0, 0.0
    %v2561 = vsel %vm2529, 1.0, 0.0
    %v2562 = vsel %vm2530, 1.0, 0.0
    %v2563 = vsel %vm2531, 1.0, 0.0
    %v2564 = vmul.f32 %v2307, %v2532
    %v2565 = vmul.f32 %v2308, %v2533
    %v2566 = vmul.f32 %v2309, %v2534
    %v2567 = vmul.f32 %v2310, %v2535
    %v2568 = vmul.f32 %v2311, %v2536
    %v2569 = vmul.f32 %v2312, %v2537
    %v2570 = vmul.f32 %v2313, %v2538
    %v2571 = vmul.f32 %v2314, %v2539
    %v2572 = vmul.f32 %v2315, %v2540
    %v2573 = vmul.f32 %v2316, %v2541
    %v2574 = vmul.f32 %v2317, %v2542
    %v2575 = vmul.f32 %v2318, %v2543
    %v2576 = vmul.f32 %v2319, %v2544
    %v2577 = vmul.f32 %v2320, %v2545
    %v2578 = vmul.f32 %v2321, %v2546
    %v2579 = vmul.f32 %v2322, %v2547
    %v2580 = vmul.f32 %v2323, %v2548
    %v2581 = vmul.f32 %v2324, %v2549
    %v2582 = vmul.f32 %v2325, %v2550
    %v2583 = vmul.f32 %v2326, %v2551
    %v2584 = vmul.f32 %v2327, %v2552
    %v2585 = vmul.f32 %v2328, %v2553
    %v2586 = vmul.f32 %v2329, %v2554
    %v2587 = vmul.f32 %v2330, %v2555
    %v2588 = vmul.f32 %v2331, %v2556
    %v2589 = vmul.f32 %v2332, %v2557
    %v2590 = vmul.f32 %v2333, %v2558
    %v2591 = vmul.f32 %v2334, %v2559
    %v2592 = vmul.f32 %v2335, %v2560
    %v2593 = vmul.f32 %v2336, %v2561
    %v2594 = vmul.f32 %v2337, %v2562
    %v2595 = vmul.f32 %v2338, %v2563
    %2596 = vrot.lane.b32.xlu0 %v2275, 64
    %v2597 = vpop.permute.xlu0 %2596
    %2598 = vrot.lane.b32.xlu0 %v2276, 64
    %v2599 = vpop.permute.xlu0 %2598
    %2600 = vrot.lane.b32.xlu0 %v2277, 64
    %v2601 = vpop.permute.xlu0 %2600
    %2602 = vrot.lane.b32.xlu0 %v2278, 64
    %v2603 = vpop.permute.xlu0 %2602
    %2604 = vrot.lane.b32.xlu0 %v2279, 64
    %v2605 = vpop.permute.xlu0 %2604
    %2606 = vrot.lane.b32.xlu0 %v2280, 64
    %v2607 = vpop.permute.xlu0 %2606
    %2608 = vrot.lane.b32.xlu0 %v2281, 64
    %v2609 = vpop.permute.xlu0 %2608
    %2610 = vrot.lane.b32.xlu0 %v2282, 64
    %v2611 = vpop.permute.xlu0 %2610
    %2612 = vrot.lane.b32.xlu0 %v2283, 64
    %v2613 = vpop.permute.xlu0 %2612
    %2614 = vrot.lane.b32.xlu0 %v2284, 64
    %v2615 = vpop.permute.xlu0 %2614
    %2616 = vrot.lane.b32.xlu0 %v2285, 64
    %v2617 = vpop.permute.xlu0 %2616
    %2618 = vrot.lane.b32.xlu0 %v2286, 64
    %v2619 = vpop.permute.xlu0 %2618
    %2620 = vrot.lane.b32.xlu0 %v2287, 64
    %v2621 = vpop.permute.xlu0 %2620
    %2622 = vrot.lane.b32.xlu0 %v2288, 64
    %v2623 = vpop.permute.xlu0 %2622
    %2624 = vrot.lane.b32.xlu0 %v2289, 64
    %v2625 = vpop.permute.xlu0 %2624
    %2626 = vrot.lane.b32.xlu0 %v2290, 64
    %v2627 = vpop.permute.xlu0 %2626
    %2628 = vrot.lane.b32.xlu0 %v2291, 64
    %v2629 = vpop.permute.xlu0 %2628
    %2630 = vrot.lane.b32.xlu0 %v2292, 64
    %v2631 = vpop.permute.xlu0 %2630
    %2632 = vrot.lane.b32.xlu0 %v2293, 64
    %v2633 = vpop.permute.xlu0 %2632
    %2634 = vrot.lane.b32.xlu0 %v2294, 64
    %v2635 = vpop.permute.xlu0 %2634
    %2636 = vrot.lane.b32.xlu0 %v2295, 64
    %v2637 = vpop.permute.xlu0 %2636
    %2638 = vrot.lane.b32.xlu0 %v2296, 64
    %v2639 = vpop.permute.xlu0 %2638
    %2640 = vrot.lane.b32.xlu0 %v2297, 64
    %v2641 = vpop.permute.xlu0 %2640
    %2642 = vrot.lane.b32.xlu0 %v2298, 64
    %v2643 = vpop.permute.xlu0 %2642
    %2644 = vrot.lane.b32.xlu0 %v2299, 64
    %v2645 = vpop.permute.xlu0 %2644
    %2646 = vrot.lane.b32.xlu0 %v2300, 64
    %v2647 = vpop.permute.xlu0 %2646
    %2648 = vrot.lane.b32.xlu0 %v2301, 64
    %v2649 = vpop.permute.xlu0 %2648
    %2650 = vrot.lane.b32.xlu0 %v2302, 64
    %v2651 = vpop.permute.xlu0 %2650
    %2652 = vrot.lane.b32.xlu0 %v2303, 64
    %v2653 = vpop.permute.xlu0 %2652
    %2654 = vrot.lane.b32.xlu0 %v2304, 64
    %v2655 = vpop.permute.xlu0 %2654
    %2656 = vrot.lane.b32.xlu0 %v2305, 64
    %v2657 = vpop.permute.xlu0 %2656
    %2658 = vrot.lane.b32.xlu0 %v2306, 64
    %v2659 = vpop.permute.xlu0 %2658
    %v2660 = vsel %vm126, 1, 0
    %vm2661 = vcmp.eq.s32.totalorder %v2660, 1
    %v2662 = vsel %vm2661, %v2468, %v2597
    %v2663 = vsel %vm2661, %v2469, %v2599
    %v2664 = vsel %vm2661, %v2470, %v2601
    %v2665 = vsel %vm2661, %v2471, %v2603
    %v2666 = vsel %vm2661, %v2472, %v2605
    %v2667 = vsel %vm2661, %v2473, %v2607
    %v2668 = vsel %vm2661, %v2474, %v2609
    %v2669 = vsel %vm2661, %v2475, %v2611
    %v2670 = vsel %vm2661, %v2476, %v2613
    %v2671 = vsel %vm2661, %v2477, %v2615
    %v2672 = vsel %vm2661, %v2478, %v2617
    %v2673 = vsel %vm2661, %v2479, %v2619
    %v2674 = vsel %vm2661, %v2480, %v2621
    %v2675 = vsel %vm2661, %v2481, %v2623
    %v2676 = vsel %vm2661, %v2482, %v2625
    %v2677 = vsel %vm2661, %v2483, %v2627
    %v2678 = vsel %vm2661, %v2484, %v2629
    %v2679 = vsel %vm2661, %v2485, %v2631
    %v2680 = vsel %vm2661, %v2486, %v2633
    %v2681 = vsel %vm2661, %v2487, %v2635
    %v2682 = vsel %vm2661, %v2488, %v2637
    %v2683 = vsel %vm2661, %v2489, %v2639
    %v2684 = vsel %vm2661, %v2490, %v2641
    %v2685 = vsel %vm2661, %v2491, %v2643
    %v2686 = vsel %vm2661, %v2492, %v2645
    %v2687 = vsel %vm2661, %v2493, %v2647
    %v2688 = vsel %vm2661, %v2494, %v2649
    %v2689 = vsel %vm2661, %v2495, %v2651
    %v2690 = vsel %vm2661, %v2496, %v2653
    %v2691 = vsel %vm2661, %v2497, %v2655
    %v2692 = vsel %vm2661, %v2498, %v2657
    %v2693 = vsel %vm2661, %v2499, %v2659
    %v2694 = vpack.c.bf16 %v2663, %v2662
    %v2695 = vpack.c.bf16 %v2565, %v2564
    %v2696 = vpack.c.bf16 %v2665, %v2664
    %v2697 = vpack.c.bf16 %v2567, %v2566
    %v2698 = vpack.c.bf16 %v2667, %v2666
    %v2699 = vpack.c.bf16 %v2569, %v2568
    %v2700 = vpack.c.bf16 %v2669, %v2668
    %v2701 = vpack.c.bf16 %v2571, %v2570
    %v2702 = vpack.c.bf16 %v2671, %v2670
    %v2703 = vpack.c.bf16 %v2573, %v2572
    %v2704 = vpack.c.bf16 %v2673, %v2672
    %v2705 = vpack.c.bf16 %v2575, %v2574
    %v2706 = vpack.c.bf16 %v2675, %v2674
    %v2707 = vpack.c.bf16 %v2577, %v2576
    %v2708 = vpack.c.bf16 %v2677, %v2676
    %v2709 = vpack.c.bf16 %v2579, %v2578
    %v2710 = vpack.c.bf16 %v2679, %v2678
    %v2711 = vpack.c.bf16 %v2581, %v2580
    %v2712 = vpack.c.bf16 %v2681, %v2680
    %v2713 = vpack.c.bf16 %v2583, %v2582
    %v2714 = vpack.c.bf16 %v2683, %v2682
    %v2715 = vpack.c.bf16 %v2585, %v2584
    %v2716 = vpack.c.bf16 %v2685, %v2684
    %v2717 = vpack.c.bf16 %v2587, %v2586
    %v2718 = vpack.c.bf16 %v2687, %v2686
    %v2719 = vpack.c.bf16 %v2589, %v2588
    %v2720 = vpack.c.bf16 %v2689, %v2688
    %v2721 = vpack.c.bf16 %v2591, %v2590
    %v2722 = vpack.c.bf16 %v2691, %v2690
    %v2723 = vpack.c.bf16 %v2593, %v2592
    %v2724 = vpack.c.bf16 %v2693, %v2692
    %v2725 = vpack.c.bf16 %v2595, %v2594
    %v2726 = vld [vmem:[%s11] sm:$0xf]
    %v2727 = vld [vmem:[%s11 + $0x4] sm:$0xf]
    %v2728 = vld [vmem:[%s11 + $0x8] sm:$0xf]
    %v2729 = vld [vmem:[%s11 + $0xc] sm:$0xf]
    %v2730 = vld [vmem:[%s11 + $0x10] sm:$0xf]
    %v2731 = vld [vmem:[%s11 + $0x14] sm:$0xf]
    %v2732 = vld [vmem:[%s11 + $0x18] sm:$0xf]
    %v2733 = vld [vmem:[%s11 + $0x1c] sm:$0xf]
    %v2734 = vld [vmem:[%s11 + $0x20] sm:$0xf]
    %v2735 = vld [vmem:[%s11 + $0x24] sm:$0xf]
    %v2736 = vld [vmem:[%s11 + $0x28] sm:$0xf]
    %v2737 = vld [vmem:[%s11 + $0x2c] sm:$0xf]
    %v2738 = vld [vmem:[%s11 + $0x30] sm:$0xf]
    %v2739 = vld [vmem:[%s11 + $0x34] sm:$0xf]
    %v2740 = vld [vmem:[%s11 + $0x38] sm:$0xf]
    %v2741 = vld [vmem:[%s11 + $0x3c] sm:$0xf]
    %v2742 = vld [vmem:[%s11 + $0x40] sm:$0xf]
    %v2743 = vld [vmem:[%s11 + $0x44] sm:$0xf]
    %v2744 = vld [vmem:[%s11 + $0x48] sm:$0xf]
    %v2745 = vld [vmem:[%s11 + $0x4c] sm:$0xf]
    %v2746 = vld [vmem:[%s11 + $0x50] sm:$0xf]
    %v2747 = vld [vmem:[%s11 + $0x54] sm:$0xf]
    %v2748 = vld [vmem:[%s11 + $0x58] sm:$0xf]
    %v2749 = vld [vmem:[%s11 + $0x5c] sm:$0xf]
    %v2750 = vld [vmem:[%s11 + $0x60] sm:$0xf]
    %v2751 = vld [vmem:[%s11 + $0x64] sm:$0xf]
    %v2752 = vld [vmem:[%s11 + $0x68] sm:$0xf]
    %v2753 = vld [vmem:[%s11 + $0x6c] sm:$0xf]
    %v2754 = vld [vmem:[%s11 + $0x70] sm:$0xf]
    %v2755 = vld [vmem:[%s11 + $0x74] sm:$0xf]
    %v2756 = vld [vmem:[%s11 + $0x78] sm:$0xf]
    %v2757 = vld [vmem:[%s11 + $0x7c] sm:$0xf]
    %v2758 = vld [vmem:[%s15] sm:$0x1]
    %v2760 = vlaneseq
    %v2761 = vshrl.u32 %v2760, 7
    %v2762 = vsub.s32 0, %v2761
    %v2763 = vrot.slane %v2758, %v2762
    %v2797 = vunpack.c.l.b16 %v2726
    %v2798 = vunpack.c.l.b16 %v2727
    %v2799 = vunpack.c.l.b16 %v2728
    %v2800 = vunpack.c.l.b16 %v2729
    %v2801 = vunpack.c.l.b16 %v2730
    %v2802 = vunpack.c.l.b16 %v2731
    %v2803 = vunpack.c.l.b16 %v2732
    %v2804 = vunpack.c.l.b16 %v2733
    %v2805 = vunpack.c.l.b16 %v2734
    %v2806 = vunpack.c.l.b16 %v2735
    %v2807 = vunpack.c.l.b16 %v2736
    %v2808 = vunpack.c.l.b16 %v2737
    %v2809 = vunpack.c.l.b16 %v2738
    %v2810 = vunpack.c.l.b16 %v2739
    %v2811 = vunpack.c.l.b16 %v2740
    %v2812 = vunpack.c.l.b16 %v2741
    %v2813 = vunpack.c.l.b16 %v2742
    %v2814 = vunpack.c.l.b16 %v2743
    %v2815 = vunpack.c.l.b16 %v2744
    %v2816 = vunpack.c.l.b16 %v2745
    %v2817 = vunpack.c.l.b16 %v2746
    %v2818 = vunpack.c.l.b16 %v2747
    %v2819 = vunpack.c.l.b16 %v2748
    %v2820 = vunpack.c.l.b16 %v2749
    %v2821 = vunpack.c.l.b16 %v2750
    %v2822 = vunpack.c.l.b16 %v2751
    %v2823 = vunpack.c.l.b16 %v2752
    %v2824 = vunpack.c.l.b16 %v2753
    %v2825 = vunpack.c.l.b16 %v2754
    %v2826 = vunpack.c.l.b16 %v2755
    %v2827 = vunpack.c.l.b16 %v2756
    %v2828 = vunpack.c.l.b16 %v2757
    %v2829 = vpack.c.b16 %v2798, %v2797
    %v2830 = vpack.c.b16 %v2800, %v2799
    %v2831 = vpack.c.b16 %v2802, %v2801
    %v2832 = vpack.c.b16 %v2804, %v2803
    %v2833 = vpack.c.b16 %v2806, %v2805
    %v2834 = vpack.c.b16 %v2808, %v2807
    %v2835 = vpack.c.b16 %v2810, %v2809
    %v2836 = vpack.c.b16 %v2812, %v2811
    %v2837 = vpack.c.b16 %v2814, %v2813
    %v2838 = vpack.c.b16 %v2816, %v2815
    %v2839 = vpack.c.b16 %v2818, %v2817
    %v2840 = vpack.c.b16 %v2820, %v2819
    %v2841 = vpack.c.b16 %v2822, %v2821
    %v2842 = vpack.c.b16 %v2824, %v2823
    %v2843 = vpack.c.b16 %v2826, %v2825
    %v2844 = vpack.c.b16 %v2828, %v2827
    %2861 = vmatprep.subr.bf16.mxu0 0
    %2862 = vmatpush1.bf16.msra.mxu0 %v2829
    %2863 = vmatprep.subr.bf16.mxu0 0
    %2864 = vmatpush1.bf16.msra.mxu0 %v2830
    %2865 = vmatprep.subr.bf16.mxu0 0
    %2866 = vmatpush1.bf16.msra.mxu0 %v2831
    %2867 = vmatprep.subr.bf16.mxu0 0
    %2868 = vmatpush1.bf16.msra.mxu0 %v2832
    %2869 = vmatprep.subr.bf16.mxu0 0
    %2870 = vmatpush1.bf16.msra.mxu0 %v2833
    %2871 = vmatprep.subr.bf16.mxu0 0
    %2872 = vmatpush1.bf16.msra.mxu0 %v2834
    %2873 = vmatprep.subr.bf16.mxu0 0
    %2874 = vmatpush1.bf16.msra.mxu0 %v2835
    %2875 = vmatprep.subr.bf16.mxu0 0
    %2876 = vmatpush1.bf16.msra.mxu0 %v2836
    %2877 = vmatprep.subr.bf16.mxu0 0
    %2878 = vmatpush1.bf16.msra.mxu0 %v2837
    %2879 = vmatprep.subr.bf16.mxu0 0
    %2880 = vmatpush1.bf16.msra.mxu0 %v2838
    %2881 = vmatprep.subr.bf16.mxu0 0
    %2882 = vmatpush1.bf16.msra.mxu0 %v2839
    %2883 = vmatprep.subr.bf16.mxu0 0
    %2884 = vmatpush1.bf16.msra.mxu0 %v2840
    %2885 = vmatprep.subr.bf16.mxu0 0
    %2886 = vmatpush1.bf16.msra.mxu0 %v2841
    %2887 = vmatprep.subr.bf16.mxu0 0
    %2888 = vmatpush1.bf16.msra.mxu0 %v2842
    %2889 = vmatprep.subr.bf16.mxu0 0
    %2890 = vmatpush1.bf16.msra.mxu0 %v2843
    %2891 = vmatprep.subr.bf16.mxu0 0
    %2892 = vmatpush1.bf16.msra.mxu0 %v2844
    %2893 = vmatprep.mubr.bf16.mxu0 %v2695
    %2894 = vmatmul.mubr.bf16.gmra.mrb[0].mxu0 %v2694
    %v2895 = vpop.f32.mrb[0].mxu0
    %v2896 = vadd.f32 %v2763, %v2895
    %v2897 = vpop.f32.mrb[0].mxu0
    %v2898 = vpop.f32.mrb[0].mxu0
    %v2899 = vadd.f32 %v2763, %v2898
    %v2900 = vpop.f32.mrb[0].mxu0
    %2901 = vmatprep.mubr.bf16.mxu0 %v2697
    %2902 = vmatmul.mubr.bf16.gmra.mrb[0].mxu0 %v2696
    %v2903 = vpop.f32.mrb[0].mxu0
    %v2904 = vadd.f32 %v2763, %v2903
    %v2905 = vpop.f32.mrb[0].mxu0
    %v2906 = vpop.f32.mrb[0].mxu0
    %v2907 = vadd.f32 %v2763, %v2906
    %v2908 = vpop.f32.mrb[0].mxu0
    %2909 = vmatprep.mubr.bf16.mxu0 %v2699
    %2910 = vmatmul.mubr.bf16.gmra.mrb[0].mxu0 %v2698
    %v2911 = vpop.f32.mrb[0].mxu0
    %v2912 = vadd.f32 %v2763, %v2911
    %v2913 = vpop.f32.mrb[0].mxu0
    %v2914 = vpop.f32.mrb[0].mxu0
    %v2915 = vadd.f32 %v2763, %v2914
    %v2916 = vpop.f32.mrb[0].mxu0
    %2917 = vmatprep.mubr.bf16.mxu0 %v2701
    %2918 = vmatmul.mubr.bf16.gmra.mrb[0].mxu0 %v2700
    %v2919 = vpop.f32.mrb[0].mxu0
    %v2920 = vadd.f32 %v2763, %v2919
    %v2921 = vpop.f32.mrb[0].mxu0
    %v2922 = vpop.f32.mrb[0].mxu0
    %v2923 = vadd.f32 %v2763, %v2922
    %v2924 = vpop.f32.mrb[0].mxu0
    %2925 = vmatprep.mubr.bf16.mxu0 %v2703
    %2926 = vmatmul.mubr.bf16.gmra.mrb[0].mxu0 %v2702
    %v2927 = vpop.f32.mrb[0].mxu0
    %v2928 = vadd.f32 %v2763, %v2927
    %v2929 = vpop.f32.mrb[0].mxu0
    %v2930 = vpop.f32.mrb[0].mxu0
    %v2931 = vadd.f32 %v2763, %v2930
    %v2932 = vpop.f32.mrb[0].mxu0
    %2933 = vmatprep.mubr.bf16.mxu0 %v2705
    %2934 = vmatmul.mubr.bf16.gmra.mrb[0].mxu0 %v2704
    %v2935 = vpop.f32.mrb[0].mxu0
    %v2936 = vadd.f32 %v2763, %v2935
    %v2937 = vpop.f32.mrb[0].mxu0
    %v2938 = vpop.f32.mrb[0].mxu0
    %v2939 = vadd.f32 %v2763, %v2938
    %v2940 = vpop.f32.mrb[0].mxu0
    %2941 = vmatprep.mubr.bf16.mxu0 %v2707
    %2942 = vmatmul.mubr.bf16.gmra.mrb[0].mxu0 %v2706
    %v2943 = vpop.f32.mrb[0].mxu0
    %v2944 = vadd.f32 %v2763, %v2943
    %v2945 = vpop.f32.mrb[0].mxu0
    %v2946 = vpop.f32.mrb[0].mxu0
    %v2947 = vadd.f32 %v2763, %v2946
    %v2948 = vpop.f32.mrb[0].mxu0
    %2949 = vmatprep.mubr.bf16.mxu0 %v2709
    %2950 = vmatmul.mubr.bf16.gmra.mrb[0].mxu0 %v2708
    %v2951 = vpop.f32.mrb[0].mxu0
    %v2952 = vadd.f32 %v2763, %v2951
    %v2953 = vpop.f32.mrb[0].mxu0
    %v2954 = vpop.f32.mrb[0].mxu0
    %v2955 = vadd.f32 %v2763, %v2954
    %v2956 = vpop.f32.mrb[0].mxu0
    %2957 = vmatprep.mubr.bf16.mxu0 %v2711
    %2958 = vmatmul.mubr.bf16.gmra.mrb[0].mxu0 %v2710
    %v2959 = vpop.f32.mrb[0].mxu0
    %v2960 = vadd.f32 %v2763, %v2959
    %v2961 = vpop.f32.mrb[0].mxu0
    %v2962 = vpop.f32.mrb[0].mxu0
    %v2963 = vadd.f32 %v2763, %v2962
    %v2964 = vpop.f32.mrb[0].mxu0
    %2965 = vmatprep.mubr.bf16.mxu0 %v2713
    %2966 = vmatmul.mubr.bf16.gmra.mrb[0].mxu0 %v2712
    %v2967 = vpop.f32.mrb[0].mxu0
    %v2968 = vadd.f32 %v2763, %v2967
    %v2969 = vpop.f32.mrb[0].mxu0
    %v2970 = vpop.f32.mrb[0].mxu0
    %v2971 = vadd.f32 %v2763, %v2970
    %v2972 = vpop.f32.mrb[0].mxu0
    %2973 = vmatprep.mubr.bf16.mxu0 %v2715
    %2974 = vmatmul.mubr.bf16.gmra.mrb[0].mxu0 %v2714
    %v2975 = vpop.f32.mrb[0].mxu0
    %v2976 = vadd.f32 %v2763, %v2975
    %v2977 = vpop.f32.mrb[0].mxu0
    %v2978 = vpop.f32.mrb[0].mxu0
    %v2979 = vadd.f32 %v2763, %v2978
    %v2980 = vpop.f32.mrb[0].mxu0
    %2981 = vmatprep.mubr.bf16.mxu0 %v2717
    %2982 = vmatmul.mubr.bf16.gmra.mrb[0].mxu0 %v2716
    %v2983 = vpop.f32.mrb[0].mxu0
    %v2984 = vadd.f32 %v2763, %v2983
    %v2985 = vpop.f32.mrb[0].mxu0
    %v2986 = vpop.f32.mrb[0].mxu0
    %v2987 = vadd.f32 %v2763, %v2986
    %v2988 = vpop.f32.mrb[0].mxu0
    %2989 = vmatprep.mubr.bf16.mxu0 %v2719
    %2990 = vmatmul.mubr.bf16.gmra.mrb[0].mxu0 %v2718
    %v2991 = vpop.f32.mrb[0].mxu0
    %v2992 = vadd.f32 %v2763, %v2991
    %v2993 = vpop.f32.mrb[0].mxu0
    %v2994 = vpop.f32.mrb[0].mxu0
    %v2995 = vadd.f32 %v2763, %v2994
    %v2996 = vpop.f32.mrb[0].mxu0
    %2997 = vmatprep.mubr.bf16.mxu0 %v2721
    %2998 = vmatmul.mubr.bf16.gmra.mrb[0].mxu0 %v2720
    %v2999 = vpop.f32.mrb[0].mxu0
    %v3000 = vadd.f32 %v2763, %v2999
    %v3001 = vpop.f32.mrb[0].mxu0
    %v3002 = vpop.f32.mrb[0].mxu0
    %v3003 = vadd.f32 %v2763, %v3002
    %v3004 = vpop.f32.mrb[0].mxu0
    %3005 = vmatprep.mubr.bf16.mxu0 %v2723
    %3006 = vmatmul.mubr.bf16.gmra.mrb[0].mxu0 %v2722
    %v3007 = vpop.f32.mrb[0].mxu0
    %v3008 = vadd.f32 %v2763, %v3007
    %v3009 = vpop.f32.mrb[0].mxu0
    %v3010 = vpop.f32.mrb[0].mxu0
    %v3011 = vadd.f32 %v2763, %v3010
    %v3012 = vpop.f32.mrb[0].mxu0
    %3013 = vmatprep.mubr.bf16.mxu0 %v2725
    %3014 = vmatmul.mubr.bf16.gmra.mrb[0].mxu0 %v2724
    %v3015 = vpop.f32.mrb[0].mxu0
    %v3016 = vadd.f32 %v2763, %v3015
    %v3017 = vpop.f32.mrb[0].mxu0
    %v3018 = vpop.f32.mrb[0].mxu0
    %v3019 = vadd.f32 %v2763, %v3018
    %v3020 = vpop.f32.mrb[0].mxu0
    %3021 = vdwg.mxu0
    %v3022 = vmul.f32 %v2662, %v2662
    %v3023 = vmul.f32 %v2564, %v2564
    %v3024 = vmul.f32 %v2663, %v2663
    %v3025 = vmul.f32 %v2565, %v2565
    %v3026 = vmul.f32 %v2664, %v2664
    %v3027 = vmul.f32 %v2566, %v2566
    %v3028 = vmul.f32 %v2665, %v2665
    %v3029 = vmul.f32 %v2567, %v2567
    %v3030 = vmul.f32 %v2666, %v2666
    %v3031 = vmul.f32 %v2568, %v2568
    %v3032 = vmul.f32 %v2667, %v2667
    %v3033 = vmul.f32 %v2569, %v2569
    %v3034 = vmul.f32 %v2668, %v2668
    %v3035 = vmul.f32 %v2570, %v2570
    %v3036 = vmul.f32 %v2669, %v2669
    %v3037 = vmul.f32 %v2571, %v2571
    %v3038 = vmul.f32 %v2670, %v2670
    %v3039 = vmul.f32 %v2572, %v2572
    %v3040 = vmul.f32 %v2671, %v2671
    %v3041 = vmul.f32 %v2573, %v2573
    %v3042 = vmul.f32 %v2672, %v2672
    %v3043 = vmul.f32 %v2574, %v2574
    %v3044 = vmul.f32 %v2673, %v2673
    %v3045 = vmul.f32 %v2575, %v2575
    %v3046 = vmul.f32 %v2674, %v2674
    %v3047 = vmul.f32 %v2576, %v2576
    %v3048 = vmul.f32 %v2675, %v2675
    %v3049 = vmul.f32 %v2577, %v2577
    %v3050 = vmul.f32 %v2676, %v2676
    %v3051 = vmul.f32 %v2578, %v2578
    %v3052 = vmul.f32 %v2677, %v2677
    %v3053 = vmul.f32 %v2579, %v2579
    %v3054 = vmul.f32 %v2678, %v2678
    %v3055 = vmul.f32 %v2580, %v2580
    %v3056 = vmul.f32 %v2679, %v2679
    %v3057 = vmul.f32 %v2581, %v2581
    %v3058 = vmul.f32 %v2680, %v2680
    %v3059 = vmul.f32 %v2582, %v2582
    %v3060 = vmul.f32 %v2681, %v2681
    %v3061 = vmul.f32 %v2583, %v2583
    %v3062 = vmul.f32 %v2682, %v2682
    %v3063 = vmul.f32 %v2584, %v2584
    %v3064 = vmul.f32 %v2683, %v2683
    %v3065 = vmul.f32 %v2585, %v2585
    %v3066 = vmul.f32 %v2684, %v2684
    %v3067 = vmul.f32 %v2586, %v2586
    %v3068 = vmul.f32 %v2685, %v2685
    %v3069 = vmul.f32 %v2587, %v2587
    %v3070 = vmul.f32 %v2686, %v2686
    %v3071 = vmul.f32 %v2588, %v2588
    %v3072 = vmul.f32 %v2687, %v2687
    %v3073 = vmul.f32 %v2589, %v2589
    %v3074 = vmul.f32 %v2688, %v2688
    %v3075 = vmul.f32 %v2590, %v2590
    %v3076 = vmul.f32 %v2689, %v2689
    %v3077 = vmul.f32 %v2591, %v2591
    %v3078 = vmul.f32 %v2690, %v2690
    %v3079 = vmul.f32 %v2592, %v2592
    %v3080 = vmul.f32 %v2691, %v2691
    %v3081 = vmul.f32 %v2593, %v2593
    %v3082 = vmul.f32 %v2692, %v2692
    %v3083 = vmul.f32 %v2594, %v2594
    %v3084 = vmul.f32 %v2693, %v2693
    %v3085 = vmul.f32 %v2595, %v2595
    %v3086 = vpack.c.bf16 %v3024, %v3022
    %v3087 = vpack.c.bf16 %v3025, %v3023
    %v3088 = vpack.c.bf16 %v3028, %v3026
    %v3089 = vpack.c.bf16 %v3029, %v3027
    %v3090 = vpack.c.bf16 %v3032, %v3030
    %v3091 = vpack.c.bf16 %v3033, %v3031
    %v3092 = vpack.c.bf16 %v3036, %v3034
    %v3093 = vpack.c.bf16 %v3037, %v3035
    %v3094 = vpack.c.bf16 %v3040, %v3038
    %v3095 = vpack.c.bf16 %v3041, %v3039
    %v3096 = vpack.c.bf16 %v3044, %v3042
    %v3097 = vpack.c.bf16 %v3045, %v3043
    %v3098 = vpack.c.bf16 %v3048, %v3046
    %v3099 = vpack.c.bf16 %v3049, %v3047
    %v3100 = vpack.c.bf16 %v3052, %v3050
    %v3101 = vpack.c.bf16 %v3053, %v3051
    %v3102 = vpack.c.bf16 %v3056, %v3054
    %v3103 = vpack.c.bf16 %v3057, %v3055
    %v3104 = vpack.c.bf16 %v3060, %v3058
    %v3105 = vpack.c.bf16 %v3061, %v3059
    %v3106 = vpack.c.bf16 %v3064, %v3062
    %v3107 = vpack.c.bf16 %v3065, %v3063
    %v3108 = vpack.c.bf16 %v3068, %v3066
    %v3109 = vpack.c.bf16 %v3069, %v3067
    %v3110 = vpack.c.bf16 %v3072, %v3070
    %v3111 = vpack.c.bf16 %v3073, %v3071
    %v3112 = vpack.c.bf16 %v3076, %v3074
    %v3113 = vpack.c.bf16 %v3077, %v3075
    %v3114 = vpack.c.bf16 %v3080, %v3078
    %v3115 = vpack.c.bf16 %v3081, %v3079
    %v3116 = vpack.c.bf16 %v3084, %v3082
    %v3117 = vpack.c.bf16 %v3085, %v3083
    %v3118 = vld [vmem:[%s13] sm:$0xf]
    %v3119 = vld [vmem:[%s13 + $0x4] sm:$0xf]
    %v3120 = vld [vmem:[%s13 + $0x8] sm:$0xf]
    %v3121 = vld [vmem:[%s13 + $0xc] sm:$0xf]
    %v3122 = vld [vmem:[%s13 + $0x10] sm:$0xf]
    %v3123 = vld [vmem:[%s13 + $0x14] sm:$0xf]
    %v3124 = vld [vmem:[%s13 + $0x18] sm:$0xf]
    %v3125 = vld [vmem:[%s13 + $0x1c] sm:$0xf]
    %v3126 = vld [vmem:[%s13 + $0x20] sm:$0xf]
    %v3127 = vld [vmem:[%s13 + $0x24] sm:$0xf]
    %v3128 = vld [vmem:[%s13 + $0x28] sm:$0xf]
    %v3129 = vld [vmem:[%s13 + $0x2c] sm:$0xf]
    %v3130 = vld [vmem:[%s13 + $0x30] sm:$0xf]
    %v3131 = vld [vmem:[%s13 + $0x34] sm:$0xf]
    %v3132 = vld [vmem:[%s13 + $0x38] sm:$0xf]
    %v3133 = vld [vmem:[%s13 + $0x3c] sm:$0xf]
    %v3134 = vld [vmem:[%s13 + $0x40] sm:$0xf]
    %v3135 = vld [vmem:[%s13 + $0x44] sm:$0xf]
    %v3136 = vld [vmem:[%s13 + $0x48] sm:$0xf]
    %v3137 = vld [vmem:[%s13 + $0x4c] sm:$0xf]
    %v3138 = vld [vmem:[%s13 + $0x50] sm:$0xf]
    %v3139 = vld [vmem:[%s13 + $0x54] sm:$0xf]
    %v3140 = vld [vmem:[%s13 + $0x58] sm:$0xf]
    %v3141 = vld [vmem:[%s13 + $0x5c] sm:$0xf]
    %v3142 = vld [vmem:[%s13 + $0x60] sm:$0xf]
    %v3143 = vld [vmem:[%s13 + $0x64] sm:$0xf]
    %v3144 = vld [vmem:[%s13 + $0x68] sm:$0xf]
    %v3145 = vld [vmem:[%s13 + $0x6c] sm:$0xf]
    %v3146 = vld [vmem:[%s13 + $0x70] sm:$0xf]
    %v3147 = vld [vmem:[%s13 + $0x74] sm:$0xf]
    %v3148 = vld [vmem:[%s13 + $0x78] sm:$0xf]
    %v3149 = vld [vmem:[%s13 + $0x7c] sm:$0xf]
    %v3150 = vld [vmem:[%s17] sm:$0x1]
    %v3152 = vlaneseq
    %v3153 = vshrl.u32 %v3152, 7
    %v3154 = vsub.s32 0, %v3153
    %v3155 = vrot.slane %v3150, %v3154
    %v3189 = vunpack.c.l.b16 %v3118
    %v3190 = vunpack.c.l.b16 %v3119
    %v3191 = vunpack.c.l.b16 %v3120
    %v3192 = vunpack.c.l.b16 %v3121
    %v3193 = vunpack.c.l.b16 %v3122
    %v3194 = vunpack.c.l.b16 %v3123
    %v3195 = vunpack.c.l.b16 %v3124
    %v3196 = vunpack.c.l.b16 %v3125
    %v3197 = vunpack.c.l.b16 %v3126
    %v3198 = vunpack.c.l.b16 %v3127
    %v3199 = vunpack.c.l.b16 %v3128
    %v3200 = vunpack.c.l.b16 %v3129
    %v3201 = vunpack.c.l.b16 %v3130
    %v3202 = vunpack.c.l.b16 %v3131
    %v3203 = vunpack.c.l.b16 %v3132
    %v3204 = vunpack.c.l.b16 %v3133
    %v3205 = vunpack.c.l.b16 %v3134
    %v3206 = vunpack.c.l.b16 %v3135
    %v3207 = vunpack.c.l.b16 %v3136
    %v3208 = vunpack.c.l.b16 %v3137
    %v3209 = vunpack.c.l.b16 %v3138
    %v3210 = vunpack.c.l.b16 %v3139
    %v3211 = vunpack.c.l.b16 %v3140
    %v3212 = vunpack.c.l.b16 %v3141
    %v3213 = vunpack.c.l.b16 %v3142
    %v3214 = vunpack.c.l.b16 %v3143
    %v3215 = vunpack.c.l.b16 %v3144
    %v3216 = vunpack.c.l.b16 %v3145
    %v3217 = vunpack.c.l.b16 %v3146
    %v3218 = vunpack.c.l.b16 %v3147
    %v3219 = vunpack.c.l.b16 %v3148
    %v3220 = vunpack.c.l.b16 %v3149
    %v3221 = vpack.c.b16 %v3190, %v3189
    %v3222 = vpack.c.b16 %v3192, %v3191
    %v3223 = vpack.c.b16 %v3194, %v3193
    %v3224 = vpack.c.b16 %v3196, %v3195
    %v3225 = vpack.c.b16 %v3198, %v3197
    %v3226 = vpack.c.b16 %v3200, %v3199
    %v3227 = vpack.c.b16 %v3202, %v3201
    %v3228 = vpack.c.b16 %v3204, %v3203
    %v3229 = vpack.c.b16 %v3206, %v3205
    %v3230 = vpack.c.b16 %v3208, %v3207
    %v3231 = vpack.c.b16 %v3210, %v3209
    %v3232 = vpack.c.b16 %v3212, %v3211
    %v3233 = vpack.c.b16 %v3214, %v3213
    %v3234 = vpack.c.b16 %v3216, %v3215
    %v3235 = vpack.c.b16 %v3218, %v3217
    %v3236 = vpack.c.b16 %v3220, %v3219
    %3253 = vmatprep.subr.bf16.mxu0 0
    %3254 = vmatpush1.bf16.msra.mxu0 %v3221
    %3255 = vmatprep.subr.bf16.mxu0 0
    %3256 = vmatpush1.bf16.msra.mxu0 %v3222
    %3257 = vmatprep.subr.bf16.mxu0 0
    %3258 = vmatpush1.bf16.msra.mxu0 %v3223
    %3259 = vmatprep.subr.bf16.mxu0 0
    %3260 = vmatpush1.bf16.msra.mxu0 %v3224
    %3261 = vmatprep.subr.bf16.mxu0 0
    %3262 = vmatpush1.bf16.msra.mxu0 %v3225
    %3263 = vmatprep.subr.bf16.mxu0 0
    %3264 = vmatpush1.bf16.msra.mxu0 %v3226
    %3265 = vmatprep.subr.bf16.mxu0 0
    %3266 = vmatpush1.bf16.msra.mxu0 %v3227
    %3267 = vmatprep.subr.bf16.mxu0 0
    %3268 = vmatpush1.bf16.msra.mxu0 %v3228
    %3269 = vmatprep.subr.bf16.mxu0 0
    %3270 = vmatpush1.bf16.msra.mxu0 %v3229
    %3271 = vmatprep.subr.bf16.mxu0 0
    %3272 = vmatpush1.bf16.msra.mxu0 %v3230
    %3273 = vmatprep.subr.bf16.mxu0 0
    %3274 = vmatpush1.bf16.msra.mxu0 %v3231
    %3275 = vmatprep.subr.bf16.mxu0 0
    %3276 = vmatpush1.bf16.msra.mxu0 %v3232
    %3277 = vmatprep.subr.bf16.mxu0 0
    %3278 = vmatpush1.bf16.msra.mxu0 %v3233
    %3279 = vmatprep.subr.bf16.mxu0 0
    %3280 = vmatpush1.bf16.msra.mxu0 %v3234
    %3281 = vmatprep.subr.bf16.mxu0 0
    %3282 = vmatpush1.bf16.msra.mxu0 %v3235
    %3283 = vmatprep.subr.bf16.mxu0 0
    %3284 = vmatpush1.bf16.msra.mxu0 %v3236
    %3285 = vmatprep.mubr.bf16.mxu0 %v3087
    %3286 = vmatmul.mubr.bf16.gmra.mrb[0].mxu0 %v3086
    %v3287 = vpop.f32.mrb[0].mxu0
    %v3288 = vadd.f32 %v3155, %v3287
    %v3289 = vpop.f32.mrb[0].mxu0
    %v3290 = vpop.f32.mrb[0].mxu0
    %v3291 = vadd.f32 %v3155, %v3290
    %v3292 = vpop.f32.mrb[0].mxu0
    %3293 = vmatprep.mubr.bf16.mxu0 %v3089
    %3294 = vmatmul.mubr.bf16.gmra.mrb[0].mxu0 %v3088
    %v3295 = vpop.f32.mrb[0].mxu0
    %v3296 = vadd.f32 %v3155, %v3295
    %v3297 = vpop.f32.mrb[0].mxu0
    %v3298 = vpop.f32.mrb[0].mxu0
    %v3299 = vadd.f32 %v3155, %v3298
    %v3300 = vpop.f32.mrb[0].mxu0
    %3301 = vmatprep.mubr.bf16.mxu0 %v3091
    %3302 = vmatmul.mubr.bf16.gmra.mrb[0].mxu0 %v3090
    %v3303 = vpop.f32.mrb[0].mxu0
    %v3304 = vadd.f32 %v3155, %v3303
    %v3305 = vpop.f32.mrb[0].mxu0
    %v3306 = vpop.f32.mrb[0].mxu0
    %v3307 = vadd.f32 %v3155, %v3306
    %v3308 = vpop.f32.mrb[0].mxu0
    %3309 = vmatprep.mubr.bf16.mxu0 %v3093
    %3310 = vmatmul.mubr.bf16.gmra.mrb[0].mxu0 %v3092
    %v3311 = vpop.f32.mrb[0].mxu0
    %v3312 = vadd.f32 %v3155, %v3311
    %v3313 = vpop.f32.mrb[0].mxu0
    %v3314 = vpop.f32.mrb[0].mxu0
    %v3315 = vadd.f32 %v3155, %v3314
    %v3316 = vpop.f32.mrb[0].mxu0
    %3317 = vmatprep.mubr.bf16.mxu0 %v3095
    %3318 = vmatmul.mubr.bf16.gmra.mrb[0].mxu0 %v3094
    %v3319 = vpop.f32.mrb[0].mxu0
    %v3320 = vadd.f32 %v3155, %v3319
    %v3321 = vpop.f32.mrb[0].mxu0
    %v3322 = vpop.f32.mrb[0].mxu0
    %v3323 = vadd.f32 %v3155, %v3322
    %v3324 = vpop.f32.mrb[0].mxu0
    %3325 = vmatprep.mubr.bf16.mxu0 %v3097
    %3326 = vmatmul.mubr.bf16.gmra.mrb[0].mxu0 %v3096
    %v3327 = vpop.f32.mrb[0].mxu0
    %v3328 = vadd.f32 %v3155, %v3327
    %v3329 = vpop.f32.mrb[0].mxu0
    %v3330 = vpop.f32.mrb[0].mxu0
    %v3331 = vadd.f32 %v3155, %v3330
    %v3332 = vpop.f32.mrb[0].mxu0
    %3333 = vmatprep.mubr.bf16.mxu0 %v3099
    %3334 = vmatmul.mubr.bf16.gmra.mrb[0].mxu0 %v3098
    %v3335 = vpop.f32.mrb[0].mxu0
    %v3336 = vadd.f32 %v3155, %v3335
    %v3337 = vpop.f32.mrb[0].mxu0
    %v3338 = vpop.f32.mrb[0].mxu0
    %v3339 = vadd.f32 %v3155, %v3338
    %v3340 = vpop.f32.mrb[0].mxu0
    %3341 = vmatprep.mubr.bf16.mxu0 %v3101
    %3342 = vmatmul.mubr.bf16.gmra.mrb[0].mxu0 %v3100
    %v3343 = vpop.f32.mrb[0].mxu0
    %v3344 = vadd.f32 %v3155, %v3343
    %v3345 = vpop.f32.mrb[0].mxu0
    %v3346 = vpop.f32.mrb[0].mxu0
    %v3347 = vadd.f32 %v3155, %v3346
    %v3348 = vpop.f32.mrb[0].mxu0
    %3349 = vmatprep.mubr.bf16.mxu0 %v3103
    %3350 = vmatmul.mubr.bf16.gmra.mrb[0].mxu0 %v3102
    %v3351 = vpop.f32.mrb[0].mxu0
    %v3352 = vadd.f32 %v3155, %v3351
    %v3353 = vpop.f32.mrb[0].mxu0
    %v3354 = vpop.f32.mrb[0].mxu0
    %v3355 = vadd.f32 %v3155, %v3354
    %v3356 = vpop.f32.mrb[0].mxu0
    %3357 = vmatprep.mubr.bf16.mxu0 %v3105
    %3358 = vmatmul.mubr.bf16.gmra.mrb[0].mxu0 %v3104
    %v3359 = vpop.f32.mrb[0].mxu0
    %v3360 = vadd.f32 %v3155, %v3359
    %v3361 = vpop.f32.mrb[0].mxu0
    %v3362 = vpop.f32.mrb[0].mxu0
    %v3363 = vadd.f32 %v3155, %v3362
    %v3364 = vpop.f32.mrb[0].mxu0
    %3365 = vmatprep.mubr.bf16.mxu0 %v3107
    %3366 = vmatmul.mubr.bf16.gmra.mrb[0].mxu0 %v3106
    %v3367 = vpop.f32.mrb[0].mxu0
    %v3368 = vadd.f32 %v3155, %v3367
    %v3369 = vpop.f32.mrb[0].mxu0
    %v3370 = vpop.f32.mrb[0].mxu0
    %v3371 = vadd.f32 %v3155, %v3370
    %v3372 = vpop.f32.mrb[0].mxu0
    %3373 = vmatprep.mubr.bf16.mxu0 %v3109
    %3374 = vmatmul.mubr.bf16.gmra.mrb[0].mxu0 %v3108
    %v3375 = vpop.f32.mrb[0].mxu0
    %v3376 = vadd.f32 %v3155, %v3375
    %v3377 = vpop.f32.mrb[0].mxu0
    %v3378 = vpop.f32.mrb[0].mxu0
    %v3379 = vadd.f32 %v3155, %v3378
    %v3380 = vpop.f32.mrb[0].mxu0
    %3381 = vmatprep.mubr.bf16.mxu0 %v3111
    %3382 = vmatmul.mubr.bf16.gmra.mrb[0].mxu0 %v3110
    %v3383 = vpop.f32.mrb[0].mxu0
    %v3384 = vadd.f32 %v3155, %v3383
    %v3385 = vpop.f32.mrb[0].mxu0
    %v3386 = vpop.f32.mrb[0].mxu0
    %v3387 = vadd.f32 %v3155, %v3386
    %v3388 = vpop.f32.mrb[0].mxu0
    %3389 = vmatprep.mubr.bf16.mxu0 %v3113
    %3390 = vmatmul.mubr.bf16.gmra.mrb[0].mxu0 %v3112
    %v3391 = vpop.f32.mrb[0].mxu0
    %v3392 = vadd.f32 %v3155, %v3391
    %v3393 = vpop.f32.mrb[0].mxu0
    %v3394 = vpop.f32.mrb[0].mxu0
    %v3395 = vadd.f32 %v3155, %v3394
    %v3396 = vpop.f32.mrb[0].mxu0
    %3397 = vmatprep.mubr.bf16.mxu0 %v3115
    %3398 = vmatmul.mubr.bf16.gmra.mrb[0].mxu0 %v3114
    %v3399 = vpop.f32.mrb[0].mxu0
    %v3400 = vadd.f32 %v3155, %v3399
    %v3401 = vpop.f32.mrb[0].mxu0
    %v3402 = vpop.f32.mrb[0].mxu0
    %v3403 = vadd.f32 %v3155, %v3402
    %v3404 = vpop.f32.mrb[0].mxu0
    %3405 = vmatprep.mubr.bf16.mxu0 %v3117
    %3406 = vmatmul.mubr.bf16.gmra.mrb[0].mxu0 %v3116
    %v3407 = vpop.f32.mrb[0].mxu0
    %v3408 = vadd.f32 %v3155, %v3407
    %v3409 = vpop.f32.mrb[0].mxu0
    %v3410 = vpop.f32.mrb[0].mxu0
    %v3411 = vadd.f32 %v3155, %v3410
    %v3412 = vpop.f32.mrb[0].mxu0
    %3413 = vdwg.mxu0
    %3414 = vrot.lane.b32.xlu0 %v2896, 64
    %v3415 = vpop.permute.xlu0 %3414
    %3416 = vrot.lane.b32.xlu0 %v2899, 64
    %v3417 = vpop.permute.xlu0 %3416
    %3418 = vrot.lane.b32.xlu0 %v2904, 64
    %v3419 = vpop.permute.xlu0 %3418
    %3420 = vrot.lane.b32.xlu0 %v2907, 64
    %v3421 = vpop.permute.xlu0 %3420
    %3422 = vrot.lane.b32.xlu0 %v2912, 64
    %v3423 = vpop.permute.xlu0 %3422
    %3424 = vrot.lane.b32.xlu0 %v2915, 64
    %v3425 = vpop.permute.xlu0 %3424
    %3426 = vrot.lane.b32.xlu0 %v2920, 64
    %v3427 = vpop.permute.xlu0 %3426
    %3428 = vrot.lane.b32.xlu0 %v2923, 64
    %v3429 = vpop.permute.xlu0 %3428
    %3430 = vrot.lane.b32.xlu0 %v2928, 64
    %v3431 = vpop.permute.xlu0 %3430
    %3432 = vrot.lane.b32.xlu0 %v2931, 64
    %v3433 = vpop.permute.xlu0 %3432
    %3434 = vrot.lane.b32.xlu0 %v2936, 64
    %v3435 = vpop.permute.xlu0 %3434
    %3436 = vrot.lane.b32.xlu0 %v2939, 64
    %v3437 = vpop.permute.xlu0 %3436
    %3438 = vrot.lane.b32.xlu0 %v2944, 64
    %v3439 = vpop.permute.xlu0 %3438
    %3440 = vrot.lane.b32.xlu0 %v2947, 64
    %v3441 = vpop.permute.xlu0 %3440
    %3442 = vrot.lane.b32.xlu0 %v2952, 64
    %v3443 = vpop.permute.xlu0 %3442
    %3444 = vrot.lane.b32.xlu0 %v2955, 64
    %v3445 = vpop.permute.xlu0 %3444
    %3446 = vrot.lane.b32.xlu0 %v2960, 64
    %v3447 = vpop.permute.xlu0 %3446
    %3448 = vrot.lane.b32.xlu0 %v2963, 64
    %v3449 = vpop.permute.xlu0 %3448
    %3450 = vrot.lane.b32.xlu0 %v2968, 64
    %v3451 = vpop.permute.xlu0 %3450
    %3452 = vrot.lane.b32.xlu0 %v2971, 64
    %v3453 = vpop.permute.xlu0 %3452
    %3454 = vrot.lane.b32.xlu0 %v2976, 64
    %v3455 = vpop.permute.xlu0 %3454
    %3456 = vrot.lane.b32.xlu0 %v2979, 64
    %v3457 = vpop.permute.xlu0 %3456
    %3458 = vrot.lane.b32.xlu0 %v2984, 64
    %v3459 = vpop.permute.xlu0 %3458
    %3460 = vrot.lane.b32.xlu0 %v2987, 64
    %v3461 = vpop.permute.xlu0 %3460
    %3462 = vrot.lane.b32.xlu0 %v2992, 64
    %v3463 = vpop.permute.xlu0 %3462
    %3464 = vrot.lane.b32.xlu0 %v2995, 64
    %v3465 = vpop.permute.xlu0 %3464
    %3466 = vrot.lane.b32.xlu0 %v3000, 64
    %v3467 = vpop.permute.xlu0 %3466
    %3468 = vrot.lane.b32.xlu0 %v3003, 64
    %v3469 = vpop.permute.xlu0 %3468
    %3470 = vrot.lane.b32.xlu0 %v3008, 64
    %v3471 = vpop.permute.xlu0 %3470
    %3472 = vrot.lane.b32.xlu0 %v3011, 64
    %v3473 = vpop.permute.xlu0 %3472
    %3474 = vrot.lane.b32.xlu0 %v3016, 64
    %v3475 = vpop.permute.xlu0 %3474
    %3476 = vrot.lane.b32.xlu0 %v3019, 64
    %v3477 = vpop.permute.xlu0 %3476
    %v3478 = vmul.f32 %v2896, %v3415
    %v3479 = vmul.f32 %v2899, %v3417
    %v3480 = vmul.f32 %v2904, %v3419
    %v3481 = vmul.f32 %v2907, %v3421
    %v3482 = vmul.f32 %v2912, %v3423
    %v3483 = vmul.f32 %v2915, %v3425
    %v3484 = vmul.f32 %v2920, %v3427
    %v3485 = vmul.f32 %v2923, %v3429
    %v3486 = vmul.f32 %v2928, %v3431
    %v3487 = vmul.f32 %v2931, %v3433
    %v3488 = vmul.f32 %v2936, %v3435
    %v3489 = vmul.f32 %v2939, %v3437
    %v3490 = vmul.f32 %v2944, %v3439
    %v3491 = vmul.f32 %v2947, %v3441
    %v3492 = vmul.f32 %v2952, %v3443
    %v3493 = vmul.f32 %v2955, %v3445
    %v3494 = vmul.f32 %v2960, %v3447
    %v3495 = vmul.f32 %v2963, %v3449
    %v3496 = vmul.f32 %v2968, %v3451
    %v3497 = vmul.f32 %v2971, %v3453
    %v3498 = vmul.f32 %v2976, %v3455
    %v3499 = vmul.f32 %v2979, %v3457
    %v3500 = vmul.f32 %v2984, %v3459
    %v3501 = vmul.f32 %v2987, %v3461
    %v3502 = vmul.f32 %v2992, %v3463
    %v3503 = vmul.f32 %v2995, %v3465
    %v3504 = vmul.f32 %v3000, %v3467
    %v3505 = vmul.f32 %v3003, %v3469
    %v3506 = vmul.f32 %v3008, %v3471
    %v3507 = vmul.f32 %v3011, %v3473
    %v3508 = vmul.f32 %v3016, %v3475
    %v3509 = vmul.f32 %v3019, %v3477
    %v3510 = vadd.f32 %v3478, %v3288
    %v3511 = vadd.f32 %v3479, %v3291
    %v3512 = vadd.f32 %v3480, %v3296
    %v3513 = vadd.f32 %v3481, %v3299
    %v3514 = vadd.f32 %v3482, %v3304
    %v3515 = vadd.f32 %v3483, %v3307
    %v3516 = vadd.f32 %v3484, %v3312
    %v3517 = vadd.f32 %v3485, %v3315
    %v3518 = vadd.f32 %v3486, %v3320
    %v3519 = vadd.f32 %v3487, %v3323
    %v3520 = vadd.f32 %v3488, %v3328
    %v3521 = vadd.f32 %v3489, %v3331
    %v3522 = vadd.f32 %v3490, %v3336
    %v3523 = vadd.f32 %v3491, %v3339
    %v3524 = vadd.f32 %v3492, %v3344
    %v3525 = vadd.f32 %v3493, %v3347
    %v3526 = vadd.f32 %v3494, %v3352
    %v3527 = vadd.f32 %v3495, %v3355
    %v3528 = vadd.f32 %v3496, %v3360
    %v3529 = vadd.f32 %v3497, %v3363
    %v3530 = vadd.f32 %v3498, %v3368
    %v3531 = vadd.f32 %v3499, %v3371
    %v3532 = vadd.f32 %v3500, %v3376
    %v3533 = vadd.f32 %v3501, %v3379
    %v3534 = vadd.f32 %v3502, %v3384
    %v3535 = vadd.f32 %v3503, %v3387
    %v3536 = vadd.f32 %v3504, %v3392
    %v3537 = vadd.f32 %v3505, %v3395
    %v3538 = vadd.f32 %v3506, %v3400
    %v3539 = vadd.f32 %v3507, %v3403
    %v3540 = vadd.f32 %v3508, %v3408
    %v3541 = vadd.f32 %v3509, %v3411
    %v3542 = vadd.f32 %v3510, %v3511
    %v3543 = vadd.f32 %v3542, %v3512
    %v3544 = vadd.f32 %v3543, %v3513
    %v3545 = vadd.f32 %v3544, %v3514
    %v3546 = vadd.f32 %v3545, %v3515
    %v3547 = vadd.f32 %v3546, %v3516
    %v3548 = vadd.f32 %v3547, %v3517
    %v3549 = vadd.f32 %v3548, %v3518
    %v3550 = vadd.f32 %v3549, %v3519
    %v3551 = vadd.f32 %v3550, %v3520
    %v3552 = vadd.f32 %v3551, %v3521
    %v3553 = vadd.f32 %v3552, %v3522
    %v3554 = vadd.f32 %v3553, %v3523
    %v3555 = vadd.f32 %v3554, %v3524
    %v3556 = vadd.f32 %v3555, %v3525
    %v3557 = vadd.f32 %v3556, %v3526
    %v3558 = vadd.f32 %v3557, %v3527
    %v3559 = vadd.f32 %v3558, %v3528
    %v3560 = vadd.f32 %v3559, %v3529
    %v3561 = vadd.f32 %v3560, %v3530
    %v3562 = vadd.f32 %v3561, %v3531
    %v3563 = vadd.f32 %v3562, %v3532
    %v3564 = vadd.f32 %v3563, %v3533
    %v3565 = vadd.f32 %v3564, %v3534
    %v3566 = vadd.f32 %v3565, %v3535
    %v3567 = vadd.f32 %v3566, %v3536
    %v3568 = vadd.f32 %v3567, %v3537
    %v3569 = vadd.f32 %v3568, %v3538
    %v3570 = vadd.f32 %v3569, %v3539
    %v3571 = vadd.f32 %v3570, %v3540
    %v3572 = vadd.f32 %v3571, %v3541
    %v3573 = vrot.slane %v3572, 4
    %v3574 = vadd.f32 %v3572, %v3573
    %v3575 = vrot.slane %v3574, 2
    %v3576 = vadd.f32 %v3574, %v3575
    %v3577 = vrot.slane %v3576, 1
    %v3578 = vadd.f32 %v3576, %v3577
    %v3579 = vmul.f32 %v3510, %v3510
    %v3580 = vmul.f32 %v3511, %v3511
    %v3581 = vmul.f32 %v3512, %v3512
    %v3582 = vmul.f32 %v3513, %v3513
    %v3583 = vmul.f32 %v3514, %v3514
    %v3584 = vmul.f32 %v3515, %v3515
    %v3585 = vmul.f32 %v3516, %v3516
    %v3586 = vmul.f32 %v3517, %v3517
    %v3587 = vmul.f32 %v3518, %v3518
    %v3588 = vmul.f32 %v3519, %v3519
    %v3589 = vmul.f32 %v3520, %v3520
    %v3590 = vmul.f32 %v3521, %v3521
    %v3591 = vmul.f32 %v3522, %v3522
    %v3592 = vmul.f32 %v3523, %v3523
    %v3593 = vmul.f32 %v3524, %v3524
    %v3594 = vmul.f32 %v3525, %v3525
    %v3595 = vmul.f32 %v3526, %v3526
    %v3596 = vmul.f32 %v3527, %v3527
    %v3597 = vmul.f32 %v3528, %v3528
    %v3598 = vmul.f32 %v3529, %v3529
    %v3599 = vmul.f32 %v3530, %v3530
    %v3600 = vmul.f32 %v3531, %v3531
    %v3601 = vmul.f32 %v3532, %v3532
    %v3602 = vmul.f32 %v3533, %v3533
    %v3603 = vmul.f32 %v3534, %v3534
    %v3604 = vmul.f32 %v3535, %v3535
    %v3605 = vmul.f32 %v3536, %v3536
    %v3606 = vmul.f32 %v3537, %v3537
    %v3607 = vmul.f32 %v3538, %v3538
    %v3608 = vmul.f32 %v3539, %v3539
    %v3609 = vmul.f32 %v3540, %v3540
    %v3610 = vmul.f32 %v3541, %v3541
    %v3611 = vadd.f32 %v3579, %v3580
    %v3612 = vadd.f32 %v3611, %v3581
    %v3613 = vadd.f32 %v3612, %v3582
    %v3614 = vadd.f32 %v3613, %v3583
    %v3615 = vadd.f32 %v3614, %v3584
    %v3616 = vadd.f32 %v3615, %v3585
    %v3617 = vadd.f32 %v3616, %v3586
    %v3618 = vadd.f32 %v3617, %v3587
    %v3619 = vadd.f32 %v3618, %v3588
    %v3620 = vadd.f32 %v3619, %v3589
    %v3621 = vadd.f32 %v3620, %v3590
    %v3622 = vadd.f32 %v3621, %v3591
    %v3623 = vadd.f32 %v3622, %v3592
    %v3624 = vadd.f32 %v3623, %v3593
    %v3625 = vadd.f32 %v3624, %v3594
    %v3626 = vadd.f32 %v3625, %v3595
    %v3627 = vadd.f32 %v3626, %v3596
    %v3628 = vadd.f32 %v3627, %v3597
    %v3629 = vadd.f32 %v3628, %v3598
    %v3630 = vadd.f32 %v3629, %v3599
    %v3631 = vadd.f32 %v3630, %v3600
    %v3632 = vadd.f32 %v3631, %v3601
    %v3633 = vadd.f32 %v3632, %v3602
    %v3634 = vadd.f32 %v3633, %v3603
    %v3635 = vadd.f32 %v3634, %v3604
    %v3636 = vadd.f32 %v3635, %v3605
    %v3637 = vadd.f32 %v3636, %v3606
    %v3638 = vadd.f32 %v3637, %v3607
    %v3639 = vadd.f32 %v3638, %v3608
    %v3640 = vadd.f32 %v3639, %v3609
    %v3641 = vadd.f32 %v3640, %v3610
    %v3642 = vrot.slane %v3641, 4
    %v3643 = vadd.f32 %v3641, %v3642
    %v3644 = vrot.slane %v3643, 2
    %v3645 = vadd.f32 %v3643, %v3644
    %v3646 = vrot.slane %v3645, 1
    %v3647 = vadd.f32 %v3645, %v3646
    %v3648 = vrcp.pop 256.0
    %v3649 = vmul.f32 %v3578, %v3648
    %v3650 = vmul.f32 %v3647, %v3648
    %v3651 = vmul.f32 %v3649, %v3649
    %v3652 = vsub.f32 %v3650, %v3651
    %v3653 = vmax.f32 %v3652, 0.0
    %v3654 = vadd.f32 %v3653, 1e-05
    %v3655 = vrsqrt.pop %v3654
    %3656 = vst [vmem:[#allocation2] sm:$0xff] %v3510
    %3657 = vst [vmem:[#allocation2 + $0x8] sm:$0xff] %v3511
    %3658 = vst [vmem:[#allocation2 + $0x10] sm:$0xff] %v3512
    %3659 = vst [vmem:[#allocation2 + $0x18] sm:$0xff] %v3513
    %3660 = vst [vmem:[#allocation2 + $0x20] sm:$0xff] %v3514
    %3661 = vst [vmem:[#allocation2 + $0x28] sm:$0xff] %v3515
    %3662 = vst [vmem:[#allocation2 + $0x30] sm:$0xff] %v3516
    %3663 = vst [vmem:[#allocation2 + $0x38] sm:$0xff] %v3517
    %3664 = vst [vmem:[#allocation2 + $0x40] sm:$0xff] %v3518
    %3665 = vst [vmem:[#allocation2 + $0x48] sm:$0xff] %v3519
    %3666 = vst [vmem:[#allocation2 + $0x50] sm:$0xff] %v3520
    %3667 = vst [vmem:[#allocation2 + $0x58] sm:$0xff] %v3521
    %3668 = vst [vmem:[#allocation2 + $0x60] sm:$0xff] %v3522
    %3669 = vst [vmem:[#allocation2 + $0x68] sm:$0xff] %v3523
    %3670 = vst [vmem:[#allocation2 + $0x70] sm:$0xff] %v3524
    %3671 = vst [vmem:[#allocation2 + $0x78] sm:$0xff] %v3525
    %3672 = vst [vmem:[#allocation2 + $0x80] sm:$0xff] %v3526
    %3673 = vst [vmem:[#allocation2 + $0x88] sm:$0xff] %v3527
    %3674 = vst [vmem:[#allocation2 + $0x90] sm:$0xff] %v3528
    %3675 = vst [vmem:[#allocation2 + $0x98] sm:$0xff] %v3529
    %3676 = vst [vmem:[#allocation2 + $0xa0] sm:$0xff] %v3530
    %3677 = vst [vmem:[#allocation2 + $0xa8] sm:$0xff] %v3531
    %3678 = vst [vmem:[#allocation2 + $0xb0] sm:$0xff] %v3532
    %3679 = vst [vmem:[#allocation2 + $0xb8] sm:$0xff] %v3533
    %3680 = vst [vmem:[#allocation2 + $0xc0] sm:$0xff] %v3534
    %3681 = vst [vmem:[#allocation2 + $0xc8] sm:$0xff] %v3535
    %3682 = vst [vmem:[#allocation2 + $0xd0] sm:$0xff] %v3536
    %3683 = vst [vmem:[#allocation2 + $0xd8] sm:$0xff] %v3537
    %3684 = vst [vmem:[#allocation2 + $0xe0] sm:$0xff] %v3538
    %3685 = vst [vmem:[#allocation2 + $0xe8] sm:$0xff] %v3539
    %3686 = vst [vmem:[#allocation2 + $0xf0] sm:$0xff] %v3540
    %3687 = vst [vmem:[#allocation2 + $0xf8] sm:$0xff] %v3541
    %v3688 = vld [vmem:[#allocation2] ss:$2 sm:$0xff]
    %s3689 = scalar_lea.vmem [#allocation2], 16
    %v3690 = vld [vmem:[%s3689] ss:$2 sm:$0xff]
    %s3691 = scalar_lea.vmem [#allocation2], 32
    %v3692 = vld [vmem:[%s3691] ss:$2 sm:$0xff]
    %s3693 = scalar_lea.vmem [#allocation2], 48
    %v3694 = vld [vmem:[%s3693] ss:$2 sm:$0xff]
    %s3695 = scalar_lea.vmem [#allocation2], 64
    %v3696 = vld [vmem:[%s3695] ss:$2 sm:$0xff]
    %s3697 = scalar_lea.vmem [#allocation2], 80
    %v3698 = vld [vmem:[%s3697] ss:$2 sm:$0xff]
    %s3699 = scalar_lea.vmem [#allocation2], 96
    %v3700 = vld [vmem:[%s3699] ss:$2 sm:$0xff]
    %s3701 = scalar_lea.vmem [#allocation2], 112
    %v3702 = vld [vmem:[%s3701] ss:$2 sm:$0xff]
    %s3703 = scalar_lea.vmem [#allocation2], 128
    %v3704 = vld [vmem:[%s3703] ss:$2 sm:$0xff]
    %s3705 = scalar_lea.vmem [#allocation2], 144
    %v3706 = vld [vmem:[%s3705] ss:$2 sm:$0xff]
    %s3707 = scalar_lea.vmem [#allocation2], 160
    %v3708 = vld [vmem:[%s3707] ss:$2 sm:$0xff]
    %s3709 = scalar_lea.vmem [#allocation2], 176
    %v3710 = vld [vmem:[%s3709] ss:$2 sm:$0xff]
    %s3711 = scalar_lea.vmem [#allocation2], 192
    %v3712 = vld [vmem:[%s3711] ss:$2 sm:$0xff]
    %s3713 = scalar_lea.vmem [#allocation2], 208
    %v3714 = vld [vmem:[%s3713] ss:$2 sm:$0xff]
    %s3715 = scalar_lea.vmem [#allocation2], 224
    %v3716 = vld [vmem:[%s3715] ss:$2 sm:$0xff]
    %s3717 = scalar_lea.vmem [#allocation2], 240
    %v3718 = vld [vmem:[%s3717] ss:$2 sm:$0xff]
    %v3719 = vld [vmem:[%s2017] ss:$2 sm:$0xff]
    %v3720 = vld [vmem:[%s2019] ss:$2 sm:$0xff]
    %v3721 = vld [vmem:[%s2021] ss:$2 sm:$0xff]
    %v3722 = vld [vmem:[%s2023] ss:$2 sm:$0xff]
    %v3723 = vld [vmem:[%s2025] ss:$2 sm:$0xff]
    %v3724 = vld [vmem:[%s2027] ss:$2 sm:$0xff]
    %v3725 = vld [vmem:[%s2029] ss:$2 sm:$0xff]
    %v3726 = vld [vmem:[%s2031] ss:$2 sm:$0xff]
    %v3727 = vld [vmem:[%s2033] ss:$2 sm:$0xff]
    %v3728 = vld [vmem:[%s2035] ss:$2 sm:$0xff]
    %v3729 = vld [vmem:[%s2037] ss:$2 sm:$0xff]
    %v3730 = vld [vmem:[%s2039] ss:$2 sm:$0xff]
    %v3731 = vld [vmem:[%s2041] ss:$2 sm:$0xff]
    %v3732 = vld [vmem:[%s2043] ss:$2 sm:$0xff]
    %v3733 = vld [vmem:[%s2045] ss:$2 sm:$0xff]
    %v3734 = vld [vmem:[%s2047] ss:$2 sm:$0xff]
    %v3735 = vmax.f32 %v3688, %v3719
    %v3736 = vmax.f32 %v3690, %v3720
    %v3737 = vmax.f32 %v3692, %v3721
    %v3738 = vmax.f32 %v3694, %v3722
    %v3739 = vmax.f32 %v3696, %v3723
    %v3740 = vmax.f32 %v3698, %v3724
    %v3741 = vmax.f32 %v3700, %v3725
    %v3742 = vmax.f32 %v3702, %v3726
    %v3743 = vmax.f32 %v3704, %v3727
    %v3744 = vmax.f32 %v3706, %v3728
    %v3745 = vmax.f32 %v3708, %v3729
    %v3746 = vmax.f32 %v3710, %v3730
    %v3747 = vmax.f32 %v3712, %v3731
    %v3748 = vmax.f32 %v3714, %v3732
    %v3749 = vmax.f32 %v3716, %v3733
    %v3750 = vmax.f32 %v3718, %v3734
    %v3751 = vsub.f32 %v3735, %v3649
    %v3752 = vsub.f32 %v3736, %v3649
    %v3753 = vsub.f32 %v3737, %v3649
    %v3754 = vsub.f32 %v3738, %v3649
    %v3755 = vsub.f32 %v3739, %v3649
    %v3756 = vsub.f32 %v3740, %v3649
    %v3757 = vsub.f32 %v3741, %v3649
    %v3758 = vsub.f32 %v3742, %v3649
    %v3759 = vsub.f32 %v3743, %v3649
    %v3760 = vsub.f32 %v3744, %v3649
    %v3761 = vsub.f32 %v3745, %v3649
    %v3762 = vsub.f32 %v3746, %v3649
    %v3763 = vsub.f32 %v3747, %v3649
    %v3764 = vsub.f32 %v3748, %v3649
    %v3765 = vsub.f32 %v3749, %v3649
    %v3766 = vsub.f32 %v3750, %v3649
    %v3767 = vmul.f32 %v3751, %v3655
    %v3768 = vmul.f32 %v3752, %v3655
    %v3769 = vmul.f32 %v3753, %v3655
    %v3770 = vmul.f32 %v3754, %v3655
    %v3771 = vmul.f32 %v3755, %v3655
    %v3772 = vmul.f32 %v3756, %v3655
    %v3773 = vmul.f32 %v3757, %v3655
    %v3774 = vmul.f32 %v3758, %v3655
    %v3775 = vmul.f32 %v3759, %v3655
    %v3776 = vmul.f32 %v3760, %v3655
    %v3777 = vmul.f32 %v3761, %v3655
    %v3778 = vmul.f32 %v3762, %v3655
    %v3779 = vmul.f32 %v3763, %v3655
    %v3780 = vmul.f32 %v3764, %v3655
    %v3781 = vmul.f32 %v3765, %v3655
    %v3782 = vmul.f32 %v3766, %v3655
    %v3783 = vmax.f32 %v3767, 0.0
    %v3784 = vmax.f32 %v3768, 0.0
    %v3785 = vmax.f32 %v3769, 0.0
    %v3786 = vmax.f32 %v3770, 0.0
    %v3787 = vmax.f32 %v3771, 0.0
    %v3788 = vmax.f32 %v3772, 0.0
    %v3789 = vmax.f32 %v3773, 0.0
    %v3790 = vmax.f32 %v3774, 0.0
    %v3791 = vmax.f32 %v3775, 0.0
    %v3792 = vmax.f32 %v3776, 0.0
    %v3793 = vmax.f32 %v3777, 0.0
    %v3794 = vmax.f32 %v3778, 0.0
    %v3795 = vmax.f32 %v3779, 0.0
    %v3796 = vmax.f32 %v3780, 0.0
    %v3797 = vmax.f32 %v3781, 0.0
    %v3798 = vmax.f32 %v3782, 0.0
    %3799 = vst [vmem:[#allocation4] sm:$0xff] 0.0
    %3800 = vst [vmem:[#allocation4 + $0x8] sm:$0xff] %v3783
    %3801 = vst [vmem:[#allocation4 + $0x10] sm:$0xff] %v3784
    %3802 = vst [vmem:[#allocation4 + $0x18] sm:$0xff] %v3785
    %3803 = vst [vmem:[#allocation4 + $0x20] sm:$0xff] %v3786
    %3804 = vst [vmem:[#allocation4 + $0x28] sm:$0xff] %v3787
    %3805 = vst [vmem:[#allocation4 + $0x30] sm:$0xff] %v3788
    %3806 = vst [vmem:[#allocation4 + $0x38] sm:$0xff] %v3789
    %3807 = vst [vmem:[#allocation4 + $0x40] sm:$0xff] %v3790
    %3808 = vst [vmem:[#allocation4 + $0x48] sm:$0xff] %v3791
    %3809 = vst [vmem:[#allocation4 + $0x50] sm:$0xff] %v3792
    %3810 = vst [vmem:[#allocation4 + $0x58] sm:$0xff] %v3793
    %3811 = vst [vmem:[#allocation4 + $0x60] sm:$0xff] %v3794
    %3812 = vst [vmem:[#allocation4 + $0x68] sm:$0xff] %v3795
    %3813 = vst [vmem:[#allocation4 + $0x70] sm:$0xff] %v3796
    %3814 = vst [vmem:[#allocation4 + $0x78] sm:$0xff] %v3797
    %3815 = vst [vmem:[#allocation4 + $0x80] sm:$0xff] %v3798
    %3816 = vst [vmem:[#allocation4 + $0x88] sm:$0xff] 0.0
    %v3817 = vld [vmem:[#allocation4 + $0x7] sm:$0xff]
    %v3818 = vld [vmem:[#allocation4 + $0xf] sm:$0xff]
    %v3819 = vld [vmem:[#allocation4 + $0x17] sm:$0xff]
    %v3820 = vld [vmem:[#allocation4 + $0x1f] sm:$0xff]
    %v3821 = vld [vmem:[#allocation4 + $0x27] sm:$0xff]
    %v3822 = vld [vmem:[#allocation4 + $0x2f] sm:$0xff]
    %v3823 = vld [vmem:[#allocation4 + $0x37] sm:$0xff]
    %v3824 = vld [vmem:[#allocation4 + $0x3f] sm:$0xff]
    %v3825 = vld [vmem:[#allocation4 + $0x47] sm:$0xff]
    %v3826 = vld [vmem:[#allocation4 + $0x4f] sm:$0xff]
    %v3827 = vld [vmem:[#allocation4 + $0x57] sm:$0xff]
    %v3828 = vld [vmem:[#allocation4 + $0x5f] sm:$0xff]
    %v3829 = vld [vmem:[#allocation4 + $0x67] sm:$0xff]
    %v3830 = vld [vmem:[#allocation4 + $0x6f] sm:$0xff]
    %v3831 = vld [vmem:[#allocation4 + $0x77] sm:$0xff]
    %v3832 = vld [vmem:[#allocation4 + $0x7f] sm:$0xff]
    %v3833 = vld [vmem:[#allocation4 + $0x8] sm:$0xff]
    %v3834 = vld [vmem:[#allocation4 + $0x10] sm:$0xff]
    %v3835 = vld [vmem:[#allocation4 + $0x18] sm:$0xff]
    %v3836 = vld [vmem:[#allocation4 + $0x20] sm:$0xff]
    %v3837 = vld [vmem:[#allocation4 + $0x28] sm:$0xff]
    %v3838 = vld [vmem:[#allocation4 + $0x30] sm:$0xff]
    %v3839 = vld [vmem:[#allocation4 + $0x38] sm:$0xff]
    %v3840 = vld [vmem:[#allocation4 + $0x40] sm:$0xff]
    %v3841 = vld [vmem:[#allocation4 + $0x48] sm:$0xff]
    %v3842 = vld [vmem:[#allocation4 + $0x50] sm:$0xff]
    %v3843 = vld [vmem:[#allocation4 + $0x58] sm:$0xff]
    %v3844 = vld [vmem:[#allocation4 + $0x60] sm:$0xff]
    %v3845 = vld [vmem:[#allocation4 + $0x68] sm:$0xff]
    %v3846 = vld [vmem:[#allocation4 + $0x70] sm:$0xff]
    %v3847 = vld [vmem:[#allocation4 + $0x78] sm:$0xff]
    %v3848 = vld [vmem:[#allocation4 + $0x80] sm:$0xff]
    %v3849 = vld [vmem:[#allocation4 + $0x9] sm:$0xff]
    %v3850 = vld [vmem:[#allocation4 + $0x11] sm:$0xff]
    %v3851 = vld [vmem:[#allocation4 + $0x19] sm:$0xff]
    %v3852 = vld [vmem:[#allocation4 + $0x21] sm:$0xff]
    %v3853 = vld [vmem:[#allocation4 + $0x29] sm:$0xff]
    %v3854 = vld [vmem:[#allocation4 + $0x31] sm:$0xff]
    %v3855 = vld [vmem:[#allocation4 + $0x39] sm:$0xff]
    %v3856 = vld [vmem:[#allocation4 + $0x41] sm:$0xff]
    %v3857 = vld [vmem:[#allocation4 + $0x49] sm:$0xff]
    %v3858 = vld [vmem:[#allocation4 + $0x51] sm:$0xff]
    %v3859 = vld [vmem:[#allocation4 + $0x59] sm:$0xff]
    %v3860 = vld [vmem:[#allocation4 + $0x61] sm:$0xff]
    %v3861 = vld [vmem:[#allocation4 + $0x69] sm:$0xff]
    %v3862 = vld [vmem:[#allocation4 + $0x71] sm:$0xff]
    %v3863 = vld [vmem:[#allocation4 + $0x79] sm:$0xff]
    %v3864 = vld [vmem:[#allocation4 + $0x81] sm:$0xff]
    %v3865 = vand.u32 %v2340, 63
    %v3866 = vand.u32 %v2341, 63
    %v3867 = vand.u32 %v2342, 63
    %v3868 = vand.u32 %v2343, 63
    %v3869 = vand.u32 %v2344, 63
    %v3870 = vand.u32 %v2345, 63
    %v3871 = vand.u32 %v2346, 63
    %v3872 = vand.u32 %v2347, 63
    %v3873 = vand.u32 %v2348, 63
    %v3874 = vand.u32 %v2349, 63
    %v3875 = vand.u32 %v2350, 63
    %v3876 = vand.u32 %v2351, 63
    %v3877 = vand.u32 %v2352, 63
    %v3878 = vand.u32 %v2353, 63
    %v3879 = vand.u32 %v2354, 63
    %v3880 = vand.u32 %v2355, 63
    %vm3881 = vcmp.ne.s32.totalorder %v3865, 0
    %vm3882 = vcmp.ne.s32.totalorder %v3866, 0
    %vm3883 = vcmp.ne.s32.totalorder %v3867, 0
    %vm3884 = vcmp.ne.s32.totalorder %v3868, 0
    %vm3885 = vcmp.ne.s32.totalorder %v3869, 0
    %vm3886 = vcmp.ne.s32.totalorder %v3870, 0
    %vm3887 = vcmp.ne.s32.totalorder %v3871, 0
    %vm3888 = vcmp.ne.s32.totalorder %v3872, 0
    %vm3889 = vcmp.ne.s32.totalorder %v3873, 0
    %vm3890 = vcmp.ne.s32.totalorder %v3874, 0
    %vm3891 = vcmp.ne.s32.totalorder %v3875, 0
    %vm3892 = vcmp.ne.s32.totalorder %v3876, 0
    %vm3893 = vcmp.ne.s32.totalorder %v3877, 0
    %vm3894 = vcmp.ne.s32.totalorder %v3878, 0
    %vm3895 = vcmp.ne.s32.totalorder %v3879, 0
    %vm3896 = vcmp.ne.s32.totalorder %v3880, 0
    %v3897 = vsel %vm3881, 1.0, 0.0
    %v3898 = vsel %vm3882, 1.0, 0.0
    %v3899 = vsel %vm3883, 1.0, 0.0
    %v3900 = vsel %vm3884, 1.0, 0.0
    %v3901 = vsel %vm3885, 1.0, 0.0
    %v3902 = vsel %vm3886, 1.0, 0.0
    %v3903 = vsel %vm3887, 1.0, 0.0
    %v3904 = vsel %vm3888, 1.0, 0.0
    %v3905 = vsel %vm3889, 1.0, 0.0
    %v3906 = vsel %vm3890, 1.0, 0.0
    %v3907 = vsel %vm3891, 1.0, 0.0
    %v3908 = vsel %vm3892, 1.0, 0.0
    %v3909 = vsel %vm3893, 1.0, 0.0
    %v3910 = vsel %vm3894, 1.0, 0.0
    %v3911 = vsel %vm3895, 1.0, 0.0
    %v3912 = vsel %vm3896, 1.0, 0.0
    %v3913 = vmul.f32 %v3817, %v3897
    %v3914 = vmul.f32 %v3818, %v3898
    %v3915 = vmul.f32 %v3819, %v3899
    %v3916 = vmul.f32 %v3820, %v3900
    %v3917 = vmul.f32 %v3821, %v3901
    %v3918 = vmul.f32 %v3822, %v3902
    %v3919 = vmul.f32 %v3823, %v3903
    %v3920 = vmul.f32 %v3824, %v3904
    %v3921 = vmul.f32 %v3825, %v3905
    %v3922 = vmul.f32 %v3826, %v3906
    %v3923 = vmul.f32 %v3827, %v3907
    %v3924 = vmul.f32 %v3828, %v3908
    %v3925 = vmul.f32 %v3829, %v3909
    %v3926 = vmul.f32 %v3830, %v3910
    %v3927 = vmul.f32 %v3831, %v3911
    %v3928 = vmul.f32 %v3832, %v3912
    %vm3929 = vcmp.ne.s32.totalorder %v3865, 63
    %vm3930 = vcmp.ne.s32.totalorder %v3866, 63
    %vm3931 = vcmp.ne.s32.totalorder %v3867, 63
    %vm3932 = vcmp.ne.s32.totalorder %v3868, 63
    %vm3933 = vcmp.ne.s32.totalorder %v3869, 63
    %vm3934 = vcmp.ne.s32.totalorder %v3870, 63
    %vm3935 = vcmp.ne.s32.totalorder %v3871, 63
    %vm3936 = vcmp.ne.s32.totalorder %v3872, 63
    %vm3937 = vcmp.ne.s32.totalorder %v3873, 63
    %vm3938 = vcmp.ne.s32.totalorder %v3874, 63
    %vm3939 = vcmp.ne.s32.totalorder %v3875, 63
    %vm3940 = vcmp.ne.s32.totalorder %v3876, 63
    %vm3941 = vcmp.ne.s32.totalorder %v3877, 63
    %vm3942 = vcmp.ne.s32.totalorder %v3878, 63
    %vm3943 = vcmp.ne.s32.totalorder %v3879, 63
    %vm3944 = vcmp.ne.s32.totalorder %v3880, 63
    %v3945 = vsel %vm3929, 1.0, 0.0
    %v3946 = vsel %vm3930, 1.0, 0.0
    %v3947 = vsel %vm3931, 1.0, 0.0
    %v3948 = vsel %vm3932, 1.0, 0.0
    %v3949 = vsel %vm3933, 1.0, 0.0
    %v3950 = vsel %vm3934, 1.0, 0.0
    %v3951 = vsel %vm3935, 1.0, 0.0
    %v3952 = vsel %vm3936, 1.0, 0.0
    %v3953 = vsel %vm3937, 1.0, 0.0
    %v3954 = vsel %vm3938, 1.0, 0.0
    %v3955 = vsel %vm3939, 1.0, 0.0
    %v3956 = vsel %vm3940, 1.0, 0.0
    %v3957 = vsel %vm3941, 1.0, 0.0
    %v3958 = vsel %vm3942, 1.0, 0.0
    %v3959 = vsel %vm3943, 1.0, 0.0
    %v3960 = vsel %vm3944, 1.0, 0.0
    %v3961 = vmul.f32 %v3849, %v3945
    %v3962 = vmul.f32 %v3850, %v3946
    %v3963 = vmul.f32 %v3851, %v3947
    %v3964 = vmul.f32 %v3852, %v3948
    %v3965 = vmul.f32 %v3853, %v3949
    %v3966 = vmul.f32 %v3854, %v3950
    %v3967 = vmul.f32 %v3855, %v3951
    %v3968 = vmul.f32 %v3856, %v3952
    %v3969 = vmul.f32 %v3857, %v3953
    %v3970 = vmul.f32 %v3858, %v3954
    %v3971 = vmul.f32 %v3859, %v3955
    %v3972 = vmul.f32 %v3860, %v3956
    %v3973 = vmul.f32 %v3861, %v3957
    %v3974 = vmul.f32 %v3862, %v3958
    %v3975 = vmul.f32 %v3863, %v3959
    %v3976 = vmul.f32 %v3864, %v3960
    %3977 = vrot.lane.b32.xlu0 %v3833, 64
    %v3978 = vpop.permute.xlu0 %3977
    %3979 = vrot.lane.b32.xlu0 %v3834, 64
    %v3980 = vpop.permute.xlu0 %3979
    %3981 = vrot.lane.b32.xlu0 %v3835, 64
    %v3982 = vpop.permute.xlu0 %3981
    %3983 = vrot.lane.b32.xlu0 %v3836, 64
    %v3984 = vpop.permute.xlu0 %3983
    %3985 = vrot.lane.b32.xlu0 %v3837, 64
    %v3986 = vpop.permute.xlu0 %3985
    %3987 = vrot.lane.b32.xlu0 %v3838, 64
    %v3988 = vpop.permute.xlu0 %3987
    %3989 = vrot.lane.b32.xlu0 %v3839, 64
    %v3990 = vpop.permute.xlu0 %3989
    %3991 = vrot.lane.b32.xlu0 %v3840, 64
    %v3992 = vpop.permute.xlu0 %3991
    %3993 = vrot.lane.b32.xlu0 %v3841, 64
    %v3994 = vpop.permute.xlu0 %3993
    %3995 = vrot.lane.b32.xlu0 %v3842, 64
    %v3996 = vpop.permute.xlu0 %3995
    %3997 = vrot.lane.b32.xlu0 %v3843, 64
    %v3998 = vpop.permute.xlu0 %3997
    %3999 = vrot.lane.b32.xlu0 %v3844, 64
    %v4000 = vpop.permute.xlu0 %3999
    %4001 = vrot.lane.b32.xlu0 %v3845, 64
    %v4002 = vpop.permute.xlu0 %4001
    %4003 = vrot.lane.b32.xlu0 %v3846, 64
    %v4004 = vpop.permute.xlu0 %4003
    %4005 = vrot.lane.b32.xlu0 %v3847, 64
    %v4006 = vpop.permute.xlu0 %4005
    %4007 = vrot.lane.b32.xlu0 %v3848, 64
    %v4008 = vpop.permute.xlu0 %4007
    %v4009 = vsel %vm2661, %v3913, %v3978
    %v4010 = vsel %vm2661, %v3914, %v3980
    %v4011 = vsel %vm2661, %v3915, %v3982
    %v4012 = vsel %vm2661, %v3916, %v3984
    %v4013 = vsel %vm2661, %v3917, %v3986
    %v4014 = vsel %vm2661, %v3918, %v3988
    %v4015 = vsel %vm2661, %v3919, %v3990
    %v4016 = vsel %vm2661, %v3920, %v3992
    %v4017 = vsel %vm2661, %v3921, %v3994
    %v4018 = vsel %vm2661, %v3922, %v3996
    %v4019 = vsel %vm2661, %v3923, %v3998
    %v4020 = vsel %vm2661, %v3924, %v4000
    %v4021 = vsel %vm2661, %v3925, %v4002
    %v4022 = vsel %vm2661, %v3926, %v4004
    %v4023 = vsel %vm2661, %v3927, %v4006
    %v4024 = vsel %vm2661, %v3928, %v4008
    %v4025 = vpack.c.bf16 %v4010, %v4009
    %v4026 = vpack.c.bf16 %v3962, %v3961
    %v4027 = vpack.c.bf16 %v4012, %v4011
    %v4028 = vpack.c.bf16 %v3964, %v3963
    %v4029 = vpack.c.bf16 %v4014, %v4013
    %v4030 = vpack.c.bf16 %v3966, %v3965
    %v4031 = vpack.c.bf16 %v4016, %v4015
    %v4032 = vpack.c.bf16 %v3968, %v3967
    %v4033 = vpack.c.bf16 %v4018, %v4017
    %v4034 = vpack.c.bf16 %v3970, %v3969
    %v4035 = vpack.c.bf16 %v4020, %v4019
    %v4036 = vpack.c.bf16 %v3972, %v3971
    %v4037 = vpack.c.bf16 %v4022, %v4021
    %v4038 = vpack.c.bf16 %v3974, %v3973
    %v4039 = vpack.c.bf16 %v4024, %v4023
    %v4040 = vpack.c.bf16 %v3976, %v3975
    %v4041 = vld [vmem:[%s19] sm:$0xf]
    %v4042 = vld [vmem:[%s19 + $0x4] sm:$0xf]
    %v4043 = vld [vmem:[%s19 + $0x8] sm:$0xf]
    %v4044 = vld [vmem:[%s19 + $0xc] sm:$0xf]
    %v4045 = vld [vmem:[%s19 + $0x10] sm:$0xf]
    %v4046 = vld [vmem:[%s19 + $0x14] sm:$0xf]
    %v4047 = vld [vmem:[%s19 + $0x18] sm:$0xf]
    %v4048 = vld [vmem:[%s19 + $0x1c] sm:$0xf]
    %v4049 = vld [vmem:[%s19 + $0x20] sm:$0xf]
    %v4050 = vld [vmem:[%s19 + $0x24] sm:$0xf]
    %v4051 = vld [vmem:[%s19 + $0x28] sm:$0xf]
    %v4052 = vld [vmem:[%s19 + $0x2c] sm:$0xf]
    %v4053 = vld [vmem:[%s19 + $0x30] sm:$0xf]
    %v4054 = vld [vmem:[%s19 + $0x34] sm:$0xf]
    %v4055 = vld [vmem:[%s19 + $0x38] sm:$0xf]
    %v4056 = vld [vmem:[%s19 + $0x3c] sm:$0xf]
    %v4057 = vld [vmem:[%s19 + $0x40] sm:$0xf]
    %v4058 = vld [vmem:[%s19 + $0x44] sm:$0xf]
    %v4059 = vld [vmem:[%s19 + $0x48] sm:$0xf]
    %v4060 = vld [vmem:[%s19 + $0x4c] sm:$0xf]
    %v4061 = vld [vmem:[%s19 + $0x50] sm:$0xf]
    %v4062 = vld [vmem:[%s19 + $0x54] sm:$0xf]
    %v4063 = vld [vmem:[%s19 + $0x58] sm:$0xf]
    %v4064 = vld [vmem:[%s19 + $0x5c] sm:$0xf]
    %v4065 = vld [vmem:[%s19 + $0x60] sm:$0xf]
    %v4066 = vld [vmem:[%s19 + $0x64] sm:$0xf]
    %v4067 = vld [vmem:[%s19 + $0x68] sm:$0xf]
    %v4068 = vld [vmem:[%s19 + $0x6c] sm:$0xf]
    %v4069 = vld [vmem:[%s19 + $0x70] sm:$0xf]
    %v4070 = vld [vmem:[%s19 + $0x74] sm:$0xf]
    %v4071 = vld [vmem:[%s19 + $0x78] sm:$0xf]
    %v4072 = vld [vmem:[%s19 + $0x7c] sm:$0xf]
    %v4073 = vld [vmem:[%s23] sm:$0x1]
    %v4075 = vlaneseq
    %v4076 = vshrl.u32 %v4075, 7
    %v4077 = vsub.s32 0, %v4076
    %v4078 = vrot.slane %v4073, %v4077
    %v4112 = vunpack.c.l.b16 %v4041
    %v4113 = vunpack.c.l.b16 %v4042
    %v4114 = vunpack.c.l.b16 %v4043
    %v4115 = vunpack.c.l.b16 %v4044
    %v4116 = vunpack.c.l.b16 %v4045
    %v4117 = vunpack.c.l.b16 %v4046
    %v4118 = vunpack.c.l.b16 %v4047
    %v4119 = vunpack.c.l.b16 %v4048
    %v4120 = vunpack.c.l.b16 %v4049
    %v4121 = vunpack.c.l.b16 %v4050
    %v4122 = vunpack.c.l.b16 %v4051
    %v4123 = vunpack.c.l.b16 %v4052
    %v4124 = vunpack.c.l.b16 %v4053
    %v4125 = vunpack.c.l.b16 %v4054
    %v4126 = vunpack.c.l.b16 %v4055
    %v4127 = vunpack.c.l.b16 %v4056
    %v4128 = vunpack.c.l.b16 %v4057
    %v4129 = vunpack.c.l.b16 %v4058
    %v4130 = vunpack.c.l.b16 %v4059
    %v4131 = vunpack.c.l.b16 %v4060
    %v4132 = vunpack.c.l.b16 %v4061
    %v4133 = vunpack.c.l.b16 %v4062
    %v4134 = vunpack.c.l.b16 %v4063
    %v4135 = vunpack.c.l.b16 %v4064
    %v4136 = vunpack.c.l.b16 %v4065
    %v4137 = vunpack.c.l.b16 %v4066
    %v4138 = vunpack.c.l.b16 %v4067
    %v4139 = vunpack.c.l.b16 %v4068
    %v4140 = vunpack.c.l.b16 %v4069
    %v4141 = vunpack.c.l.b16 %v4070
    %v4142 = vunpack.c.l.b16 %v4071
    %v4143 = vunpack.c.l.b16 %v4072
    %v4144 = vpack.c.b16 %v4113, %v4112
    %v4145 = vpack.c.b16 %v4115, %v4114
    %v4146 = vpack.c.b16 %v4117, %v4116
    %v4147 = vpack.c.b16 %v4119, %v4118
    %v4148 = vpack.c.b16 %v4121, %v4120
    %v4149 = vpack.c.b16 %v4123, %v4122
    %v4150 = vpack.c.b16 %v4125, %v4124
    %v4151 = vpack.c.b16 %v4127, %v4126
    %v4152 = vpack.c.b16 %v4129, %v4128
    %v4153 = vpack.c.b16 %v4131, %v4130
    %v4154 = vpack.c.b16 %v4133, %v4132
    %v4155 = vpack.c.b16 %v4135, %v4134
    %v4156 = vpack.c.b16 %v4137, %v4136
    %v4157 = vpack.c.b16 %v4139, %v4138
    %v4158 = vpack.c.b16 %v4141, %v4140
    %v4159 = vpack.c.b16 %v4143, %v4142
    %4176 = vmatprep.subr.bf16.mxu0 0
    %4177 = vmatpush1.bf16.msra.mxu0 %v4144
    %4178 = vmatprep.subr.bf16.mxu0 0
    %4179 = vmatpush1.bf16.msra.mxu0 %v4145
    %4180 = vmatprep.subr.bf16.mxu0 0
    %4181 = vmatpush1.bf16.msra.mxu0 %v4146
    %4182 = vmatprep.subr.bf16.mxu0 0
    %4183 = vmatpush1.bf16.msra.mxu0 %v4147
    %4184 = vmatprep.subr.bf16.mxu0 0
    %4185 = vmatpush1.bf16.msra.mxu0 %v4148
    %4186 = vmatprep.subr.bf16.mxu0 0
    %4187 = vmatpush1.bf16.msra.mxu0 %v4149
    %4188 = vmatprep.subr.bf16.mxu0 0
    %4189 = vmatpush1.bf16.msra.mxu0 %v4150
    %4190 = vmatprep.subr.bf16.mxu0 0
    %4191 = vmatpush1.bf16.msra.mxu0 %v4151
    %4192 = vmatprep.subr.bf16.mxu0 0
    %4193 = vmatpush1.bf16.msra.mxu0 %v4152
    %4194 = vmatprep.subr.bf16.mxu0 0
    %4195 = vmatpush1.bf16.msra.mxu0 %v4153
    %4196 = vmatprep.subr.bf16.mxu0 0
    %4197 = vmatpush1.bf16.msra.mxu0 %v4154
    %4198 = vmatprep.subr.bf16.mxu0 0
    %4199 = vmatpush1.bf16.msra.mxu0 %v4155
    %4200 = vmatprep.subr.bf16.mxu0 0
    %4201 = vmatpush1.bf16.msra.mxu0 %v4156
    %4202 = vmatprep.subr.bf16.mxu0 0
    %4203 = vmatpush1.bf16.msra.mxu0 %v4157
    %4204 = vmatprep.subr.bf16.mxu0 0
    %4205 = vmatpush1.bf16.msra.mxu0 %v4158
    %4206 = vmatprep.subr.bf16.mxu0 0
    %4207 = vmatpush1.bf16.msra.mxu0 %v4159
    %4208 = vmatprep.mubr.bf16.mxu0 %v4026
    %4209 = vmatmul.mubr.bf16.gmra.mrb[0].mxu0 %v4025
    %v4210 = vpop.f32.mrb[0].mxu0
    %v4211 = vadd.f32 %v4078, %v4210
    %v4212 = vpop.f32.mrb[0].mxu0
    %v4213 = vpop.f32.mrb[0].mxu0
    %v4214 = vadd.f32 %v4078, %v4213
    %v4215 = vpop.f32.mrb[0].mxu0
    %4216 = vmatprep.mubr.bf16.mxu0 %v4028
    %4217 = vmatmul.mubr.bf16.gmra.mrb[0].mxu0 %v4027
    %v4218 = vpop.f32.mrb[0].mxu0
    %v4219 = vadd.f32 %v4078, %v4218
    %v4220 = vpop.f32.mrb[0].mxu0
    %v4221 = vpop.f32.mrb[0].mxu0
    %v4222 = vadd.f32 %v4078, %v4221
    %v4223 = vpop.f32.mrb[0].mxu0
    %4224 = vmatprep.mubr.bf16.mxu0 %v4030
    %4225 = vmatmul.mubr.bf16.gmra.mrb[0].mxu0 %v4029
    %v4226 = vpop.f32.mrb[0].mxu0
    %v4227 = vadd.f32 %v4078, %v4226
    %v4228 = vpop.f32.mrb[0].mxu0
    %v4229 = vpop.f32.mrb[0].mxu0
    %v4230 = vadd.f32 %v4078, %v4229
    %v4231 = vpop.f32.mrb[0].mxu0
    %4232 = vmatprep.mubr.bf16.mxu0 %v4032
    %4233 = vmatmul.mubr.bf16.gmra.mrb[0].mxu0 %v4031
    %v4234 = vpop.f32.mrb[0].mxu0
    %v4235 = vadd.f32 %v4078, %v4234
    %v4236 = vpop.f32.mrb[0].mxu0
    %v4237 = vpop.f32.mrb[0].mxu0
    %v4238 = vadd.f32 %v4078, %v4237
    %v4239 = vpop.f32.mrb[0].mxu0
    %4240 = vmatprep.mubr.bf16.mxu0 %v4034
    %4241 = vmatmul.mubr.bf16.gmra.mrb[0].mxu0 %v4033
    %v4242 = vpop.f32.mrb[0].mxu0
    %v4243 = vadd.f32 %v4078, %v4242
    %v4244 = vpop.f32.mrb[0].mxu0
    %v4245 = vpop.f32.mrb[0].mxu0
    %v4246 = vadd.f32 %v4078, %v4245
    %v4247 = vpop.f32.mrb[0].mxu0
    %4248 = vmatprep.mubr.bf16.mxu0 %v4036
    %4249 = vmatmul.mubr.bf16.gmra.mrb[0].mxu0 %v4035
    %v4250 = vpop.f32.mrb[0].mxu0
    %v4251 = vadd.f32 %v4078, %v4250
    %v4252 = vpop.f32.mrb[0].mxu0
    %v4253 = vpop.f32.mrb[0].mxu0
    %v4254 = vadd.f32 %v4078, %v4253
    %v4255 = vpop.f32.mrb[0].mxu0
    %4256 = vmatprep.mubr.bf16.mxu0 %v4038
    %4257 = vmatmul.mubr.bf16.gmra.mrb[0].mxu0 %v4037
    %v4258 = vpop.f32.mrb[0].mxu0
    %v4259 = vadd.f32 %v4078, %v4258
    %v4260 = vpop.f32.mrb[0].mxu0
    %v4261 = vpop.f32.mrb[0].mxu0
    %v4262 = vadd.f32 %v4078, %v4261
    %v4263 = vpop.f32.mrb[0].mxu0
    %4264 = vmatprep.mubr.bf16.mxu0 %v4040
    %4265 = vmatmul.mubr.bf16.gmra.mrb[0].mxu0 %v4039
    %v4266 = vpop.f32.mrb[0].mxu0
    %v4267 = vadd.f32 %v4078, %v4266
    %v4268 = vpop.f32.mrb[0].mxu0
    %v4269 = vpop.f32.mrb[0].mxu0
    %v4270 = vadd.f32 %v4078, %v4269
    %v4271 = vpop.f32.mrb[0].mxu0
    %4272 = vdwg.mxu0
    %v4273 = vmul.f32 %v4009, %v4009
    %v4274 = vmul.f32 %v3961, %v3961
    %v4275 = vmul.f32 %v4010, %v4010
    %v4276 = vmul.f32 %v3962, %v3962
    %v4277 = vmul.f32 %v4011, %v4011
    %v4278 = vmul.f32 %v3963, %v3963
    %v4279 = vmul.f32 %v4012, %v4012
    %v4280 = vmul.f32 %v3964, %v3964
    %v4281 = vmul.f32 %v4013, %v4013
    %v4282 = vmul.f32 %v3965, %v3965
    %v4283 = vmul.f32 %v4014, %v4014
    %v4284 = vmul.f32 %v3966, %v3966
    %v4285 = vmul.f32 %v4015, %v4015
    %v4286 = vmul.f32 %v3967, %v3967
    %v4287 = vmul.f32 %v4016, %v4016
    %v4288 = vmul.f32 %v3968, %v3968
    %v4289 = vmul.f32 %v4017, %v4017
    %v4290 = vmul.f32 %v3969, %v3969
    %v4291 = vmul.f32 %v4018, %v4018
    %v4292 = vmul.f32 %v3970, %v3970
    %v4293 = vmul.f32 %v4019, %v4019
    %v4294 = vmul.f32 %v3971, %v3971
    %v4295 = vmul.f32 %v4020, %v4020
    %v4296 = vmul.f32 %v3972, %v3972
    %v4297 = vmul.f32 %v4021, %v4021
    %v4298 = vmul.f32 %v3973, %v3973
    %v4299 = vmul.f32 %v4022, %v4022
    %v4300 = vmul.f32 %v3974, %v3974
    %v4301 = vmul.f32 %v4023, %v4023
    %v4302 = vmul.f32 %v3975, %v3975
    %v4303 = vmul.f32 %v4024, %v4024
    %v4304 = vmul.f32 %v3976, %v3976
    %v4305 = vpack.c.bf16 %v4275, %v4273
    %v4306 = vpack.c.bf16 %v4276, %v4274
    %v4307 = vpack.c.bf16 %v4279, %v4277
    %v4308 = vpack.c.bf16 %v4280, %v4278
    %v4309 = vpack.c.bf16 %v4283, %v4281
    %v4310 = vpack.c.bf16 %v4284, %v4282
    %v4311 = vpack.c.bf16 %v4287, %v4285
    %v4312 = vpack.c.bf16 %v4288, %v4286
    %v4313 = vpack.c.bf16 %v4291, %v4289
    %v4314 = vpack.c.bf16 %v4292, %v4290
    %v4315 = vpack.c.bf16 %v4295, %v4293
    %v4316 = vpack.c.bf16 %v4296, %v4294
    %v4317 = vpack.c.bf16 %v4299, %v4297
    %v4318 = vpack.c.bf16 %v4300, %v4298
    %v4319 = vpack.c.bf16 %v4303, %v4301
    %v4320 = vpack.c.bf16 %v4304, %v4302
    %v4321 = vld [vmem:[%s21] sm:$0xf]
    %v4322 = vld [vmem:[%s21 + $0x4] sm:$0xf]
    %v4323 = vld [vmem:[%s21 + $0x8] sm:$0xf]
    %v4324 = vld [vmem:[%s21 + $0xc] sm:$0xf]
    %v4325 = vld [vmem:[%s21 + $0x10] sm:$0xf]
    %v4326 = vld [vmem:[%s21 + $0x14] sm:$0xf]
    %v4327 = vld [vmem:[%s21 + $0x18] sm:$0xf]
    %v4328 = vld [vmem:[%s21 + $0x1c] sm:$0xf]
    %v4329 = vld [vmem:[%s21 + $0x20] sm:$0xf]
    %v4330 = vld [vmem:[%s21 + $0x24] sm:$0xf]
    %v4331 = vld [vmem:[%s21 + $0x28] sm:$0xf]
    %v4332 = vld [vmem:[%s21 + $0x2c] sm:$0xf]
    %v4333 = vld [vmem:[%s21 + $0x30] sm:$0xf]
    %v4334 = vld [vmem:[%s21 + $0x34] sm:$0xf]
    %v4335 = vld [vmem:[%s21 + $0x38] sm:$0xf]
    %v4336 = vld [vmem:[%s21 + $0x3c] sm:$0xf]
    %v4337 = vld [vmem:[%s21 + $0x40] sm:$0xf]
    %v4338 = vld [vmem:[%s21 + $0x44] sm:$0xf]
    %v4339 = vld [vmem:[%s21 + $0x48] sm:$0xf]
    %v4340 = vld [vmem:[%s21 + $0x4c] sm:$0xf]
    %v4341 = vld [vmem:[%s21 + $0x50] sm:$0xf]
    %v4342 = vld [vmem:[%s21 + $0x54] sm:$0xf]
    %v4343 = vld [vmem:[%s21 + $0x58] sm:$0xf]
    %v4344 = vld [vmem:[%s21 + $0x5c] sm:$0xf]
    %v4345 = vld [vmem:[%s21 + $0x60] sm:$0xf]
    %v4346 = vld [vmem:[%s21 + $0x64] sm:$0xf]
    %v4347 = vld [vmem:[%s21 + $0x68] sm:$0xf]
    %v4348 = vld [vmem:[%s21 + $0x6c] sm:$0xf]
    %v4349 = vld [vmem:[%s21 + $0x70] sm:$0xf]
    %v4350 = vld [vmem:[%s21 + $0x74] sm:$0xf]
    %v4351 = vld [vmem:[%s21 + $0x78] sm:$0xf]
    %v4352 = vld [vmem:[%s21 + $0x7c] sm:$0xf]
    %v4353 = vld [vmem:[%s25] sm:$0x1]
    %v4355 = vlaneseq
    %v4356 = vshrl.u32 %v4355, 7
    %v4357 = vsub.s32 0, %v4356
    %v4358 = vrot.slane %v4353, %v4357
    %v4392 = vunpack.c.l.b16 %v4321
    %v4393 = vunpack.c.l.b16 %v4322
    %v4394 = vunpack.c.l.b16 %v4323
    %v4395 = vunpack.c.l.b16 %v4324
    %v4396 = vunpack.c.l.b16 %v4325
    %v4397 = vunpack.c.l.b16 %v4326
    %v4398 = vunpack.c.l.b16 %v4327
    %v4399 = vunpack.c.l.b16 %v4328
    %v4400 = vunpack.c.l.b16 %v4329
    %v4401 = vunpack.c.l.b16 %v4330
    %v4402 = vunpack.c.l.b16 %v4331
    %v4403 = vunpack.c.l.b16 %v4332
    %v4404 = vunpack.c.l.b16 %v4333
    %v4405 = vunpack.c.l.b16 %v4334
    %v4406 = vunpack.c.l.b16 %v4335
    %v4407 = vunpack.c.l.b16 %v4336
    %v4408 = vunpack.c.l.b16 %v4337
    %v4409 = vunpack.c.l.b16 %v4338
    %v4410 = vunpack.c.l.b16 %v4339
    %v4411 = vunpack.c.l.b16 %v4340
    %v4412 = vunpack.c.l.b16 %v4341
    %v4413 = vunpack.c.l.b16 %v4342
    %v4414 = vunpack.c.l.b16 %v4343
    %v4415 = vunpack.c.l.b16 %v4344
    %v4416 = vunpack.c.l.b16 %v4345
    %v4417 = vunpack.c.l.b16 %v4346
    %v4418 = vunpack.c.l.b16 %v4347
    %v4419 = vunpack.c.l.b16 %v4348
    %v4420 = vunpack.c.l.b16 %v4349
    %v4421 = vunpack.c.l.b16 %v4350
    %v4422 = vunpack.c.l.b16 %v4351
    %v4423 = vunpack.c.l.b16 %v4352
    %v4424 = vpack.c.b16 %v4393, %v4392
    %v4425 = vpack.c.b16 %v4395, %v4394
    %v4426 = vpack.c.b16 %v4397, %v4396
    %v4427 = vpack.c.b16 %v4399, %v4398
    %v4428 = vpack.c.b16 %v4401, %v4400
    %v4429 = vpack.c.b16 %v4403, %v4402
    %v4430 = vpack.c.b16 %v4405, %v4404
    %v4431 = vpack.c.b16 %v4407, %v4406
    %v4432 = vpack.c.b16 %v4409, %v4408
    %v4433 = vpack.c.b16 %v4411, %v4410
    %v4434 = vpack.c.b16 %v4413, %v4412
    %v4435 = vpack.c.b16 %v4415, %v4414
    %v4436 = vpack.c.b16 %v4417, %v4416
    %v4437 = vpack.c.b16 %v4419, %v4418
    %v4438 = vpack.c.b16 %v4421, %v4420
    %v4439 = vpack.c.b16 %v4423, %v4422
    %4456 = vmatprep.subr.bf16.mxu0 0
    %4457 = vmatpush1.bf16.msra.mxu0 %v4424
    %4458 = vmatprep.subr.bf16.mxu0 0
    %4459 = vmatpush1.bf16.msra.mxu0 %v4425
    %4460 = vmatprep.subr.bf16.mxu0 0
    %4461 = vmatpush1.bf16.msra.mxu0 %v4426
    %4462 = vmatprep.subr.bf16.mxu0 0
    %4463 = vmatpush1.bf16.msra.mxu0 %v4427
    %4464 = vmatprep.subr.bf16.mxu0 0
    %4465 = vmatpush1.bf16.msra.mxu0 %v4428
    %4466 = vmatprep.subr.bf16.mxu0 0
    %4467 = vmatpush1.bf16.msra.mxu0 %v4429
    %4468 = vmatprep.subr.bf16.mxu0 0
    %4469 = vmatpush1.bf16.msra.mxu0 %v4430
    %4470 = vmatprep.subr.bf16.mxu0 0
    %4471 = vmatpush1.bf16.msra.mxu0 %v4431
    %4472 = vmatprep.subr.bf16.mxu0 0
    %4473 = vmatpush1.bf16.msra.mxu0 %v4432
    %4474 = vmatprep.subr.bf16.mxu0 0
    %4475 = vmatpush1.bf16.msra.mxu0 %v4433
    %4476 = vmatprep.subr.bf16.mxu0 0
    %4477 = vmatpush1.bf16.msra.mxu0 %v4434
    %4478 = vmatprep.subr.bf16.mxu0 0
    %4479 = vmatpush1.bf16.msra.mxu0 %v4435
    %4480 = vmatprep.subr.bf16.mxu0 0
    %4481 = vmatpush1.bf16.msra.mxu0 %v4436
    %4482 = vmatprep.subr.bf16.mxu0 0
    %4483 = vmatpush1.bf16.msra.mxu0 %v4437
    %4484 = vmatprep.subr.bf16.mxu0 0
    %4485 = vmatpush1.bf16.msra.mxu0 %v4438
    %4486 = vmatprep.subr.bf16.mxu0 0
    %4487 = vmatpush1.bf16.msra.mxu0 %v4439
    %4488 = vmatprep.mubr.bf16.mxu0 %v4306
    %4489 = vmatmul.mubr.bf16.gmra.mrb[0].mxu0 %v4305
    %v4490 = vpop.f32.mrb[0].mxu0
    %v4491 = vadd.f32 %v4358, %v4490
    %v4492 = vpop.f32.mrb[0].mxu0
    %v4493 = vpop.f32.mrb[0].mxu0
    %v4494 = vadd.f32 %v4358, %v4493
    %v4495 = vpop.f32.mrb[0].mxu0
    %4496 = vmatprep.mubr.bf16.mxu0 %v4308
    %4497 = vmatmul.mubr.bf16.gmra.mrb[0].mxu0 %v4307
    %v4498 = vpop.f32.mrb[0].mxu0
    %v4499 = vadd.f32 %v4358, %v4498
    %v4500 = vpop.f32.mrb[0].mxu0
    %v4501 = vpop.f32.mrb[0].mxu0
    %v4502 = vadd.f32 %v4358, %v4501
    %v4503 = vpop.f32.mrb[0].mxu0
    %4504 = vmatprep.mubr.bf16.mxu0 %v4310
    %4505 = vmatmul.mubr.bf16.gmra.mrb[0].mxu0 %v4309
    %v4506 = vpop.f32.mrb[0].mxu0
    %v4507 = vadd.f32 %v4358, %v4506
    %v4508 = vpop.f32.mrb[0].mxu0
    %v4509 = vpop.f32.mrb[0].mxu0
    %v4510 = vadd.f32 %v4358, %v4509
    %v4511 = vpop.f32.mrb[0].mxu0
    %4512 = vmatprep.mubr.bf16.mxu0 %v4312
    %4513 = vmatmul.mubr.bf16.gmra.mrb[0].mxu0 %v4311
    %v4514 = vpop.f32.mrb[0].mxu0
    %v4515 = vadd.f32 %v4358, %v4514
    %v4516 = vpop.f32.mrb[0].mxu0
    %v4517 = vpop.f32.mrb[0].mxu0
    %v4518 = vadd.f32 %v4358, %v4517
    %v4519 = vpop.f32.mrb[0].mxu0
    %4520 = vmatprep.mubr.bf16.mxu0 %v4314
    %4521 = vmatmul.mubr.bf16.gmra.mrb[0].mxu0 %v4313
    %v4522 = vpop.f32.mrb[0].mxu0
    %v4523 = vadd.f32 %v4358, %v4522
    %v4524 = vpop.f32.mrb[0].mxu0
    %v4525 = vpop.f32.mrb[0].mxu0
    %v4526 = vadd.f32 %v4358, %v4525
    %v4527 = vpop.f32.mrb[0].mxu0
    %4528 = vmatprep.mubr.bf16.mxu0 %v4316
    %4529 = vmatmul.mubr.bf16.gmra.mrb[0].mxu0 %v4315
    %v4530 = vpop.f32.mrb[0].mxu0
    %v4531 = vadd.f32 %v4358, %v4530
    %v4532 = vpop.f32.mrb[0].mxu0
    %v4533 = vpop.f32.mrb[0].mxu0
    %v4534 = vadd.f32 %v4358, %v4533
    %v4535 = vpop.f32.mrb[0].mxu0
    %4536 = vmatprep.mubr.bf16.mxu0 %v4318
    %4537 = vmatmul.mubr.bf16.gmra.mrb[0].mxu0 %v4317
    %v4538 = vpop.f32.mrb[0].mxu0
    %v4539 = vadd.f32 %v4358, %v4538
    %v4540 = vpop.f32.mrb[0].mxu0
    %v4541 = vpop.f32.mrb[0].mxu0
    %v4542 = vadd.f32 %v4358, %v4541
    %v4543 = vpop.f32.mrb[0].mxu0
    %4544 = vmatprep.mubr.bf16.mxu0 %v4320
    %4545 = vmatmul.mubr.bf16.gmra.mrb[0].mxu0 %v4319
    %v4546 = vpop.f32.mrb[0].mxu0
    %v4547 = vadd.f32 %v4358, %v4546
    %v4548 = vpop.f32.mrb[0].mxu0
    %v4549 = vpop.f32.mrb[0].mxu0
    %v4550 = vadd.f32 %v4358, %v4549
    %v4551 = vpop.f32.mrb[0].mxu0
    %4552 = vdwg.mxu0
    %4553 = vrot.lane.b32.xlu0 %v4211, 64
    %v4554 = vpop.permute.xlu0 %4553
    %4555 = vrot.lane.b32.xlu0 %v4214, 64
    %v4556 = vpop.permute.xlu0 %4555
    %4557 = vrot.lane.b32.xlu0 %v4219, 64
    %v4558 = vpop.permute.xlu0 %4557
    %4559 = vrot.lane.b32.xlu0 %v4222, 64
    %v4560 = vpop.permute.xlu0 %4559
    %4561 = vrot.lane.b32.xlu0 %v4227, 64
    %v4562 = vpop.permute.xlu0 %4561
    %4563 = vrot.lane.b32.xlu0 %v4230, 64
    %v4564 = vpop.permute.xlu0 %4563
    %4565 = vrot.lane.b32.xlu0 %v4235, 64
    %v4566 = vpop.permute.xlu0 %4565
    %4567 = vrot.lane.b32.xlu0 %v4238, 64
    %v4568 = vpop.permute.xlu0 %4567
    %4569 = vrot.lane.b32.xlu0 %v4243, 64
    %v4570 = vpop.permute.xlu0 %4569
    %4571 = vrot.lane.b32.xlu0 %v4246, 64
    %v4572 = vpop.permute.xlu0 %4571
    %4573 = vrot.lane.b32.xlu0 %v4251, 64
    %v4574 = vpop.permute.xlu0 %4573
    %4575 = vrot.lane.b32.xlu0 %v4254, 64
    %v4576 = vpop.permute.xlu0 %4575
    %4577 = vrot.lane.b32.xlu0 %v4259, 64
    %v4578 = vpop.permute.xlu0 %4577
    %4579 = vrot.lane.b32.xlu0 %v4262, 64
    %v4580 = vpop.permute.xlu0 %4579
    %4581 = vrot.lane.b32.xlu0 %v4267, 64
    %v4582 = vpop.permute.xlu0 %4581
    %4583 = vrot.lane.b32.xlu0 %v4270, 64
    %v4584 = vpop.permute.xlu0 %4583
    %v4585 = vmul.f32 %v4211, %v4554
    %v4586 = vmul.f32 %v4214, %v4556
    %v4587 = vmul.f32 %v4219, %v4558
    %v4588 = vmul.f32 %v4222, %v4560
    %v4589 = vmul.f32 %v4227, %v4562
    %v4590 = vmul.f32 %v4230, %v4564
    %v4591 = vmul.f32 %v4235, %v4566
    %v4592 = vmul.f32 %v4238, %v4568
    %v4593 = vmul.f32 %v4243, %v4570
    %v4594 = vmul.f32 %v4246, %v4572
    %v4595 = vmul.f32 %v4251, %v4574
    %v4596 = vmul.f32 %v4254, %v4576
    %v4597 = vmul.f32 %v4259, %v4578
    %v4598 = vmul.f32 %v4262, %v4580
    %v4599 = vmul.f32 %v4267, %v4582
    %v4600 = vmul.f32 %v4270, %v4584
    %v4601 = vadd.f32 %v4585, %v4491
    %v4602 = vadd.f32 %v4586, %v4494
    %v4603 = vadd.f32 %v4587, %v4499
    %v4604 = vadd.f32 %v4588, %v4502
    %v4605 = vadd.f32 %v4589, %v4507
    %v4606 = vadd.f32 %v4590, %v4510
    %v4607 = vadd.f32 %v4591, %v4515
    %v4608 = vadd.f32 %v4592, %v4518
    %v4609 = vadd.f32 %v4593, %v4523
    %v4610 = vadd.f32 %v4594, %v4526
    %v4611 = vadd.f32 %v4595, %v4531
    %v4612 = vadd.f32 %v4596, %v4534
    %v4613 = vadd.f32 %v4597, %v4539
    %v4614 = vadd.f32 %v4598, %v4542
    %v4615 = vadd.f32 %v4599, %v4547
    %v4616 = vadd.f32 %v4600, %v4550
    %v4617 = vadd.f32 %v4601, %v4602
    %v4618 = vadd.f32 %v4617, %v4603
    %v4619 = vadd.f32 %v4618, %v4604
    %v4620 = vadd.f32 %v4619, %v4605
    %v4621 = vadd.f32 %v4620, %v4606
    %v4622 = vadd.f32 %v4621, %v4607
    %v4623 = vadd.f32 %v4622, %v4608
    %v4624 = vadd.f32 %v4623, %v4609
    %v4625 = vadd.f32 %v4624, %v4610
    %v4626 = vadd.f32 %v4625, %v4611
    %v4627 = vadd.f32 %v4626, %v4612
    %v4628 = vadd.f32 %v4627, %v4613
    %v4629 = vadd.f32 %v4628, %v4614
    %v4630 = vadd.f32 %v4629, %v4615
    %v4631 = vadd.f32 %v4630, %v4616
    %v4632 = vrot.slane %v4631, 4
    %v4633 = vadd.f32 %v4631, %v4632
    %v4634 = vrot.slane %v4633, 2
    %v4635 = vadd.f32 %v4633, %v4634
    %v4636 = vrot.slane %v4635, 1
    %v4637 = vadd.f32 %v4635, %v4636
    %v4638 = vmul.f32 %v4601, %v4601
    %v4639 = vmul.f32 %v4602, %v4602
    %v4640 = vmul.f32 %v4603, %v4603
    %v4641 = vmul.f32 %v4604, %v4604
    %v4642 = vmul.f32 %v4605, %v4605
    %v4643 = vmul.f32 %v4606, %v4606
    %v4644 = vmul.f32 %v4607, %v4607
    %v4645 = vmul.f32 %v4608, %v4608
    %v4646 = vmul.f32 %v4609, %v4609
    %v4647 = vmul.f32 %v4610, %v4610
    %v4648 = vmul.f32 %v4611, %v4611
    %v4649 = vmul.f32 %v4612, %v4612
    %v4650 = vmul.f32 %v4613, %v4613
    %v4651 = vmul.f32 %v4614, %v4614
    %v4652 = vmul.f32 %v4615, %v4615
    %v4653 = vmul.f32 %v4616, %v4616
    %v4654 = vadd.f32 %v4638, %v4639
    %v4655 = vadd.f32 %v4654, %v4640
    %v4656 = vadd.f32 %v4655, %v4641
    %v4657 = vadd.f32 %v4656, %v4642
    %v4658 = vadd.f32 %v4657, %v4643
    %v4659 = vadd.f32 %v4658, %v4644
    %v4660 = vadd.f32 %v4659, %v4645
    %v4661 = vadd.f32 %v4660, %v4646
    %v4662 = vadd.f32 %v4661, %v4647
    %v4663 = vadd.f32 %v4662, %v4648
    %v4664 = vadd.f32 %v4663, %v4649
    %v4665 = vadd.f32 %v4664, %v4650
    %v4666 = vadd.f32 %v4665, %v4651
    %v4667 = vadd.f32 %v4666, %v4652
    %v4668 = vadd.f32 %v4667, %v4653
    %v4669 = vrot.slane %v4668, 4
    %v4670 = vadd.f32 %v4668, %v4669
    %v4671 = vrot.slane %v4670, 2
    %v4672 = vadd.f32 %v4670, %v4671
    %v4673 = vrot.slane %v4672, 1
    %v4674 = vadd.f32 %v4672, %v4673
    %v4675 = vrcp.pop 128.0
    %v4676 = vmul.f32 %v4637, %v4675
    %v4677 = vmul.f32 %v4674, %v4675
    %v4678 = vmul.f32 %v4676, %v4676
    %v4679 = vsub.f32 %v4677, %v4678
    %v4680 = vmax.f32 %v4679, 0.0
    %v4681 = vadd.f32 %v4680, 1e-05
    %v4682 = vrsqrt.pop %v4681
    %4683 = vst [vmem:[#allocation2] sm:$0xff] %v4601
    %4684 = vst [vmem:[#allocation2 + $0x8] sm:$0xff] %v4602
    %4685 = vst [vmem:[#allocation2 + $0x10] sm:$0xff] %v4603
    %4686 = vst [vmem:[#allocation2 + $0x18] sm:$0xff] %v4604
    %4687 = vst [vmem:[#allocation2 + $0x20] sm:$0xff] %v4605
    %4688 = vst [vmem:[#allocation2 + $0x28] sm:$0xff] %v4606
    %4689 = vst [vmem:[#allocation2 + $0x30] sm:$0xff] %v4607
    %4690 = vst [vmem:[#allocation2 + $0x38] sm:$0xff] %v4608
    %4691 = vst [vmem:[#allocation2 + $0x40] sm:$0xff] %v4609
    %4692 = vst [vmem:[#allocation2 + $0x48] sm:$0xff] %v4610
    %4693 = vst [vmem:[#allocation2 + $0x50] sm:$0xff] %v4611
    %4694 = vst [vmem:[#allocation2 + $0x58] sm:$0xff] %v4612
    %4695 = vst [vmem:[#allocation2 + $0x60] sm:$0xff] %v4613
    %4696 = vst [vmem:[#allocation2 + $0x68] sm:$0xff] %v4614
    %4697 = vst [vmem:[#allocation2 + $0x70] sm:$0xff] %v4615
    %4698 = vst [vmem:[#allocation2 + $0x78] sm:$0xff] %v4616
    %v4699 = vld [vmem:[#allocation2] ss:$2 sm:$0xff]
    %v4700 = vld [vmem:[%s3689] ss:$2 sm:$0xff]
    %v4701 = vld [vmem:[%s3691] ss:$2 sm:$0xff]
    %v4702 = vld [vmem:[%s3693] ss:$2 sm:$0xff]
    %v4703 = vld [vmem:[%s3695] ss:$2 sm:$0xff]
    %v4704 = vld [vmem:[%s3697] ss:$2 sm:$0xff]
    %v4705 = vld [vmem:[%s3699] ss:$2 sm:$0xff]
    %v4706 = vld [vmem:[%s3701] ss:$2 sm:$0xff]
    %v4707 = vld [vmem:[%s2017] ss:$2 sm:$0xff]
    %v4708 = vld [vmem:[%s2019] ss:$2 sm:$0xff]
    %v4709 = vld [vmem:[%s2021] ss:$2 sm:$0xff]
    %v4710 = vld [vmem:[%s2023] ss:$2 sm:$0xff]
    %v4711 = vld [vmem:[%s2025] ss:$2 sm:$0xff]
    %v4712 = vld [vmem:[%s2027] ss:$2 sm:$0xff]
    %v4713 = vld [vmem:[%s2029] ss:$2 sm:$0xff]
    %v4714 = vld [vmem:[%s2031] ss:$2 sm:$0xff]
    %v4715 = vmax.f32 %v4699, %v4707
    %v4716 = vmax.f32 %v4700, %v4708
    %v4717 = vmax.f32 %v4701, %v4709
    %v4718 = vmax.f32 %v4702, %v4710
    %v4719 = vmax.f32 %v4703, %v4711
    %v4720 = vmax.f32 %v4704, %v4712
    %v4721 = vmax.f32 %v4705, %v4713
    %v4722 = vmax.f32 %v4706, %v4714
    %v4723 = vsub.f32 %v4715, %v4676
    %v4724 = vsub.f32 %v4716, %v4676
    %v4725 = vsub.f32 %v4717, %v4676
    %v4726 = vsub.f32 %v4718, %v4676
    %v4727 = vsub.f32 %v4719, %v4676
    %v4728 = vsub.f32 %v4720, %v4676
    %v4729 = vsub.f32 %v4721, %v4676
    %v4730 = vsub.f32 %v4722, %v4676
    %v4731 = vmul.f32 %v4723, %v4682
    %v4732 = vmul.f32 %v4724, %v4682
    %v4733 = vmul.f32 %v4725, %v4682
    %v4734 = vmul.f32 %v4726, %v4682
    %v4735 = vmul.f32 %v4727, %v4682
    %v4736 = vmul.f32 %v4728, %v4682
    %v4737 = vmul.f32 %v4729, %v4682
    %v4738 = vmul.f32 %v4730, %v4682
    %v4739 = vmax.f32 %v4731, 0.0
    %v4740 = vmax.f32 %v4732, 0.0
    %v4741 = vmax.f32 %v4733, 0.0
    %v4742 = vmax.f32 %v4734, 0.0
    %v4743 = vmax.f32 %v4735, 0.0
    %v4744 = vmax.f32 %v4736, 0.0
    %v4745 = vmax.f32 %v4737, 0.0
    %v4746 = vmax.f32 %v4738, 0.0
    %4747 = vst [vmem:[#allocation5] sm:$0xff] 0.0
    %4748 = vst [vmem:[#allocation5 + $0x8] sm:$0xff] %v4739
    %4749 = vst [vmem:[#allocation5 + $0x10] sm:$0xff] %v4740
    %4750 = vst [vmem:[#allocation5 + $0x18] sm:$0xff] %v4741
    %4751 = vst [vmem:[#allocation5 + $0x20] sm:$0xff] %v4742
    %4752 = vst [vmem:[#allocation5 + $0x28] sm:$0xff] %v4743
    %4753 = vst [vmem:[#allocation5 + $0x30] sm:$0xff] %v4744
    %4754 = vst [vmem:[#allocation5 + $0x38] sm:$0xff] %v4745
    %4755 = vst [vmem:[#allocation5 + $0x40] sm:$0xff] %v4746
    %4756 = vst [vmem:[#allocation5 + $0x48] sm:$0xff] 0.0
    %v4757 = vld [vmem:[#allocation5 + $0x7] sm:$0xff]
    %v4758 = vld [vmem:[#allocation5 + $0xf] sm:$0xff]
    %v4759 = vld [vmem:[#allocation5 + $0x17] sm:$0xff]
    %v4760 = vld [vmem:[#allocation5 + $0x1f] sm:$0xff]
    %v4761 = vld [vmem:[#allocation5 + $0x27] sm:$0xff]
    %v4762 = vld [vmem:[#allocation5 + $0x2f] sm:$0xff]
    %v4763 = vld [vmem:[#allocation5 + $0x37] sm:$0xff]
    %v4764 = vld [vmem:[#allocation5 + $0x3f] sm:$0xff]
    %v4765 = vld [vmem:[#allocation5 + $0x8] sm:$0xff]
    %v4766 = vld [vmem:[#allocation5 + $0x10] sm:$0xff]
    %v4767 = vld [vmem:[#allocation5 + $0x18] sm:$0xff]
    %v4768 = vld [vmem:[#allocation5 + $0x20] sm:$0xff]
    %v4769 = vld [vmem:[#allocation5 + $0x28] sm:$0xff]
    %v4770 = vld [vmem:[#allocation5 + $0x30] sm:$0xff]
    %v4771 = vld [vmem:[#allocation5 + $0x38] sm:$0xff]
    %v4772 = vld [vmem:[#allocation5 + $0x40] sm:$0xff]
    %v4773 = vld [vmem:[#allocation5 + $0x9] sm:$0xff]
    %v4774 = vld [vmem:[#allocation5 + $0x11] sm:$0xff]
    %v4775 = vld [vmem:[#allocation5 + $0x19] sm:$0xff]
    %v4776 = vld [vmem:[#allocation5 + $0x21] sm:$0xff]
    %v4777 = vld [vmem:[#allocation5 + $0x29] sm:$0xff]
    %v4778 = vld [vmem:[#allocation5 + $0x31] sm:$0xff]
    %v4779 = vld [vmem:[#allocation5 + $0x39] sm:$0xff]
    %v4780 = vld [vmem:[#allocation5 + $0x41] sm:$0xff]
    %v4781 = vand.u32 %v2340, 31
    %v4782 = vand.u32 %v2341, 31
    %v4783 = vand.u32 %v2342, 31
    %v4784 = vand.u32 %v2343, 31
    %v4785 = vand.u32 %v2344, 31
    %v4786 = vand.u32 %v2345, 31
    %v4787 = vand.u32 %v2346, 31
    %v4788 = vand.u32 %v2347, 31
    %vm4789 = vcmp.ne.s32.totalorder %v4781, 0
    %vm4790 = vcmp.ne.s32.totalorder %v4782, 0
    %vm4791 = vcmp.ne.s32.totalorder %v4783, 0
    %vm4792 = vcmp.ne.s32.totalorder %v4784, 0
    %vm4793 = vcmp.ne.s32.totalorder %v4785, 0
    %vm4794 = vcmp.ne.s32.totalorder %v4786, 0
    %vm4795 = vcmp.ne.s32.totalorder %v4787, 0
    %vm4796 = vcmp.ne.s32.totalorder %v4788, 0
    %v4797 = vsel %vm4789, 1.0, 0.0
    %v4798 = vsel %vm4790, 1.0, 0.0
    %v4799 = vsel %vm4791, 1.0, 0.0
    %v4800 = vsel %vm4792, 1.0, 0.0
    %v4801 = vsel %vm4793, 1.0, 0.0
    %v4802 = vsel %vm4794, 1.0, 0.0
    %v4803 = vsel %vm4795, 1.0, 0.0
    %v4804 = vsel %vm4796, 1.0, 0.0
    %v4805 = vmul.f32 %v4757, %v4797
    %v4806 = vmul.f32 %v4758, %v4798
    %v4807 = vmul.f32 %v4759, %v4799
    %v4808 = vmul.f32 %v4760, %v4800
    %v4809 = vmul.f32 %v4761, %v4801
    %v4810 = vmul.f32 %v4762, %v4802
    %v4811 = vmul.f32 %v4763, %v4803
    %v4812 = vmul.f32 %v4764, %v4804
    %vm4813 = vcmp.ne.s32.totalorder %v4781, 31
    %vm4814 = vcmp.ne.s32.totalorder %v4782, 31
    %vm4815 = vcmp.ne.s32.totalorder %v4783, 31
    %vm4816 = vcmp.ne.s32.totalorder %v4784, 31
    %vm4817 = vcmp.ne.s32.totalorder %v4785, 31
    %vm4818 = vcmp.ne.s32.totalorder %v4786, 31
    %vm4819 = vcmp.ne.s32.totalorder %v4787, 31
    %vm4820 = vcmp.ne.s32.totalorder %v4788, 31
    %v4821 = vsel %vm4813, 1.0, 0.0
    %v4822 = vsel %vm4814, 1.0, 0.0
    %v4823 = vsel %vm4815, 1.0, 0.0
    %v4824 = vsel %vm4816, 1.0, 0.0
    %v4825 = vsel %vm4817, 1.0, 0.0
    %v4826 = vsel %vm4818, 1.0, 0.0
    %v4827 = vsel %vm4819, 1.0, 0.0
    %v4828 = vsel %vm4820, 1.0, 0.0
    %v4829 = vmul.f32 %v4773, %v4821
    %v4830 = vmul.f32 %v4774, %v4822
    %v4831 = vmul.f32 %v4775, %v4823
    %v4832 = vmul.f32 %v4776, %v4824
    %v4833 = vmul.f32 %v4777, %v4825
    %v4834 = vmul.f32 %v4778, %v4826
    %v4835 = vmul.f32 %v4779, %v4827
    %v4836 = vmul.f32 %v4780, %v4828
    %4837 = vrot.lane.b32.xlu0 %v4765, 64
    %v4838 = vpop.permute.xlu0 %4837
    %4839 = vrot.lane.b32.xlu0 %v4766, 64
    %v4840 = vpop.permute.xlu0 %4839
    %4841 = vrot.lane.b32.xlu0 %v4767, 64
    %v4842 = vpop.permute.xlu0 %4841
    %4843 = vrot.lane.b32.xlu0 %v4768, 64
    %v4844 = vpop.permute.xlu0 %4843
    %4845 = vrot.lane.b32.xlu0 %v4769, 64
    %v4846 = vpop.permute.xlu0 %4845
    %4847 = vrot.lane.b32.xlu0 %v4770, 64
    %v4848 = vpop.permute.xlu0 %4847
    %4849 = vrot.lane.b32.xlu0 %v4771, 64
    %v4850 = vpop.permute.xlu0 %4849
    %4851 = vrot.lane.b32.xlu0 %v4772, 64
    %v4852 = vpop.permute.xlu0 %4851
    %v4853 = vsel %vm2661, %v4805, %v4838
    %v4854 = vsel %vm2661, %v4806, %v4840
    %v4855 = vsel %vm2661, %v4807, %v4842
    %v4856 = vsel %vm2661, %v4808, %v4844
    %v4857 = vsel %vm2661, %v4809, %v4846
    %v4858 = vsel %vm2661, %v4810, %v4848
    %v4859 = vsel %vm2661, %v4811, %v4850
    %v4860 = vsel %vm2661, %v4812, %v4852
    %v4861 = vpack.c.bf16 %v4854, %v4853
    %v4862 = vpack.c.bf16 %v4830, %v4829
    %v4863 = vpack.c.bf16 %v4856, %v4855
    %v4864 = vpack.c.bf16 %v4832, %v4831
    %v4865 = vpack.c.bf16 %v4858, %v4857
    %v4866 = vpack.c.bf16 %v4834, %v4833
    %v4867 = vpack.c.bf16 %v4860, %v4859
    %v4868 = vpack.c.bf16 %v4836, %v4835
    %v4869 = vld [vmem:[%s27] sm:$0xf]
    %v4870 = vld [vmem:[%s27 + $0x4] sm:$0xf]
    %v4871 = vld [vmem:[%s27 + $0x8] sm:$0xf]
    %v4872 = vld [vmem:[%s27 + $0xc] sm:$0xf]
    %v4873 = vld [vmem:[%s27 + $0x10] sm:$0xf]
    %v4874 = vld [vmem:[%s27 + $0x14] sm:$0xf]
    %v4875 = vld [vmem:[%s27 + $0x18] sm:$0xf]
    %v4876 = vld [vmem:[%s27 + $0x1c] sm:$0xf]
    %v4877 = vld [vmem:[%s27 + $0x20] sm:$0xf]
    %v4878 = vld [vmem:[%s27 + $0x24] sm:$0xf]
    %v4879 = vld [vmem:[%s27 + $0x28] sm:$0xf]
    %v4880 = vld [vmem:[%s27 + $0x2c] sm:$0xf]
    %v4881 = vld [vmem:[%s27 + $0x30] sm:$0xf]
    %v4882 = vld [vmem:[%s27 + $0x34] sm:$0xf]
    %v4883 = vld [vmem:[%s27 + $0x38] sm:$0xf]
    %v4884 = vld [vmem:[%s27 + $0x3c] sm:$0xf]
    %v4885 = vld [vmem:[%s27 + $0x40] sm:$0xf]
    %v4886 = vld [vmem:[%s27 + $0x44] sm:$0xf]
    %v4887 = vld [vmem:[%s27 + $0x48] sm:$0xf]
    %v4888 = vld [vmem:[%s27 + $0x4c] sm:$0xf]
    %v4889 = vld [vmem:[%s27 + $0x50] sm:$0xf]
    %v4890 = vld [vmem:[%s27 + $0x54] sm:$0xf]
    %v4891 = vld [vmem:[%s27 + $0x58] sm:$0xf]
    %v4892 = vld [vmem:[%s27 + $0x5c] sm:$0xf]
    %v4893 = vld [vmem:[%s27 + $0x60] sm:$0xf]
    %v4894 = vld [vmem:[%s27 + $0x64] sm:$0xf]
    %v4895 = vld [vmem:[%s27 + $0x68] sm:$0xf]
    %v4896 = vld [vmem:[%s27 + $0x6c] sm:$0xf]
    %v4897 = vld [vmem:[%s27 + $0x70] sm:$0xf]
    %v4898 = vld [vmem:[%s27 + $0x74] sm:$0xf]
    %v4899 = vld [vmem:[%s27 + $0x78] sm:$0xf]
    %v4900 = vld [vmem:[%s27 + $0x7c] sm:$0xf]
    %v4901 = vld [vmem:[%s31] sm:$0x1]
    %v4903 = vlaneseq
    %v4904 = vshrl.u32 %v4903, 7
    %v4905 = vsub.s32 0, %v4904
    %v4906 = vrot.slane %v4901, %v4905
    %v4940 = vunpack.c.l.b16 %v4869
    %v4941 = vunpack.c.l.b16 %v4870
    %v4942 = vunpack.c.l.b16 %v4871
    %v4943 = vunpack.c.l.b16 %v4872
    %v4944 = vunpack.c.l.b16 %v4873
    %v4945 = vunpack.c.l.b16 %v4874
    %v4946 = vunpack.c.l.b16 %v4875
    %v4947 = vunpack.c.l.b16 %v4876
    %v4948 = vunpack.c.l.b16 %v4877
    %v4949 = vunpack.c.l.b16 %v4878
    %v4950 = vunpack.c.l.b16 %v4879
    %v4951 = vunpack.c.l.b16 %v4880
    %v4952 = vunpack.c.l.b16 %v4881
    %v4953 = vunpack.c.l.b16 %v4882
    %v4954 = vunpack.c.l.b16 %v4883
    %v4955 = vunpack.c.l.b16 %v4884
    %v4956 = vunpack.c.l.b16 %v4885
    %v4957 = vunpack.c.l.b16 %v4886
    %v4958 = vunpack.c.l.b16 %v4887
    %v4959 = vunpack.c.l.b16 %v4888
    %v4960 = vunpack.c.l.b16 %v4889
    %v4961 = vunpack.c.l.b16 %v4890
    %v4962 = vunpack.c.l.b16 %v4891
    %v4963 = vunpack.c.l.b16 %v4892
    %v4964 = vunpack.c.l.b16 %v4893
    %v4965 = vunpack.c.l.b16 %v4894
    %v4966 = vunpack.c.l.b16 %v4895
    %v4967 = vunpack.c.l.b16 %v4896
    %v4968 = vunpack.c.l.b16 %v4897
    %v4969 = vunpack.c.l.b16 %v4898
    %v4970 = vunpack.c.l.b16 %v4899
    %v4971 = vunpack.c.l.b16 %v4900
    %v4972 = vpack.c.b16 %v4941, %v4940
    %v4973 = vpack.c.b16 %v4943, %v4942
    %v4974 = vpack.c.b16 %v4945, %v4944
    %v4975 = vpack.c.b16 %v4947, %v4946
    %v4976 = vpack.c.b16 %v4949, %v4948
    %v4977 = vpack.c.b16 %v4951, %v4950
    %v4978 = vpack.c.b16 %v4953, %v4952
    %v4979 = vpack.c.b16 %v4955, %v4954
    %v4980 = vpack.c.b16 %v4957, %v4956
    %v4981 = vpack.c.b16 %v4959, %v4958
    %v4982 = vpack.c.b16 %v4961, %v4960
    %v4983 = vpack.c.b16 %v4963, %v4962
    %v4984 = vpack.c.b16 %v4965, %v4964
    %v4985 = vpack.c.b16 %v4967, %v4966
    %v4986 = vpack.c.b16 %v4969, %v4968
    %v4987 = vpack.c.b16 %v4971, %v4970
    %5004 = vmatprep.subr.bf16.mxu0 0
    %5005 = vmatpush1.bf16.msra.mxu0 %v4972
    %5006 = vmatprep.subr.bf16.mxu0 0
    %5007 = vmatpush1.bf16.msra.mxu0 %v4973
    %5008 = vmatprep.subr.bf16.mxu0 0
    %5009 = vmatpush1.bf16.msra.mxu0 %v4974
    %5010 = vmatprep.subr.bf16.mxu0 0
    %5011 = vmatpush1.bf16.msra.mxu0 %v4975
    %5012 = vmatprep.subr.bf16.mxu0 0
    %5013 = vmatpush1.bf16.msra.mxu0 %v4976
    %5014 = vmatprep.subr.bf16.mxu0 0
    %5015 = vmatpush1.bf16.msra.mxu0 %v4977
    %5016 = vmatprep.subr.bf16.mxu0 0
    %5017 = vmatpush1.bf16.msra.mxu0 %v4978
    %5018 = vmatprep.subr.bf16.mxu0 0
    %5019 = vmatpush1.bf16.msra.mxu0 %v4979
    %5020 = vmatprep.subr.bf16.mxu0 0
    %5021 = vmatpush1.bf16.msra.mxu0 %v4980
    %5022 = vmatprep.subr.bf16.mxu0 0
    %5023 = vmatpush1.bf16.msra.mxu0 %v4981
    %5024 = vmatprep.subr.bf16.mxu0 0
    %5025 = vmatpush1.bf16.msra.mxu0 %v4982
    %5026 = vmatprep.subr.bf16.mxu0 0
    %5027 = vmatpush1.bf16.msra.mxu0 %v4983
    %5028 = vmatprep.subr.bf16.mxu0 0
    %5029 = vmatpush1.bf16.msra.mxu0 %v4984
    %5030 = vmatprep.subr.bf16.mxu0 0
    %5031 = vmatpush1.bf16.msra.mxu0 %v4985
    %5032 = vmatprep.subr.bf16.mxu0 0
    %5033 = vmatpush1.bf16.msra.mxu0 %v4986
    %5034 = vmatprep.subr.bf16.mxu0 0
    %5035 = vmatpush1.bf16.msra.mxu0 %v4987
    %5036 = vmatprep.mubr.bf16.mxu0 %v4862
    %5037 = vmatmul.mubr.bf16.gmra.mrb[0].mxu0 %v4861
    %v5038 = vpop.f32.mrb[0].mxu0
    %v5039 = vadd.f32 %v4906, %v5038
    %v5040 = vpop.f32.mrb[0].mxu0
    %v5041 = vpop.f32.mrb[0].mxu0
    %v5042 = vadd.f32 %v4906, %v5041
    %v5043 = vpop.f32.mrb[0].mxu0
    %5044 = vmatprep.mubr.bf16.mxu0 %v4864
    %5045 = vmatmul.mubr.bf16.gmra.mrb[0].mxu0 %v4863
    %v5046 = vpop.f32.mrb[0].mxu0
    %v5047 = vadd.f32 %v4906, %v5046
    %v5048 = vpop.f32.mrb[0].mxu0
    %v5049 = vpop.f32.mrb[0].mxu0
    %v5050 = vadd.f32 %v4906, %v5049
    %v5051 = vpop.f32.mrb[0].mxu0
    %5052 = vmatprep.mubr.bf16.mxu0 %v4866
    %5053 = vmatmul.mubr.bf16.gmra.mrb[0].mxu0 %v4865
    %v5054 = vpop.f32.mrb[0].mxu0
    %v5055 = vadd.f32 %v4906, %v5054
    %v5056 = vpop.f32.mrb[0].mxu0
    %v5057 = vpop.f32.mrb[0].mxu0
    %v5058 = vadd.f32 %v4906, %v5057
    %v5059 = vpop.f32.mrb[0].mxu0
    %5060 = vmatprep.mubr.bf16.mxu0 %v4868
    %5061 = vmatmul.mubr.bf16.gmra.mrb[0].mxu0 %v4867
    %v5062 = vpop.f32.mrb[0].mxu0
    %v5063 = vadd.f32 %v4906, %v5062
    %v5064 = vpop.f32.mrb[0].mxu0
    %v5065 = vpop.f32.mrb[0].mxu0
    %v5066 = vadd.f32 %v4906, %v5065
    %v5067 = vpop.f32.mrb[0].mxu0
    %5068 = vdwg.mxu0
    %v5069 = vmul.f32 %v4853, %v4853
    %v5070 = vmul.f32 %v4829, %v4829
    %v5071 = vmul.f32 %v4854, %v4854
    %v5072 = vmul.f32 %v4830, %v4830
    %v5073 = vmul.f32 %v4855, %v4855
    %v5074 = vmul.f32 %v4831, %v4831
    %v5075 = vmul.f32 %v4856, %v4856
    %v5076 = vmul.f32 %v4832, %v4832
    %v5077 = vmul.f32 %v4857, %v4857
    %v5078 = vmul.f32 %v4833, %v4833
    %v5079 = vmul.f32 %v4858, %v4858
    %v5080 = vmul.f32 %v4834, %v4834
    %v5081 = vmul.f32 %v4859, %v4859
    %v5082 = vmul.f32 %v4835, %v4835
    %v5083 = vmul.f32 %v4860, %v4860
    %v5084 = vmul.f32 %v4836, %v4836
    %v5085 = vpack.c.bf16 %v5071, %v5069
    %v5086 = vpack.c.bf16 %v5072, %v5070
    %v5087 = vpack.c.bf16 %v5075, %v5073
    %v5088 = vpack.c.bf16 %v5076, %v5074
    %v5089 = vpack.c.bf16 %v5079, %v5077
    %v5090 = vpack.c.bf16 %v5080, %v5078
    %v5091 = vpack.c.bf16 %v5083, %v5081
    %v5092 = vpack.c.bf16 %v5084, %v5082
    %v5093 = vld [vmem:[%s29] sm:$0xf]
    %v5094 = vld [vmem:[%s29 + $0x4] sm:$0xf]
    %v5095 = vld [vmem:[%s29 + $0x8] sm:$0xf]
    %v5096 = vld [vmem:[%s29 + $0xc] sm:$0xf]
    %v5097 = vld [vmem:[%s29 + $0x10] sm:$0xf]
    %v5098 = vld [vmem:[%s29 + $0x14] sm:$0xf]
    %v5099 = vld [vmem:[%s29 + $0x18] sm:$0xf]
    %v5100 = vld [vmem:[%s29 + $0x1c] sm:$0xf]
    %v5101 = vld [vmem:[%s29 + $0x20] sm:$0xf]
    %v5102 = vld [vmem:[%s29 + $0x24] sm:$0xf]
    %v5103 = vld [vmem:[%s29 + $0x28] sm:$0xf]
    %v5104 = vld [vmem:[%s29 + $0x2c] sm:$0xf]
    %v5105 = vld [vmem:[%s29 + $0x30] sm:$0xf]
    %v5106 = vld [vmem:[%s29 + $0x34] sm:$0xf]
    %v5107 = vld [vmem:[%s29 + $0x38] sm:$0xf]
    %v5108 = vld [vmem:[%s29 + $0x3c] sm:$0xf]
    %v5109 = vld [vmem:[%s29 + $0x40] sm:$0xf]
    %v5110 = vld [vmem:[%s29 + $0x44] sm:$0xf]
    %v5111 = vld [vmem:[%s29 + $0x48] sm:$0xf]
    %v5112 = vld [vmem:[%s29 + $0x4c] sm:$0xf]
    %v5113 = vld [vmem:[%s29 + $0x50] sm:$0xf]
    %v5114 = vld [vmem:[%s29 + $0x54] sm:$0xf]
    %v5115 = vld [vmem:[%s29 + $0x58] sm:$0xf]
    %v5116 = vld [vmem:[%s29 + $0x5c] sm:$0xf]
    %v5117 = vld [vmem:[%s29 + $0x60] sm:$0xf]
    %v5118 = vld [vmem:[%s29 + $0x64] sm:$0xf]
    %v5119 = vld [vmem:[%s29 + $0x68] sm:$0xf]
    %v5120 = vld [vmem:[%s29 + $0x6c] sm:$0xf]
    %v5121 = vld [vmem:[%s29 + $0x70] sm:$0xf]
    %v5122 = vld [vmem:[%s29 + $0x74] sm:$0xf]
    %v5123 = vld [vmem:[%s29 + $0x78] sm:$0xf]
    %v5124 = vld [vmem:[%s29 + $0x7c] sm:$0xf]
    %v5125 = vld [vmem:[%s33] sm:$0x1]
    %v5127 = vlaneseq
    %v5128 = vshrl.u32 %v5127, 7
    %v5129 = vsub.s32 0, %v5128
    %v5130 = vrot.slane %v5125, %v5129
    %v5164 = vunpack.c.l.b16 %v5093
    %v5165 = vunpack.c.l.b16 %v5094
    %v5166 = vunpack.c.l.b16 %v5095
    %v5167 = vunpack.c.l.b16 %v5096
    %v5168 = vunpack.c.l.b16 %v5097
    %v5169 = vunpack.c.l.b16 %v5098
    %v5170 = vunpack.c.l.b16 %v5099
    %v5171 = vunpack.c.l.b16 %v5100
    %v5172 = vunpack.c.l.b16 %v5101
    %v5173 = vunpack.c.l.b16 %v5102
    %v5174 = vunpack.c.l.b16 %v5103
    %v5175 = vunpack.c.l.b16 %v5104
    %v5176 = vunpack.c.l.b16 %v5105
    %v5177 = vunpack.c.l.b16 %v5106
    %v5178 = vunpack.c.l.b16 %v5107
    %v5179 = vunpack.c.l.b16 %v5108
    %v5180 = vunpack.c.l.b16 %v5109
    %v5181 = vunpack.c.l.b16 %v5110
    %v5182 = vunpack.c.l.b16 %v5111
    %v5183 = vunpack.c.l.b16 %v5112
    %v5184 = vunpack.c.l.b16 %v5113
    %v5185 = vunpack.c.l.b16 %v5114
    %v5186 = vunpack.c.l.b16 %v5115
    %v5187 = vunpack.c.l.b16 %v5116
    %v5188 = vunpack.c.l.b16 %v5117
    %v5189 = vunpack.c.l.b16 %v5118
    %v5190 = vunpack.c.l.b16 %v5119
    %v5191 = vunpack.c.l.b16 %v5120
    %v5192 = vunpack.c.l.b16 %v5121
    %v5193 = vunpack.c.l.b16 %v5122
    %v5194 = vunpack.c.l.b16 %v5123
    %v5195 = vunpack.c.l.b16 %v5124
    %v5196 = vpack.c.b16 %v5165, %v5164
    %v5197 = vpack.c.b16 %v5167, %v5166
    %v5198 = vpack.c.b16 %v5169, %v5168
    %v5199 = vpack.c.b16 %v5171, %v5170
    %v5200 = vpack.c.b16 %v5173, %v5172
    %v5201 = vpack.c.b16 %v5175, %v5174
    %v5202 = vpack.c.b16 %v5177, %v5176
    %v5203 = vpack.c.b16 %v5179, %v5178
    %v5204 = vpack.c.b16 %v5181, %v5180
    %v5205 = vpack.c.b16 %v5183, %v5182
    %v5206 = vpack.c.b16 %v5185, %v5184
    %v5207 = vpack.c.b16 %v5187, %v5186
    %v5208 = vpack.c.b16 %v5189, %v5188
    %v5209 = vpack.c.b16 %v5191, %v5190
    %v5210 = vpack.c.b16 %v5193, %v5192
    %v5211 = vpack.c.b16 %v5195, %v5194
    %5228 = vmatprep.subr.bf16.mxu0 0
    %5229 = vmatpush1.bf16.msra.mxu0 %v5196
    %5230 = vmatprep.subr.bf16.mxu0 0
    %5231 = vmatpush1.bf16.msra.mxu0 %v5197
    %5232 = vmatprep.subr.bf16.mxu0 0
    %5233 = vmatpush1.bf16.msra.mxu0 %v5198
    %5234 = vmatprep.subr.bf16.mxu0 0
    %5235 = vmatpush1.bf16.msra.mxu0 %v5199
    %5236 = vmatprep.subr.bf16.mxu0 0
    %5237 = vmatpush1.bf16.msra.mxu0 %v5200
    %5238 = vmatprep.subr.bf16.mxu0 0
    %5239 = vmatpush1.bf16.msra.mxu0 %v5201
    %5240 = vmatprep.subr.bf16.mxu0 0
    %5241 = vmatpush1.bf16.msra.mxu0 %v5202
    %5242 = vmatprep.subr.bf16.mxu0 0
    %5243 = vmatpush1.bf16.msra.mxu0 %v5203
    %5244 = vmatprep.subr.bf16.mxu0 0
    %5245 = vmatpush1.bf16.msra.mxu0 %v5204
    %5246 = vmatprep.subr.bf16.mxu0 0
    %5247 = vmatpush1.bf16.msra.mxu0 %v5205
    %5248 = vmatprep.subr.bf16.mxu0 0
    %5249 = vmatpush1.bf16.msra.mxu0 %v5206
    %5250 = vmatprep.subr.bf16.mxu0 0
    %5251 = vmatpush1.bf16.msra.mxu0 %v5207
    %5252 = vmatprep.subr.bf16.mxu0 0
    %5253 = vmatpush1.bf16.msra.mxu0 %v5208
    %5254 = vmatprep.subr.bf16.mxu0 0
    %5255 = vmatpush1.bf16.msra.mxu0 %v5209
    %5256 = vmatprep.subr.bf16.mxu0 0
    %5257 = vmatpush1.bf16.msra.mxu0 %v5210
    %5258 = vmatprep.subr.bf16.mxu0 0
    %5259 = vmatpush1.bf16.msra.mxu0 %v5211
    %5260 = vmatprep.mubr.bf16.mxu0 %v5086
    %5261 = vmatmul.mubr.bf16.gmra.mrb[0].mxu0 %v5085
    %v5262 = vpop.f32.mrb[0].mxu0
    %v5263 = vadd.f32 %v5130, %v5262
    %v5264 = vpop.f32.mrb[0].mxu0
    %v5265 = vpop.f32.mrb[0].mxu0
    %v5266 = vadd.f32 %v5130, %v5265
    %v5267 = vpop.f32.mrb[0].mxu0
    %5268 = vmatprep.mubr.bf16.mxu0 %v5088
    %5269 = vmatmul.mubr.bf16.gmra.mrb[0].mxu0 %v5087
    %v5270 = vpop.f32.mrb[0].mxu0
    %v5271 = vadd.f32 %v5130, %v5270
    %v5272 = vpop.f32.mrb[0].mxu0
    %v5273 = vpop.f32.mrb[0].mxu0
    %v5274 = vadd.f32 %v5130, %v5273
    %v5275 = vpop.f32.mrb[0].mxu0
    %5276 = vmatprep.mubr.bf16.mxu0 %v5090
    %5277 = vmatmul.mubr.bf16.gmra.mrb[0].mxu0 %v5089
    %v5278 = vpop.f32.mrb[0].mxu0
    %v5279 = vadd.f32 %v5130, %v5278
    %v5280 = vpop.f32.mrb[0].mxu0
    %v5281 = vpop.f32.mrb[0].mxu0
    %v5282 = vadd.f32 %v5130, %v5281
    %v5283 = vpop.f32.mrb[0].mxu0
    %5284 = vmatprep.mubr.bf16.mxu0 %v5092
    %5285 = vmatmul.mubr.bf16.gmra.mrb[0].mxu0 %v5091
    %v5286 = vpop.f32.mrb[0].mxu0
    %v5287 = vadd.f32 %v5130, %v5286
    %v5288 = vpop.f32.mrb[0].mxu0
    %v5289 = vpop.f32.mrb[0].mxu0
    %v5290 = vadd.f32 %v5130, %v5289
    %v5291 = vpop.f32.mrb[0].mxu0
    %5292 = vdwg.mxu0
    %5293 = vrot.lane.b32.xlu0 %v5039, 64
    %v5294 = vpop.permute.xlu0 %5293
    %5295 = vrot.lane.b32.xlu0 %v5042, 64
    %v5296 = vpop.permute.xlu0 %5295
    %5297 = vrot.lane.b32.xlu0 %v5047, 64
    %v5298 = vpop.permute.xlu0 %5297
    %5299 = vrot.lane.b32.xlu0 %v5050, 64
    %v5300 = vpop.permute.xlu0 %5299
    %5301 = vrot.lane.b32.xlu0 %v5055, 64
    %v5302 = vpop.permute.xlu0 %5301
    %5303 = vrot.lane.b32.xlu0 %v5058, 64
    %v5304 = vpop.permute.xlu0 %5303
    %5305 = vrot.lane.b32.xlu0 %v5063, 64
    %v5306 = vpop.permute.xlu0 %5305
    %5307 = vrot.lane.b32.xlu0 %v5066, 64
    %v5308 = vpop.permute.xlu0 %5307
    %v5309 = vmul.f32 %v5039, %v5294
    %v5310 = vmul.f32 %v5042, %v5296
    %v5311 = vmul.f32 %v5047, %v5298
    %v5312 = vmul.f32 %v5050, %v5300
    %v5313 = vmul.f32 %v5055, %v5302
    %v5314 = vmul.f32 %v5058, %v5304
    %v5315 = vmul.f32 %v5063, %v5306
    %v5316 = vmul.f32 %v5066, %v5308
    %v5317 = vadd.f32 %v5309, %v5263
    %v5318 = vadd.f32 %v5310, %v5266
    %v5319 = vadd.f32 %v5311, %v5271
    %v5320 = vadd.f32 %v5312, %v5274
    %v5321 = vadd.f32 %v5313, %v5279
    %v5322 = vadd.f32 %v5314, %v5282
    %v5323 = vadd.f32 %v5315, %v5287
    %v5324 = vadd.f32 %v5316, %v5290
    %v5325 = vadd.f32 %v5317, %v5318
    %v5326 = vadd.f32 %v5325, %v5319
    %v5327 = vadd.f32 %v5326, %v5320
    %v5328 = vadd.f32 %v5327, %v5321
    %v5329 = vadd.f32 %v5328, %v5322
    %v5330 = vadd.f32 %v5329, %v5323
    %v5331 = vadd.f32 %v5330, %v5324
    %v5332 = vrot.slane %v5331, 4
    %v5333 = vadd.f32 %v5331, %v5332
    %v5334 = vrot.slane %v5333, 2
    %v5335 = vadd.f32 %v5333, %v5334
    %v5336 = vrot.slane %v5335, 1
    %v5337 = vadd.f32 %v5335, %v5336
    %v5338 = vmul.f32 %v5317, %v5317
    %v5339 = vmul.f32 %v5318, %v5318
    %v5340 = vmul.f32 %v5319, %v5319
    %v5341 = vmul.f32 %v5320, %v5320
    %v5342 = vmul.f32 %v5321, %v5321
    %v5343 = vmul.f32 %v5322, %v5322
    %v5344 = vmul.f32 %v5323, %v5323
    %v5345 = vmul.f32 %v5324, %v5324
    %v5346 = vadd.f32 %v5338, %v5339
    %v5347 = vadd.f32 %v5346, %v5340
    %v5348 = vadd.f32 %v5347, %v5341
    %v5349 = vadd.f32 %v5348, %v5342
    %v5350 = vadd.f32 %v5349, %v5343
    %v5351 = vadd.f32 %v5350, %v5344
    %v5352 = vadd.f32 %v5351, %v5345
    %v5353 = vrot.slane %v5352, 4
    %v5354 = vadd.f32 %v5352, %v5353
    %v5355 = vrot.slane %v5354, 2
    %v5356 = vadd.f32 %v5354, %v5355
    %v5357 = vrot.slane %v5356, 1
    %v5358 = vadd.f32 %v5356, %v5357
    %v5359 = vrcp.pop 64.0
    %v5360 = vmul.f32 %v5337, %v5359
    %v5361 = vmul.f32 %v5358, %v5359
    %v5362 = vmul.f32 %v5360, %v5360
    %v5363 = vsub.f32 %v5361, %v5362
    %v5364 = vmax.f32 %v5363, 0.0
    %v5365 = vadd.f32 %v5364, 1e-05
    %v5366 = vrsqrt.pop %v5365
    %5367 = vst [vmem:[#allocation2] sm:$0xff] %v5317
    %5368 = vst [vmem:[#allocation2 + $0x8] sm:$0xff] %v5318
    %5369 = vst [vmem:[#allocation2 + $0x10] sm:$0xff] %v5319
    %5370 = vst [vmem:[#allocation2 + $0x18] sm:$0xff] %v5320
    %5371 = vst [vmem:[#allocation2 + $0x20] sm:$0xff] %v5321
    %5372 = vst [vmem:[#allocation2 + $0x28] sm:$0xff] %v5322
    %5373 = vst [vmem:[#allocation2 + $0x30] sm:$0xff] %v5323
    %5374 = vst [vmem:[#allocation2 + $0x38] sm:$0xff] %v5324
    %v5375 = vld [vmem:[#allocation2] ss:$2 sm:$0xff]
    %v5376 = vld [vmem:[%s3689] ss:$2 sm:$0xff]
    %v5377 = vld [vmem:[%s3691] ss:$2 sm:$0xff]
    %v5378 = vld [vmem:[%s3693] ss:$2 sm:$0xff]
    %v5379 = vld [vmem:[%s2017] ss:$2 sm:$0xff]
    %v5380 = vld [vmem:[%s2019] ss:$2 sm:$0xff]
    %v5381 = vld [vmem:[%s2021] ss:$2 sm:$0xff]
    %v5382 = vld [vmem:[%s2023] ss:$2 sm:$0xff]
    %v5383 = vmax.f32 %v5375, %v5379
    %v5384 = vmax.f32 %v5376, %v5380
    %v5385 = vmax.f32 %v5377, %v5381
    %v5386 = vmax.f32 %v5378, %v5382
    %v5387 = vsub.f32 %v5383, %v5360
    %v5388 = vsub.f32 %v5384, %v5360
    %v5389 = vsub.f32 %v5385, %v5360
    %v5390 = vsub.f32 %v5386, %v5360
    %v5391 = vmul.f32 %v5387, %v5366
    %v5392 = vmul.f32 %v5388, %v5366
    %v5393 = vmul.f32 %v5389, %v5366
    %v5394 = vmul.f32 %v5390, %v5366
    %v5395 = vmax.f32 %v5391, 0.0
    %v5396 = vmax.f32 %v5392, 0.0
    %v5397 = vmax.f32 %v5393, 0.0
    %v5398 = vmax.f32 %v5394, 0.0
    %5399 = vst [vmem:[#allocation6] sm:$0xff] 0.0
    %5400 = vst [vmem:[#allocation6 + $0x8] sm:$0xff] %v5395
    %5401 = vst [vmem:[#allocation6 + $0x10] sm:$0xff] %v5396
    %5402 = vst [vmem:[#allocation6 + $0x18] sm:$0xff] %v5397
    %5403 = vst [vmem:[#allocation6 + $0x20] sm:$0xff] %v5398
    %5404 = vst [vmem:[#allocation6 + $0x28] sm:$0xff] 0.0
    %v5405 = vld [vmem:[#allocation6 + $0x7] sm:$0xff]
    %v5406 = vld [vmem:[#allocation6 + $0xf] sm:$0xff]
    %v5407 = vld [vmem:[#allocation6 + $0x17] sm:$0xff]
    %v5408 = vld [vmem:[#allocation6 + $0x1f] sm:$0xff]
    %v5409 = vld [vmem:[#allocation6 + $0x8] sm:$0xff]
    %v5410 = vld [vmem:[#allocation6 + $0x10] sm:$0xff]
    %v5411 = vld [vmem:[#allocation6 + $0x18] sm:$0xff]
    %v5412 = vld [vmem:[#allocation6 + $0x20] sm:$0xff]
    %v5413 = vld [vmem:[#allocation6 + $0x9] sm:$0xff]
    %v5414 = vld [vmem:[#allocation6 + $0x11] sm:$0xff]
    %v5415 = vld [vmem:[#allocation6 + $0x19] sm:$0xff]
    %v5416 = vld [vmem:[#allocation6 + $0x21] sm:$0xff]
    %v5417 = vand.u32 %v2340, 15
    %v5418 = vand.u32 %v2341, 15
    %v5419 = vand.u32 %v2342, 15
    %v5420 = vand.u32 %v2343, 15
    %vm5421 = vcmp.ne.s32.totalorder %v5417, 0
    %vm5422 = vcmp.ne.s32.totalorder %v5418, 0
    %vm5423 = vcmp.ne.s32.totalorder %v5419, 0
    %vm5424 = vcmp.ne.s32.totalorder %v5420, 0
    %v5425 = vsel %vm5421, 1.0, 0.0
    %v5426 = vsel %vm5422, 1.0, 0.0
    %v5427 = vsel %vm5423, 1.0, 0.0
    %v5428 = vsel %vm5424, 1.0, 0.0
    %v5429 = vmul.f32 %v5405, %v5425
    %v5430 = vmul.f32 %v5406, %v5426
    %v5431 = vmul.f32 %v5407, %v5427
    %v5432 = vmul.f32 %v5408, %v5428
    %vm5433 = vcmp.ne.s32.totalorder %v5417, 15
    %vm5434 = vcmp.ne.s32.totalorder %v5418, 15
    %vm5435 = vcmp.ne.s32.totalorder %v5419, 15
    %vm5436 = vcmp.ne.s32.totalorder %v5420, 15
    %v5437 = vsel %vm5433, 1.0, 0.0
    %v5438 = vsel %vm5434, 1.0, 0.0
    %v5439 = vsel %vm5435, 1.0, 0.0
    %v5440 = vsel %vm5436, 1.0, 0.0
    %v5441 = vmul.f32 %v5413, %v5437
    %v5442 = vmul.f32 %v5414, %v5438
    %v5443 = vmul.f32 %v5415, %v5439
    %v5444 = vmul.f32 %v5416, %v5440
    %5445 = vrot.lane.b32.xlu0 %v5409, 64
    %v5446 = vpop.permute.xlu0 %5445
    %5447 = vrot.lane.b32.xlu0 %v5410, 64
    %v5448 = vpop.permute.xlu0 %5447
    %5449 = vrot.lane.b32.xlu0 %v5411, 64
    %v5450 = vpop.permute.xlu0 %5449
    %5451 = vrot.lane.b32.xlu0 %v5412, 64
    %v5452 = vpop.permute.xlu0 %5451
    %v5453 = vsel %vm2661, %v5429, %v5446
    %v5454 = vsel %vm2661, %v5430, %v5448
    %v5455 = vsel %vm2661, %v5431, %v5450
    %v5456 = vsel %vm2661, %v5432, %v5452
    %v5457 = vpack.c.bf16 %v5454, %v5453
    %v5458 = vpack.c.bf16 %v5442, %v5441
    %v5459 = vpack.c.bf16 %v5456, %v5455
    %v5460 = vpack.c.bf16 %v5444, %v5443
    %v5461 = vld [vmem:[%s35] sm:$0xf]
    %v5462 = vld [vmem:[%s35 + $0x4] sm:$0xf]
    %v5463 = vld [vmem:[%s35 + $0x8] sm:$0xf]
    %v5464 = vld [vmem:[%s35 + $0xc] sm:$0xf]
    %v5465 = vld [vmem:[%s35 + $0x10] sm:$0xf]
    %v5466 = vld [vmem:[%s35 + $0x14] sm:$0xf]
    %v5467 = vld [vmem:[%s35 + $0x18] sm:$0xf]
    %v5468 = vld [vmem:[%s35 + $0x1c] sm:$0xf]
    %v5469 = vld [vmem:[%s35 + $0x20] sm:$0xf]
    %v5470 = vld [vmem:[%s35 + $0x24] sm:$0xf]
    %v5471 = vld [vmem:[%s35 + $0x28] sm:$0xf]
    %v5472 = vld [vmem:[%s35 + $0x2c] sm:$0xf]
    %v5473 = vld [vmem:[%s35 + $0x30] sm:$0xf]
    %v5474 = vld [vmem:[%s35 + $0x34] sm:$0xf]
    %v5475 = vld [vmem:[%s35 + $0x38] sm:$0xf]
    %v5476 = vld [vmem:[%s35 + $0x3c] sm:$0xf]
    %v5477 = vld [vmem:[%s35 + $0x40] sm:$0xf]
    %v5478 = vld [vmem:[%s35 + $0x44] sm:$0xf]
    %v5479 = vld [vmem:[%s35 + $0x48] sm:$0xf]
    %v5480 = vld [vmem:[%s35 + $0x4c] sm:$0xf]
    %v5481 = vld [vmem:[%s35 + $0x50] sm:$0xf]
    %v5482 = vld [vmem:[%s35 + $0x54] sm:$0xf]
    %v5483 = vld [vmem:[%s35 + $0x58] sm:$0xf]
    %v5484 = vld [vmem:[%s35 + $0x5c] sm:$0xf]
    %v5485 = vld [vmem:[%s35 + $0x60] sm:$0xf]
    %v5486 = vld [vmem:[%s35 + $0x64] sm:$0xf]
    %v5487 = vld [vmem:[%s35 + $0x68] sm:$0xf]
    %v5488 = vld [vmem:[%s35 + $0x6c] sm:$0xf]
    %v5489 = vld [vmem:[%s35 + $0x70] sm:$0xf]
    %v5490 = vld [vmem:[%s35 + $0x74] sm:$0xf]
    %v5491 = vld [vmem:[%s35 + $0x78] sm:$0xf]
    %v5492 = vld [vmem:[%s35 + $0x7c] sm:$0xf]
    %v5493 = vld [vmem:[%s39] sm:$0x1]
    %v5495 = vlaneseq
    %v5496 = vshrl.u32 %v5495, 7
    %v5497 = vsub.s32 0, %v5496
    %v5498 = vrot.slane %v5493, %v5497
    %v5532 = vunpack.c.l.b16 %v5461
    %v5533 = vunpack.c.l.b16 %v5462
    %v5534 = vunpack.c.l.b16 %v5463
    %v5535 = vunpack.c.l.b16 %v5464
    %v5536 = vunpack.c.l.b16 %v5465
    %v5537 = vunpack.c.l.b16 %v5466
    %v5538 = vunpack.c.l.b16 %v5467
    %v5539 = vunpack.c.l.b16 %v5468
    %v5540 = vunpack.c.l.b16 %v5469
    %v5541 = vunpack.c.l.b16 %v5470
    %v5542 = vunpack.c.l.b16 %v5471
    %v5543 = vunpack.c.l.b16 %v5472
    %v5544 = vunpack.c.l.b16 %v5473
    %v5545 = vunpack.c.l.b16 %v5474
    %v5546 = vunpack.c.l.b16 %v5475
    %v5547 = vunpack.c.l.b16 %v5476
    %v5548 = vunpack.c.l.b16 %v5477
    %v5549 = vunpack.c.l.b16 %v5478
    %v5550 = vunpack.c.l.b16 %v5479
    %v5551 = vunpack.c.l.b16 %v5480
    %v5552 = vunpack.c.l.b16 %v5481
    %v5553 = vunpack.c.l.b16 %v5482
    %v5554 = vunpack.c.l.b16 %v5483
    %v5555 = vunpack.c.l.b16 %v5484
    %v5556 = vunpack.c.l.b16 %v5485
    %v5557 = vunpack.c.l.b16 %v5486
    %v5558 = vunpack.c.l.b16 %v5487
    %v5559 = vunpack.c.l.b16 %v5488
    %v5560 = vunpack.c.l.b16 %v5489
    %v5561 = vunpack.c.l.b16 %v5490
    %v5562 = vunpack.c.l.b16 %v5491
    %v5563 = vunpack.c.l.b16 %v5492
    %v5564 = vpack.c.b16 %v5533, %v5532
    %v5565 = vpack.c.b16 %v5535, %v5534
    %v5566 = vpack.c.b16 %v5537, %v5536
    %v5567 = vpack.c.b16 %v5539, %v5538
    %v5568 = vpack.c.b16 %v5541, %v5540
    %v5569 = vpack.c.b16 %v5543, %v5542
    %v5570 = vpack.c.b16 %v5545, %v5544
    %v5571 = vpack.c.b16 %v5547, %v5546
    %v5572 = vpack.c.b16 %v5549, %v5548
    %v5573 = vpack.c.b16 %v5551, %v5550
    %v5574 = vpack.c.b16 %v5553, %v5552
    %v5575 = vpack.c.b16 %v5555, %v5554
    %v5576 = vpack.c.b16 %v5557, %v5556
    %v5577 = vpack.c.b16 %v5559, %v5558
    %v5578 = vpack.c.b16 %v5561, %v5560
    %v5579 = vpack.c.b16 %v5563, %v5562
    %5596 = vmatprep.subr.bf16.mxu0 0
    %5597 = vmatpush1.bf16.msra.mxu0 %v5564
    %5598 = vmatprep.subr.bf16.mxu0 0
    %5599 = vmatpush1.bf16.msra.mxu0 %v5565
    %5600 = vmatprep.subr.bf16.mxu0 0
    %5601 = vmatpush1.bf16.msra.mxu0 %v5566
    %5602 = vmatprep.subr.bf16.mxu0 0
    %5603 = vmatpush1.bf16.msra.mxu0 %v5567
    %5604 = vmatprep.subr.bf16.mxu0 0
    %5605 = vmatpush1.bf16.msra.mxu0 %v5568
    %5606 = vmatprep.subr.bf16.mxu0 0
    %5607 = vmatpush1.bf16.msra.mxu0 %v5569
    %5608 = vmatprep.subr.bf16.mxu0 0
    %5609 = vmatpush1.bf16.msra.mxu0 %v5570
    %5610 = vmatprep.subr.bf16.mxu0 0
    %5611 = vmatpush1.bf16.msra.mxu0 %v5571
    %5612 = vmatprep.subr.bf16.mxu0 0
    %5613 = vmatpush1.bf16.msra.mxu0 %v5572
    %5614 = vmatprep.subr.bf16.mxu0 0
    %5615 = vmatpush1.bf16.msra.mxu0 %v5573
    %5616 = vmatprep.subr.bf16.mxu0 0
    %5617 = vmatpush1.bf16.msra.mxu0 %v5574
    %5618 = vmatprep.subr.bf16.mxu0 0
    %5619 = vmatpush1.bf16.msra.mxu0 %v5575
    %5620 = vmatprep.subr.bf16.mxu0 0
    %5621 = vmatpush1.bf16.msra.mxu0 %v5576
    %5622 = vmatprep.subr.bf16.mxu0 0
    %5623 = vmatpush1.bf16.msra.mxu0 %v5577
    %5624 = vmatprep.subr.bf16.mxu0 0
    %5625 = vmatpush1.bf16.msra.mxu0 %v5578
    %5626 = vmatprep.subr.bf16.mxu0 0
    %5627 = vmatpush1.bf16.msra.mxu0 %v5579
    %5628 = vmatprep.mubr.bf16.mxu0 %v5458
    %5629 = vmatmul.mubr.bf16.gmra.mrb[0].mxu0 %v5457
    %v5630 = vpop.f32.mrb[0].mxu0
    %v5631 = vadd.f32 %v5498, %v5630
    %v5632 = vpop.f32.mrb[0].mxu0
    %v5633 = vpop.f32.mrb[0].mxu0
    %v5634 = vadd.f32 %v5498, %v5633
    %v5635 = vpop.f32.mrb[0].mxu0
    %5636 = vmatprep.mubr.bf16.mxu0 %v5460
    %5637 = vmatmul.mubr.bf16.gmra.mrb[0].mxu0 %v5459
    %v5638 = vpop.f32.mrb[0].mxu0
    %v5639 = vadd.f32 %v5498, %v5638
    %v5640 = vpop.f32.mrb[0].mxu0
    %v5641 = vpop.f32.mrb[0].mxu0
    %v5642 = vadd.f32 %v5498, %v5641
    %v5643 = vpop.f32.mrb[0].mxu0
    %5644 = vdwg.mxu0
    %v5645 = vmul.f32 %v5453, %v5453
    %v5646 = vmul.f32 %v5441, %v5441
    %v5647 = vmul.f32 %v5454, %v5454
    %v5648 = vmul.f32 %v5442, %v5442
    %v5649 = vmul.f32 %v5455, %v5455
    %v5650 = vmul.f32 %v5443, %v5443
    %v5651 = vmul.f32 %v5456, %v5456
    %v5652 = vmul.f32 %v5444, %v5444
    %v5653 = vpack.c.bf16 %v5647, %v5645
    %v5654 = vpack.c.bf16 %v5648, %v5646
    %v5655 = vpack.c.bf16 %v5651, %v5649
    %v5656 = vpack.c.bf16 %v5652, %v5650
    %v5657 = vld [vmem:[%s37] sm:$0xf]
    %v5658 = vld [vmem:[%s37 + $0x4] sm:$0xf]
    %v5659 = vld [vmem:[%s37 + $0x8] sm:$0xf]
    %v5660 = vld [vmem:[%s37 + $0xc] sm:$0xf]
    %v5661 = vld [vmem:[%s37 + $0x10] sm:$0xf]
    %v5662 = vld [vmem:[%s37 + $0x14] sm:$0xf]
    %v5663 = vld [vmem:[%s37 + $0x18] sm:$0xf]
    %v5664 = vld [vmem:[%s37 + $0x1c] sm:$0xf]
    %v5665 = vld [vmem:[%s37 + $0x20] sm:$0xf]
    %v5666 = vld [vmem:[%s37 + $0x24] sm:$0xf]
    %v5667 = vld [vmem:[%s37 + $0x28] sm:$0xf]
    %v5668 = vld [vmem:[%s37 + $0x2c] sm:$0xf]
    %v5669 = vld [vmem:[%s37 + $0x30] sm:$0xf]
    %v5670 = vld [vmem:[%s37 + $0x34] sm:$0xf]
    %v5671 = vld [vmem:[%s37 + $0x38] sm:$0xf]
    %v5672 = vld [vmem:[%s37 + $0x3c] sm:$0xf]
    %v5673 = vld [vmem:[%s37 + $0x40] sm:$0xf]
    %v5674 = vld [vmem:[%s37 + $0x44] sm:$0xf]
    %v5675 = vld [vmem:[%s37 + $0x48] sm:$0xf]
    %v5676 = vld [vmem:[%s37 + $0x4c] sm:$0xf]
    %v5677 = vld [vmem:[%s37 + $0x50] sm:$0xf]
    %v5678 = vld [vmem:[%s37 + $0x54] sm:$0xf]
    %v5679 = vld [vmem:[%s37 + $0x58] sm:$0xf]
    %v5680 = vld [vmem:[%s37 + $0x5c] sm:$0xf]
    %v5681 = vld [vmem:[%s37 + $0x60] sm:$0xf]
    %v5682 = vld [vmem:[%s37 + $0x64] sm:$0xf]
    %v5683 = vld [vmem:[%s37 + $0x68] sm:$0xf]
    %v5684 = vld [vmem:[%s37 + $0x6c] sm:$0xf]
    %v5685 = vld [vmem:[%s37 + $0x70] sm:$0xf]
    %v5686 = vld [vmem:[%s37 + $0x74] sm:$0xf]
    %v5687 = vld [vmem:[%s37 + $0x78] sm:$0xf]
    %v5688 = vld [vmem:[%s37 + $0x7c] sm:$0xf]
    %v5689 = vld [vmem:[%s41] sm:$0x1]
    %v5691 = vlaneseq
    %v5692 = vshrl.u32 %v5691, 7
    %v5693 = vsub.s32 0, %v5692
    %v5694 = vrot.slane %v5689, %v5693
    %v5728 = vunpack.c.l.b16 %v5657
    %v5729 = vunpack.c.l.b16 %v5658
    %v5730 = vunpack.c.l.b16 %v5659
    %v5731 = vunpack.c.l.b16 %v5660
    %v5732 = vunpack.c.l.b16 %v5661
    %v5733 = vunpack.c.l.b16 %v5662
    %v5734 = vunpack.c.l.b16 %v5663
    %v5735 = vunpack.c.l.b16 %v5664
    %v5736 = vunpack.c.l.b16 %v5665
    %v5737 = vunpack.c.l.b16 %v5666
    %v5738 = vunpack.c.l.b16 %v5667
    %v5739 = vunpack.c.l.b16 %v5668
    %v5740 = vunpack.c.l.b16 %v5669
    %v5741 = vunpack.c.l.b16 %v5670
    %v5742 = vunpack.c.l.b16 %v5671
    %v5743 = vunpack.c.l.b16 %v5672
    %v5744 = vunpack.c.l.b16 %v5673
    %v5745 = vunpack.c.l.b16 %v5674
    %v5746 = vunpack.c.l.b16 %v5675
    %v5747 = vunpack.c.l.b16 %v5676
    %v5748 = vunpack.c.l.b16 %v5677
    %v5749 = vunpack.c.l.b16 %v5678
    %v5750 = vunpack.c.l.b16 %v5679
    %v5751 = vunpack.c.l.b16 %v5680
    %v5752 = vunpack.c.l.b16 %v5681
    %v5753 = vunpack.c.l.b16 %v5682
    %v5754 = vunpack.c.l.b16 %v5683
    %v5755 = vunpack.c.l.b16 %v5684
    %v5756 = vunpack.c.l.b16 %v5685
    %v5757 = vunpack.c.l.b16 %v5686
    %v5758 = vunpack.c.l.b16 %v5687
    %v5759 = vunpack.c.l.b16 %v5688
    %v5760 = vpack.c.b16 %v5729, %v5728
    %v5761 = vpack.c.b16 %v5731, %v5730
    %v5762 = vpack.c.b16 %v5733, %v5732
    %v5763 = vpack.c.b16 %v5735, %v5734
    %v5764 = vpack.c.b16 %v5737, %v5736
    %v5765 = vpack.c.b16 %v5739, %v5738
    %v5766 = vpack.c.b16 %v5741, %v5740
    %v5767 = vpack.c.b16 %v5743, %v5742
    %v5768 = vpack.c.b16 %v5745, %v5744
    %v5769 = vpack.c.b16 %v5747, %v5746
    %v5770 = vpack.c.b16 %v5749, %v5748
    %v5771 = vpack.c.b16 %v5751, %v5750
    %v5772 = vpack.c.b16 %v5753, %v5752
    %v5773 = vpack.c.b16 %v5755, %v5754
    %v5774 = vpack.c.b16 %v5757, %v5756
    %v5775 = vpack.c.b16 %v5759, %v5758
    %5792 = vmatprep.subr.bf16.mxu0 0
    %5793 = vmatpush1.bf16.msra.mxu0 %v5760
    %5794 = vmatprep.subr.bf16.mxu0 0
    %5795 = vmatpush1.bf16.msra.mxu0 %v5761
    %5796 = vmatprep.subr.bf16.mxu0 0
    %5797 = vmatpush1.bf16.msra.mxu0 %v5762
    %5798 = vmatprep.subr.bf16.mxu0 0
    %5799 = vmatpush1.bf16.msra.mxu0 %v5763
    %5800 = vmatprep.subr.bf16.mxu0 0
    %5801 = vmatpush1.bf16.msra.mxu0 %v5764
    %5802 = vmatprep.subr.bf16.mxu0 0
    %5803 = vmatpush1.bf16.msra.mxu0 %v5765
    %5804 = vmatprep.subr.bf16.mxu0 0
    %5805 = vmatpush1.bf16.msra.mxu0 %v5766
    %5806 = vmatprep.subr.bf16.mxu0 0
    %5807 = vmatpush1.bf16.msra.mxu0 %v5767
    %5808 = vmatprep.subr.bf16.mxu0 0
    %5809 = vmatpush1.bf16.msra.mxu0 %v5768
    %5810 = vmatprep.subr.bf16.mxu0 0
    %5811 = vmatpush1.bf16.msra.mxu0 %v5769
    %5812 = vmatprep.subr.bf16.mxu0 0
    %5813 = vmatpush1.bf16.msra.mxu0 %v5770
    %5814 = vmatprep.subr.bf16.mxu0 0
    %5815 = vmatpush1.bf16.msra.mxu0 %v5771
    %5816 = vmatprep.subr.bf16.mxu0 0
    %5817 = vmatpush1.bf16.msra.mxu0 %v5772
    %5818 = vmatprep.subr.bf16.mxu0 0
    %5819 = vmatpush1.bf16.msra.mxu0 %v5773
    %5820 = vmatprep.subr.bf16.mxu0 0
    %5821 = vmatpush1.bf16.msra.mxu0 %v5774
    %5822 = vmatprep.subr.bf16.mxu0 0
    %5823 = vmatpush1.bf16.msra.mxu0 %v5775
    %5824 = vmatprep.mubr.bf16.mxu0 %v5654
    %5825 = vmatmul.mubr.bf16.gmra.mrb[0].mxu0 %v5653
    %v5826 = vpop.f32.mrb[0].mxu0
    %v5827 = vadd.f32 %v5694, %v5826
    %v5828 = vpop.f32.mrb[0].mxu0
    %v5829 = vpop.f32.mrb[0].mxu0
    %v5830 = vadd.f32 %v5694, %v5829
    %v5831 = vpop.f32.mrb[0].mxu0
    %5832 = vmatprep.mubr.bf16.mxu0 %v5656
    %5833 = vmatmul.mubr.bf16.gmra.mrb[0].mxu0 %v5655
    %v5834 = vpop.f32.mrb[0].mxu0
    %v5835 = vadd.f32 %v5694, %v5834
    %v5836 = vpop.f32.mrb[0].mxu0
    %v5837 = vpop.f32.mrb[0].mxu0
    %v5838 = vadd.f32 %v5694, %v5837
    %v5839 = vpop.f32.mrb[0].mxu0
    %5840 = vdwg.mxu0
    %5841 = vrot.lane.b32.xlu0 %v5631, 64
    %v5842 = vpop.permute.xlu0 %5841
    %5843 = vrot.lane.b32.xlu0 %v5634, 64
    %v5844 = vpop.permute.xlu0 %5843
    %5845 = vrot.lane.b32.xlu0 %v5639, 64
    %v5846 = vpop.permute.xlu0 %5845
    %5847 = vrot.lane.b32.xlu0 %v5642, 64
    %v5848 = vpop.permute.xlu0 %5847
    %v5849 = vmul.f32 %v5631, %v5842
    %v5850 = vmul.f32 %v5634, %v5844
    %v5851 = vmul.f32 %v5639, %v5846
    %v5852 = vmul.f32 %v5642, %v5848
    %v5853 = vadd.f32 %v5849, %v5827
    %v5854 = vadd.f32 %v5850, %v5830
    %v5855 = vadd.f32 %v5851, %v5835
    %v5856 = vadd.f32 %v5852, %v5838
    %v5857 = vadd.f32 %v5853, %v5854
    %v5858 = vadd.f32 %v5857, %v5855
    %v5859 = vadd.f32 %v5858, %v5856
    %v5860 = vrot.slane %v5859, 4
    %v5861 = vadd.f32 %v5859, %v5860
    %v5862 = vrot.slane %v5861, 2
    %v5863 = vadd.f32 %v5861, %v5862
    %v5864 = vrot.slane %v5863, 1
    %v5865 = vadd.f32 %v5863, %v5864
    %v5866 = vmul.f32 %v5853, %v5853
    %v5867 = vmul.f32 %v5854, %v5854
    %v5868 = vmul.f32 %v5855, %v5855
    %v5869 = vmul.f32 %v5856, %v5856
    %v5870 = vadd.f32 %v5866, %v5867
    %v5871 = vadd.f32 %v5870, %v5868
    %v5872 = vadd.f32 %v5871, %v5869
    %v5873 = vrot.slane %v5872, 4
    %v5874 = vadd.f32 %v5872, %v5873
    %v5875 = vrot.slane %v5874, 2
    %v5876 = vadd.f32 %v5874, %v5875
    %v5877 = vrot.slane %v5876, 1
    %v5878 = vadd.f32 %v5876, %v5877
    %v5879 = vrcp.pop 32.0
    %v5880 = vmul.f32 %v5865, %v5879
    %v5881 = vmul.f32 %v5878, %v5879
    %v5882 = vmul.f32 %v5880, %v5880
    %v5883 = vsub.f32 %v5881, %v5882
    %v5884 = vmax.f32 %v5883, 0.0
    %v5885 = vadd.f32 %v5884, 1e-05
    %v5886 = vrsqrt.pop %v5885
    %5887 = vst [vmem:[#allocation2] sm:$0xff] %v5853
    %5888 = vst [vmem:[#allocation2 + $0x8] sm:$0xff] %v5854
    %5889 = vst [vmem:[#allocation2 + $0x10] sm:$0xff] %v5855
    %5890 = vst [vmem:[#allocation2 + $0x18] sm:$0xff] %v5856
    %v5891 = vld [vmem:[#allocation2] ss:$2 sm:$0xff]
    %v5892 = vld [vmem:[%s3689] ss:$2 sm:$0xff]
    %v5893 = vld [vmem:[%s2017] ss:$2 sm:$0xff]
    %v5894 = vld [vmem:[%s2019] ss:$2 sm:$0xff]
    %v5895 = vmax.f32 %v5891, %v5893
    %v5896 = vmax.f32 %v5892, %v5894
    %v5897 = vsub.f32 %v5895, %v5880
    %v5898 = vsub.f32 %v5896, %v5880
    %v5899 = vmul.f32 %v5897, %v5886
    %v5900 = vmul.f32 %v5898, %v5886
    %v5901 = vmax.f32 %v5899, 0.0
    %v5902 = vmax.f32 %v5900, 0.0
    %5903 = vst [vmem:[#allocation7] sm:$0xff] 0.0
    %5904 = vst [vmem:[#allocation7 + $0x8] sm:$0xff] %v5901
    %5905 = vst [vmem:[#allocation7 + $0x10] sm:$0xff] %v5902
    %5906 = vst [vmem:[#allocation7 + $0x18] sm:$0xff] 0.0
    %v5907 = vld [vmem:[#allocation7 + $0x8] sm:$0xff]
    %v5908 = vld [vmem:[#allocation7 + $0x10] sm:$0xff]
    %v5909 = vld [vmem:[#allocation7 + $0x9] sm:$0xff]
    %v5910 = vld [vmem:[#allocation7 + $0x11] sm:$0xff]
    %v5911 = vld [vmem:[#allocation7 + $0xa] sm:$0xff]
    %v5912 = vld [vmem:[#allocation7 + $0x12] sm:$0xff]
    %5913 = vrot.lane.b32.xlu0 %v5909, 64
    %v5914 = vpop.permute.xlu0 %5913
    %5915 = vrot.lane.b32.xlu0 %v5910, 64
    %v5916 = vpop.permute.xlu0 %5915
    %v5917 = vsel %vm2661, %v5907, %v5914
    %v5918 = vsel %vm2661, %v5908, %v5916
    %v5919 = vpack.c.bf16 %v5918, %v5917
    %v5920 = vpack.c.bf16 %v5912, %v5911
    %v5921 = vld [vmem:[%s43] sm:$0xf]
    %v5922 = vld [vmem:[%s43 + $0x4] sm:$0xf]
    %v5923 = vld [vmem:[%s43 + $0x8] sm:$0xf]
    %v5924 = vld [vmem:[%s43 + $0xc] sm:$0xf]
    %v5925 = vld [vmem:[%s43 + $0x10] sm:$0xf]
    %v5926 = vld [vmem:[%s43 + $0x14] sm:$0xf]
    %v5927 = vld [vmem:[%s43 + $0x18] sm:$0xf]
    %v5928 = vld [vmem:[%s43 + $0x1c] sm:$0xf]
    %v5929 = vld [vmem:[%s43 + $0x20] sm:$0xf]
    %v5930 = vld [vmem:[%s43 + $0x24] sm:$0xf]
    %v5931 = vld [vmem:[%s43 + $0x28] sm:$0xf]
    %v5932 = vld [vmem:[%s43 + $0x2c] sm:$0xf]
    %v5933 = vld [vmem:[%s43 + $0x30] sm:$0xf]
    %v5934 = vld [vmem:[%s43 + $0x34] sm:$0xf]
    %v5935 = vld [vmem:[%s43 + $0x38] sm:$0xf]
    %v5936 = vld [vmem:[%s43 + $0x3c] sm:$0xf]
    %v5937 = vld [vmem:[%s43 + $0x40] sm:$0xf]
    %v5938 = vld [vmem:[%s43 + $0x44] sm:$0xf]
    %v5939 = vld [vmem:[%s43 + $0x48] sm:$0xf]
    %v5940 = vld [vmem:[%s43 + $0x4c] sm:$0xf]
    %v5941 = vld [vmem:[%s43 + $0x50] sm:$0xf]
    %v5942 = vld [vmem:[%s43 + $0x54] sm:$0xf]
    %v5943 = vld [vmem:[%s43 + $0x58] sm:$0xf]
    %v5944 = vld [vmem:[%s43 + $0x5c] sm:$0xf]
    %v5945 = vld [vmem:[%s43 + $0x60] sm:$0xf]
    %v5946 = vld [vmem:[%s43 + $0x64] sm:$0xf]
    %v5947 = vld [vmem:[%s43 + $0x68] sm:$0xf]
    %v5948 = vld [vmem:[%s43 + $0x6c] sm:$0xf]
    %v5949 = vld [vmem:[%s43 + $0x70] sm:$0xf]
    %v5950 = vld [vmem:[%s43 + $0x74] sm:$0xf]
    %v5951 = vld [vmem:[%s43 + $0x78] sm:$0xf]
    %v5952 = vld [vmem:[%s43 + $0x7c] sm:$0xf]
    %v5953 = vld [vmem:[%s47] sm:$0x1]
    %v5955 = vlaneseq
    %v5956 = vshrl.u32 %v5955, 7
    %v5957 = vsub.s32 0, %v5956
    %v5958 = vrot.slane %v5953, %v5957
    %v5992 = vunpack.c.l.b16 %v5921
    %v5993 = vunpack.c.l.b16 %v5922
    %v5994 = vunpack.c.l.b16 %v5923
    %v5995 = vunpack.c.l.b16 %v5924
    %v5996 = vunpack.c.l.b16 %v5925
    %v5997 = vunpack.c.l.b16 %v5926
    %v5998 = vunpack.c.l.b16 %v5927
    %v5999 = vunpack.c.l.b16 %v5928
    %v6000 = vunpack.c.l.b16 %v5929
    %v6001 = vunpack.c.l.b16 %v5930
    %v6002 = vunpack.c.l.b16 %v5931
    %v6003 = vunpack.c.l.b16 %v5932
    %v6004 = vunpack.c.l.b16 %v5933
    %v6005 = vunpack.c.l.b16 %v5934
    %v6006 = vunpack.c.l.b16 %v5935
    %v6007 = vunpack.c.l.b16 %v5936
    %v6008 = vunpack.c.l.b16 %v5937
    %v6009 = vunpack.c.l.b16 %v5938
    %v6010 = vunpack.c.l.b16 %v5939
    %v6011 = vunpack.c.l.b16 %v5940
    %v6012 = vunpack.c.l.b16 %v5941
    %v6013 = vunpack.c.l.b16 %v5942
    %v6014 = vunpack.c.l.b16 %v5943
    %v6015 = vunpack.c.l.b16 %v5944
    %v6016 = vunpack.c.l.b16 %v5945
    %v6017 = vunpack.c.l.b16 %v5946
    %v6018 = vunpack.c.l.b16 %v5947
    %v6019 = vunpack.c.l.b16 %v5948
    %v6020 = vunpack.c.l.b16 %v5949
    %v6021 = vunpack.c.l.b16 %v5950
    %v6022 = vunpack.c.l.b16 %v5951
    %v6023 = vunpack.c.l.b16 %v5952
    %v6024 = vpack.c.b16 %v5993, %v5992
    %v6025 = vpack.c.b16 %v5995, %v5994
    %v6026 = vpack.c.b16 %v5997, %v5996
    %v6027 = vpack.c.b16 %v5999, %v5998
    %v6028 = vpack.c.b16 %v6001, %v6000
    %v6029 = vpack.c.b16 %v6003, %v6002
    %v6030 = vpack.c.b16 %v6005, %v6004
    %v6031 = vpack.c.b16 %v6007, %v6006
    %v6032 = vpack.c.b16 %v6009, %v6008
    %v6033 = vpack.c.b16 %v6011, %v6010
    %v6034 = vpack.c.b16 %v6013, %v6012
    %v6035 = vpack.c.b16 %v6015, %v6014
    %v6036 = vpack.c.b16 %v6017, %v6016
    %v6037 = vpack.c.b16 %v6019, %v6018
    %v6038 = vpack.c.b16 %v6021, %v6020
    %v6039 = vpack.c.b16 %v6023, %v6022
    %6056 = vmatprep.subr.bf16.mxu0 0
    %6057 = vmatpush1.bf16.msra.mxu0 %v6024
    %6058 = vmatprep.subr.bf16.mxu0 0
    %6059 = vmatpush1.bf16.msra.mxu0 %v6025
    %6060 = vmatprep.subr.bf16.mxu0 0
    %6061 = vmatpush1.bf16.msra.mxu0 %v6026
    %6062 = vmatprep.subr.bf16.mxu0 0
    %6063 = vmatpush1.bf16.msra.mxu0 %v6027
    %6064 = vmatprep.subr.bf16.mxu0 0
    %6065 = vmatpush1.bf16.msra.mxu0 %v6028
    %6066 = vmatprep.subr.bf16.mxu0 0
    %6067 = vmatpush1.bf16.msra.mxu0 %v6029
    %6068 = vmatprep.subr.bf16.mxu0 0
    %6069 = vmatpush1.bf16.msra.mxu0 %v6030
    %6070 = vmatprep.subr.bf16.mxu0 0
    %6071 = vmatpush1.bf16.msra.mxu0 %v6031
    %6072 = vmatprep.subr.bf16.mxu0 0
    %6073 = vmatpush1.bf16.msra.mxu0 %v6032
    %6074 = vmatprep.subr.bf16.mxu0 0
    %6075 = vmatpush1.bf16.msra.mxu0 %v6033
    %6076 = vmatprep.subr.bf16.mxu0 0
    %6077 = vmatpush1.bf16.msra.mxu0 %v6034
    %6078 = vmatprep.subr.bf16.mxu0 0
    %6079 = vmatpush1.bf16.msra.mxu0 %v6035
    %6080 = vmatprep.subr.bf16.mxu0 0
    %6081 = vmatpush1.bf16.msra.mxu0 %v6036
    %6082 = vmatprep.subr.bf16.mxu0 0
    %6083 = vmatpush1.bf16.msra.mxu0 %v6037
    %6084 = vmatprep.subr.bf16.mxu0 0
    %6085 = vmatpush1.bf16.msra.mxu0 %v6038
    %6086 = vmatprep.subr.bf16.mxu0 0
    %6087 = vmatpush1.bf16.msra.mxu0 %v6039
    %6088 = vmatprep.mubr.bf16.mxu0 %v5920
    %6089 = vmatmul.mubr.bf16.gmra.mrb[0].mxu0 %v5919
    %v6090 = vpop.f32.mrb[0].mxu0
    %v6091 = vadd.f32 %v5958, %v6090
    %v6092 = vpop.f32.mrb[0].mxu0
    %v6093 = vpop.f32.mrb[0].mxu0
    %v6094 = vadd.f32 %v5958, %v6093
    %v6095 = vpop.f32.mrb[0].mxu0
    %6096 = vdwg.mxu0
    %v6097 = vmul.f32 %v5917, %v5917
    %v6098 = vmul.f32 %v5911, %v5911
    %v6099 = vmul.f32 %v5918, %v5918
    %v6100 = vmul.f32 %v5912, %v5912
    %v6101 = vpack.c.bf16 %v6099, %v6097
    %v6102 = vpack.c.bf16 %v6100, %v6098
    %v6103 = vld [vmem:[%s45] sm:$0xf]
    %v6104 = vld [vmem:[%s45 + $0x4] sm:$0xf]
    %v6105 = vld [vmem:[%s45 + $0x8] sm:$0xf]
    %v6106 = vld [vmem:[%s45 + $0xc] sm:$0xf]
    %v6107 = vld [vmem:[%s45 + $0x10] sm:$0xf]
    %v6108 = vld [vmem:[%s45 + $0x14] sm:$0xf]
    %v6109 = vld [vmem:[%s45 + $0x18] sm:$0xf]
    %v6110 = vld [vmem:[%s45 + $0x1c] sm:$0xf]
    %v6111 = vld [vmem:[%s45 + $0x20] sm:$0xf]
    %v6112 = vld [vmem:[%s45 + $0x24] sm:$0xf]
    %v6113 = vld [vmem:[%s45 + $0x28] sm:$0xf]
    %v6114 = vld [vmem:[%s45 + $0x2c] sm:$0xf]
    %v6115 = vld [vmem:[%s45 + $0x30] sm:$0xf]
    %v6116 = vld [vmem:[%s45 + $0x34] sm:$0xf]
    %v6117 = vld [vmem:[%s45 + $0x38] sm:$0xf]
    %v6118 = vld [vmem:[%s45 + $0x3c] sm:$0xf]
    %v6119 = vld [vmem:[%s45 + $0x40] sm:$0xf]
    %v6120 = vld [vmem:[%s45 + $0x44] sm:$0xf]
    %v6121 = vld [vmem:[%s45 + $0x48] sm:$0xf]
    %v6122 = vld [vmem:[%s45 + $0x4c] sm:$0xf]
    %v6123 = vld [vmem:[%s45 + $0x50] sm:$0xf]
    %v6124 = vld [vmem:[%s45 + $0x54] sm:$0xf]
    %v6125 = vld [vmem:[%s45 + $0x58] sm:$0xf]
    %v6126 = vld [vmem:[%s45 + $0x5c] sm:$0xf]
    %v6127 = vld [vmem:[%s45 + $0x60] sm:$0xf]
    %v6128 = vld [vmem:[%s45 + $0x64] sm:$0xf]
    %v6129 = vld [vmem:[%s45 + $0x68] sm:$0xf]
    %v6130 = vld [vmem:[%s45 + $0x6c] sm:$0xf]
    %v6131 = vld [vmem:[%s45 + $0x70] sm:$0xf]
    %v6132 = vld [vmem:[%s45 + $0x74] sm:$0xf]
    %v6133 = vld [vmem:[%s45 + $0x78] sm:$0xf]
    %v6134 = vld [vmem:[%s45 + $0x7c] sm:$0xf]
    %v6135 = vld [vmem:[%s49] sm:$0x1]
    %v6137 = vlaneseq
    %v6138 = vshrl.u32 %v6137, 7
    %v6139 = vsub.s32 0, %v6138
    %v6140 = vrot.slane %v6135, %v6139
    %v6174 = vunpack.c.l.b16 %v6103
    %v6175 = vunpack.c.l.b16 %v6104
    %v6176 = vunpack.c.l.b16 %v6105
    %v6177 = vunpack.c.l.b16 %v6106
    %v6178 = vunpack.c.l.b16 %v6107
    %v6179 = vunpack.c.l.b16 %v6108
    %v6180 = vunpack.c.l.b16 %v6109
    %v6181 = vunpack.c.l.b16 %v6110
    %v6182 = vunpack.c.l.b16 %v6111
    %v6183 = vunpack.c.l.b16 %v6112
    %v6184 = vunpack.c.l.b16 %v6113
    %v6185 = vunpack.c.l.b16 %v6114
    %v6186 = vunpack.c.l.b16 %v6115
    %v6187 = vunpack.c.l.b16 %v6116
    %v6188 = vunpack.c.l.b16 %v6117
    %v6189 = vunpack.c.l.b16 %v6118
    %v6190 = vunpack.c.l.b16 %v6119
    %v6191 = vunpack.c.l.b16 %v6120
    %v6192 = vunpack.c.l.b16 %v6121
    %v6193 = vunpack.c.l.b16 %v6122
    %v6194 = vunpack.c.l.b16 %v6123
    %v6195 = vunpack.c.l.b16 %v6124
    %v6196 = vunpack.c.l.b16 %v6125
    %v6197 = vunpack.c.l.b16 %v6126
    %v6198 = vunpack.c.l.b16 %v6127
    %v6199 = vunpack.c.l.b16 %v6128
    %v6200 = vunpack.c.l.b16 %v6129
    %v6201 = vunpack.c.l.b16 %v6130
    %v6202 = vunpack.c.l.b16 %v6131
    %v6203 = vunpack.c.l.b16 %v6132
    %v6204 = vunpack.c.l.b16 %v6133
    %v6205 = vunpack.c.l.b16 %v6134
    %v6206 = vpack.c.b16 %v6175, %v6174
    %v6207 = vpack.c.b16 %v6177, %v6176
    %v6208 = vpack.c.b16 %v6179, %v6178
    %v6209 = vpack.c.b16 %v6181, %v6180
    %v6210 = vpack.c.b16 %v6183, %v6182
    %v6211 = vpack.c.b16 %v6185, %v6184
    %v6212 = vpack.c.b16 %v6187, %v6186
    %v6213 = vpack.c.b16 %v6189, %v6188
    %v6214 = vpack.c.b16 %v6191, %v6190
    %v6215 = vpack.c.b16 %v6193, %v6192
    %v6216 = vpack.c.b16 %v6195, %v6194
    %v6217 = vpack.c.b16 %v6197, %v6196
    %v6218 = vpack.c.b16 %v6199, %v6198
    %v6219 = vpack.c.b16 %v6201, %v6200
    %v6220 = vpack.c.b16 %v6203, %v6202
    %v6221 = vpack.c.b16 %v6205, %v6204
    %6238 = vmatprep.subr.bf16.mxu0 0
    %6239 = vmatpush1.bf16.msra.mxu0 %v6206
    %6240 = vmatprep.subr.bf16.mxu0 0
    %6241 = vmatpush1.bf16.msra.mxu0 %v6207
    %6242 = vmatprep.subr.bf16.mxu0 0
    %6243 = vmatpush1.bf16.msra.mxu0 %v6208
    %6244 = vmatprep.subr.bf16.mxu0 0
    %6245 = vmatpush1.bf16.msra.mxu0 %v6209
    %6246 = vmatprep.subr.bf16.mxu0 0
    %6247 = vmatpush1.bf16.msra.mxu0 %v6210
    %6248 = vmatprep.subr.bf16.mxu0 0
    %6249 = vmatpush1.bf16.msra.mxu0 %v6211
    %6250 = vmatprep.subr.bf16.mxu0 0
    %6251 = vmatpush1.bf16.msra.mxu0 %v6212
    %6252 = vmatprep.subr.bf16.mxu0 0
    %6253 = vmatpush1.bf16.msra.mxu0 %v6213
    %6254 = vmatprep.subr.bf16.mxu0 0
    %6255 = vmatpush1.bf16.msra.mxu0 %v6214
    %6256 = vmatprep.subr.bf16.mxu0 0
    %6257 = vmatpush1.bf16.msra.mxu0 %v6215
    %6258 = vmatprep.subr.bf16.mxu0 0
    %6259 = vmatpush1.bf16.msra.mxu0 %v6216
    %6260 = vmatprep.subr.bf16.mxu0 0
    %6261 = vmatpush1.bf16.msra.mxu0 %v6217
    %6262 = vmatprep.subr.bf16.mxu0 0
    %6263 = vmatpush1.bf16.msra.mxu0 %v6218
    %6264 = vmatprep.subr.bf16.mxu0 0
    %6265 = vmatpush1.bf16.msra.mxu0 %v6219
    %6266 = vmatprep.subr.bf16.mxu0 0
    %6267 = vmatpush1.bf16.msra.mxu0 %v6220
    %6268 = vmatprep.subr.bf16.mxu0 0
    %6269 = vmatpush1.bf16.msra.mxu0 %v6221
    %6270 = vmatprep.mubr.bf16.mxu0 %v6102
    %6271 = vmatmul.mubr.bf16.gmra.mrb[0].mxu0 %v6101
    %v6272 = vpop.f32.mrb[0].mxu0
    %v6273 = vadd.f32 %v6140, %v6272
    %v6274 = vpop.f32.mrb[0].mxu0
    %v6275 = vpop.f32.mrb[0].mxu0
    %v6276 = vadd.f32 %v6140, %v6275
    %v6277 = vpop.f32.mrb[0].mxu0
    %6278 = vdwg.mxu0
    %6279 = vrot.lane.b32.xlu0 %v6091, 64
    %v6280 = vpop.permute.xlu0 %6279
    %6281 = vrot.lane.b32.xlu0 %v6094, 64
    %v6282 = vpop.permute.xlu0 %6281
    %v6283 = vmul.f32 %v6091, %v6280
    %v6284 = vmul.f32 %v6094, %v6282
    %v6285 = vadd.f32 %v6283, %v6273
    %v6286 = vadd.f32 %v6284, %v6276
    %v6287 = vand.u32 %v2340, 7
    %v6288 = vand.u32 %v2341, 7
    %vm6289 = vcmp.lt.s32.totalorder %v6287, 6
    %vm6290 = vcmp.lt.s32.totalorder %v6288, 6
    %v6291 = vsel %vm6289, 1.0, 0.0
    %v6292 = vsel %vm6290, 1.0, 0.0
    %v6293 = vmul.f32 %v6285, %v6291
    %v6294 = vmul.f32 %v6286, %v6292
    %v6295 = vadd.f32 %v6293, %v6294
    %v6296 = vrot.slane %v6295, 4
    %v6297 = vadd.f32 %v6295, %v6296
    %v6298 = vrot.slane %v6297, 2
    %v6299 = vadd.f32 %v6297, %v6298
    %v6300 = vrot.slane %v6299, 1
    %v6301 = vadd.f32 %v6299, %v6300
    %v6302 = vmul.f32 %v6293, %v6285
    %v6303 = vmul.f32 %v6294, %v6286
    %v6304 = vadd.f32 %v6302, %v6303
    %v6305 = vrot.slane %v6304, 4
    %v6306 = vadd.f32 %v6304, %v6305
    %v6307 = vrot.slane %v6306, 2
    %v6308 = vadd.f32 %v6306, %v6307
    %v6309 = vrot.slane %v6308, 1
    %v6310 = vadd.f32 %v6308, %v6309
    %v6311 = vrcp.pop 12.0
    %v6312 = vmul.f32 %v6301, %v6311
    %v6313 = vmul.f32 %v6310, %v6311
    %v6314 = vmul.f32 %v6312, %v6312
    %v6315 = vsub.f32 %v6313, %v6314
    %v6316 = vmax.f32 %v6315, 0.0
    %v6317 = vadd.f32 %v6316, 1e-05
    %v6318 = vrsqrt.pop %v6317
    %v6319 = vsub.f32 %v6285, %v6312
    %v6320 = vsub.f32 %v6286, %v6312
    %v6321 = vmul.f32 %v6319, %v6318
    %v6322 = vmul.f32 %v6320, %v6318
    %v6323 = vmax.f32 %v6321, 0.0
    %v6324 = vmax.f32 %v6322, 0.0
    %6325 = vst [vmem:[#allocation8] sm:$0xff] %v6323
    %6326 = vst [vmem:[#allocation8 + $0x8] sm:$0xff] %v6324
    %v6327 = vld [vmem:[#allocation8] ss:$8 sm:$0x3]
    %s6328 = scalar_lea.vmem [#allocation8], 1
    %v6329 = vld [vmem:[%s6328] ss:$8 sm:$0x3]
    %v6330 = vmax.f32 %v6327, %v6329
    %s6331 = scalar_lea.vmem [#allocation8], 2
    %v6332 = vld [vmem:[%s6331] ss:$8 sm:$0x3]
    %s6333 = scalar_lea.vmem [#allocation8], 3
    %v6334 = vld [vmem:[%s6333] ss:$8 sm:$0x3]
    %v6335 = vmax.f32 %v6332, %v6334
    %s6336 = scalar_lea.vmem [#allocation8], 4
    %v6337 = vld [vmem:[%s6336] ss:$8 sm:$0x3]
    %s6338 = scalar_lea.vmem [#allocation8], 5
    %v6339 = vld [vmem:[%s6338] ss:$8 sm:$0x3]
    %v6340 = vmax.f32 %v6337, %v6339
    %6341 = vrot.lane.b32.xlu0 %v6335, 64
    %v6342 = vpop.permute.xlu0 %6341
    %v6343 = vsel %vm2661, %v6330, %v6342
    %v6344 = vpack.c.bf16 %v6343, %v6343
    %v6345 = vpack.c.bf16 %v6340, %v6340
    %v6346 = vld [vmem:[%s51] sm:$0xf]
    %v6347 = vld [vmem:[%s51 + $0x4] sm:$0xf]
    %v6348 = vld [vmem:[%s51 + $0x8] sm:$0xf]
    %v6349 = vld [vmem:[%s51 + $0xc] sm:$0xf]
    %v6350 = vld [vmem:[%s51 + $0x10] sm:$0xf]
    %v6351 = vld [vmem:[%s51 + $0x14] sm:$0xf]
    %v6352 = vld [vmem:[%s51 + $0x18] sm:$0xf]
    %v6353 = vld [vmem:[%s51 + $0x1c] sm:$0xf]
    %v6354 = vld [vmem:[%s51 + $0x20] sm:$0xf]
    %v6355 = vld [vmem:[%s51 + $0x24] sm:$0xf]
    %v6356 = vld [vmem:[%s51 + $0x28] sm:$0xf]
    %v6357 = vld [vmem:[%s51 + $0x2c] sm:$0xf]
    %v6358 = vld [vmem:[%s51 + $0x30] sm:$0xf]
    %v6359 = vld [vmem:[%s51 + $0x34] sm:$0xf]
    %v6360 = vld [vmem:[%s51 + $0x38] sm:$0xf]
    %v6361 = vld [vmem:[%s51 + $0x3c] sm:$0xf]
    %v6362 = vld [vmem:[%s51 + $0x40] sm:$0xf]
    %v6363 = vld [vmem:[%s51 + $0x44] sm:$0xf]
    %v6364 = vld [vmem:[%s51 + $0x48] sm:$0xf]
    %v6365 = vld [vmem:[%s51 + $0x4c] sm:$0xf]
    %v6366 = vld [vmem:[%s51 + $0x50] sm:$0xf]
    %v6367 = vld [vmem:[%s51 + $0x54] sm:$0xf]
    %v6368 = vld [vmem:[%s51 + $0x58] sm:$0xf]
    %v6369 = vld [vmem:[%s51 + $0x5c] sm:$0xf]
    %v6370 = vld [vmem:[%s51 + $0x60] sm:$0xf]
    %v6371 = vld [vmem:[%s51 + $0x64] sm:$0xf]
    %v6372 = vld [vmem:[%s51 + $0x68] sm:$0xf]
    %v6373 = vld [vmem:[%s51 + $0x6c] sm:$0xf]
    %v6374 = vld [vmem:[%s51 + $0x70] sm:$0xf]
    %v6375 = vld [vmem:[%s51 + $0x74] sm:$0xf]
    %v6376 = vld [vmem:[%s51 + $0x78] sm:$0xf]
    %v6377 = vld [vmem:[%s51 + $0x7c] sm:$0xf]
    %v6378 = vld [vmem:[%s53] sm:$0x1]
    %v6380 = vlaneseq
    %v6381 = vshrl.u32 %v6380, 7
    %v6382 = vsub.s32 0, %v6381
    %v6383 = vrot.slane %v6378, %v6382
    %v6417 = vunpack.c.l.b16 %v6346
    %v6418 = vunpack.c.l.b16 %v6347
    %v6419 = vunpack.c.l.b16 %v6348
    %v6420 = vunpack.c.l.b16 %v6349
    %v6421 = vunpack.c.l.b16 %v6350
    %v6422 = vunpack.c.l.b16 %v6351
    %v6423 = vunpack.c.l.b16 %v6352
    %v6424 = vunpack.c.l.b16 %v6353
    %v6425 = vunpack.c.l.b16 %v6354
    %v6426 = vunpack.c.l.b16 %v6355
    %v6427 = vunpack.c.l.b16 %v6356
    %v6428 = vunpack.c.l.b16 %v6357
    %v6429 = vunpack.c.l.b16 %v6358
    %v6430 = vunpack.c.l.b16 %v6359
    %v6431 = vunpack.c.l.b16 %v6360
    %v6432 = vunpack.c.l.b16 %v6361
    %v6433 = vunpack.c.l.b16 %v6362
    %v6434 = vunpack.c.l.b16 %v6363
    %v6435 = vunpack.c.l.b16 %v6364
    %v6436 = vunpack.c.l.b16 %v6365
    %v6437 = vunpack.c.l.b16 %v6366
    %v6438 = vunpack.c.l.b16 %v6367
    %v6439 = vunpack.c.l.b16 %v6368
    %v6440 = vunpack.c.l.b16 %v6369
    %v6441 = vunpack.c.l.b16 %v6370
    %v6442 = vunpack.c.l.b16 %v6371
    %v6443 = vunpack.c.l.b16 %v6372
    %v6444 = vunpack.c.l.b16 %v6373
    %v6445 = vunpack.c.l.b16 %v6374
    %v6446 = vunpack.c.l.b16 %v6375
    %v6447 = vunpack.c.l.b16 %v6376
    %v6448 = vunpack.c.l.b16 %v6377
    %v6449 = vpack.c.b16 %v6418, %v6417
    %v6450 = vpack.c.b16 %v6420, %v6419
    %v6451 = vpack.c.b16 %v6422, %v6421
    %v6452 = vpack.c.b16 %v6424, %v6423
    %v6453 = vpack.c.b16 %v6426, %v6425
    %v6454 = vpack.c.b16 %v6428, %v6427
    %v6455 = vpack.c.b16 %v6430, %v6429
    %v6456 = vpack.c.b16 %v6432, %v6431
    %v6457 = vpack.c.b16 %v6434, %v6433
    %v6458 = vpack.c.b16 %v6436, %v6435
    %v6459 = vpack.c.b16 %v6438, %v6437
    %v6460 = vpack.c.b16 %v6440, %v6439
    %v6461 = vpack.c.b16 %v6442, %v6441
    %v6462 = vpack.c.b16 %v6444, %v6443
    %v6463 = vpack.c.b16 %v6446, %v6445
    %v6464 = vpack.c.b16 %v6448, %v6447
    %6481 = vmatprep.subr.bf16.mxu0 0
    %6482 = vmatpush1.bf16.msra.mxu0 %v6449
    %6483 = vmatprep.subr.bf16.mxu0 0
    %6484 = vmatpush1.bf16.msra.mxu0 %v6450
    %6485 = vmatprep.subr.bf16.mxu0 0
    %6486 = vmatpush1.bf16.msra.mxu0 %v6451
    %6487 = vmatprep.subr.bf16.mxu0 0
    %6488 = vmatpush1.bf16.msra.mxu0 %v6452
    %6489 = vmatprep.subr.bf16.mxu0 0
    %6490 = vmatpush1.bf16.msra.mxu0 %v6453
    %6491 = vmatprep.subr.bf16.mxu0 0
    %6492 = vmatpush1.bf16.msra.mxu0 %v6454
    %6493 = vmatprep.subr.bf16.mxu0 0
    %6494 = vmatpush1.bf16.msra.mxu0 %v6455
    %6495 = vmatprep.subr.bf16.mxu0 0
    %6496 = vmatpush1.bf16.msra.mxu0 %v6456
    %6497 = vmatprep.subr.bf16.mxu0 0
    %6498 = vmatpush1.bf16.msra.mxu0 %v6457
    %6499 = vmatprep.subr.bf16.mxu0 0
    %6500 = vmatpush1.bf16.msra.mxu0 %v6458
    %6501 = vmatprep.subr.bf16.mxu0 0
    %6502 = vmatpush1.bf16.msra.mxu0 %v6459
    %6503 = vmatprep.subr.bf16.mxu0 0
    %6504 = vmatpush1.bf16.msra.mxu0 %v6460
    %6505 = vmatprep.subr.bf16.mxu0 0
    %6506 = vmatpush1.bf16.msra.mxu0 %v6461
    %6507 = vmatprep.subr.bf16.mxu0 0
    %6508 = vmatpush1.bf16.msra.mxu0 %v6462
    %6509 = vmatprep.subr.bf16.mxu0 0
    %6510 = vmatpush1.bf16.msra.mxu0 %v6463
    %6511 = vmatprep.subr.bf16.mxu0 0
    %6512 = vmatpush1.bf16.msra.mxu0 %v6464
    %6513 = vmatprep.mubr.bf16.mxu0 %v6345
    %6514 = vmatmul.mubr.bf16.gmra.mrb[0].mxu0 %v6344
    %v6515 = vpop.f32.mrb[0].mxu0
    %v6516 = vadd.f32 %v6383, %v6515
    %v6517 = vpop.f32.mrb[0].mxu0
    %v6518 = vpop.f32.mrb[0].mxu0
    %v6519 = vpop.f32.mrb[0].mxu0
    %6520 = vdwg.mxu0
    %v6521 = vmax.f32 %v6516, 0.0
    %v6522 = vld [vmem:[%s55] sm:$0xff]
    %v6523 = vld [vmem:[%s55 + $0x8] sm:$0xff]
    %v6524 = vld [vmem:[%s55 + $0x10] sm:$0xff]
    %v6525 = vld [vmem:[%s55 + $0x18] sm:$0xff]
    %v6526 = vld [vmem:[%s55 + $0x20] sm:$0xff]
    %v6527 = vld [vmem:[%s55 + $0x28] sm:$0xff]
    %v6528 = vld [vmem:[%s55 + $0x30] sm:$0xff]
    %v6529 = vld [vmem:[%s55 + $0x38] sm:$0xff]
    %v6530 = vld [vmem:[%s55 + $0x40] sm:$0xff]
    %v6531 = vld [vmem:[%s55 + $0x48] sm:$0xff]
    %v6532 = vld [vmem:[%s55 + $0x50] sm:$0xff]
    %v6533 = vld [vmem:[%s55 + $0x58] sm:$0xff]
    %v6534 = vld [vmem:[%s55 + $0x60] sm:$0xff]
    %v6535 = vld [vmem:[%s55 + $0x68] sm:$0xff]
    %v6536 = vld [vmem:[%s55 + $0x70] sm:$0xff]
    %v6537 = vld [vmem:[%s55 + $0x78] sm:$0xff]
    %v6538 = vld [vmem:[%s57] sm:$0x1]
    %v6540 = vlaneseq
    %v6541 = vshrl.u32 %v6540, 7
    %v6542 = vsub.s32 0, %v6541
    %v6543 = vrot.slane %v6538, %v6542
    %6545 = vmatprep.subr.mxu0 0.0
    %6546 = vmatpush1.msra.mxu0 %v6522
    %6547 = vmatprep.subr.mxu0 0.0
    %6548 = vmatpush1.msra.mxu0 %v6523
    %6549 = vmatprep.subr.mxu0 0.0
    %6550 = vmatpush1.msra.mxu0 %v6524
    %6551 = vmatprep.subr.mxu0 0.0
    %6552 = vmatpush1.msra.mxu0 %v6525
    %6553 = vmatprep.subr.mxu0 0.0
    %6554 = vmatpush1.msra.mxu0 %v6526
    %6555 = vmatprep.subr.mxu0 0.0
    %6556 = vmatpush1.msra.mxu0 %v6527
    %6557 = vmatprep.subr.mxu0 0.0
    %6558 = vmatpush1.msra.mxu0 %v6528
    %6559 = vmatprep.subr.mxu0 0.0
    %6560 = vmatpush1.msra.mxu0 %v6529
    %6561 = vmatprep.subr.mxu0 0.0
    %6562 = vmatpush1.msra.mxu0 %v6530
    %6563 = vmatprep.subr.mxu0 0.0
    %6564 = vmatpush1.msra.mxu0 %v6531
    %6565 = vmatprep.subr.mxu0 0.0
    %6566 = vmatpush1.msra.mxu0 %v6532
    %6567 = vmatprep.subr.mxu0 0.0
    %6568 = vmatpush1.msra.mxu0 %v6533
    %6569 = vmatprep.subr.mxu0 0.0
    %6570 = vmatpush1.msra.mxu0 %v6534
    %6571 = vmatprep.subr.mxu0 0.0
    %6572 = vmatpush1.msra.mxu0 %v6535
    %6573 = vmatprep.subr.mxu0 0.0
    %6574 = vmatpush1.msra.mxu0 %v6536
    %6575 = vmatprep.subr.mxu0 0.0
    %6576 = vmatpush1.msra.mxu0 %v6537
    %6577 = vmatprep.subr.mxu0 0.0
    %6578 = vmatpush1.msra.mxu0 0.0
    %6579 = vmatprep.subr.mxu0 0.0
    %6580 = vmatpush1.msra.mxu0 0.0
    %6581 = vmatprep.subr.mxu0 0.0
    %6582 = vmatpush1.msra.mxu0 0.0
    %6583 = vmatprep.subr.mxu0 0.0
    %6584 = vmatpush1.msra.mxu0 0.0
    %6585 = vmatprep.subr.mxu0 0.0
    %6586 = vmatpush1.msra.mxu0 0.0
    %6587 = vmatprep.subr.mxu0 0.0
    %6588 = vmatpush1.msra.mxu0 0.0
    %6589 = vmatprep.subr.mxu0 0.0
    %6590 = vmatpush1.msra.mxu0 0.0
    %6591 = vmatprep.subr.mxu0 0.0
    %6592 = vmatpush1.msra.mxu0 0.0
    %6593 = vmatprep.subr.mxu0 0.0
    %6594 = vmatpush1.msra.mxu0 0.0
    %6595 = vmatprep.subr.mxu0 0.0
    %6596 = vmatpush1.msra.mxu0 0.0
    %6597 = vmatprep.subr.mxu0 0.0
    %6598 = vmatpush1.msra.mxu0 0.0
    %6599 = vmatprep.subr.mxu0 0.0
    %6600 = vmatpush1.msra.mxu0 0.0
    %6601 = vmatprep.subr.mxu0 0.0
    %6602 = vmatpush1.msra.mxu0 0.0
    %6603 = vmatprep.subr.mxu0 0.0
    %6604 = vmatpush1.msra.mxu0 0.0
    %6605 = vmatprep.subr.mxu0 0.0
    %6606 = vmatpush1.msra.mxu0 0.0
    %6607 = vmatprep.subr.mxu0 0.0
    %6608 = vmatpush1.msra.mxu0 0.0
    %6609 = vmatprep.mubr.f32.mxu0 0.0
    %6610 = vmatmul.mubr.f32.gmra.mrb[0].mxu0 %v6521
    %v6611 = vpop.f32.mrb[0].mxu0
    %v6612 = vadd.f32 %v6543, %v6611
    %v6613 = vpop.f32.mrb[0].mxu0
    %6614 = vdwg.mxu0
    %vm6615 = vcmask 74752
    %6616 = vst.msk [vmem:[#allocation9] sm:$0x3] %vm6615, %v6612
    // Predicated region
    $region118: #{qcnn_forward.1} parent=1 // pred_check
      _
    $region119: #{qcnn_forward.1} parent=1 // pred_check_branch
      %6618 = sbr.rel (0) target = $region121
    $region120: #{qcnn_forward.1} parent=1 // pred_region
      %s6620 = ssub.s32 32, 32
      %6621 = vsyncadd [#allocation10], %s6620
      %s6623 = sshll.u32 [#allocation9], 4
      %s6624 = int_to_ptr.vmem [resolvable:$true] %s6623
      %6626 = dma.vmem_to_hbm [thread:$0]  %s6624, 32, %s59, [#allocation10]
    $region121: #{qcnn_forward.1} parent=1 // pred_fallthru
      _
    // Predicated region
    $region122: #{qcnn_forward.1} parent=1 // pred_check
      _
    $region123: #{qcnn_forward.1} parent=1 // pred_check_branch
      %6628 = sbr.rel (0) target = $region125
    $region124: #{qcnn_forward.1} parent=1 // pred_region
      %6629 = dma.done [#allocation10], 32
    $region125: #{qcnn_forward.1} parent=1 // pred_fallthru
      _
    %6630 = vsyncpa [#allocation10], 1

</llo_original>
